<compile_context>
chip_gen: v6e
topology: v6e:2x2x1
jax: 0.10.0
libtpu: 0.0.40
codegen_flags: <defaults>
</compile_context>

<pallas_src>
import jax
import jax.numpy as jnp
from jax import lax
from jax.experimental import pallas as pl
from jax.experimental.pallas import tpu as pltpu

CONV_CHANNELS = 8          # module-level constant from discriminator.py
LEAKY_SLOPE = 0.2
BN_EPS = 1e-5


# ----------------------------------------------------------------------------
# In-kernel helpers (traced inside the single fused Pallas kernel)
# ----------------------------------------------------------------------------
def _leaky(y):
    return jnp.where(y >= 0.0, y, LEAKY_SLOPE * y)


def _scatter_s2d(y, dst_ref, n, ho, wo, cc):
    """Scatter activation y (row-major (n, ho, wo, c) order, any compatible shape)
    into dst_ref of shape (2*n, ho//2+1, wo//2+1, 2*cc):

        dst[hp*n + b, hs, ws, wp*cc + c] = ypad[b, 2*hs + hp, 2*ws + wp, c]

    i.e. a zero-padded (pad=1) space-to-depth layout.  dst_ref must be
    zero-initialized by the caller (the untouched border IS the conv padding).
    Only contiguous slices + minor-dim-preserving reshapes are used."""
    ho2, wo2 = ho // 2, wo // 2
    y5 = y.reshape(n * ho2, 2, wo2, 2, cc)
    for p in range(2):                                   # output row parity
        rs = slice(0, ho2) if p == 0 else slice(1, ho2 + 1)
        for q in range(2):                               # output col parity
            cs = slice(0, wo2) if q == 0 else slice(1, wo2 + 1)
            c0 = (1 - q) * cc
            piece = y5[:, p, :, q, :].reshape(n, ho2, wo2, cc)
            dst_ref[(1 - p) * n:(2 - p) * n, rs, cs, c0:c0 + cc] = piece


def _conv4x4s2(xs_ref, w_ref, n, ho, wo, vpu=False):
    """Conv2d(k=4, s=2, p=1) over the space-to-depth input in xs_ref
    ((2*n, hs, ws, 2*cin), see _scatter_s2d) as a sum of 8 shifted matmuls.

    w_ref: (8, 2*cin, cout) packed weight pieces (or (8, 1, 2*cin) for the
    VPU path used when cout == 1).  Returns (n*ho*wo, cout) float32."""
    k = xs_ref.shape[-1]                 # 2 * cin
    m = n * ho * wo
    cout = w_ref.shape[1] if vpu else w_ref.shape[2]
    acc = jnp.zeros((m, cout), jnp.float32)
    piece = 0
    for ki in range(4):                  # kernel row  = 2*a + hp
        a, hp = ki // 2, ki % 2
        for b in range(2):               # kernel cols = 2*b + {0, 1}
            slab = xs_ref[hp * n:(hp + 1) * n, a:a + ho, b:b + wo, :]
            lhs = slab.reshape(m, k)
            w = w_ref[piece]
            if vpu:
                # cout == 1: VPU multiply + lane reduce, skip the MXU entirely.
                acc = acc + jnp.sum(lhs * w, axis=-1, keepdims=True)
            else:
                acc = acc + jnp.dot(lhs, w, preferred_element_type=jnp.float32)
            piece += 1
    return acc


def _bn_lrelu(y, g_ref, b_ref):
    """Training-mode BatchNorm (single-pass sum / sum-of-squares, biased var)
    fused with LeakyReLU.  y: (M, C) float32."""
    inv_m = 1.0 / y.shape[0]
    s1 = jnp.sum(y, axis=0, keepdims=True)
    s2 = jnp.sum(y * y, axis=0, keepdims=True)
    mean = s1 * inv_m
    var = s2 * inv_m - mean * mean
    out = (y - mean) * lax.rsqrt(var + BN_EPS)
    return _leaky(out * g_ref[...] + b_ref[...])


# ----------------------------------------------------------------------------
# The single fused kernel
# ----------------------------------------------------------------------------
def _discriminator_kernel(x_ref, w0, b0, w1, b1, g1, be1, w2, b2, g2, be2, w3, b3,
                          o_ref, xs0, xs1, xs2, xs3):
    N, H, W, Cin = x_ref.shape
    C = CONV_CHANNELS

    # Zero the padded space-to-depth scratch buffers (borders = conv padding).
    for ref in (xs0, xs1, xs2, xs3):
        ref[...] = jnp.zeros(ref.shape, ref.dtype)

    # Stage the input; every intermediate stays in VMEM from here on.
    _scatter_s2d(x_ref[...], xs0, N, H, W, Cin)

    H1, W1 = H // 2, W // 2                              # layer 0: Conv + LeakyReLU
    y = _conv4x4s2(xs0, w0, N, H1, W1) + b0[...]
    _scatter_s2d(_leaky(y), xs1, N, H1, W1, C)

    H2, W2 = H1 // 2, W1 // 2                            # layer 1: Conv + BN + LeakyReLU
    y = _conv4x4s2(xs1, w1, N, H2, W2) + b1[...]
    _scatter_s2d(_bn_lrelu(y, g1, be1), xs2, N, H2, W2, 2 * C)

    H3, W3 = H2 // 2, W2 // 2                            # layer 2: Conv + BN + LeakyReLU
    y = _conv4x4s2(xs2, w2, N, H3, W3) + b2[...]
    _scatter_s2d(_bn_lrelu(y, g2, be2), xs3, N, H3, W3, 4 * C)

    H4, W4 = H3 // 2, W3 // 2                            # layer 3: Conv -> 1 channel (VPU)
    y = _conv4x4s2(xs3, w3, N, H4, W4, vpu=True) + b3[...]
    o_ref[...] = y


# ----------------------------------------------------------------------------
# Host-side parameter packing (hoisted out of the forward pass) + wrapper
# ----------------------------------------------------------------------------
def pack_params(params):
    """One-time repack of PyTorch-layout parameters into the kernel layout:
    per conv, 8 weight pieces of shape (2*Cin, Cout) matching the space-to-depth
    taps (ki = 2a+hp, kj = 2b+wp); biases / BN params as (1, C) rows."""
    packed = {}
    for idx in range(4):
        w = params[f"w{idx}"]                      # (Cout, Cin, 4, 4)
        cout, cin = w.shape[0], w.shape[1]
        w4 = jnp.transpose(w, (2, 3, 1, 0))        # (kh, kw, Cin, Cout)
        pieces = [w4[ki, 2 * b:2 * b + 2].reshape(2 * cin, cout)
                  for ki in range(4) for b in range(2)]
        wp = jnp.stack(pieces, axis=0)             # (8, 2*Cin, Cout)
        if cout == 1:                              # VPU path wants (8, 1, 2*Cin)
            wp = jnp.transpose(wp, (0, 2, 1))
        packed[f"w{idx}"] = wp
        packed[f"b{idx}"] = params[f"b{idx}"].reshape(1, cout)
    for layer in (1, 2):
        packed[f"gamma{layer}"] = params[f"gamma{layer}"].reshape(1, -1)
        packed[f"beta{layer}"] = params[f"beta{layer}"].reshape(1, -1)
    return packed


@jax.jit
def discriminator_forward(packed, x_nchw):
    """Matches Discriminator.forward (training-mode BatchNorm). NCHW in, NCHW out.
    Requires H, W divisible by 16 (four stride-2 convs)."""
    N, Cin, H, W = x_nchw.shape
    C = CONV_CHANNELS
    Ho, Wo = H // 16, W // 16
    x_nhwc = jnp.transpose(x_nchw, (0, 2, 3, 1)).astype(jnp.float32)

    vmem = pl.BlockSpec(memory_space=pltpu.MemorySpace.VMEM)
    out = pl.pallas_call(
        _discriminator_kernel,
        out_shape=jax.ShapeDtypeStruct((N * Ho * Wo, 1), jnp.float32),
        in_specs=[vmem] * 13,
        out_specs=vmem,
        scratch_shapes=[
            pltpu.VMEM((2 * N, H // 2 + 1, W // 2 + 1, 2 * Cin), jnp.float32),
            pltpu.VMEM((2 * N, H // 4 + 1, W // 4 + 1, 2 * C), jnp.float32),
            pltpu.VMEM((2 * N, H // 8 + 1, W // 8 + 1, 4 * C), jnp.float32),
            pltpu.VMEM((2 * N, H // 16 + 1, W // 16 + 1, 8 * C), jnp.float32),
        ],
    )(x_nhwc,
      packed["w0"], packed["b0"],
      packed["w1"], packed["b1"], packed["gamma1"], packed["beta1"],
      packed["w2"], packed["b2"], packed["gamma2"], packed["beta2"],
      packed["w3"], packed["b3"])
    return jnp.transpose(out.reshape(N, Ho, Wo, 1), (0, 3, 1, 2))


# ----------------------------------------------------------------------------
# Parameters + pure-JAX reference (mirrors the PyTorch module) for checking
# ----------------------------------------------------------------------------
def init_params(key):
    C = CONV_CHANNELS
    conv_dims = [(C, 4), (2 * C, C), (4 * C, 2 * C), (1, 4 * C)]   # (Cout, Cin)
    params = {}
    for idx, (cout, cin) in enumerate(conv_dims):
        key, k1, k2 = jax.random.split(key, 3)
        bound = 1.0 / (cin * 16) ** 0.5
        params[f"w{idx}"] = jax.random.uniform(k1, (cout, cin, 4, 4), jnp.float32, -bound, bound)
        params[f"b{idx}"] = jax.random.uniform(k2, (cout,), jnp.float32, -bound, bound)
    for layer, c in [(1, 2 * C), (2, 4 * C)]:
        key, k1, k2 = jax.random.split(key, 3)
        params[f"gamma{layer}"] = 1.0 + 0.1 * jax.random.normal(k1, (c,), jnp.float32)
        params[f"beta{layer}"] = 0.1 * jax.random.normal(k2, (c,), jnp.float32)
    return params


def reference_forward(params, x):
    def conv(x, w, b):
        y = lax.conv_general_dilated(
            x, w, window_strides=(2, 2), padding=((1, 1), (1, 1)),
            dimension_numbers=("NCHW", "OIHW", "NCHW"),
            precision=lax.Precision.HIGHEST)
        return y + b.reshape(1, -1, 1, 1)

    def bn_lrelu(x, g, be):
        mean = jnp.mean(x, axis=(0, 2, 3), keepdims=True)
        var = jnp.mean((x - mean) ** 2, axis=(0, 2, 3), keepdims=True)
        y = (x - mean) / jnp.sqrt(var + BN_EPS)
        y = y * g.reshape(1, -1, 1, 1) + be.reshape(1, -1, 1, 1)
        return jnp.where(y >= 0, y, LEAKY_SLOPE * y)

    def lrelu(x):
        return jnp.where(x >= 0, x, LEAKY_SLOPE * x)

    x = lrelu(conv(x, params["w0"], params["b0"]))
    x = bn_lrelu(conv(x, params["w1"], params["b1"]), params["gamma1"], params["beta1"])
    x = bn_lrelu(conv(x, params["w2"], params["b2"]), params["gamma2"], params["beta2"])
    return conv(x, params["w3"], params["b3"])


if __name__ == "__main__":
    key = jax.random.PRNGKey(0)
    kp, kx = jax.random.split(key)
    params = init_params(kp)
    packed = pack_params(params)          # weight repack hoisted out of the forward pass

    # PyTorch-style NCHW input: batch=2, channels=3+1, spatial=16x16
    x = jax.random.normal(kx, (2, 4, 16, 16), dtype=jnp.float32)

    out = jax.block_until_ready(discriminator_forward(packed, x))
    assert out.shape == (2, 1, 1, 1), out.shape

    ref = jax.block_until_ready(reference_forward(params, x))
    assert jnp.allclose(out, ref, rtol=1e-2, atol=1e-2), (out, ref)

    print("KERNEL_OK")
</pallas_src>

<mosaic_0001>
module attributes {stable_mosaic.version = 11 : i64} {
  func.func @_discriminator_kernel(%arg0: memref<2x16x16x4xf32, #tpu.memory_space<vmem>>, %arg1: memref<8x8x8xf32, #tpu.memory_space<vmem>>, %arg2: memref<1x8xf32, #tpu.memory_space<vmem>>, %arg3: memref<8x16x16xf32, #tpu.memory_space<vmem>>, %arg4: memref<1x16xf32, #tpu.memory_space<vmem>>, %arg5: memref<1x16xf32, #tpu.memory_space<vmem>>, %arg6: memref<1x16xf32, #tpu.memory_space<vmem>>, %arg7: memref<8x32x32xf32, #tpu.memory_space<vmem>>, %arg8: memref<1x32xf32, #tpu.memory_space<vmem>>, %arg9: memref<1x32xf32, #tpu.memory_space<vmem>>, %arg10: memref<1x32xf32, #tpu.memory_space<vmem>>, %arg11: memref<8x1x64xf32, #tpu.memory_space<vmem>>, %arg12: memref<1x1xf32, #tpu.memory_space<vmem>>, %arg13: memref<2x1xf32, #tpu.memory_space<vmem>>, %arg14: memref<4x9x9x8xf32, #tpu.memory_space<vmem>>, %arg15: memref<4x5x5x16xf32, #tpu.memory_space<vmem>>, %arg16: memref<4x3x3x32xf32, #tpu.memory_space<vmem>>, %arg17: memref<4x2x2x64xf32, #tpu.memory_space<vmem>>) attributes {dimension_semantics = [], scalar_prefetch = 0 : i64, scratch_operands = 4 : i64, tpu.core_type = #tpu.core_type<tc>} {
    %cst = arith.constant 0.000000e+00 : f32
    %0 = vector.broadcast %cst : f32 to vector<4x9x9x8xf32>
    %c0 = arith.constant 0 : index
    %c0_0 = arith.constant 0 : index
    %c0_1 = arith.constant 0 : index
    %c0_2 = arith.constant 0 : index
    %1 = vector.load %arg14[%c0, %c0_0, %c0_1, %c0_2] : memref<4x9x9x8xf32, #tpu.memory_space<vmem>>, vector<4x9x9x8xf32>
    tpu.vector_store %arg14[%c0, %c0_0, %c0_1, %c0_2], %0 {strides = array<i32>} : memref<4x9x9x8xf32, #tpu.memory_space<vmem>>, vector<4x9x9x8xf32>,
    %cst_3 = arith.constant 0.000000e+00 : f32
    %2 = vector.broadcast %cst_3 : f32 to vector<4x5x5x16xf32>
    %c0_4 = arith.constant 0 : index
    %c0_5 = arith.constant 0 : index
    %c0_6 = arith.constant 0 : index
    %c0_7 = arith.constant 0 : index
    %3 = vector.load %arg15[%c0_4, %c0_5, %c0_6, %c0_7] : memref<4x5x5x16xf32, #tpu.memory_space<vmem>>, vector<4x5x5x16xf32>
    tpu.vector_store %arg15[%c0_4, %c0_5, %c0_6, %c0_7], %2 {strides = array<i32>} : memref<4x5x5x16xf32, #tpu.memory_space<vmem>>, vector<4x5x5x16xf32>,
    %cst_8 = arith.constant 0.000000e+00 : f32
    %4 = vector.broadcast %cst_8 : f32 to vector<4x3x3x32xf32>
    %c0_9 = arith.constant 0 : index
    %c0_10 = arith.constant 0 : index
    %c0_11 = arith.constant 0 : index
    %c0_12 = arith.constant 0 : index
    %5 = vector.load %arg16[%c0_9, %c0_10, %c0_11, %c0_12] : memref<4x3x3x32xf32, #tpu.memory_space<vmem>>, vector<4x3x3x32xf32>
    tpu.vector_store %arg16[%c0_9, %c0_10, %c0_11, %c0_12], %4 {strides = array<i32>} : memref<4x3x3x32xf32, #tpu.memory_space<vmem>>, vector<4x3x3x32xf32>,
    %cst_13 = arith.constant 0.000000e+00 : f32
    %6 = vector.broadcast %cst_13 : f32 to vector<4x2x2x64xf32>
    %c0_14 = arith.constant 0 : index
    %c0_15 = arith.constant 0 : index
    %c0_16 = arith.constant 0 : index
    %c0_17 = arith.constant 0 : index
    %7 = vector.load %arg17[%c0_14, %c0_15, %c0_16, %c0_17] : memref<4x2x2x64xf32, #tpu.memory_space<vmem>>, vector<4x2x2x64xf32>
    tpu.vector_store %arg17[%c0_14, %c0_15, %c0_16, %c0_17], %6 {strides = array<i32>} : memref<4x2x2x64xf32, #tpu.memory_space<vmem>>, vector<4x2x2x64xf32>,
    %c0_18 = arith.constant 0 : index
    %c0_19 = arith.constant 0 : index
    %c0_20 = arith.constant 0 : index
    %c0_21 = arith.constant 0 : index
    %8 = vector.load %arg0[%c0_18, %c0_19, %c0_20, %c0_21] : memref<2x16x16x4xf32, #tpu.memory_space<vmem>>, vector<2x16x16x4xf32>
    %9 = vector.shape_cast %8 : vector<2x16x16x4xf32> to vector<16x2x8x2x4xf32>
    %10 = vector.extract_strided_slice %9 {offsets = [0, 0, 0, 0, 0], sizes = [16, 1, 8, 1, 4], strides = [1, 1, 1, 1, 1]} : vector<16x2x8x2x4xf32> to vector<16x1x8x1x4xf32>
    %11 = vector.shape_cast %10 : vector<16x1x8x1x4xf32> to vector<16x8x4xf32>
    %12 = vector.shape_cast %11 : vector<16x8x4xf32> to vector<2x8x8x4xf32>
    %c2 = arith.constant 2 : index
    %c0_22 = arith.constant 0 : index
    %c0_23 = arith.constant 0 : index
    %c4 = arith.constant 4 : index
    %13 = vector.load %arg14[%c2, %c0_22, %c0_23, %c4] : memref<4x9x9x8xf32, #tpu.memory_space<vmem>>, vector<2x8x8x4xf32>
    tpu.vector_store %arg14[%c2, %c0_22, %c0_23, %c4], %12 {strides = array<i32>} : memref<4x9x9x8xf32, #tpu.memory_space<vmem>>, vector<2x8x8x4xf32>,
    %14 = vector.extract_strided_slice %9 {offsets = [0, 0, 0, 1, 0], sizes = [16, 1, 8, 1, 4], strides = [1, 1, 1, 1, 1]} : vector<16x2x8x2x4xf32> to vector<16x1x8x1x4xf32>
    %15 = vector.shape_cast %14 : vector<16x1x8x1x4xf32> to vector<16x8x4xf32>
    %16 = vector.shape_cast %15 : vector<16x8x4xf32> to vector<2x8x8x4xf32>
    %c2_24 = arith.constant 2 : index
    %c0_25 = arith.constant 0 : index
    %c1 = arith.constant 1 : index
    %c0_26 = arith.constant 0 : index
    %17 = vector.load %arg14[%c2_24, %c0_25, %c1, %c0_26] : memref<4x9x9x8xf32, #tpu.memory_space<vmem>>, vector<2x8x8x4xf32>
    tpu.vector_store %arg14[%c2_24, %c0_25, %c1, %c0_26], %16 {strides = array<i32>} : memref<4x9x9x8xf32, #tpu.memory_space<vmem>>, vector<2x8x8x4xf32>,
    %18 = vector.extract_strided_slice %9 {offsets = [0, 1, 0, 0, 0], sizes = [16, 1, 8, 1, 4], strides = [1, 1, 1, 1, 1]} : vector<16x2x8x2x4xf32> to vector<16x1x8x1x4xf32>
    %19 = vector.shape_cast %18 : vector<16x1x8x1x4xf32> to vector<16x8x4xf32>
    %20 = vector.shape_cast %19 : vector<16x8x4xf32> to vector<2x8x8x4xf32>
    %c0_27 = arith.constant 0 : index
    %c1_28 = arith.constant 1 : index
    %c0_29 = arith.constant 0 : index
    %c4_30 = arith.constant 4 : index
    %21 = vector.load %arg14[%c0_27, %c1_28, %c0_29, %c4_30] : memref<4x9x9x8xf32, #tpu.memory_space<vmem>>, vector<2x8x8x4xf32>
    tpu.vector_store %arg14[%c0_27, %c1_28, %c0_29, %c4_30], %20 {strides = array<i32>} : memref<4x9x9x8xf32, #tpu.memory_space<vmem>>, vector<2x8x8x4xf32>,
    %22 = vector.extract_strided_slice %9 {offsets = [0, 1, 0, 1, 0], sizes = [16, 1, 8, 1, 4], strides = [1, 1, 1, 1, 1]} : vector<16x2x8x2x4xf32> to vector<16x1x8x1x4xf32>
    %23 = vector.shape_cast %22 : vector<16x1x8x1x4xf32> to vector<16x8x4xf32>
    %24 = vector.shape_cast %23 : vector<16x8x4xf32> to vector<2x8x8x4xf32>
    %c0_31 = arith.constant 0 : index
    %c1_32 = arith.constant 1 : index
    %c1_33 = arith.constant 1 : index
    %c0_34 = arith.constant 0 : index
    %25 = vector.load %arg14[%c0_31, %c1_32, %c1_33, %c0_34] : memref<4x9x9x8xf32, #tpu.memory_space<vmem>>, vector<2x8x8x4xf32>
    tpu.vector_store %arg14[%c0_31, %c1_32, %c1_33, %c0_34], %24 {strides = array<i32>} : memref<4x9x9x8xf32, #tpu.memory_space<vmem>>, vector<2x8x8x4xf32>,
    %cst_35 = arith.constant 0.000000e+00 : f32
    %26 = vector.broadcast %cst_35 : f32 to vector<128x8xf32>
    %c0_36 = arith.constant 0 : index
    %c0_37 = arith.constant 0 : index
    %c0_38 = arith.constant 0 : index
    %c0_39 = arith.constant 0 : index
    %27 = vector.load %arg14[%c0_36, %c0_37, %c0_38, %c0_39] : memref<4x9x9x8xf32, #tpu.memory_space<vmem>>, vector<2x8x8x8xf32>
    %28 = vector.shape_cast %27 : vector<2x8x8x8xf32> to vector<128x8xf32>
    %c0_40 = arith.constant 0 : index
    %c0_41 = arith.constant 0 : index
    %c0_42 = arith.constant 0 : index
    %29 = vector.load %arg1[%c0_40, %c0_41, %c0_42] : memref<8x8x8xf32, #tpu.memory_space<vmem>>, vector<1x8x8xf32>
    %30 = vector.shape_cast %29 : vector<1x8x8xf32> to vector<8x8xf32>
    %cst_43 = arith.constant dense<0.000000e+00> : vector<128x8xf32>
    %31 = tpu.matmul %28, %30, %cst_43 {dimension_numbers = #tpu.dot_dimension_numbers<[1], [0], [0], [1], [0, 0, 1, 1], [], []>} : vector<128x8xf32>, vector<8x8xf32>, vector<128x8xf32> -> vector<128x8xf32>
    %32 = arith.addf %26, %31 : vector<128x8xf32>
    %c0_44 = arith.constant 0 : index
    %c0_45 = arith.constant 0 : index
    %c1_46 = arith.constant 1 : index
    %c0_47 = arith.constant 0 : index
    %33 = vector.load %arg14[%c0_44, %c0_45, %c1_46, %c0_47] : memref<4x9x9x8xf32, #tpu.memory_space<vmem>>, vector<2x8x8x8xf32>
    %34 = vector.shape_cast %33 : vector<2x8x8x8xf32> to vector<128x8xf32>
    %c1_48 = arith.constant 1 : index
    %c0_49 = arith.constant 0 : index
    %c0_50 = arith.constant 0 : index
    %35 = vector.load %arg1[%c1_48, %c0_49, %c0_50] : memref<8x8x8xf32, #tpu.memory_space<vmem>>, vector<1x8x8xf32>
    %36 = vector.shape_cast %35 : vector<1x8x8xf32> to vector<8x8xf32>
    %cst_51 = arith.constant dense<0.000000e+00> : vector<128x8xf32>
    %37 = tpu.matmul %34, %36, %cst_51 {dimension_numbers = #tpu.dot_dimension_numbers<[1], [0], [0], [1], [0, 0, 1, 1], [], []>} : vector<128x8xf32>, vector<8x8xf32>, vector<128x8xf32> -> vector<128x8xf32>
    %38 = arith.addf %32, %37 : vector<128x8xf32>
    %c2_52 = arith.constant 2 : index
    %c0_53 = arith.constant 0 : index
    %c0_54 = arith.constant 0 : index
    %c0_55 = arith.constant 0 : index
    %39 = vector.load %arg14[%c2_52, %c0_53, %c0_54, %c0_55] : memref<4x9x9x8xf32, #tpu.memory_space<vmem>>, vector<2x8x8x8xf32>
    %40 = vector.shape_cast %39 : vector<2x8x8x8xf32> to vector<128x8xf32>
    %c2_56 = arith.constant 2 : index
    %c0_57 = arith.constant 0 : index
    %c0_58 = arith.constant 0 : index
    %41 = vector.load %arg1[%c2_56, %c0_57, %c0_58] : memref<8x8x8xf32, #tpu.memory_space<vmem>>, vector<1x8x8xf32>
    %42 = vector.shape_cast %41 : vector<1x8x8xf32> to vector<8x8xf32>
    %cst_59 = arith.constant dense<0.000000e+00> : vector<128x8xf32>
    %43 = tpu.matmul %40, %42, %cst_59 {dimension_numbers = #tpu.dot_dimension_numbers<[1], [0], [0], [1], [0, 0, 1, 1], [], []>} : vector<128x8xf32>, vector<8x8xf32>, vector<128x8xf32> -> vector<128x8xf32>
    %44 = arith.addf %38, %43 : vector<128x8xf32>
    %c2_60 = arith.constant 2 : index
    %c0_61 = arith.constant 0 : index
    %c1_62 = arith.constant 1 : index
    %c0_63 = arith.constant 0 : index
    %45 = vector.load %arg14[%c2_60, %c0_61, %c1_62, %c0_63] : memref<4x9x9x8xf32, #tpu.memory_space<vmem>>, vector<2x8x8x8xf32>
    %46 = vector.shape_cast %45 : vector<2x8x8x8xf32> to vector<128x8xf32>
    %c3 = arith.constant 3 : index
    %c0_64 = arith.constant 0 : index
    %c0_65 = arith.constant 0 : index
    %47 = vector.load %arg1[%c3, %c0_64, %c0_65] : memref<8x8x8xf32, #tpu.memory_space<vmem>>, vector<1x8x8xf32>
    %48 = vector.shape_cast %47 : vector<1x8x8xf32> to vector<8x8xf32>
    %cst_66 = arith.constant dense<0.000000e+00> : vector<128x8xf32>
    %49 = tpu.matmul %46, %48, %cst_66 {dimension_numbers = #tpu.dot_dimension_numbers<[1], [0], [0], [1], [0, 0, 1, 1], [], []>} : vector<128x8xf32>, vector<8x8xf32>, vector<128x8xf32> -> vector<128x8xf32>
    %50 = arith.addf %44, %49 : vector<128x8xf32>
    %c0_67 = arith.constant 0 : index
    %c1_68 = arith.constant 1 : index
    %c0_69 = arith.constant 0 : index
    %c0_70 = arith.constant 0 : index
    %51 = vector.load %arg14[%c0_67, %c1_68, %c0_69, %c0_70] : memref<4x9x9x8xf32, #tpu.memory_space<vmem>>, vector<2x8x8x8xf32>
    %52 = vector.shape_cast %51 : vector<2x8x8x8xf32> to vector<128x8xf32>
    %c4_71 = arith.constant 4 : index
    %c0_72 = arith.constant 0 : index
    %c0_73 = arith.constant 0 : index
    %53 = vector.load %arg1[%c4_71, %c0_72, %c0_73] : memref<8x8x8xf32, #tpu.memory_space<vmem>>, vector<1x8x8xf32>
    %54 = vector.shape_cast %53 : vector<1x8x8xf32> to vector<8x8xf32>
    %cst_74 = arith.constant dense<0.000000e+00> : vector<128x8xf32>
    %55 = tpu.matmul %52, %54, %cst_74 {dimension_numbers = #tpu.dot_dimension_numbers<[1], [0], [0], [1], [0, 0, 1, 1], [], []>} : vector<128x8xf32>, vector<8x8xf32>, vector<128x8xf32> -> vector<128x8xf32>
    %56 = arith.addf %50, %55 : vector<128x8xf32>
    %c0_75 = arith.constant 0 : index
    %c1_76 = arith.constant 1 : index
    %c1_77 = arith.constant 1 : index
    %c0_78 = arith.constant 0 : index
    %57 = vector.load %arg14[%c0_75, %c1_76, %c1_77, %c0_78] : memref<4x9x9x8xf32, #tpu.memory_space<vmem>>, vector<2x8x8x8xf32>
    %58 = vector.shape_cast %57 : vector<2x8x8x8xf32> to vector<128x8xf32>
    %c5 = arith.constant 5 : index
    %c0_79 = arith.constant 0 : index
    %c0_80 = arith.constant 0 : index
    %59 = vector.load %arg1[%c5, %c0_79, %c0_80] : memref<8x8x8xf32, #tpu.memory_space<vmem>>, vector<1x8x8xf32>
    %60 = vector.shape_cast %59 : vector<1x8x8xf32> to vector<8x8xf32>
    %cst_81 = arith.constant dense<0.000000e+00> : vector<128x8xf32>
    %61 = tpu.matmul %58, %60, %cst_81 {dimension_numbers = #tpu.dot_dimension_numbers<[1], [0], [0], [1], [0, 0, 1, 1], [], []>} : vector<128x8xf32>, vector<8x8xf32>, vector<128x8xf32> -> vector<128x8xf32>
    %62 = arith.addf %56, %61 : vector<128x8xf32>
    %c2_82 = arith.constant 2 : index
    %c1_83 = arith.constant 1 : index
    %c0_84 = arith.constant 0 : index
    %c0_85 = arith.constant 0 : index
    %63 = vector.load %arg14[%c2_82, %c1_83, %c0_84, %c0_85] : memref<4x9x9x8xf32, #tpu.memory_space<vmem>>, vector<2x8x8x8xf32>
    %64 = vector.shape_cast %63 : vector<2x8x8x8xf32> to vector<128x8xf32>
    %c6 = arith.constant 6 : index
    %c0_86 = arith.constant 0 : index
    %c0_87 = arith.constant 0 : index
    %65 = vector.load %arg1[%c6, %c0_86, %c0_87] : memref<8x8x8xf32, #tpu.memory_space<vmem>>, vector<1x8x8xf32>
    %66 = vector.shape_cast %65 : vector<1x8x8xf32> to vector<8x8xf32>
    %cst_88 = arith.constant dense<0.000000e+00> : vector<128x8xf32>
    %67 = tpu.matmul %64, %66, %cst_88 {dimension_numbers = #tpu.dot_dimension_numbers<[1], [0], [0], [1], [0, 0, 1, 1], [], []>} : vector<128x8xf32>, vector<8x8xf32>, vector<128x8xf32> -> vector<128x8xf32>
    %68 = arith.addf %62, %67 : vector<128x8xf32>
    %c2_89 = arith.constant 2 : index
    %c1_90 = arith.constant 1 : index
    %c1_91 = arith.constant 1 : index
    %c0_92 = arith.constant 0 : index
    %69 = vector.load %arg14[%c2_89, %c1_90, %c1_91, %c0_92] : memref<4x9x9x8xf32, #tpu.memory_space<vmem>>, vector<2x8x8x8xf32>
    %70 = vector.shape_cast %69 : vector<2x8x8x8xf32> to vector<128x8xf32>
    %c7 = arith.constant 7 : index
    %c0_93 = arith.constant 0 : index
    %c0_94 = arith.constant 0 : index
    %71 = vector.load %arg1[%c7, %c0_93, %c0_94] : memref<8x8x8xf32, #tpu.memory_space<vmem>>, vector<1x8x8xf32>
    %72 = vector.shape_cast %71 : vector<1x8x8xf32> to vector<8x8xf32>
    %cst_95 = arith.constant dense<0.000000e+00> : vector<128x8xf32>
    %73 = tpu.matmul %70, %72, %cst_95 {dimension_numbers = #tpu.dot_dimension_numbers<[1], [0], [0], [1], [0, 0, 1, 1], [], []>} : vector<128x8xf32>, vector<8x8xf32>, vector<128x8xf32> -> vector<128x8xf32>
    %74 = arith.addf %68, %73 : vector<128x8xf32>
    %c0_96 = arith.constant 0 : index
    %c0_97 = arith.constant 0 : index
    %75 = vector.load %arg2[%c0_96, %c0_97] : memref<1x8xf32, #tpu.memory_space<vmem>>, vector<1x8xf32>
    %76 = vector.broadcast %75 : vector<1x8xf32> to vector<128x8xf32>
    %77 = arith.addf %74, %76 : vector<128x8xf32>
    %cst_98 = arith.constant 0.000000e+00 : f32
    %78 = vector.broadcast %cst_98 : f32 to vector<128x8xf32>
    %79 = arith.cmpf oge, %77, %78 : vector<128x8xf32>
    %cst_99 = arith.constant 2.000000e-01 : f32
    %80 = vector.broadcast %cst_99 : f32 to vector<128x8xf32>
    %81 = arith.mulf %80, %77 : vector<128x8xf32>
    %82 = arith.select %79, %77, %81 : vector<128x8xi1>, vector<128x8xf32>
    %83 = vector.shape_cast %82 : vector<128x8xf32> to vector<8x2x4x2x8xf32>
    %84 = vector.extract_strided_slice %83 {offsets = [0, 0, 0, 0, 0], sizes = [8, 1, 4, 1, 8], strides = [1, 1, 1, 1, 1]} : vector<8x2x4x2x8xf32> to vector<8x1x4x1x8xf32>
    %85 = vector.shape_cast %84 : vector<8x1x4x1x8xf32> to vector<8x4x8xf32>
    %86 = vector.shape_cast %85 : vector<8x4x8xf32> to vector<2x4x4x8xf32>
    %c2_100 = arith.constant 2 : index
    %c0_101 = arith.constant 0 : index
    %c0_102 = arith.constant 0 : index
    %c8 = arith.constant 8 : index
    %87 = vector.load %arg15[%c2_100, %c0_101, %c0_102, %c8] : memref<4x5x5x16xf32, #tpu.memory_space<vmem>>, vector<2x4x4x8xf32>
    tpu.vector_store %arg15[%c2_100, %c0_101, %c0_102, %c8], %86 {strides = array<i32>} : memref<4x5x5x16xf32, #tpu.memory_space<vmem>>, vector<2x4x4x8xf32>,
    %88 = vector.extract_strided_slice %83 {offsets = [0, 0, 0, 1, 0], sizes = [8, 1, 4, 1, 8], strides = [1, 1, 1, 1, 1]} : vector<8x2x4x2x8xf32> to vector<8x1x4x1x8xf32>
    %89 = vector.shape_cast %88 : vector<8x1x4x1x8xf32> to vector<8x4x8xf32>
    %90 = vector.shape_cast %89 : vector<8x4x8xf32> to vector<2x4x4x8xf32>
    %c2_103 = arith.constant 2 : index
    %c0_104 = arith.constant 0 : index
    %c1_105 = arith.constant 1 : index
    %c0_106 = arith.constant 0 : index
    %91 = vector.load %arg15[%c2_103, %c0_104, %c1_105, %c0_106] : memref<4x5x5x16xf32, #tpu.memory_space<vmem>>, vector<2x4x4x8xf32>
    tpu.vector_store %arg15[%c2_103, %c0_104, %c1_105, %c0_106], %90 {strides = array<i32>} : memref<4x5x5x16xf32, #tpu.memory_space<vmem>>, vector<2x4x4x8xf32>,
    %92 = vector.extract_strided_slice %83 {offsets = [0, 1, 0, 0, 0], sizes = [8, 1, 4, 1, 8], strides = [1, 1, 1, 1, 1]} : vector<8x2x4x2x8xf32> to vector<8x1x4x1x8xf32>
    %93 = vector.shape_cast %92 : vector<8x1x4x1x8xf32> to vector<8x4x8xf32>
    %94 = vector.shape_cast %93 : vector<8x4x8xf32> to vector<2x4x4x8xf32>
    %c0_107 = arith.constant 0 : index
    %c1_108 = arith.constant 1 : index
    %c0_109 = arith.constant 0 : index
    %c8_110 = arith.constant 8 : index
    %95 = vector.load %arg15[%c0_107, %c1_108, %c0_109, %c8_110] : memref<4x5x5x16xf32, #tpu.memory_space<vmem>>, vector<2x4x4x8xf32>
    tpu.vector_store %arg15[%c0_107, %c1_108, %c0_109, %c8_110], %94 {strides = array<i32>} : memref<4x5x5x16xf32, #tpu.memory_space<vmem>>, vector<2x4x4x8xf32>,
    %96 = vector.extract_strided_slice %83 {offsets = [0, 1, 0, 1, 0], sizes = [8, 1, 4, 1, 8], strides = [1, 1, 1, 1, 1]} : vector<8x2x4x2x8xf32> to vector<8x1x4x1x8xf32>
    %97 = vector.shape_cast %96 : vector<8x1x4x1x8xf32> to vector<8x4x8xf32>
    %98 = vector.shape_cast %97 : vector<8x4x8xf32> to vector<2x4x4x8xf32>
    %c0_111 = arith.constant 0 : index
    %c1_112 = arith.constant 1 : index
    %c1_113 = arith.constant 1 : index
    %c0_114 = arith.constant 0 : index
    %99 = vector.load %arg15[%c0_111, %c1_112, %c1_113, %c0_114] : memref<4x5x5x16xf32, #tpu.memory_space<vmem>>, vector<2x4x4x8xf32>
    tpu.vector_store %arg15[%c0_111, %c1_112, %c1_113, %c0_114], %98 {strides = array<i32>} : memref<4x5x5x16xf32, #tpu.memory_space<vmem>>, vector<2x4x4x8xf32>,
    %cst_115 = arith.constant 0.000000e+00 : f32
    %100 = vector.broadcast %cst_115 : f32 to vector<32x16xf32>
    %c0_116 = arith.constant 0 : index
    %c0_117 = arith.constant 0 : index
    %c0_118 = arith.constant 0 : index
    %c0_119 = arith.constant 0 : index
    %101 = vector.load %arg15[%c0_116, %c0_117, %c0_118, %c0_119] : memref<4x5x5x16xf32, #tpu.memory_space<vmem>>, vector<2x4x4x16xf32>
    %102 = vector.shape_cast %101 : vector<2x4x4x16xf32> to vector<32x16xf32>
    %c0_120 = arith.constant 0 : index
    %c0_121 = arith.constant 0 : index
    %c0_122 = arith.constant 0 : index
    %103 = vector.load %arg3[%c0_120, %c0_121, %c0_122] : memref<8x16x16xf32, #tpu.memory_space<vmem>>, vector<1x16x16xf32>
    %104 = vector.shape_cast %103 : vector<1x16x16xf32> to vector<16x16xf32>
    %cst_123 = arith.constant dense<0.000000e+00> : vector<32x16xf32>
    %105 = tpu.matmul %102, %104, %cst_123 {dimension_numbers = #tpu.dot_dimension_numbers<[1], [0], [0], [1], [0, 0, 1, 1], [], []>} : vector<32x16xf32>, vector<16x16xf32>, vector<32x16xf32> -> vector<32x16xf32>
    %106 = arith.addf %100, %105 : vector<32x16xf32>
    %c0_124 = arith.constant 0 : index
    %c0_125 = arith.constant 0 : index
    %c1_126 = arith.constant 1 : index
    %c0_127 = arith.constant 0 : index
    %107 = vector.load %arg15[%c0_124, %c0_125, %c1_126, %c0_127] : memref<4x5x5x16xf32, #tpu.memory_space<vmem>>, vector<2x4x4x16xf32>
    %108 = vector.shape_cast %107 : vector<2x4x4x16xf32> to vector<32x16xf32>
    %c1_128 = arith.constant 1 : index
    %c0_129 = arith.constant 0 : index
    %c0_130 = arith.constant 0 : index
    %109 = vector.load %arg3[%c1_128, %c0_129, %c0_130] : memref<8x16x16xf32, #tpu.memory_space<vmem>>, vector<1x16x16xf32>
    %110 = vector.shape_cast %109 : vector<1x16x16xf32> to vector<16x16xf32>
    %cst_131 = arith.constant dense<0.000000e+00> : vector<32x16xf32>
    %111 = tpu.matmul %108, %110, %cst_131 {dimension_numbers = #tpu.dot_dimension_numbers<[1], [0], [0], [1], [0, 0, 1, 1], [], []>} : vector<32x16xf32>, vector<16x16xf32>, vector<32x16xf32> -> vector<32x16xf32>
    %112 = arith.addf %106, %111 : vector<32x16xf32>
    %c2_132 = arith.constant 2 : index
    %c0_133 = arith.constant 0 : index
    %c0_134 = arith.constant 0 : index
    %c0_135 = arith.constant 0 : index
    %113 = vector.load %arg15[%c2_132, %c0_133, %c0_134, %c0_135] : memref<4x5x5x16xf32, #tpu.memory_space<vmem>>, vector<2x4x4x16xf32>
    %114 = vector.shape_cast %113 : vector<2x4x4x16xf32> to vector<32x16xf32>
    %c2_136 = arith.constant 2 : index
    %c0_137 = arith.constant 0 : index
    %c0_138 = arith.constant 0 : index
    %115 = vector.load %arg3[%c2_136, %c0_137, %c0_138] : memref<8x16x16xf32, #tpu.memory_space<vmem>>, vector<1x16x16xf32>
    %116 = vector.shape_cast %115 : vector<1x16x16xf32> to vector<16x16xf32>
    %cst_139 = arith.constant dense<0.000000e+00> : vector<32x16xf32>
    %117 = tpu.matmul %114, %116, %cst_139 {dimension_numbers = #tpu.dot_dimension_numbers<[1], [0], [0], [1], [0, 0, 1, 1], [], []>} : vector<32x16xf32>, vector<16x16xf32>, vector<32x16xf32> -> vector<32x16xf32>
    %118 = arith.addf %112, %117 : vector<32x16xf32>
    %c2_140 = arith.constant 2 : index
    %c0_141 = arith.constant 0 : index
    %c1_142 = arith.constant 1 : index
    %c0_143 = arith.constant 0 : index
    %119 = vector.load %arg15[%c2_140, %c0_141, %c1_142, %c0_143] : memref<4x5x5x16xf32, #tpu.memory_space<vmem>>, vector<2x4x4x16xf32>
    %120 = vector.shape_cast %119 : vector<2x4x4x16xf32> to vector<32x16xf32>
    %c3_144 = arith.constant 3 : index
    %c0_145 = arith.constant 0 : index
    %c0_146 = arith.constant 0 : index
    %121 = vector.load %arg3[%c3_144, %c0_145, %c0_146] : memref<8x16x16xf32, #tpu.memory_space<vmem>>, vector<1x16x16xf32>
    %122 = vector.shape_cast %121 : vector<1x16x16xf32> to vector<16x16xf32>
    %cst_147 = arith.constant dense<0.000000e+00> : vector<32x16xf32>
    %123 = tpu.matmul %120, %122, %cst_147 {dimension_numbers = #tpu.dot_dimension_numbers<[1], [0], [0], [1], [0, 0, 1, 1], [], []>} : vector<32x16xf32>, vector<16x16xf32>, vector<32x16xf32> -> vector<32x16xf32>
    %124 = arith.addf %118, %123 : vector<32x16xf32>
    %c0_148 = arith.constant 0 : index
    %c1_149 = arith.constant 1 : index
    %c0_150 = arith.constant 0 : index
    %c0_151 = arith.constant 0 : index
    %125 = vector.load %arg15[%c0_148, %c1_149, %c0_150, %c0_151] : memref<4x5x5x16xf32, #tpu.memory_space<vmem>>, vector<2x4x4x16xf32>
    %126 = vector.shape_cast %125 : vector<2x4x4x16xf32> to vector<32x16xf32>
    %c4_152 = arith.constant 4 : index
    %c0_153 = arith.constant 0 : index
    %c0_154 = arith.constant 0 : index
    %127 = vector.load %arg3[%c4_152, %c0_153, %c0_154] : memref<8x16x16xf32, #tpu.memory_space<vmem>>, vector<1x16x16xf32>
    %128 = vector.shape_cast %127 : vector<1x16x16xf32> to vector<16x16xf32>
    %cst_155 = arith.constant dense<0.000000e+00> : vector<32x16xf32>
    %129 = tpu.matmul %126, %128, %cst_155 {dimension_numbers = #tpu.dot_dimension_numbers<[1], [0], [0], [1], [0, 0, 1, 1], [], []>} : vector<32x16xf32>, vector<16x16xf32>, vector<32x16xf32> -> vector<32x16xf32>
    %130 = arith.addf %124, %129 : vector<32x16xf32>
    %c0_156 = arith.constant 0 : index
    %c1_157 = arith.constant 1 : index
    %c1_158 = arith.constant 1 : index
    %c0_159 = arith.constant 0 : index
    %131 = vector.load %arg15[%c0_156, %c1_157, %c1_158, %c0_159] : memref<4x5x5x16xf32, #tpu.memory_space<vmem>>, vector<2x4x4x16xf32>
    %132 = vector.shape_cast %131 : vector<2x4x4x16xf32> to vector<32x16xf32>
    %c5_160 = arith.constant 5 : index
    %c0_161 = arith.constant 0 : index
    %c0_162 = arith.constant 0 : index
    %133 = vector.load %arg3[%c5_160, %c0_161, %c0_162] : memref<8x16x16xf32, #tpu.memory_space<vmem>>, vector<1x16x16xf32>
    %134 = vector.shape_cast %133 : vector<1x16x16xf32> to vector<16x16xf32>
    %cst_163 = arith.constant dense<0.000000e+00> : vector<32x16xf32>
    %135 = tpu.matmul %132, %134, %cst_163 {dimension_numbers = #tpu.dot_dimension_numbers<[1], [0], [0], [1], [0, 0, 1, 1], [], []>} : vector<32x16xf32>, vector<16x16xf32>, vector<32x16xf32> -> vector<32x16xf32>
    %136 = arith.addf %130, %135 : vector<32x16xf32>
    %c2_164 = arith.constant 2 : index
    %c1_165 = arith.constant 1 : index
    %c0_166 = arith.constant 0 : index
    %c0_167 = arith.constant 0 : index
    %137 = vector.load %arg15[%c2_164, %c1_165, %c0_166, %c0_167] : memref<4x5x5x16xf32, #tpu.memory_space<vmem>>, vector<2x4x4x16xf32>
    %138 = vector.shape_cast %137 : vector<2x4x4x16xf32> to vector<32x16xf32>
    %c6_168 = arith.constant 6 : index
    %c0_169 = arith.constant 0 : index
    %c0_170 = arith.constant 0 : index
    %139 = vector.load %arg3[%c6_168, %c0_169, %c0_170] : memref<8x16x16xf32, #tpu.memory_space<vmem>>, vector<1x16x16xf32>
    %140 = vector.shape_cast %139 : vector<1x16x16xf32> to vector<16x16xf32>
    %cst_171 = arith.constant dense<0.000000e+00> : vector<32x16xf32>
    %141 = tpu.matmul %138, %140, %cst_171 {dimension_numbers = #tpu.dot_dimension_numbers<[1], [0], [0], [1], [0, 0, 1, 1], [], []>} : vector<32x16xf32>, vector<16x16xf32>, vector<32x16xf32> -> vector<32x16xf32>
    %142 = arith.addf %136, %141 : vector<32x16xf32>
    %c2_172 = arith.constant 2 : index
    %c1_173 = arith.constant 1 : index
    %c1_174 = arith.constant 1 : index
    %c0_175 = arith.constant 0 : index
    %143 = vector.load %arg15[%c2_172, %c1_173, %c1_174, %c0_175] : memref<4x5x5x16xf32, #tpu.memory_space<vmem>>, vector<2x4x4x16xf32>
    %144 = vector.shape_cast %143 : vector<2x4x4x16xf32> to vector<32x16xf32>
    %c7_176 = arith.constant 7 : index
    %c0_177 = arith.constant 0 : index
    %c0_178 = arith.constant 0 : index
    %145 = vector.load %arg3[%c7_176, %c0_177, %c0_178] : memref<8x16x16xf32, #tpu.memory_space<vmem>>, vector<1x16x16xf32>
    %146 = vector.shape_cast %145 : vector<1x16x16xf32> to vector<16x16xf32>
    %cst_179 = arith.constant dense<0.000000e+00> : vector<32x16xf32>
    %147 = tpu.matmul %144, %146, %cst_179 {dimension_numbers = #tpu.dot_dimension_numbers<[1], [0], [0], [1], [0, 0, 1, 1], [], []>} : vector<32x16xf32>, vector<16x16xf32>, vector<32x16xf32> -> vector<32x16xf32>
    %148 = arith.addf %142, %147 : vector<32x16xf32>
    %c0_180 = arith.constant 0 : index
    %c0_181 = arith.constant 0 : index
    %149 = vector.load %arg4[%c0_180, %c0_181] : memref<1x16xf32, #tpu.memory_space<vmem>>, vector<1x16xf32>
    %150 = vector.broadcast %149 : vector<1x16xf32> to vector<32x16xf32>
    %151 = arith.addf %148, %150 : vector<32x16xf32>
    %cst_182 = arith.constant dense<0.000000e+00> : vector<16xf32>
    %152 = vector.multi_reduction <add>, %151, %cst_182 [0] : vector<32x16xf32> to vector<16xf32>
    %153 = vector.shape_cast %152 : vector<16xf32> to vector<1x16xf32>
    %154 = arith.mulf %151, %151 : vector<32x16xf32>
    %cst_183 = arith.constant dense<0.000000e+00> : vector<16xf32>
    %155 = vector.multi_reduction <add>, %154, %cst_183 [0] : vector<32x16xf32> to vector<16xf32>
    %156 = vector.shape_cast %155 : vector<16xf32> to vector<1x16xf32>
    %cst_184 = arith.constant 3.125000e-02 : f32
    %157 = vector.broadcast %cst_184 : f32 to vector<1x16xf32>
    %158 = arith.mulf %153, %157 : vector<1x16xf32>
    %cst_185 = arith.constant 3.125000e-02 : f32
    %159 = vector.broadcast %cst_185 : f32 to vector<1x16xf32>
    %160 = arith.mulf %156, %159 : vector<1x16xf32>
    %161 = arith.mulf %158, %158 : vector<1x16xf32>
    %162 = arith.subf %160, %161 : vector<1x16xf32>
    %163 = vector.broadcast %158 : vector<1x16xf32> to vector<32x16xf32>
    %164 = arith.subf %151, %163 : vector<32x16xf32>
    %cst_186 = arith.constant 9.99999974E-6 : f32
    %165 = vector.broadcast %cst_186 : f32 to vector<1x16xf32>
    %166 = arith.addf %162, %165 : vector<1x16xf32>
    %167 = math.rsqrt %166 : vector<1x16xf32>
    %168 = vector.broadcast %167 : vector<1x16xf32> to vector<32x16xf32>
    %169 = arith.mulf %164, %168 : vector<32x16xf32>
    %c0_187 = arith.constant 0 : index
    %c0_188 = arith.constant 0 : index
    %170 = vector.load %arg5[%c0_187, %c0_188] : memref<1x16xf32, #tpu.memory_space<vmem>>, vector<1x16xf32>
    %171 = vector.broadcast %170 : vector<1x16xf32> to vector<32x16xf32>
    %172 = arith.mulf %169, %171 : vector<32x16xf32>
    %c0_189 = arith.constant 0 : index
    %c0_190 = arith.constant 0 : index
    %173 = vector.load %arg6[%c0_189, %c0_190] : memref<1x16xf32, #tpu.memory_space<vmem>>, vector<1x16xf32>
    %174 = vector.broadcast %173 : vector<1x16xf32> to vector<32x16xf32>
    %175 = arith.addf %172, %174 : vector<32x16xf32>
    %cst_191 = arith.constant 0.000000e+00 : f32
    %176 = vector.broadcast %cst_191 : f32 to vector<32x16xf32>
    %177 = arith.cmpf oge, %175, %176 : vector<32x16xf32>
    %cst_192 = arith.constant 2.000000e-01 : f32
    %178 = vector.broadcast %cst_192 : f32 to vector<32x16xf32>
    %179 = arith.mulf %178, %175 : vector<32x16xf32>
    %180 = arith.select %177, %175, %179 : vector<32x16xi1>, vector<32x16xf32>
    %181 = vector.shape_cast %180 : vector<32x16xf32> to vector<4x2x2x2x16xf32>
    %182 = vector.extract_strided_slice %181 {offsets = [0, 0, 0, 0, 0], sizes = [4, 1, 2, 1, 16], strides = [1, 1, 1, 1, 1]} : vector<4x2x2x2x16xf32> to vector<4x1x2x1x16xf32>
    %183 = vector.shape_cast %182 : vector<4x1x2x1x16xf32> to vector<4x2x16xf32>
    %184 = vector.shape_cast %183 : vector<4x2x16xf32> to vector<2x2x2x16xf32>
    %c2_193 = arith.constant 2 : index
    %c0_194 = arith.constant 0 : index
    %c0_195 = arith.constant 0 : index
    %c16 = arith.constant 16 : index
    %185 = vector.load %arg16[%c2_193, %c0_194, %c0_195, %c16] : memref<4x3x3x32xf32, #tpu.memory_space<vmem>>, vector<2x2x2x16xf32>
    tpu.vector_store %arg16[%c2_193, %c0_194, %c0_195, %c16], %184 {strides = array<i32>} : memref<4x3x3x32xf32, #tpu.memory_space<vmem>>, vector<2x2x2x16xf32>,
    %186 = vector.extract_strided_slice %181 {offsets = [0, 0, 0, 1, 0], sizes = [4, 1, 2, 1, 16], strides = [1, 1, 1, 1, 1]} : vector<4x2x2x2x16xf32> to vector<4x1x2x1x16xf32>
    %187 = vector.shape_cast %186 : vector<4x1x2x1x16xf32> to vector<4x2x16xf32>
    %188 = vector.shape_cast %187 : vector<4x2x16xf32> to vector<2x2x2x16xf32>
    %c2_196 = arith.constant 2 : index
    %c0_197 = arith.constant 0 : index
    %c1_198 = arith.constant 1 : index
    %c0_199 = arith.constant 0 : index
    %189 = vector.load %arg16[%c2_196, %c0_197, %c1_198, %c0_199] : memref<4x3x3x32xf32, #tpu.memory_space<vmem>>, vector<2x2x2x16xf32>
    tpu.vector_store %arg16[%c2_196, %c0_197, %c1_198, %c0_199], %188 {strides = array<i32>} : memref<4x3x3x32xf32, #tpu.memory_space<vmem>>, vector<2x2x2x16xf32>,
    %190 = vector.extract_strided_slice %181 {offsets = [0, 1, 0, 0, 0], sizes = [4, 1, 2, 1, 16], strides = [1, 1, 1, 1, 1]} : vector<4x2x2x2x16xf32> to vector<4x1x2x1x16xf32>
    %191 = vector.shape_cast %190 : vector<4x1x2x1x16xf32> to vector<4x2x16xf32>
    %192 = vector.shape_cast %191 : vector<4x2x16xf32> to vector<2x2x2x16xf32>
    %c0_200 = arith.constant 0 : index
    %c1_201 = arith.constant 1 : index
    %c0_202 = arith.constant 0 : index
    %c16_203 = arith.constant 16 : index
    %193 = vector.load %arg16[%c0_200, %c1_201, %c0_202, %c16_203] : memref<4x3x3x32xf32, #tpu.memory_space<vmem>>, vector<2x2x2x16xf32>
    tpu.vector_store %arg16[%c0_200, %c1_201, %c0_202, %c16_203], %192 {strides = array<i32>} : memref<4x3x3x32xf32, #tpu.memory_space<vmem>>, vector<2x2x2x16xf32>,
    %194 = vector.extract_strided_slice %181 {offsets = [0, 1, 0, 1, 0], sizes = [4, 1, 2, 1, 16], strides = [1, 1, 1, 1, 1]} : vector<4x2x2x2x16xf32> to vector<4x1x2x1x16xf32>
    %195 = vector.shape_cast %194 : vector<4x1x2x1x16xf32> to vector<4x2x16xf32>
    %196 = vector.shape_cast %195 : vector<4x2x16xf32> to vector<2x2x2x16xf32>
    %c0_204 = arith.constant 0 : index
    %c1_205 = arith.constant 1 : index
    %c1_206 = arith.constant 1 : index
    %c0_207 = arith.constant 0 : index
    %197 = vector.load %arg16[%c0_204, %c1_205, %c1_206, %c0_207] : memref<4x3x3x32xf32, #tpu.memory_space<vmem>>, vector<2x2x2x16xf32>
    tpu.vector_store %arg16[%c0_204, %c1_205, %c1_206, %c0_207], %196 {strides = array<i32>} : memref<4x3x3x32xf32, #tpu.memory_space<vmem>>, vector<2x2x2x16xf32>,
    %cst_208 = arith.constant 0.000000e+00 : f32
    %198 = vector.broadcast %cst_208 : f32 to vector<8x32xf32>
    %c0_209 = arith.constant 0 : index
    %c0_210 = arith.constant 0 : index
    %c0_211 = arith.constant 0 : index
    %c0_212 = arith.constant 0 : index
    %199 = vector.load %arg16[%c0_209, %c0_210, %c0_211, %c0_212] : memref<4x3x3x32xf32, #tpu.memory_space<vmem>>, vector<2x2x2x32xf32>
    %200 = vector.shape_cast %199 : vector<2x2x2x32xf32> to vector<8x32xf32>
    %c0_213 = arith.constant 0 : index
    %c0_214 = arith.constant 0 : index
    %c0_215 = arith.constant 0 : index
    %201 = vector.load %arg7[%c0_213, %c0_214, %c0_215] : memref<8x32x32xf32, #tpu.memory_space<vmem>>, vector<1x32x32xf32>
    %202 = vector.shape_cast %201 : vector<1x32x32xf32> to vector<32x32xf32>
    %cst_216 = arith.constant dense<0.000000e+00> : vector<8x32xf32>
    %203 = tpu.matmul %200, %202, %cst_216 {dimension_numbers = #tpu.dot_dimension_numbers<[1], [0], [0], [1], [0, 0, 1, 1], [], []>} : vector<8x32xf32>, vector<32x32xf32>, vector<8x32xf32> -> vector<8x32xf32>
    %204 = arith.addf %198, %203 : vector<8x32xf32>
    %c0_217 = arith.constant 0 : index
    %c0_218 = arith.constant 0 : index
    %c1_219 = arith.constant 1 : index
    %c0_220 = arith.constant 0 : index
    %205 = vector.load %arg16[%c0_217, %c0_218, %c1_219, %c0_220] : memref<4x3x3x32xf32, #tpu.memory_space<vmem>>, vector<2x2x2x32xf32>
    %206 = vector.shape_cast %205 : vector<2x2x2x32xf32> to vector<8x32xf32>
    %c1_221 = arith.constant 1 : index
    %c0_222 = arith.constant 0 : index
    %c0_223 = arith.constant 0 : index
    %207 = vector.load %arg7[%c1_221, %c0_222, %c0_223] : memref<8x32x32xf32, #tpu.memory_space<vmem>>, vector<1x32x32xf32>
    %208 = vector.shape_cast %207 : vector<1x32x32xf32> to vector<32x32xf32>
    %cst_224 = arith.constant dense<0.000000e+00> : vector<8x32xf32>
    %209 = tpu.matmul %206, %208, %cst_224 {dimension_numbers = #tpu.dot_dimension_numbers<[1], [0], [0], [1], [0, 0, 1, 1], [], []>} : vector<8x32xf32>, vector<32x32xf32>, vector<8x32xf32> -> vector<8x32xf32>
    %210 = arith.addf %204, %209 : vector<8x32xf32>
    %c2_225 = arith.constant 2 : index
    %c0_226 = arith.constant 0 : index
    %c0_227 = arith.constant 0 : index
    %c0_228 = arith.constant 0 : index
    %211 = vector.load %arg16[%c2_225, %c0_226, %c0_227, %c0_228] : memref<4x3x3x32xf32, #tpu.memory_space<vmem>>, vector<2x2x2x32xf32>
    %212 = vector.shape_cast %211 : vector<2x2x2x32xf32> to vector<8x32xf32>
    %c2_229 = arith.constant 2 : index
    %c0_230 = arith.constant 0 : index
    %c0_231 = arith.constant 0 : index
    %213 = vector.load %arg7[%c2_229, %c0_230, %c0_231] : memref<8x32x32xf32, #tpu.memory_space<vmem>>, vector<1x32x32xf32>
    %214 = vector.shape_cast %213 : vector<1x32x32xf32> to vector<32x32xf32>
    %cst_232 = arith.constant dense<0.000000e+00> : vector<8x32xf32>
    %215 = tpu.matmul %212, %214, %cst_232 {dimension_numbers = #tpu.dot_dimension_numbers<[1], [0], [0], [1], [0, 0, 1, 1], [], []>} : vector<8x32xf32>, vector<32x32xf32>, vector<8x32xf32> -> vector<8x32xf32>
    %216 = arith.addf %210, %215 : vector<8x32xf32>
    %c2_233 = arith.constant 2 : index
    %c0_234 = arith.constant 0 : index
    %c1_235 = arith.constant 1 : index
    %c0_236 = arith.constant 0 : index
    %217 = vector.load %arg16[%c2_233, %c0_234, %c1_235, %c0_236] : memref<4x3x3x32xf32, #tpu.memory_space<vmem>>, vector<2x2x2x32xf32>
    %218 = vector.shape_cast %217 : vector<2x2x2x32xf32> to vector<8x32xf32>
    %c3_237 = arith.constant 3 : index
    %c0_238 = arith.constant 0 : index
    %c0_239 = arith.constant 0 : index
    %219 = vector.load %arg7[%c3_237, %c0_238, %c0_239] : memref<8x32x32xf32, #tpu.memory_space<vmem>>, vector<1x32x32xf32>
    %220 = vector.shape_cast %219 : vector<1x32x32xf32> to vector<32x32xf32>
    %cst_240 = arith.constant dense<0.000000e+00> : vector<8x32xf32>
    %221 = tpu.matmul %218, %220, %cst_240 {dimension_numbers = #tpu.dot_dimension_numbers<[1], [0], [0], [1], [0, 0, 1, 1], [], []>} : vector<8x32xf32>, vector<32x32xf32>, vector<8x32xf32> -> vector<8x32xf32>
    %222 = arith.addf %216, %221 : vector<8x32xf32>
    %c0_241 = arith.constant 0 : index
    %c1_242 = arith.constant 1 : index
    %c0_243 = arith.constant 0 : index
    %c0_244 = arith.constant 0 : index
    %223 = vector.load %arg16[%c0_241, %c1_242, %c0_243, %c0_244] : memref<4x3x3x32xf32, #tpu.memory_space<vmem>>, vector<2x2x2x32xf32>
    %224 = vector.shape_cast %223 : vector<2x2x2x32xf32> to vector<8x32xf32>
    %c4_245 = arith.constant 4 : index
    %c0_246 = arith.constant 0 : index
    %c0_247 = arith.constant 0 : index
    %225 = vector.load %arg7[%c4_245, %c0_246, %c0_247] : memref<8x32x32xf32, #tpu.memory_space<vmem>>, vector<1x32x32xf32>
    %226 = vector.shape_cast %225 : vector<1x32x32xf32> to vector<32x32xf32>
    %cst_248 = arith.constant dense<0.000000e+00> : vector<8x32xf32>
    %227 = tpu.matmul %224, %226, %cst_248 {dimension_numbers = #tpu.dot_dimension_numbers<[1], [0], [0], [1], [0, 0, 1, 1], [], []>} : vector<8x32xf32>, vector<32x32xf32>, vector<8x32xf32> -> vector<8x32xf32>
    %228 = arith.addf %222, %227 : vector<8x32xf32>
    %c0_249 = arith.constant 0 : index
    %c1_250 = arith.constant 1 : index
    %c1_251 = arith.constant 1 : index
    %c0_252 = arith.constant 0 : index
    %229 = vector.load %arg16[%c0_249, %c1_250, %c1_251, %c0_252] : memref<4x3x3x32xf32, #tpu.memory_space<vmem>>, vector<2x2x2x32xf32>
    %230 = vector.shape_cast %229 : vector<2x2x2x32xf32> to vector<8x32xf32>
    %c5_253 = arith.constant 5 : index
    %c0_254 = arith.constant 0 : index
    %c0_255 = arith.constant 0 : index
    %231 = vector.load %arg7[%c5_253, %c0_254, %c0_255] : memref<8x32x32xf32, #tpu.memory_space<vmem>>, vector<1x32x32xf32>
    %232 = vector.shape_cast %231 : vector<1x32x32xf32> to vector<32x32xf32>
    %cst_256 = arith.constant dense<0.000000e+00> : vector<8x32xf32>
    %233 = tpu.matmul %230, %232, %cst_256 {dimension_numbers = #tpu.dot_dimension_numbers<[1], [0], [0], [1], [0, 0, 1, 1], [], []>} : vector<8x32xf32>, vector<32x32xf32>, vector<8x32xf32> -> vector<8x32xf32>
    %234 = arith.addf %228, %233 : vector<8x32xf32>
    %c2_257 = arith.constant 2 : index
    %c1_258 = arith.constant 1 : index
    %c0_259 = arith.constant 0 : index
    %c0_260 = arith.constant 0 : index
    %235 = vector.load %arg16[%c2_257, %c1_258, %c0_259, %c0_260] : memref<4x3x3x32xf32, #tpu.memory_space<vmem>>, vector<2x2x2x32xf32>
    %236 = vector.shape_cast %235 : vector<2x2x2x32xf32> to vector<8x32xf32>
    %c6_261 = arith.constant 6 : index
    %c0_262 = arith.constant 0 : index
    %c0_263 = arith.constant 0 : index
    %237 = vector.load %arg7[%c6_261, %c0_262, %c0_263] : memref<8x32x32xf32, #tpu.memory_space<vmem>>, vector<1x32x32xf32>
    %238 = vector.shape_cast %237 : vector<1x32x32xf32> to vector<32x32xf32>
    %cst_264 = arith.constant dense<0.000000e+00> : vector<8x32xf32>
    %239 = tpu.matmul %236, %238, %cst_264 {dimension_numbers = #tpu.dot_dimension_numbers<[1], [0], [0], [1], [0, 0, 1, 1], [], []>} : vector<8x32xf32>, vector<32x32xf32>, vector<8x32xf32> -> vector<8x32xf32>
    %240 = arith.addf %234, %239 : vector<8x32xf32>
    %c2_265 = arith.constant 2 : index
    %c1_266 = arith.constant 1 : index
    %c1_267 = arith.constant 1 : index
    %c0_268 = arith.constant 0 : index
    %241 = vector.load %arg16[%c2_265, %c1_266, %c1_267, %c0_268] : memref<4x3x3x32xf32, #tpu.memory_space<vmem>>, vector<2x2x2x32xf32>
    %242 = vector.shape_cast %241 : vector<2x2x2x32xf32> to vector<8x32xf32>
    %c7_269 = arith.constant 7 : index
    %c0_270 = arith.constant 0 : index
    %c0_271 = arith.constant 0 : index
    %243 = vector.load %arg7[%c7_269, %c0_270, %c0_271] : memref<8x32x32xf32, #tpu.memory_space<vmem>>, vector<1x32x32xf32>
    %244 = vector.shape_cast %243 : vector<1x32x32xf32> to vector<32x32xf32>
    %cst_272 = arith.constant dense<0.000000e+00> : vector<8x32xf32>
    %245 = tpu.matmul %242, %244, %cst_272 {dimension_numbers = #tpu.dot_dimension_numbers<[1], [0], [0], [1], [0, 0, 1, 1], [], []>} : vector<8x32xf32>, vector<32x32xf32>, vector<8x32xf32> -> vector<8x32xf32>
    %246 = arith.addf %240, %245 : vector<8x32xf32>
    %c0_273 = arith.constant 0 : index
    %c0_274 = arith.constant 0 : index
    %247 = vector.load %arg8[%c0_273, %c0_274] : memref<1x32xf32, #tpu.memory_space<vmem>>, vector<1x32xf32>
    %248 = vector.broadcast %247 : vector<1x32xf32> to vector<8x32xf32>
    %249 = arith.addf %246, %248 : vector<8x32xf32>
    %cst_275 = arith.constant dense<0.000000e+00> : vector<32xf32>
    %250 = vector.multi_reduction <add>, %249, %cst_275 [0] : vector<8x32xf32> to vector<32xf32>
    %251 = vector.shape_cast %250 : vector<32xf32> to vector<1x32xf32>
    %252 = arith.mulf %249, %249 : vector<8x32xf32>
    %cst_276 = arith.constant dense<0.000000e+00> : vector<32xf32>
    %253 = vector.multi_reduction <add>, %252, %cst_276 [0] : vector<8x32xf32> to vector<32xf32>
    %254 = vector.shape_cast %253 : vector<32xf32> to vector<1x32xf32>
    %cst_277 = arith.constant 1.250000e-01 : f32
    %255 = vector.broadcast %cst_277 : f32 to vector<1x32xf32>
    %256 = arith.mulf %251, %255 : vector<1x32xf32>
    %cst_278 = arith.constant 1.250000e-01 : f32
    %257 = vector.broadcast %cst_278 : f32 to vector<1x32xf32>
    %258 = arith.mulf %254, %257 : vector<1x32xf32>
    %259 = arith.mulf %256, %256 : vector<1x32xf32>
    %260 = arith.subf %258, %259 : vector<1x32xf32>
    %261 = vector.broadcast %256 : vector<1x32xf32> to vector<8x32xf32>
    %262 = arith.subf %249, %261 : vector<8x32xf32>
    %cst_279 = arith.constant 9.99999974E-6 : f32
    %263 = vector.broadcast %cst_279 : f32 to vector<1x32xf32>
    %264 = arith.addf %260, %263 : vector<1x32xf32>
    %265 = math.rsqrt %264 : vector<1x32xf32>
    %266 = vector.broadcast %265 : vector<1x32xf32> to vector<8x32xf32>
    %267 = arith.mulf %262, %266 : vector<8x32xf32>
    %c0_280 = arith.constant 0 : index
    %c0_281 = arith.constant 0 : index
    %268 = vector.load %arg9[%c0_280, %c0_281] : memref<1x32xf32, #tpu.memory_space<vmem>>, vector<1x32xf32>
    %269 = vector.broadcast %268 : vector<1x32xf32> to vector<8x32xf32>
    %270 = arith.mulf %267, %269 : vector<8x32xf32>
    %c0_282 = arith.constant 0 : index
    %c0_283 = arith.constant 0 : index
    %271 = vector.load %arg10[%c0_282, %c0_283] : memref<1x32xf32, #tpu.memory_space<vmem>>, vector<1x32xf32>
    %272 = vector.broadcast %271 : vector<1x32xf32> to vector<8x32xf32>
    %273 = arith.addf %270, %272 : vector<8x32xf32>
    %cst_284 = arith.constant 0.000000e+00 : f32
    %274 = vector.broadcast %cst_284 : f32 to vector<8x32xf32>
    %275 = arith.cmpf oge, %273, %274 : vector<8x32xf32>
    %cst_285 = arith.constant 2.000000e-01 : f32
    %276 = vector.broadcast %cst_285 : f32 to vector<8x32xf32>
    %277 = arith.mulf %276, %273 : vector<8x32xf32>
    %278 = arith.select %275, %273, %277 : vector<8x32xi1>, vector<8x32xf32>
    %279 = vector.shape_cast %278 : vector<8x32xf32> to vector<2x2x1x2x32xf32>
    %280 = vector.extract_strided_slice %279 {offsets = [0, 0, 0, 0, 0], sizes = [2, 1, 1, 1, 32], strides = [1, 1, 1, 1, 1]} : vector<2x2x1x2x32xf32> to vector<2x1x1x1x32xf32>
    %281 = vector.shape_cast %280 : vector<2x1x1x1x32xf32> to vector<2x1x32xf32>
    %282 = vector.shape_cast %281 : vector<2x1x32xf32> to vector<2x1x1x32xf32>
    %c2_286 = arith.constant 2 : index
    %c0_287 = arith.constant 0 : index
    %c0_288 = arith.constant 0 : index
    %c32 = arith.constant 32 : index
    %283 = vector.load %arg17[%c2_286, %c0_287, %c0_288, %c32] : memref<4x2x2x64xf32, #tpu.memory_space<vmem>>, vector<2x1x1x32xf32>
    tpu.vector_store %arg17[%c2_286, %c0_287, %c0_288, %c32], %282 {strides = array<i32>} : memref<4x2x2x64xf32, #tpu.memory_space<vmem>>, vector<2x1x1x32xf32>,
    %284 = vector.extract_strided_slice %279 {offsets = [0, 0, 0, 1, 0], sizes = [2, 1, 1, 1, 32], strides = [1, 1, 1, 1, 1]} : vector<2x2x1x2x32xf32> to vector<2x1x1x1x32xf32>
    %285 = vector.shape_cast %284 : vector<2x1x1x1x32xf32> to vector<2x1x32xf32>
    %286 = vector.shape_cast %285 : vector<2x1x32xf32> to vector<2x1x1x32xf32>
    %c2_289 = arith.constant 2 : index
    %c0_290 = arith.constant 0 : index
    %c1_291 = arith.constant 1 : index
    %c0_292 = arith.constant 0 : index
    %287 = vector.load %arg17[%c2_289, %c0_290, %c1_291, %c0_292] : memref<4x2x2x64xf32, #tpu.memory_space<vmem>>, vector<2x1x1x32xf32>
    tpu.vector_store %arg17[%c2_289, %c0_290, %c1_291, %c0_292], %286 {strides = array<i32>} : memref<4x2x2x64xf32, #tpu.memory_space<vmem>>, vector<2x1x1x32xf32>,
    %288 = vector.extract_strided_slice %279 {offsets = [0, 1, 0, 0, 0], sizes = [2, 1, 1, 1, 32], strides = [1, 1, 1, 1, 1]} : vector<2x2x1x2x32xf32> to vector<2x1x1x1x32xf32>
    %289 = vector.shape_cast %288 : vector<2x1x1x1x32xf32> to vector<2x1x32xf32>
    %290 = vector.shape_cast %289 : vector<2x1x32xf32> to vector<2x1x1x32xf32>
    %c0_293 = arith.constant 0 : index
    %c1_294 = arith.constant 1 : index
    %c0_295 = arith.constant 0 : index
    %c32_296 = arith.constant 32 : index
    %291 = vector.load %arg17[%c0_293, %c1_294, %c0_295, %c32_296] : memref<4x2x2x64xf32, #tpu.memory_space<vmem>>, vector<2x1x1x32xf32>
    tpu.vector_store %arg17[%c0_293, %c1_294, %c0_295, %c32_296], %290 {strides = array<i32>} : memref<4x2x2x64xf32, #tpu.memory_space<vmem>>, vector<2x1x1x32xf32>,
    %292 = vector.extract_strided_slice %279 {offsets = [0, 1, 0, 1, 0], sizes = [2, 1, 1, 1, 32], strides = [1, 1, 1, 1, 1]} : vector<2x2x1x2x32xf32> to vector<2x1x1x1x32xf32>
    %293 = vector.shape_cast %292 : vector<2x1x1x1x32xf32> to vector<2x1x32xf32>
    %294 = vector.shape_cast %293 : vector<2x1x32xf32> to vector<2x1x1x32xf32>
    %c0_297 = arith.constant 0 : index
    %c1_298 = arith.constant 1 : index
    %c1_299 = arith.constant 1 : index
    %c0_300 = arith.constant 0 : index
    %295 = vector.load %arg17[%c0_297, %c1_298, %c1_299, %c0_300] : memref<4x2x2x64xf32, #tpu.memory_space<vmem>>, vector<2x1x1x32xf32>
    tpu.vector_store %arg17[%c0_297, %c1_298, %c1_299, %c0_300], %294 {strides = array<i32>} : memref<4x2x2x64xf32, #tpu.memory_space<vmem>>, vector<2x1x1x32xf32>,
    %cst_301 = arith.constant 0.000000e+00 : f32
    %296 = vector.broadcast %cst_301 : f32 to vector<2x1xf32>
    %c0_302 = arith.constant 0 : index
    %c0_303 = arith.constant 0 : index
    %c0_304 = arith.constant 0 : index
    %c0_305 = arith.constant 0 : index
    %297 = vector.load %arg17[%c0_302, %c0_303, %c0_304, %c0_305] : memref<4x2x2x64xf32, #tpu.memory_space<vmem>>, vector<2x1x1x64xf32>
    %298 = vector.shape_cast %297 : vector<2x1x1x64xf32> to vector<2x64xf32>
    %c0_306 = arith.constant 0 : index
    %c0_307 = arith.constant 0 : index
    %c0_308 = arith.constant 0 : index
    %299 = vector.load %arg11[%c0_306, %c0_307, %c0_308] : memref<8x1x64xf32, #tpu.memory_space<vmem>>, vector<1x1x64xf32>
    %300 = vector.shape_cast %299 : vector<1x1x64xf32> to vector<1x64xf32>
    %301 = vector.broadcast %300 : vector<1x64xf32> to vector<2x64xf32>
    %302 = arith.mulf %298, %301 : vector<2x64xf32>
    %cst_309 = arith.constant dense<0.000000e+00> : vector<2xf32>
    %303 = vector.multi_reduction <add>, %302, %cst_309 [1] : vector<2x64xf32> to vector<2xf32>
    %304 = vector.shape_cast %303 : vector<2xf32> to vector<2x1xf32>
    %305 = arith.addf %296, %304 : vector<2x1xf32>
    %c0_310 = arith.constant 0 : index
    %c0_311 = arith.constant 0 : index
    %c1_312 = arith.constant 1 : index
    %c0_313 = arith.constant 0 : index
    %306 = vector.load %arg17[%c0_310, %c0_311, %c1_312, %c0_313] : memref<4x2x2x64xf32, #tpu.memory_space<vmem>>, vector<2x1x1x64xf32>
    %307 = vector.shape_cast %306 : vector<2x1x1x64xf32> to vector<2x64xf32>
    %c1_314 = arith.constant 1 : index
    %c0_315 = arith.constant 0 : index
    %c0_316 = arith.constant 0 : index
    %308 = vector.load %arg11[%c1_314, %c0_315, %c0_316] : memref<8x1x64xf32, #tpu.memory_space<vmem>>, vector<1x1x64xf32>
    %309 = vector.shape_cast %308 : vector<1x1x64xf32> to vector<1x64xf32>
    %310 = vector.broadcast %309 : vector<1x64xf32> to vector<2x64xf32>
    %311 = arith.mulf %307, %310 : vector<2x64xf32>
    %cst_317 = arith.constant dense<0.000000e+00> : vector<2xf32>
    %312 = vector.multi_reduction <add>, %311, %cst_317 [1] : vector<2x64xf32> to vector<2xf32>
    %313 = vector.shape_cast %312 : vector<2xf32> to vector<2x1xf32>
    %314 = arith.addf %305, %313 : vector<2x1xf32>
    %c2_318 = arith.constant 2 : index
    %c0_319 = arith.constant 0 : index
    %c0_320 = arith.constant 0 : index
    %c0_321 = arith.constant 0 : index
    %315 = vector.load %arg17[%c2_318, %c0_319, %c0_320, %c0_321] : memref<4x2x2x64xf32, #tpu.memory_space<vmem>>, vector<2x1x1x64xf32>
    %316 = vector.shape_cast %315 : vector<2x1x1x64xf32> to vector<2x64xf32>
    %c2_322 = arith.constant 2 : index
    %c0_323 = arith.constant 0 : index
    %c0_324 = arith.constant 0 : index
    %317 = vector.load %arg11[%c2_322, %c0_323, %c0_324] : memref<8x1x64xf32, #tpu.memory_space<vmem>>, vector<1x1x64xf32>
    %318 = vector.shape_cast %317 : vector<1x1x64xf32> to vector<1x64xf32>
    %319 = vector.broadcast %318 : vector<1x64xf32> to vector<2x64xf32>
    %320 = arith.mulf %316, %319 : vector<2x64xf32>
    %cst_325 = arith.constant dense<0.000000e+00> : vector<2xf32>
    %321 = vector.multi_reduction <add>, %320, %cst_325 [1] : vector<2x64xf32> to vector<2xf32>
    %322 = vector.shape_cast %321 : vector<2xf32> to vector<2x1xf32>
    %323 = arith.addf %314, %322 : vector<2x1xf32>
    %c2_326 = arith.constant 2 : index
    %c0_327 = arith.constant 0 : index
    %c1_328 = arith.constant 1 : index
    %c0_329 = arith.constant 0 : index
    %324 = vector.load %arg17[%c2_326, %c0_327, %c1_328, %c0_329] : memref<4x2x2x64xf32, #tpu.memory_space<vmem>>, vector<2x1x1x64xf32>
    %325 = vector.shape_cast %324 : vector<2x1x1x64xf32> to vector<2x64xf32>
    %c3_330 = arith.constant 3 : index
    %c0_331 = arith.constant 0 : index
    %c0_332 = arith.constant 0 : index
    %326 = vector.load %arg11[%c3_330, %c0_331, %c0_332] : memref<8x1x64xf32, #tpu.memory_space<vmem>>, vector<1x1x64xf32>
    %327 = vector.shape_cast %326 : vector<1x1x64xf32> to vector<1x64xf32>
    %328 = vector.broadcast %327 : vector<1x64xf32> to vector<2x64xf32>
    %329 = arith.mulf %325, %328 : vector<2x64xf32>
    %cst_333 = arith.constant dense<0.000000e+00> : vector<2xf32>
    %330 = vector.multi_reduction <add>, %329, %cst_333 [1] : vector<2x64xf32> to vector<2xf32>
    %331 = vector.shape_cast %330 : vector<2xf32> to vector<2x1xf32>
    %332 = arith.addf %323, %331 : vector<2x1xf32>
    %c0_334 = arith.constant 0 : index
    %c1_335 = arith.constant 1 : index
    %c0_336 = arith.constant 0 : index
    %c0_337 = arith.constant 0 : index
    %333 = vector.load %arg17[%c0_334, %c1_335, %c0_336, %c0_337] : memref<4x2x2x64xf32, #tpu.memory_space<vmem>>, vector<2x1x1x64xf32>
    %334 = vector.shape_cast %333 : vector<2x1x1x64xf32> to vector<2x64xf32>
    %c4_338 = arith.constant 4 : index
    %c0_339 = arith.constant 0 : index
    %c0_340 = arith.constant 0 : index
    %335 = vector.load %arg11[%c4_338, %c0_339, %c0_340] : memref<8x1x64xf32, #tpu.memory_space<vmem>>, vector<1x1x64xf32>
    %336 = vector.shape_cast %335 : vector<1x1x64xf32> to vector<1x64xf32>
    %337 = vector.broadcast %336 : vector<1x64xf32> to vector<2x64xf32>
    %338 = arith.mulf %334, %337 : vector<2x64xf32>
    %cst_341 = arith.constant dense<0.000000e+00> : vector<2xf32>
    %339 = vector.multi_reduction <add>, %338, %cst_341 [1] : vector<2x64xf32> to vector<2xf32>
    %340 = vector.shape_cast %339 : vector<2xf32> to vector<2x1xf32>
    %341 = arith.addf %332, %340 : vector<2x1xf32>
    %c0_342 = arith.constant 0 : index
    %c1_343 = arith.constant 1 : index
    %c1_344 = arith.constant 1 : index
    %c0_345 = arith.constant 0 : index
    %342 = vector.load %arg17[%c0_342, %c1_343, %c1_344, %c0_345] : memref<4x2x2x64xf32, #tpu.memory_space<vmem>>, vector<2x1x1x64xf32>
    %343 = vector.shape_cast %342 : vector<2x1x1x64xf32> to vector<2x64xf32>
    %c5_346 = arith.constant 5 : index
    %c0_347 = arith.constant 0 : index
    %c0_348 = arith.constant 0 : index
    %344 = vector.load %arg11[%c5_346, %c0_347, %c0_348] : memref<8x1x64xf32, #tpu.memory_space<vmem>>, vector<1x1x64xf32>
    %345 = vector.shape_cast %344 : vector<1x1x64xf32> to vector<1x64xf32>
    %346 = vector.broadcast %345 : vector<1x64xf32> to vector<2x64xf32>
    %347 = arith.mulf %343, %346 : vector<2x64xf32>
    %cst_349 = arith.constant dense<0.000000e+00> : vector<2xf32>
    %348 = vector.multi_reduction <add>, %347, %cst_349 [1] : vector<2x64xf32> to vector<2xf32>
    %349 = vector.shape_cast %348 : vector<2xf32> to vector<2x1xf32>
    %350 = arith.addf %341, %349 : vector<2x1xf32>
    %c2_350 = arith.constant 2 : index
    %c1_351 = arith.constant 1 : index
    %c0_352 = arith.constant 0 : index
    %c0_353 = arith.constant 0 : index
    %351 = vector.load %arg17[%c2_350, %c1_351, %c0_352, %c0_353] : memref<4x2x2x64xf32, #tpu.memory_space<vmem>>, vector<2x1x1x64xf32>
    %352 = vector.shape_cast %351 : vector<2x1x1x64xf32> to vector<2x64xf32>
    %c6_354 = arith.constant 6 : index
    %c0_355 = arith.constant 0 : index
    %c0_356 = arith.constant 0 : index
    %353 = vector.load %arg11[%c6_354, %c0_355, %c0_356] : memref<8x1x64xf32, #tpu.memory_space<vmem>>, vector<1x1x64xf32>
    %354 = vector.shape_cast %353 : vector<1x1x64xf32> to vector<1x64xf32>
    %355 = vector.broadcast %354 : vector<1x64xf32> to vector<2x64xf32>
    %356 = arith.mulf %352, %355 : vector<2x64xf32>
    %cst_357 = arith.constant dense<0.000000e+00> : vector<2xf32>
    %357 = vector.multi_reduction <add>, %356, %cst_357 [1] : vector<2x64xf32> to vector<2xf32>
    %358 = vector.shape_cast %357 : vector<2xf32> to vector<2x1xf32>
    %359 = arith.addf %350, %358 : vector<2x1xf32>
    %c2_358 = arith.constant 2 : index
    %c1_359 = arith.constant 1 : index
    %c1_360 = arith.constant 1 : index
    %c0_361 = arith.constant 0 : index
    %360 = vector.load %arg17[%c2_358, %c1_359, %c1_360, %c0_361] : memref<4x2x2x64xf32, #tpu.memory_space<vmem>>, vector<2x1x1x64xf32>
    %361 = vector.shape_cast %360 : vector<2x1x1x64xf32> to vector<2x64xf32>
    %c7_362 = arith.constant 7 : index
    %c0_363 = arith.constant 0 : index
    %c0_364 = arith.constant 0 : index
    %362 = vector.load %arg11[%c7_362, %c0_363, %c0_364] : memref<8x1x64xf32, #tpu.memory_space<vmem>>, vector<1x1x64xf32>
    %363 = vector.shape_cast %362 : vector<1x1x64xf32> to vector<1x64xf32>
    %364 = vector.broadcast %363 : vector<1x64xf32> to vector<2x64xf32>
    %365 = arith.mulf %361, %364 : vector<2x64xf32>
    %cst_365 = arith.constant dense<0.000000e+00> : vector<2xf32>
    %366 = vector.multi_reduction <add>, %365, %cst_365 [1] : vector<2x64xf32> to vector<2xf32>
    %367 = vector.shape_cast %366 : vector<2xf32> to vector<2x1xf32>
    %368 = arith.addf %359, %367 : vector<2x1xf32>
    %c0_366 = arith.constant 0 : index
    %c0_367 = arith.constant 0 : index
    %369 = vector.load %arg12[%c0_366, %c0_367] : memref<1x1xf32, #tpu.memory_space<vmem>>, vector<1x1xf32>
    %370 = vector.broadcast %369 : vector<1x1xf32> to vector<2x1xf32>
    %371 = arith.addf %368, %370 : vector<2x1xf32>
    %c0_368 = arith.constant 0 : index
    %c0_369 = arith.constant 0 : index
    %372 = vector.load %arg13[%c0_368, %c0_369] : memref<2x1xf32, #tpu.memory_space<vmem>>, vector<2x1xf32>
    tpu.vector_store %arg13[%c0_368, %c0_369], %371 {strides = array<i32>} : memref<2x1xf32, #tpu.memory_space<vmem>>, vector<2x1xf32>,
    return
  }
}

</mosaic_0001>

<llo_original>
// kernel: discriminator_forward.1
$region0: #{discriminator_forward.1}
  #allocation0 [shape = 'u32[]', space=smem, size = 0x4, offset = 0x4, fixed_abs, tag = 'smem constant byte address 0x4 - core index']
  #allocation1 [shape = 'u32[144,128]{1,0:T(1,128)}', space=vmem, size = 0x12000, scoped, tag = 'internal scratch']
  #allocation2 [shape = 'f32[4,9,9,8]{3,2,1,0:T(8,128)}', space=vmem, size = 0x48000, scoped, tag = 'scratch operand']
  #allocation3 [shape = 'f32[4,5,5,16]{3,2,1,0:T(8,128)}', space=vmem, size = 0x14000, scoped, tag = 'scratch operand']
  #allocation4 [shape = 'f32[4,3,3,32]{3,2,1,0:T(4,128)}', space=vmem, size = 0x6000, scoped, tag = 'scratch operand']
  #allocation5 [shape = 'f32[4,2,2,64]{3,2,1,0:T(2,128)}', space=vmem, size = 0x2000, scoped, tag = 'scratch operand']
  #allocation6 [shape = 'f32[1,1]{1,0:T(1,128)S(1)}', space=vmem, size = 0x200, scoped, tag = 'scoped memory for discriminator_forward.1']
  %s0 = inlined_call_operand.vmem [shape: f32[2,16,16,4], index: 0, kind: input, shape index: {}]
  %s1 = inlined_call_operand.vmem [shape: f32[8,8,8], index: 1, kind: input, shape index: {}]
  %s2 = inlined_call_operand.vmem [shape: f32[1,8], index: 2, kind: input, shape index: {}]
  %s3 = inlined_call_operand.vmem [shape: f32[8,16,16], index: 3, kind: input, shape index: {}]
  %s4 = inlined_call_operand.vmem [shape: f32[1,16], index: 4, kind: input, shape index: {}]
  %s5 = inlined_call_operand.vmem [shape: f32[1,16], index: 5, kind: input, shape index: {}]
  %s6 = inlined_call_operand.vmem [shape: f32[1,16], index: 6, kind: input, shape index: {}]
  %s7 = inlined_call_operand.vmem [shape: f32[8,32,32], index: 7, kind: input, shape index: {}]
  %s8 = inlined_call_operand.vmem [shape: f32[1,32], index: 8, kind: input, shape index: {}]
  %s9 = inlined_call_operand.vmem [shape: f32[1,32], index: 9, kind: input, shape index: {}]
  %s10 = inlined_call_operand.vmem [shape: f32[1,32], index: 10, kind: input, shape index: {}]
  %s11 = inlined_call_operand.vmem [shape: f32[8,1,64], index: 11, kind: input, shape index: {}]
  %s12 = inlined_call_operand.<no memory space> [shape: f32[1,1], index: 12, kind: input, shape index: {}]
  %s13 = inlined_call_operand.vmem [shape: f32[2,1], index: 13, kind: output, shape index: {}]
  %s14 = sld [smem:[#allocation0]]
  $region62: #{discriminator_forward.1} parent=0
    _
  %s16 = ssub.s32 1, %s14
  %s17 = scalar_select 0, %s16, %s14
  %v18 = vstv %s12
  %19 = vst [vmem:[#allocation6] sm:$0x1] %v18
  // Predicated region
  $region2: #{discriminator_forward.1} parent=0 // pred_check
    _
  $region3: #{discriminator_forward.1} parent=0 // pred_check_branch
    %21 = sbr.rel (0) target = $region5
  $region4: #{discriminator_forward.1} parent=0 // pred_region
    _
  $region5: #{discriminator_forward.1} parent=0 // pred_fallthru
    _
  // Predicated region
  $region6: #{discriminator_forward.1} parent=0 // pred_check
    _
  $region7: #{discriminator_forward.1} parent=0 // pred_check_branch
    %23 = sbr.rel (0) target = $region9
  $region8: #{discriminator_forward.1} parent=0 // pred_region
    _
  $region9: #{discriminator_forward.1} parent=0 // pred_fallthru
    _
  // Predicated region
  $region10: #{discriminator_forward.1} parent=0 // pred_check
    _
  $region11: #{discriminator_forward.1} parent=0 // pred_check_branch
    %25 = sbr.rel (0) target = $region13
  $region12: #{discriminator_forward.1} parent=0 // pred_region
    _
  $region13: #{discriminator_forward.1} parent=0 // pred_fallthru
    _
  // Predicated region
  $region14: #{discriminator_forward.1} parent=0 // pred_check
    _
  $region15: #{discriminator_forward.1} parent=0 // pred_check_branch
    %27 = sbr.rel (0) target = $region17
  $region16: #{discriminator_forward.1} parent=0 // pred_region
    _
  $region17: #{discriminator_forward.1} parent=0 // pred_fallthru
    _
  // Predicated region
  $region18: #{discriminator_forward.1} parent=0 // pred_check
    _
  $region19: #{discriminator_forward.1} parent=0 // pred_check_branch
    %29 = sbr.rel (0) target = $region21
  $region20: #{discriminator_forward.1} parent=0 // pred_region
    _
  $region21: #{discriminator_forward.1} parent=0 // pred_fallthru
    _
  // Predicated region
  $region22: #{discriminator_forward.1} parent=0 // pred_check
    _
  $region23: #{discriminator_forward.1} parent=0 // pred_check_branch
    %31 = sbr.rel (0) target = $region25
  $region24: #{discriminator_forward.1} parent=0 // pred_region
    _
  $region25: #{discriminator_forward.1} parent=0 // pred_fallthru
    _
  // Predicated region
  $region26: #{discriminator_forward.1} parent=0 // pred_check
    _
  $region27: #{discriminator_forward.1} parent=0 // pred_check_branch
    %33 = sbr.rel (0) target = $region29
  $region28: #{discriminator_forward.1} parent=0 // pred_region
    _
  $region29: #{discriminator_forward.1} parent=0 // pred_fallthru
    _
  // Predicated region
  $region30: #{discriminator_forward.1} parent=0 // pred_check
    _
  $region31: #{discriminator_forward.1} parent=0 // pred_check_branch
    %35 = sbr.rel (0) target = $region33
  $region32: #{discriminator_forward.1} parent=0 // pred_region
    _
  $region33: #{discriminator_forward.1} parent=0 // pred_fallthru
    _
  // Predicated region
  $region34: #{discriminator_forward.1} parent=0 // pred_check
    _
  $region35: #{discriminator_forward.1} parent=0 // pred_check_branch
    %37 = sbr.rel (0) target = $region37
  $region36: #{discriminator_forward.1} parent=0 // pred_region
    _
  $region37: #{discriminator_forward.1} parent=0 // pred_fallthru
    _
  // Predicated region
  $region38: #{discriminator_forward.1} parent=0 // pred_check
    _
  $region39: #{discriminator_forward.1} parent=0 // pred_check_branch
    %39 = sbr.rel (0) target = $region41
  $region40: #{discriminator_forward.1} parent=0 // pred_region
    _
  $region41: #{discriminator_forward.1} parent=0 // pred_fallthru
    _
  // Predicated region
  $region42: #{discriminator_forward.1} parent=0 // pred_check
    _
  $region43: #{discriminator_forward.1} parent=0 // pred_check_branch
    %41 = sbr.rel (0) target = $region45
  $region44: #{discriminator_forward.1} parent=0 // pred_region
    _
  $region45: #{discriminator_forward.1} parent=0 // pred_fallthru
    _
  // Predicated region
  $region46: #{discriminator_forward.1} parent=0 // pred_check
    _
  $region47: #{discriminator_forward.1} parent=0 // pred_check_branch
    %43 = sbr.rel (0) target = $region49
  $region48: #{discriminator_forward.1} parent=0 // pred_region
    _
  $region49: #{discriminator_forward.1} parent=0 // pred_fallthru
    _
  // Predicated region
  $region50: #{discriminator_forward.1} parent=0 // pred_check
    _
  $region51: #{discriminator_forward.1} parent=0 // pred_check_branch
    %45 = sbr.rel (0) target = $region53
  $region52: #{discriminator_forward.1} parent=0 // pred_region
    _
  $region53: #{discriminator_forward.1} parent=0 // pred_fallthru
    _
  %vm46 = vcmask 64512
  %47 = vst.msk [vmem:[#allocation2] sm:$0xff] %vm46, 0.0
  %vm48 = vcmask 57344
  %49 = vst.msk [vmem:[#allocation2 + $0x8] sm:$0x1] %vm48, 0.0
  %50 = vst.msk [vmem:[#allocation2 + $0x10] sm:$0xff] %vm46, 0.0
  %51 = vst.msk [vmem:[#allocation2 + $0x18] sm:$0x1] %vm48, 0.0
  %52 = vst.msk [vmem:[#allocation2 + $0x20] sm:$0xff] %vm46, 0.0
  %53 = vst.msk [vmem:[#allocation2 + $0x28] sm:$0x1] %vm48, 0.0
  %54 = vst.msk [vmem:[#allocation2 + $0x30] sm:$0xff] %vm46, 0.0
  %55 = vst.msk [vmem:[#allocation2 + $0x38] sm:$0x1] %vm48, 0.0
  %56 = vst.msk [vmem:[#allocation2 + $0x40] sm:$0xff] %vm46, 0.0
  %57 = vst.msk [vmem:[#allocation2 + $0x48] sm:$0x1] %vm48, 0.0
  %58 = vst.msk [vmem:[#allocation2 + $0x50] sm:$0xff] %vm46, 0.0
  %59 = vst.msk [vmem:[#allocation2 + $0x58] sm:$0x1] %vm48, 0.0
  %60 = vst.msk [vmem:[#allocation2 + $0x60] sm:$0xff] %vm46, 0.0
  %61 = vst.msk [vmem:[#allocation2 + $0x68] sm:$0x1] %vm48, 0.0
  %62 = vst.msk [vmem:[#allocation2 + $0x70] sm:$0xff] %vm46, 0.0
  %63 = vst.msk [vmem:[#allocation2 + $0x78] sm:$0x1] %vm48, 0.0
  %64 = vst.msk [vmem:[#allocation2 + $0x80] sm:$0xff] %vm46, 0.0
  %65 = vst.msk [vmem:[#allocation2 + $0x88] sm:$0x1] %vm48, 0.0
  %66 = vst.msk [vmem:[#allocation2 + $0x90] sm:$0xff] %vm46, 0.0
  %67 = vst.msk [vmem:[#allocation2 + $0x98] sm:$0x1] %vm48, 0.0
  %68 = vst.msk [vmem:[#allocation2 + $0xa0] sm:$0xff] %vm46, 0.0
  %69 = vst.msk [vmem:[#allocation2 + $0xa8] sm:$0x1] %vm48, 0.0
  %70 = vst.msk [vmem:[#allocation2 + $0xb0] sm:$0xff] %vm46, 0.0
  %71 = vst.msk [vmem:[#allocation2 + $0xb8] sm:$0x1] %vm48, 0.0
  %72 = vst.msk [vmem:[#allocation2 + $0xc0] sm:$0xff] %vm46, 0.0
  %73 = vst.msk [vmem:[#allocation2 + $0xc8] sm:$0x1] %vm48, 0.0
  %74 = vst.msk [vmem:[#allocation2 + $0xd0] sm:$0xff] %vm46, 0.0
  %75 = vst.msk [vmem:[#allocation2 + $0xd8] sm:$0x1] %vm48, 0.0
  %76 = vst.msk [vmem:[#allocation2 + $0xe0] sm:$0xff] %vm46, 0.0
  %77 = vst.msk [vmem:[#allocation2 + $0xe8] sm:$0x1] %vm48, 0.0
  %78 = vst.msk [vmem:[#allocation2 + $0xf0] sm:$0xff] %vm46, 0.0
  %79 = vst.msk [vmem:[#allocation2 + $0xf8] sm:$0x1] %vm48, 0.0
  %80 = vst.msk [vmem:[#allocation2 + $0x100] sm:$0xff] %vm46, 0.0
  %81 = vst.msk [vmem:[#allocation2 + $0x108] sm:$0x1] %vm48, 0.0
  %82 = vst.msk [vmem:[#allocation2 + $0x110] sm:$0xff] %vm46, 0.0
  %83 = vst.msk [vmem:[#allocation2 + $0x118] sm:$0x1] %vm48, 0.0
  %84 = vst.msk [vmem:[#allocation2 + $0x120] sm:$0xff] %vm46, 0.0
  %85 = vst.msk [vmem:[#allocation2 + $0x128] sm:$0x1] %vm48, 0.0
  %86 = vst.msk [vmem:[#allocation2 + $0x130] sm:$0xff] %vm46, 0.0
  %87 = vst.msk [vmem:[#allocation2 + $0x138] sm:$0x1] %vm48, 0.0
  %88 = vst.msk [vmem:[#allocation2 + $0x140] sm:$0xff] %vm46, 0.0
  %89 = vst.msk [vmem:[#allocation2 + $0x148] sm:$0x1] %vm48, 0.0
  %90 = vst.msk [vmem:[#allocation2 + $0x150] sm:$0xff] %vm46, 0.0
  %91 = vst.msk [vmem:[#allocation2 + $0x158] sm:$0x1] %vm48, 0.0
  %92 = vst.msk [vmem:[#allocation2 + $0x160] sm:$0xff] %vm46, 0.0
  %93 = vst.msk [vmem:[#allocation2 + $0x168] sm:$0x1] %vm48, 0.0
  %94 = vst.msk [vmem:[#allocation2 + $0x170] sm:$0xff] %vm46, 0.0
  %95 = vst.msk [vmem:[#allocation2 + $0x178] sm:$0x1] %vm48, 0.0
  %96 = vst.msk [vmem:[#allocation2 + $0x180] sm:$0xff] %vm46, 0.0
  %97 = vst.msk [vmem:[#allocation2 + $0x188] sm:$0x1] %vm48, 0.0
  %98 = vst.msk [vmem:[#allocation2 + $0x190] sm:$0xff] %vm46, 0.0
  %99 = vst.msk [vmem:[#allocation2 + $0x198] sm:$0x1] %vm48, 0.0
  %100 = vst.msk [vmem:[#allocation2 + $0x1a0] sm:$0xff] %vm46, 0.0
  %101 = vst.msk [vmem:[#allocation2 + $0x1a8] sm:$0x1] %vm48, 0.0
  %102 = vst.msk [vmem:[#allocation2 + $0x1b0] sm:$0xff] %vm46, 0.0
  %103 = vst.msk [vmem:[#allocation2 + $0x1b8] sm:$0x1] %vm48, 0.0
  %104 = vst.msk [vmem:[#allocation2 + $0x1c0] sm:$0xff] %vm46, 0.0
  %105 = vst.msk [vmem:[#allocation2 + $0x1c8] sm:$0x1] %vm48, 0.0
  %106 = vst.msk [vmem:[#allocation2 + $0x1d0] sm:$0xff] %vm46, 0.0
  %107 = vst.msk [vmem:[#allocation2 + $0x1d8] sm:$0x1] %vm48, 0.0
  %108 = vst.msk [vmem:[#allocation2 + $0x1e0] sm:$0xff] %vm46, 0.0
  %109 = vst.msk [vmem:[#allocation2 + $0x1e8] sm:$0x1] %vm48, 0.0
  %110 = vst.msk [vmem:[#allocation2 + $0x1f0] sm:$0xff] %vm46, 0.0
  %111 = vst.msk [vmem:[#allocation2 + $0x1f8] sm:$0x1] %vm48, 0.0
  %112 = vst.msk [vmem:[#allocation2 + $0x200] sm:$0xff] %vm46, 0.0
  %113 = vst.msk [vmem:[#allocation2 + $0x208] sm:$0x1] %vm48, 0.0
  %114 = vst.msk [vmem:[#allocation2 + $0x210] sm:$0xff] %vm46, 0.0
  %115 = vst.msk [vmem:[#allocation2 + $0x218] sm:$0x1] %vm48, 0.0
  %116 = vst.msk [vmem:[#allocation2 + $0x220] sm:$0xff] %vm46, 0.0
  %117 = vst.msk [vmem:[#allocation2 + $0x228] sm:$0x1] %vm48, 0.0
  %118 = vst.msk [vmem:[#allocation2 + $0x230] sm:$0xff] %vm46, 0.0
  %119 = vst.msk [vmem:[#allocation2 + $0x238] sm:$0x1] %vm48, 0.0
  %vm120 = vcmask 126976
  %121 = vst.msk [vmem:[#allocation3] sm:$0x1f] %vm120, 0.0
  %122 = vst.msk [vmem:[#allocation3 + $0x8] sm:$0x1f] %vm120, 0.0
  %123 = vst.msk [vmem:[#allocation3 + $0x10] sm:$0x1f] %vm120, 0.0
  %124 = vst.msk [vmem:[#allocation3 + $0x18] sm:$0x1f] %vm120, 0.0
  %125 = vst.msk [vmem:[#allocation3 + $0x20] sm:$0x1f] %vm120, 0.0
  %126 = vst.msk [vmem:[#allocation3 + $0x28] sm:$0x1f] %vm120, 0.0
  %127 = vst.msk [vmem:[#allocation3 + $0x30] sm:$0x1f] %vm120, 0.0
  %128 = vst.msk [vmem:[#allocation3 + $0x38] sm:$0x1f] %vm120, 0.0
  %129 = vst.msk [vmem:[#allocation3 + $0x40] sm:$0x1f] %vm120, 0.0
  %130 = vst.msk [vmem:[#allocation3 + $0x48] sm:$0x1f] %vm120, 0.0
  %131 = vst.msk [vmem:[#allocation3 + $0x50] sm:$0x1f] %vm120, 0.0
  %132 = vst.msk [vmem:[#allocation3 + $0x58] sm:$0x1f] %vm120, 0.0
  %133 = vst.msk [vmem:[#allocation3 + $0x60] sm:$0x1f] %vm120, 0.0
  %134 = vst.msk [vmem:[#allocation3 + $0x68] sm:$0x1f] %vm120, 0.0
  %135 = vst.msk [vmem:[#allocation3 + $0x70] sm:$0x1f] %vm120, 0.0
  %136 = vst.msk [vmem:[#allocation3 + $0x78] sm:$0x1f] %vm120, 0.0
  %137 = vst.msk [vmem:[#allocation3 + $0x80] sm:$0x1f] %vm120, 0.0
  %138 = vst.msk [vmem:[#allocation3 + $0x88] sm:$0x1f] %vm120, 0.0
  %139 = vst.msk [vmem:[#allocation3 + $0x90] sm:$0x1f] %vm120, 0.0
  %140 = vst.msk [vmem:[#allocation3 + $0x98] sm:$0x1f] %vm120, 0.0
  %vm141 = vcmask 256000
  %142 = vst.msk [vmem:[#allocation4] sm:$0x7] %vm141, 0.0
  %143 = vst.msk [vmem:[#allocation4 + $0x4] sm:$0x7] %vm141, 0.0
  %144 = vst.msk [vmem:[#allocation4 + $0x8] sm:$0x7] %vm141, 0.0
  %145 = vst.msk [vmem:[#allocation4 + $0xc] sm:$0x7] %vm141, 0.0
  %146 = vst.msk [vmem:[#allocation4 + $0x10] sm:$0x7] %vm141, 0.0
  %147 = vst.msk [vmem:[#allocation4 + $0x14] sm:$0x7] %vm141, 0.0
  %148 = vst.msk [vmem:[#allocation4 + $0x18] sm:$0x7] %vm141, 0.0
  %149 = vst.msk [vmem:[#allocation4 + $0x1c] sm:$0x7] %vm141, 0.0
  %150 = vst.msk [vmem:[#allocation4 + $0x20] sm:$0x7] %vm141, 0.0
  %151 = vst.msk [vmem:[#allocation4 + $0x24] sm:$0x7] %vm141, 0.0
  %152 = vst.msk [vmem:[#allocation4 + $0x28] sm:$0x7] %vm141, 0.0
  %153 = vst.msk [vmem:[#allocation4 + $0x2c] sm:$0x7] %vm141, 0.0
  %vm154 = vcmask 517120
  %155 = vst.msk [vmem:[#allocation5] sm:$0x3] %vm154, 0.0
  %156 = vst.msk [vmem:[#allocation5 + $0x2] sm:$0x3] %vm154, 0.0
  %157 = vst.msk [vmem:[#allocation5 + $0x4] sm:$0x3] %vm154, 0.0
  %158 = vst.msk [vmem:[#allocation5 + $0x6] sm:$0x3] %vm154, 0.0
  %159 = vst.msk [vmem:[#allocation5 + $0x8] sm:$0x3] %vm154, 0.0
  %160 = vst.msk [vmem:[#allocation5 + $0xa] sm:$0x3] %vm154, 0.0
  %161 = vst.msk [vmem:[#allocation5 + $0xc] sm:$0x3] %vm154, 0.0
  %162 = vst.msk [vmem:[#allocation5 + $0xe] sm:$0x3] %vm154, 0.0
  %v163 = vld [vmem:[%s0] sm:$0xff]
  %v164 = vld [vmem:[%s0 + $0x8] sm:$0xff]
  %v165 = vld [vmem:[%s0 + $0x10] sm:$0xff]
  %v166 = vld [vmem:[%s0 + $0x18] sm:$0xff]
  %v167 = vld [vmem:[%s0 + $0x20] sm:$0xff]
  %v168 = vld [vmem:[%s0 + $0x28] sm:$0xff]
  %v169 = vld [vmem:[%s0 + $0x30] sm:$0xff]
  %v170 = vld [vmem:[%s0 + $0x38] sm:$0xff]
  %v171 = vld [vmem:[%s0 + $0x40] sm:$0xff]
  %v172 = vld [vmem:[%s0 + $0x48] sm:$0xff]
  %v173 = vld [vmem:[%s0 + $0x50] sm:$0xff]
  %v174 = vld [vmem:[%s0 + $0x58] sm:$0xff]
  %v175 = vld [vmem:[%s0 + $0x60] sm:$0xff]
  %v176 = vld [vmem:[%s0 + $0x68] sm:$0xff]
  %v177 = vld [vmem:[%s0 + $0x70] sm:$0xff]
  %v178 = vld [vmem:[%s0 + $0x78] sm:$0xff]
  %v179 = vld [vmem:[%s0 + $0x80] sm:$0xff]
  %v180 = vld [vmem:[%s0 + $0x88] sm:$0xff]
  %v181 = vld [vmem:[%s0 + $0x90] sm:$0xff]
  %v182 = vld [vmem:[%s0 + $0x98] sm:$0xff]
  %v183 = vld [vmem:[%s0 + $0xa0] sm:$0xff]
  %v184 = vld [vmem:[%s0 + $0xa8] sm:$0xff]
  %v185 = vld [vmem:[%s0 + $0xb0] sm:$0xff]
  %v186 = vld [vmem:[%s0 + $0xb8] sm:$0xff]
  %v187 = vld [vmem:[%s0 + $0xc0] sm:$0xff]
  %v188 = vld [vmem:[%s0 + $0xc8] sm:$0xff]
  %v189 = vld [vmem:[%s0 + $0xd0] sm:$0xff]
  %v190 = vld [vmem:[%s0 + $0xd8] sm:$0xff]
  %v191 = vld [vmem:[%s0 + $0xe0] sm:$0xff]
  %v192 = vld [vmem:[%s0 + $0xe8] sm:$0xff]
  %v193 = vld [vmem:[%s0 + $0xf0] sm:$0xff]
  %v194 = vld [vmem:[%s0 + $0xf8] sm:$0xff]
  %v195 = vld [vmem:[%s0 + $0x100] sm:$0xff]
  %v196 = vld [vmem:[%s0 + $0x108] sm:$0xff]
  %v197 = vld [vmem:[%s0 + $0x110] sm:$0xff]
  %v198 = vld [vmem:[%s0 + $0x118] sm:$0xff]
  %v199 = vld [vmem:[%s0 + $0x120] sm:$0xff]
  %v200 = vld [vmem:[%s0 + $0x128] sm:$0xff]
  %v201 = vld [vmem:[%s0 + $0x130] sm:$0xff]
  %v202 = vld [vmem:[%s0 + $0x138] sm:$0xff]
  %v203 = vld [vmem:[%s0 + $0x140] sm:$0xff]
  %v204 = vld [vmem:[%s0 + $0x148] sm:$0xff]
  %v205 = vld [vmem:[%s0 + $0x150] sm:$0xff]
  %v206 = vld [vmem:[%s0 + $0x158] sm:$0xff]
  %v207 = vld [vmem:[%s0 + $0x160] sm:$0xff]
  %v208 = vld [vmem:[%s0 + $0x168] sm:$0xff]
  %v209 = vld [vmem:[%s0 + $0x170] sm:$0xff]
  %v210 = vld [vmem:[%s0 + $0x178] sm:$0xff]
  %v211 = vld [vmem:[%s0 + $0x180] sm:$0xff]
  %v212 = vld [vmem:[%s0 + $0x188] sm:$0xff]
  %v213 = vld [vmem:[%s0 + $0x190] sm:$0xff]
  %v214 = vld [vmem:[%s0 + $0x198] sm:$0xff]
  %v215 = vld [vmem:[%s0 + $0x1a0] sm:$0xff]
  %v216 = vld [vmem:[%s0 + $0x1a8] sm:$0xff]
  %v217 = vld [vmem:[%s0 + $0x1b0] sm:$0xff]
  %v218 = vld [vmem:[%s0 + $0x1b8] sm:$0xff]
  %v219 = vld [vmem:[%s0 + $0x1c0] sm:$0xff]
  %v220 = vld [vmem:[%s0 + $0x1c8] sm:$0xff]
  %v221 = vld [vmem:[%s0 + $0x1d0] sm:$0xff]
  %v222 = vld [vmem:[%s0 + $0x1d8] sm:$0xff]
  %v223 = vld [vmem:[%s0 + $0x1e0] sm:$0xff]
  %v224 = vld [vmem:[%s0 + $0x1e8] sm:$0xff]
  %v225 = vld [vmem:[%s0 + $0x1f0] sm:$0xff]
  %v226 = vld [vmem:[%s0 + $0x1f8] sm:$0xff]
  %v291 = vcombine.high %v163, %v163
  %v293 = vunpack.c.l.s4 1983009808
  %v294 = vunpack.c.0.s8 %v293
  %v295 = vlaneseq
  %v296 = vshrl.u32 %v295, 7
  %v297 = vsub.s32 %v294, %v296
  %v298 = vrot.slane %v163, %v297
  %v300 = vunpack.c.l.s4 1983009808
  %v301 = vunpack.c.0.s8 %v300
  %v302 = vlaneseq
  %v303 = vshrl.u32 %v302, 7
  %v304 = vsub.s32 %v301, %v303
  %v305 = vrot.slane %v291, %v304
  %v306 = vcombine.high %v298, %v298
  %v307 = vcombine.high %v305, %v305
  %v308 = vcombine.high %v164, %v164
  %v310 = vunpack.c.l.s4 1983009808
  %v311 = vunpack.c.0.s8 %v310
  %v312 = vlaneseq
  %v313 = vshrl.u32 %v312, 7
  %v314 = vsub.s32 %v311, %v313
  %v315 = vrot.slane %v164, %v314
  %v317 = vunpack.c.l.s4 1983009808
  %v318 = vunpack.c.0.s8 %v317
  %v319 = vlaneseq
  %v320 = vshrl.u32 %v319, 7
  %v321 = vsub.s32 %v318, %v320
  %v322 = vrot.slane %v308, %v321
  %v323 = vcombine.high %v315, %v315
  %v324 = vcombine.high %v322, %v322
  %v325 = vcombine.high %v165, %v165
  %v327 = vunpack.c.l.s4 1983009808
  %v328 = vunpack.c.0.s8 %v327
  %v329 = vlaneseq
  %v330 = vshrl.u32 %v329, 7
  %v331 = vsub.s32 %v328, %v330
  %v332 = vrot.slane %v165, %v331
  %v334 = vunpack.c.l.s4 1983009808
  %v335 = vunpack.c.0.s8 %v334
  %v336 = vlaneseq
  %v337 = vshrl.u32 %v336, 7
  %v338 = vsub.s32 %v335, %v337
  %v339 = vrot.slane %v325, %v338
  %v340 = vcombine.high %v332, %v332
  %v341 = vcombine.high %v339, %v339
  %v342 = vcombine.high %v166, %v166
  %v344 = vunpack.c.l.s4 1983009808
  %v345 = vunpack.c.0.s8 %v344
  %v346 = vlaneseq
  %v347 = vshrl.u32 %v346, 7
  %v348 = vsub.s32 %v345, %v347
  %v349 = vrot.slane %v166, %v348
  %v351 = vunpack.c.l.s4 1983009808
  %v352 = vunpack.c.0.s8 %v351
  %v353 = vlaneseq
  %v354 = vshrl.u32 %v353, 7
  %v355 = vsub.s32 %v352, %v354
  %v356 = vrot.slane %v342, %v355
  %v357 = vcombine.high %v349, %v349
  %v358 = vcombine.high %v356, %v356
  %v359 = vcombine.high %v167, %v167
  %v361 = vunpack.c.l.s4 1983009808
  %v362 = vunpack.c.0.s8 %v361
  %v363 = vlaneseq
  %v364 = vshrl.u32 %v363, 7
  %v365 = vsub.s32 %v362, %v364
  %v366 = vrot.slane %v167, %v365
  %v368 = vunpack.c.l.s4 1983009808
  %v369 = vunpack.c.0.s8 %v368
  %v370 = vlaneseq
  %v371 = vshrl.u32 %v370, 7
  %v372 = vsub.s32 %v369, %v371
  %v373 = vrot.slane %v359, %v372
  %v374 = vcombine.high %v366, %v366
  %v375 = vcombine.high %v373, %v373
  %v376 = vcombine.high %v168, %v168
  %v378 = vunpack.c.l.s4 1983009808
  %v379 = vunpack.c.0.s8 %v378
  %v380 = vlaneseq
  %v381 = vshrl.u32 %v380, 7
  %v382 = vsub.s32 %v379, %v381
  %v383 = vrot.slane %v168, %v382
  %v385 = vunpack.c.l.s4 1983009808
  %v386 = vunpack.c.0.s8 %v385
  %v387 = vlaneseq
  %v388 = vshrl.u32 %v387, 7
  %v389 = vsub.s32 %v386, %v388
  %v390 = vrot.slane %v376, %v389
  %v391 = vcombine.high %v383, %v383
  %v392 = vcombine.high %v390, %v390
  %v393 = vcombine.high %v169, %v169
  %v395 = vunpack.c.l.s4 1983009808
  %v396 = vunpack.c.0.s8 %v395
  %v397 = vlaneseq
  %v398 = vshrl.u32 %v397, 7
  %v399 = vsub.s32 %v396, %v398
  %v400 = vrot.slane %v169, %v399
  %v402 = vunpack.c.l.s4 1983009808
  %v403 = vunpack.c.0.s8 %v402
  %v404 = vlaneseq
  %v405 = vshrl.u32 %v404, 7
  %v406 = vsub.s32 %v403, %v405
  %v407 = vrot.slane %v393, %v406
  %v408 = vcombine.high %v400, %v400
  %v409 = vcombine.high %v407, %v407
  %v410 = vcombine.high %v170, %v170
  %v412 = vunpack.c.l.s4 1983009808
  %v413 = vunpack.c.0.s8 %v412
  %v414 = vlaneseq
  %v415 = vshrl.u32 %v414, 7
  %v416 = vsub.s32 %v413, %v415
  %v417 = vrot.slane %v170, %v416
  %v419 = vunpack.c.l.s4 1983009808
  %v420 = vunpack.c.0.s8 %v419
  %v421 = vlaneseq
  %v422 = vshrl.u32 %v421, 7
  %v423 = vsub.s32 %v420, %v422
  %v424 = vrot.slane %v410, %v423
  %v425 = vcombine.high %v417, %v417
  %v426 = vcombine.high %v424, %v424
  %v427 = vcombine.high %v171, %v171
  %v429 = vunpack.c.l.s4 1983009808
  %v430 = vunpack.c.0.s8 %v429
  %v431 = vlaneseq
  %v432 = vshrl.u32 %v431, 7
  %v433 = vsub.s32 %v430, %v432
  %v434 = vrot.slane %v171, %v433
  %v436 = vunpack.c.l.s4 1983009808
  %v437 = vunpack.c.0.s8 %v436
  %v438 = vlaneseq
  %v439 = vshrl.u32 %v438, 7
  %v440 = vsub.s32 %v437, %v439
  %v441 = vrot.slane %v427, %v440
  %v442 = vcombine.high %v434, %v434
  %v443 = vcombine.high %v441, %v441
  %v444 = vcombine.high %v172, %v172
  %v446 = vunpack.c.l.s4 1983009808
  %v447 = vunpack.c.0.s8 %v446
  %v448 = vlaneseq
  %v449 = vshrl.u32 %v448, 7
  %v450 = vsub.s32 %v447, %v449
  %v451 = vrot.slane %v172, %v450
  %v453 = vunpack.c.l.s4 1983009808
  %v454 = vunpack.c.0.s8 %v453
  %v455 = vlaneseq
  %v456 = vshrl.u32 %v455, 7
  %v457 = vsub.s32 %v454, %v456
  %v458 = vrot.slane %v444, %v457
  %v459 = vcombine.high %v451, %v451
  %v460 = vcombine.high %v458, %v458
  %v461 = vcombine.high %v173, %v173
  %v463 = vunpack.c.l.s4 1983009808
  %v464 = vunpack.c.0.s8 %v463
  %v465 = vlaneseq
  %v466 = vshrl.u32 %v465, 7
  %v467 = vsub.s32 %v464, %v466
  %v468 = vrot.slane %v173, %v467
  %v470 = vunpack.c.l.s4 1983009808
  %v471 = vunpack.c.0.s8 %v470
  %v472 = vlaneseq
  %v473 = vshrl.u32 %v472, 7
  %v474 = vsub.s32 %v471, %v473
  %v475 = vrot.slane %v461, %v474
  %v476 = vcombine.high %v468, %v468
  %v477 = vcombine.high %v475, %v475
  %v478 = vcombine.high %v174, %v174
  %v480 = vunpack.c.l.s4 1983009808
  %v481 = vunpack.c.0.s8 %v480
  %v482 = vlaneseq
  %v483 = vshrl.u32 %v482, 7
  %v484 = vsub.s32 %v481, %v483
  %v485 = vrot.slane %v174, %v484
  %v487 = vunpack.c.l.s4 1983009808
  %v488 = vunpack.c.0.s8 %v487
  %v489 = vlaneseq
  %v490 = vshrl.u32 %v489, 7
  %v491 = vsub.s32 %v488, %v490
  %v492 = vrot.slane %v478, %v491
  %v493 = vcombine.high %v485, %v485
  %v494 = vcombine.high %v492, %v492
  %v495 = vcombine.high %v175, %v175
  %v497 = vunpack.c.l.s4 1983009808
  %v498 = vunpack.c.0.s8 %v497
  %v499 = vlaneseq
  %v500 = vshrl.u32 %v499, 7
  %v501 = vsub.s32 %v498, %v500
  %v502 = vrot.slane %v175, %v501
  %v504 = vunpack.c.l.s4 1983009808
  %v505 = vunpack.c.0.s8 %v504
  %v506 = vlaneseq
  %v507 = vshrl.u32 %v506, 7
  %v508 = vsub.s32 %v505, %v507
  %v509 = vrot.slane %v495, %v508
  %v510 = vcombine.high %v502, %v502
  %v511 = vcombine.high %v509, %v509
  %v512 = vcombine.high %v176, %v176
  %v514 = vunpack.c.l.s4 1983009808
  %v515 = vunpack.c.0.s8 %v514
  %v516 = vlaneseq
  %v517 = vshrl.u32 %v516, 7
  %v518 = vsub.s32 %v515, %v517
  %v519 = vrot.slane %v176, %v518
  %v521 = vunpack.c.l.s4 1983009808
  %v522 = vunpack.c.0.s8 %v521
  %v523 = vlaneseq
  %v524 = vshrl.u32 %v523, 7
  %v525 = vsub.s32 %v522, %v524
  %v526 = vrot.slane %v512, %v525
  %v527 = vcombine.high %v519, %v519
  %v528 = vcombine.high %v526, %v526
  %v529 = vcombine.high %v177, %v177
  %v531 = vunpack.c.l.s4 1983009808
  %v532 = vunpack.c.0.s8 %v531
  %v533 = vlaneseq
  %v534 = vshrl.u32 %v533, 7
  %v535 = vsub.s32 %v532, %v534
  %v536 = vrot.slane %v177, %v535
  %v538 = vunpack.c.l.s4 1983009808
  %v539 = vunpack.c.0.s8 %v538
  %v540 = vlaneseq
  %v541 = vshrl.u32 %v540, 7
  %v542 = vsub.s32 %v539, %v541
  %v543 = vrot.slane %v529, %v542
  %v544 = vcombine.high %v536, %v536
  %v545 = vcombine.high %v543, %v543
  %v546 = vcombine.high %v178, %v178
  %v548 = vunpack.c.l.s4 1983009808
  %v549 = vunpack.c.0.s8 %v548
  %v550 = vlaneseq
  %v551 = vshrl.u32 %v550, 7
  %v552 = vsub.s32 %v549, %v551
  %v553 = vrot.slane %v178, %v552
  %v555 = vunpack.c.l.s4 1983009808
  %v556 = vunpack.c.0.s8 %v555
  %v557 = vlaneseq
  %v558 = vshrl.u32 %v557, 7
  %v559 = vsub.s32 %v556, %v558
  %v560 = vrot.slane %v546, %v559
  %v561 = vcombine.high %v553, %v553
  %v562 = vcombine.high %v560, %v560
  %v563 = vcombine.high %v179, %v179
  %v565 = vunpack.c.l.s4 1983009808
  %v566 = vunpack.c.0.s8 %v565
  %v567 = vlaneseq
  %v568 = vshrl.u32 %v567, 7
  %v569 = vsub.s32 %v566, %v568
  %v570 = vrot.slane %v179, %v569
  %v572 = vunpack.c.l.s4 1983009808
  %v573 = vunpack.c.0.s8 %v572
  %v574 = vlaneseq
  %v575 = vshrl.u32 %v574, 7
  %v576 = vsub.s32 %v573, %v575
  %v577 = vrot.slane %v563, %v576
  %v578 = vcombine.high %v570, %v570
  %v579 = vcombine.high %v577, %v577
  %v580 = vcombine.high %v180, %v180
  %v582 = vunpack.c.l.s4 1983009808
  %v583 = vunpack.c.0.s8 %v582
  %v584 = vlaneseq
  %v585 = vshrl.u32 %v584, 7
  %v586 = vsub.s32 %v583, %v585
  %v587 = vrot.slane %v180, %v586
  %v589 = vunpack.c.l.s4 1983009808
  %v590 = vunpack.c.0.s8 %v589
  %v591 = vlaneseq
  %v592 = vshrl.u32 %v591, 7
  %v593 = vsub.s32 %v590, %v592
  %v594 = vrot.slane %v580, %v593
  %v595 = vcombine.high %v587, %v587
  %v596 = vcombine.high %v594, %v594
  %v597 = vcombine.high %v181, %v181
  %v599 = vunpack.c.l.s4 1983009808
  %v600 = vunpack.c.0.s8 %v599
  %v601 = vlaneseq
  %v602 = vshrl.u32 %v601, 7
  %v603 = vsub.s32 %v600, %v602
  %v604 = vrot.slane %v181, %v603
  %v606 = vunpack.c.l.s4 1983009808
  %v607 = vunpack.c.0.s8 %v606
  %v608 = vlaneseq
  %v609 = vshrl.u32 %v608, 7
  %v610 = vsub.s32 %v607, %v609
  %v611 = vrot.slane %v597, %v610
  %v612 = vcombine.high %v604, %v604
  %v613 = vcombine.high %v611, %v611
  %v614 = vcombine.high %v182, %v182
  %v616 = vunpack.c.l.s4 1983009808
  %v617 = vunpack.c.0.s8 %v616
  %v618 = vlaneseq
  %v619 = vshrl.u32 %v618, 7
  %v620 = vsub.s32 %v617, %v619
  %v621 = vrot.slane %v182, %v620
  %v623 = vunpack.c.l.s4 1983009808
  %v624 = vunpack.c.0.s8 %v623
  %v625 = vlaneseq
  %v626 = vshrl.u32 %v625, 7
  %v627 = vsub.s32 %v624, %v626
  %v628 = vrot.slane %v614, %v627
  %v629 = vcombine.high %v621, %v621
  %v630 = vcombine.high %v628, %v628
  %v631 = vcombine.high %v183, %v183
  %v633 = vunpack.c.l.s4 1983009808
  %v634 = vunpack.c.0.s8 %v633
  %v635 = vlaneseq
  %v636 = vshrl.u32 %v635, 7
  %v637 = vsub.s32 %v634, %v636
  %v638 = vrot.slane %v183, %v637
  %v640 = vunpack.c.l.s4 1983009808
  %v641 = vunpack.c.0.s8 %v640
  %v642 = vlaneseq
  %v643 = vshrl.u32 %v642, 7
  %v644 = vsub.s32 %v641, %v643
  %v645 = vrot.slane %v631, %v644
  %v646 = vcombine.high %v638, %v638
  %v647 = vcombine.high %v645, %v645
  %v648 = vcombine.high %v184, %v184
  %v650 = vunpack.c.l.s4 1983009808
  %v651 = vunpack.c.0.s8 %v650
  %v652 = vlaneseq
  %v653 = vshrl.u32 %v652, 7
  %v654 = vsub.s32 %v651, %v653
  %v655 = vrot.slane %v184, %v654
  %v657 = vunpack.c.l.s4 1983009808
  %v658 = vunpack.c.0.s8 %v657
  %v659 = vlaneseq
  %v660 = vshrl.u32 %v659, 7
  %v661 = vsub.s32 %v658, %v660
  %v662 = vrot.slane %v648, %v661
  %v663 = vcombine.high %v655, %v655
  %v664 = vcombine.high %v662, %v662
  %v665 = vcombine.high %v185, %v185
  %v667 = vunpack.c.l.s4 1983009808
  %v668 = vunpack.c.0.s8 %v667
  %v669 = vlaneseq
  %v670 = vshrl.u32 %v669, 7
  %v671 = vsub.s32 %v668, %v670
  %v672 = vrot.slane %v185, %v671
  %v674 = vunpack.c.l.s4 1983009808
  %v675 = vunpack.c.0.s8 %v674
  %v676 = vlaneseq
  %v677 = vshrl.u32 %v676, 7
  %v678 = vsub.s32 %v675, %v677
  %v679 = vrot.slane %v665, %v678
  %v680 = vcombine.high %v672, %v672
  %v681 = vcombine.high %v679, %v679
  %v682 = vcombine.high %v186, %v186
  %v684 = vunpack.c.l.s4 1983009808
  %v685 = vunpack.c.0.s8 %v684
  %v686 = vlaneseq
  %v687 = vshrl.u32 %v686, 7
  %v688 = vsub.s32 %v685, %v687
  %v689 = vrot.slane %v186, %v688
  %v691 = vunpack.c.l.s4 1983009808
  %v692 = vunpack.c.0.s8 %v691
  %v693 = vlaneseq
  %v694 = vshrl.u32 %v693, 7
  %v695 = vsub.s32 %v692, %v694
  %v696 = vrot.slane %v682, %v695
  %v697 = vcombine.high %v689, %v689
  %v698 = vcombine.high %v696, %v696
  %v699 = vcombine.high %v187, %v187
  %v701 = vunpack.c.l.s4 1983009808
  %v702 = vunpack.c.0.s8 %v701
  %v703 = vlaneseq
  %v704 = vshrl.u32 %v703, 7
  %v705 = vsub.s32 %v702, %v704
  %v706 = vrot.slane %v187, %v705
  %v708 = vunpack.c.l.s4 1983009808
  %v709 = vunpack.c.0.s8 %v708
  %v710 = vlaneseq
  %v711 = vshrl.u32 %v710, 7
  %v712 = vsub.s32 %v709, %v711
  %v713 = vrot.slane %v699, %v712
  %v714 = vcombine.high %v706, %v706
  %v715 = vcombine.high %v713, %v713
  %v716 = vcombine.high %v188, %v188
  %v718 = vunpack.c.l.s4 1983009808
  %v719 = vunpack.c.0.s8 %v718
  %v720 = vlaneseq
  %v721 = vshrl.u32 %v720, 7
  %v722 = vsub.s32 %v719, %v721
  %v723 = vrot.slane %v188, %v722
  %v725 = vunpack.c.l.s4 1983009808
  %v726 = vunpack.c.0.s8 %v725
  %v727 = vlaneseq
  %v728 = vshrl.u32 %v727, 7
  %v729 = vsub.s32 %v726, %v728
  %v730 = vrot.slane %v716, %v729
  %v731 = vcombine.high %v723, %v723
  %v732 = vcombine.high %v730, %v730
  %v733 = vcombine.high %v189, %v189
  %v735 = vunpack.c.l.s4 1983009808
  %v736 = vunpack.c.0.s8 %v735
  %v737 = vlaneseq
  %v738 = vshrl.u32 %v737, 7
  %v739 = vsub.s32 %v736, %v738
  %v740 = vrot.slane %v189, %v739
  %v742 = vunpack.c.l.s4 1983009808
  %v743 = vunpack.c.0.s8 %v742
  %v744 = vlaneseq
  %v745 = vshrl.u32 %v744, 7
  %v746 = vsub.s32 %v743, %v745
  %v747 = vrot.slane %v733, %v746
  %v748 = vcombine.high %v740, %v740
  %v749 = vcombine.high %v747, %v747
  %v750 = vcombine.high %v190, %v190
  %v752 = vunpack.c.l.s4 1983009808
  %v753 = vunpack.c.0.s8 %v752
  %v754 = vlaneseq
  %v755 = vshrl.u32 %v754, 7
  %v756 = vsub.s32 %v753, %v755
  %v757 = vrot.slane %v190, %v756
  %v759 = vunpack.c.l.s4 1983009808
  %v760 = vunpack.c.0.s8 %v759
  %v761 = vlaneseq
  %v762 = vshrl.u32 %v761, 7
  %v763 = vsub.s32 %v760, %v762
  %v764 = vrot.slane %v750, %v763
  %v765 = vcombine.high %v757, %v757
  %v766 = vcombine.high %v764, %v764
  %v767 = vcombine.high %v191, %v191
  %v769 = vunpack.c.l.s4 1983009808
  %v770 = vunpack.c.0.s8 %v769
  %v771 = vlaneseq
  %v772 = vshrl.u32 %v771, 7
  %v773 = vsub.s32 %v770, %v772
  %v774 = vrot.slane %v191, %v773
  %v776 = vunpack.c.l.s4 1983009808
  %v777 = vunpack.c.0.s8 %v776
  %v778 = vlaneseq
  %v779 = vshrl.u32 %v778, 7
  %v780 = vsub.s32 %v777, %v779
  %v781 = vrot.slane %v767, %v780
  %v782 = vcombine.high %v774, %v774
  %v783 = vcombine.high %v781, %v781
  %v784 = vcombine.high %v192, %v192
  %v786 = vunpack.c.l.s4 1983009808
  %v787 = vunpack.c.0.s8 %v786
  %v788 = vlaneseq
  %v789 = vshrl.u32 %v788, 7
  %v790 = vsub.s32 %v787, %v789
  %v791 = vrot.slane %v192, %v790
  %v793 = vunpack.c.l.s4 1983009808
  %v794 = vunpack.c.0.s8 %v793
  %v795 = vlaneseq
  %v796 = vshrl.u32 %v795, 7
  %v797 = vsub.s32 %v794, %v796
  %v798 = vrot.slane %v784, %v797
  %v799 = vcombine.high %v791, %v791
  %v800 = vcombine.high %v798, %v798
  %v801 = vcombine.high %v193, %v193
  %v803 = vunpack.c.l.s4 1983009808
  %v804 = vunpack.c.0.s8 %v803
  %v805 = vlaneseq
  %v806 = vshrl.u32 %v805, 7
  %v807 = vsub.s32 %v804, %v806
  %v808 = vrot.slane %v193, %v807
  %v810 = vunpack.c.l.s4 1983009808
  %v811 = vunpack.c.0.s8 %v810
  %v812 = vlaneseq
  %v813 = vshrl.u32 %v812, 7
  %v814 = vsub.s32 %v811, %v813
  %v815 = vrot.slane %v801, %v814
  %v816 = vcombine.high %v808, %v808
  %v817 = vcombine.high %v815, %v815
  %v818 = vcombine.high %v194, %v194
  %v820 = vunpack.c.l.s4 1983009808
  %v821 = vunpack.c.0.s8 %v820
  %v822 = vlaneseq
  %v823 = vshrl.u32 %v822, 7
  %v824 = vsub.s32 %v821, %v823
  %v825 = vrot.slane %v194, %v824
  %v827 = vunpack.c.l.s4 1983009808
  %v828 = vunpack.c.0.s8 %v827
  %v829 = vlaneseq
  %v830 = vshrl.u32 %v829, 7
  %v831 = vsub.s32 %v828, %v830
  %v832 = vrot.slane %v818, %v831
  %v833 = vcombine.high %v825, %v825
  %v834 = vcombine.high %v832, %v832
  %v835 = vcombine.high %v195, %v195
  %v837 = vunpack.c.l.s4 1983009808
  %v838 = vunpack.c.0.s8 %v837
  %v839 = vlaneseq
  %v840 = vshrl.u32 %v839, 7
  %v841 = vsub.s32 %v838, %v840
  %v842 = vrot.slane %v195, %v841
  %v844 = vunpack.c.l.s4 1983009808
  %v845 = vunpack.c.0.s8 %v844
  %v846 = vlaneseq
  %v847 = vshrl.u32 %v846, 7
  %v848 = vsub.s32 %v845, %v847
  %v849 = vrot.slane %v835, %v848
  %v850 = vcombine.high %v842, %v842
  %v851 = vcombine.high %v849, %v849
  %v852 = vcombine.high %v196, %v196
  %v854 = vunpack.c.l.s4 1983009808
  %v855 = vunpack.c.0.s8 %v854
  %v856 = vlaneseq
  %v857 = vshrl.u32 %v856, 7
  %v858 = vsub.s32 %v855, %v857
  %v859 = vrot.slane %v196, %v858
  %v861 = vunpack.c.l.s4 1983009808
  %v862 = vunpack.c.0.s8 %v861
  %v863 = vlaneseq
  %v864 = vshrl.u32 %v863, 7
  %v865 = vsub.s32 %v862, %v864
  %v866 = vrot.slane %v852, %v865
  %v867 = vcombine.high %v859, %v859
  %v868 = vcombine.high %v866, %v866
  %v869 = vcombine.high %v197, %v197
  %v871 = vunpack.c.l.s4 1983009808
  %v872 = vunpack.c.0.s8 %v871
  %v873 = vlaneseq
  %v874 = vshrl.u32 %v873, 7
  %v875 = vsub.s32 %v872, %v874
  %v876 = vrot.slane %v197, %v875
  %v878 = vunpack.c.l.s4 1983009808
  %v879 = vunpack.c.0.s8 %v878
  %v880 = vlaneseq
  %v881 = vshrl.u32 %v880, 7
  %v882 = vsub.s32 %v879, %v881
  %v883 = vrot.slane %v869, %v882
  %v884 = vcombine.high %v876, %v876
  %v885 = vcombine.high %v883, %v883
  %v886 = vcombine.high %v198, %v198
  %v888 = vunpack.c.l.s4 1983009808
  %v889 = vunpack.c.0.s8 %v888
  %v890 = vlaneseq
  %v891 = vshrl.u32 %v890, 7
  %v892 = vsub.s32 %v889, %v891
  %v893 = vrot.slane %v198, %v892
  %v895 = vunpack.c.l.s4 1983009808
  %v896 = vunpack.c.0.s8 %v895
  %v897 = vlaneseq
  %v898 = vshrl.u32 %v897, 7
  %v899 = vsub.s32 %v896, %v898
  %v900 = vrot.slane %v886, %v899
  %v901 = vcombine.high %v893, %v893
  %v902 = vcombine.high %v900, %v900
  %v903 = vcombine.high %v199, %v199
  %v905 = vunpack.c.l.s4 1983009808
  %v906 = vunpack.c.0.s8 %v905
  %v907 = vlaneseq
  %v908 = vshrl.u32 %v907, 7
  %v909 = vsub.s32 %v906, %v908
  %v910 = vrot.slane %v199, %v909
  %v912 = vunpack.c.l.s4 1983009808
  %v913 = vunpack.c.0.s8 %v912
  %v914 = vlaneseq
  %v915 = vshrl.u32 %v914, 7
  %v916 = vsub.s32 %v913, %v915
  %v917 = vrot.slane %v903, %v916
  %v918 = vcombine.high %v910, %v910
  %v919 = vcombine.high %v917, %v917
  %v920 = vcombine.high %v200, %v200
  %v922 = vunpack.c.l.s4 1983009808
  %v923 = vunpack.c.0.s8 %v922
  %v924 = vlaneseq
  %v925 = vshrl.u32 %v924, 7
  %v926 = vsub.s32 %v923, %v925
  %v927 = vrot.slane %v200, %v926
  %v929 = vunpack.c.l.s4 1983009808
  %v930 = vunpack.c.0.s8 %v929
  %v931 = vlaneseq
  %v932 = vshrl.u32 %v931, 7
  %v933 = vsub.s32 %v930, %v932
  %v934 = vrot.slane %v920, %v933
  %v935 = vcombine.high %v927, %v927
  %v936 = vcombine.high %v934, %v934
  %v937 = vcombine.high %v201, %v201
  %v939 = vunpack.c.l.s4 1983009808
  %v940 = vunpack.c.0.s8 %v939
  %v941 = vlaneseq
  %v942 = vshrl.u32 %v941, 7
  %v943 = vsub.s32 %v940, %v942
  %v944 = vrot.slane %v201, %v943
  %v946 = vunpack.c.l.s4 1983009808
  %v947 = vunpack.c.0.s8 %v946
  %v948 = vlaneseq
  %v949 = vshrl.u32 %v948, 7
  %v950 = vsub.s32 %v947, %v949
  %v951 = vrot.slane %v937, %v950
  %v952 = vcombine.high %v944, %v944
  %v953 = vcombine.high %v951, %v951
  %v954 = vcombine.high %v202, %v202
  %v956 = vunpack.c.l.s4 1983009808
  %v957 = vunpack.c.0.s8 %v956
  %v958 = vlaneseq
  %v959 = vshrl.u32 %v958, 7
  %v960 = vsub.s32 %v957, %v959
  %v961 = vrot.slane %v202, %v960
  %v963 = vunpack.c.l.s4 1983009808
  %v964 = vunpack.c.0.s8 %v963
  %v965 = vlaneseq
  %v966 = vshrl.u32 %v965, 7
  %v967 = vsub.s32 %v964, %v966
  %v968 = vrot.slane %v954, %v967
  %v969 = vcombine.high %v961, %v961
  %v970 = vcombine.high %v968, %v968
  %v971 = vcombine.high %v203, %v203
  %v973 = vunpack.c.l.s4 1983009808
  %v974 = vunpack.c.0.s8 %v973
  %v975 = vlaneseq
  %v976 = vshrl.u32 %v975, 7
  %v977 = vsub.s32 %v974, %v976
  %v978 = vrot.slane %v203, %v977
  %v980 = vunpack.c.l.s4 1983009808
  %v981 = vunpack.c.0.s8 %v980
  %v982 = vlaneseq
  %v983 = vshrl.u32 %v982, 7
  %v984 = vsub.s32 %v981, %v983
  %v985 = vrot.slane %v971, %v984
  %v986 = vcombine.high %v978, %v978
  %v987 = vcombine.high %v985, %v985
  %v988 = vcombine.high %v204, %v204
  %v990 = vunpack.c.l.s4 1983009808
  %v991 = vunpack.c.0.s8 %v990
  %v992 = vlaneseq
  %v993 = vshrl.u32 %v992, 7
  %v994 = vsub.s32 %v991, %v993
  %v995 = vrot.slane %v204, %v994
  %v997 = vunpack.c.l.s4 1983009808
  %v998 = vunpack.c.0.s8 %v997
  %v999 = vlaneseq
  %v1000 = vshrl.u32 %v999, 7
  %v1001 = vsub.s32 %v998, %v1000
  %v1002 = vrot.slane %v988, %v1001
  %v1003 = vcombine.high %v995, %v995
  %v1004 = vcombine.high %v1002, %v1002
  %v1005 = vcombine.high %v205, %v205
  %v1007 = vunpack.c.l.s4 1983009808
  %v1008 = vunpack.c.0.s8 %v1007
  %v1009 = vlaneseq
  %v1010 = vshrl.u32 %v1009, 7
  %v1011 = vsub.s32 %v1008, %v1010
  %v1012 = vrot.slane %v205, %v1011
  %v1014 = vunpack.c.l.s4 1983009808
  %v1015 = vunpack.c.0.s8 %v1014
  %v1016 = vlaneseq
  %v1017 = vshrl.u32 %v1016, 7
  %v1018 = vsub.s32 %v1015, %v1017
  %v1019 = vrot.slane %v1005, %v1018
  %v1020 = vcombine.high %v1012, %v1012
  %v1021 = vcombine.high %v1019, %v1019
  %v1022 = vcombine.high %v206, %v206
  %v1024 = vunpack.c.l.s4 1983009808
  %v1025 = vunpack.c.0.s8 %v1024
  %v1026 = vlaneseq
  %v1027 = vshrl.u32 %v1026, 7
  %v1028 = vsub.s32 %v1025, %v1027
  %v1029 = vrot.slane %v206, %v1028
  %v1031 = vunpack.c.l.s4 1983009808
  %v1032 = vunpack.c.0.s8 %v1031
  %v1033 = vlaneseq
  %v1034 = vshrl.u32 %v1033, 7
  %v1035 = vsub.s32 %v1032, %v1034
  %v1036 = vrot.slane %v1022, %v1035
  %v1037 = vcombine.high %v1029, %v1029
  %v1038 = vcombine.high %v1036, %v1036
  %v1039 = vcombine.high %v207, %v207
  %v1041 = vunpack.c.l.s4 1983009808
  %v1042 = vunpack.c.0.s8 %v1041
  %v1043 = vlaneseq
  %v1044 = vshrl.u32 %v1043, 7
  %v1045 = vsub.s32 %v1042, %v1044
  %v1046 = vrot.slane %v207, %v1045
  %v1048 = vunpack.c.l.s4 1983009808
  %v1049 = vunpack.c.0.s8 %v1048
  %v1050 = vlaneseq
  %v1051 = vshrl.u32 %v1050, 7
  %v1052 = vsub.s32 %v1049, %v1051
  %v1053 = vrot.slane %v1039, %v1052
  %v1054 = vcombine.high %v1046, %v1046
  %v1055 = vcombine.high %v1053, %v1053
  %v1056 = vcombine.high %v208, %v208
  %v1058 = vunpack.c.l.s4 1983009808
  %v1059 = vunpack.c.0.s8 %v1058
  %v1060 = vlaneseq
  %v1061 = vshrl.u32 %v1060, 7
  %v1062 = vsub.s32 %v1059, %v1061
  %v1063 = vrot.slane %v208, %v1062
  %v1065 = vunpack.c.l.s4 1983009808
  %v1066 = vunpack.c.0.s8 %v1065
  %v1067 = vlaneseq
  %v1068 = vshrl.u32 %v1067, 7
  %v1069 = vsub.s32 %v1066, %v1068
  %v1070 = vrot.slane %v1056, %v1069
  %v1071 = vcombine.high %v1063, %v1063
  %v1072 = vcombine.high %v1070, %v1070
  %v1073 = vcombine.high %v209, %v209
  %v1075 = vunpack.c.l.s4 1983009808
  %v1076 = vunpack.c.0.s8 %v1075
  %v1077 = vlaneseq
  %v1078 = vshrl.u32 %v1077, 7
  %v1079 = vsub.s32 %v1076, %v1078
  %v1080 = vrot.slane %v209, %v1079
  %v1082 = vunpack.c.l.s4 1983009808
  %v1083 = vunpack.c.0.s8 %v1082
  %v1084 = vlaneseq
  %v1085 = vshrl.u32 %v1084, 7
  %v1086 = vsub.s32 %v1083, %v1085
  %v1087 = vrot.slane %v1073, %v1086
  %v1088 = vcombine.high %v1080, %v1080
  %v1089 = vcombine.high %v1087, %v1087
  %v1090 = vcombine.high %v210, %v210
  %v1092 = vunpack.c.l.s4 1983009808
  %v1093 = vunpack.c.0.s8 %v1092
  %v1094 = vlaneseq
  %v1095 = vshrl.u32 %v1094, 7
  %v1096 = vsub.s32 %v1093, %v1095
  %v1097 = vrot.slane %v210, %v1096
  %v1099 = vunpack.c.l.s4 1983009808
  %v1100 = vunpack.c.0.s8 %v1099
  %v1101 = vlaneseq
  %v1102 = vshrl.u32 %v1101, 7
  %v1103 = vsub.s32 %v1100, %v1102
  %v1104 = vrot.slane %v1090, %v1103
  %v1105 = vcombine.high %v1097, %v1097
  %v1106 = vcombine.high %v1104, %v1104
  %v1107 = vcombine.high %v211, %v211
  %v1109 = vunpack.c.l.s4 1983009808
  %v1110 = vunpack.c.0.s8 %v1109
  %v1111 = vlaneseq
  %v1112 = vshrl.u32 %v1111, 7
  %v1113 = vsub.s32 %v1110, %v1112
  %v1114 = vrot.slane %v211, %v1113
  %v1116 = vunpack.c.l.s4 1983009808
  %v1117 = vunpack.c.0.s8 %v1116
  %v1118 = vlaneseq
  %v1119 = vshrl.u32 %v1118, 7
  %v1120 = vsub.s32 %v1117, %v1119
  %v1121 = vrot.slane %v1107, %v1120
  %v1122 = vcombine.high %v1114, %v1114
  %v1123 = vcombine.high %v1121, %v1121
  %v1124 = vcombine.high %v212, %v212
  %v1126 = vunpack.c.l.s4 1983009808
  %v1127 = vunpack.c.0.s8 %v1126
  %v1128 = vlaneseq
  %v1129 = vshrl.u32 %v1128, 7
  %v1130 = vsub.s32 %v1127, %v1129
  %v1131 = vrot.slane %v212, %v1130
  %v1133 = vunpack.c.l.s4 1983009808
  %v1134 = vunpack.c.0.s8 %v1133
  %v1135 = vlaneseq
  %v1136 = vshrl.u32 %v1135, 7
  %v1137 = vsub.s32 %v1134, %v1136
  %v1138 = vrot.slane %v1124, %v1137
  %v1139 = vcombine.high %v1131, %v1131
  %v1140 = vcombine.high %v1138, %v1138
  %v1141 = vcombine.high %v213, %v213
  %v1143 = vunpack.c.l.s4 1983009808
  %v1144 = vunpack.c.0.s8 %v1143
  %v1145 = vlaneseq
  %v1146 = vshrl.u32 %v1145, 7
  %v1147 = vsub.s32 %v1144, %v1146
  %v1148 = vrot.slane %v213, %v1147
  %v1150 = vunpack.c.l.s4 1983009808
  %v1151 = vunpack.c.0.s8 %v1150
  %v1152 = vlaneseq
  %v1153 = vshrl.u32 %v1152, 7
  %v1154 = vsub.s32 %v1151, %v1153
  %v1155 = vrot.slane %v1141, %v1154
  %v1156 = vcombine.high %v1148, %v1148
  %v1157 = vcombine.high %v1155, %v1155
  %v1158 = vcombine.high %v214, %v214
  %v1160 = vunpack.c.l.s4 1983009808
  %v1161 = vunpack.c.0.s8 %v1160
  %v1162 = vlaneseq
  %v1163 = vshrl.u32 %v1162, 7
  %v1164 = vsub.s32 %v1161, %v1163
  %v1165 = vrot.slane %v214, %v1164
  %v1167 = vunpack.c.l.s4 1983009808
  %v1168 = vunpack.c.0.s8 %v1167
  %v1169 = vlaneseq
  %v1170 = vshrl.u32 %v1169, 7
  %v1171 = vsub.s32 %v1168, %v1170
  %v1172 = vrot.slane %v1158, %v1171
  %v1173 = vcombine.high %v1165, %v1165
  %v1174 = vcombine.high %v1172, %v1172
  %v1175 = vcombine.high %v215, %v215
  %v1177 = vunpack.c.l.s4 1983009808
  %v1178 = vunpack.c.0.s8 %v1177
  %v1179 = vlaneseq
  %v1180 = vshrl.u32 %v1179, 7
  %v1181 = vsub.s32 %v1178, %v1180
  %v1182 = vrot.slane %v215, %v1181
  %v1184 = vunpack.c.l.s4 1983009808
  %v1185 = vunpack.c.0.s8 %v1184
  %v1186 = vlaneseq
  %v1187 = vshrl.u32 %v1186, 7
  %v1188 = vsub.s32 %v1185, %v1187
  %v1189 = vrot.slane %v1175, %v1188
  %v1190 = vcombine.high %v1182, %v1182
  %v1191 = vcombine.high %v1189, %v1189
  %v1192 = vcombine.high %v216, %v216
  %v1194 = vunpack.c.l.s4 1983009808
  %v1195 = vunpack.c.0.s8 %v1194
  %v1196 = vlaneseq
  %v1197 = vshrl.u32 %v1196, 7
  %v1198 = vsub.s32 %v1195, %v1197
  %v1199 = vrot.slane %v216, %v1198
  %v1201 = vunpack.c.l.s4 1983009808
  %v1202 = vunpack.c.0.s8 %v1201
  %v1203 = vlaneseq
  %v1204 = vshrl.u32 %v1203, 7
  %v1205 = vsub.s32 %v1202, %v1204
  %v1206 = vrot.slane %v1192, %v1205
  %v1207 = vcombine.high %v1199, %v1199
  %v1208 = vcombine.high %v1206, %v1206
  %v1209 = vcombine.high %v217, %v217
  %v1211 = vunpack.c.l.s4 1983009808
  %v1212 = vunpack.c.0.s8 %v1211
  %v1213 = vlaneseq
  %v1214 = vshrl.u32 %v1213, 7
  %v1215 = vsub.s32 %v1212, %v1214
  %v1216 = vrot.slane %v217, %v1215
  %v1218 = vunpack.c.l.s4 1983009808
  %v1219 = vunpack.c.0.s8 %v1218
  %v1220 = vlaneseq
  %v1221 = vshrl.u32 %v1220, 7
  %v1222 = vsub.s32 %v1219, %v1221
  %v1223 = vrot.slane %v1209, %v1222
  %v1224 = vcombine.high %v1216, %v1216
  %v1225 = vcombine.high %v1223, %v1223
  %v1226 = vcombine.high %v218, %v218
  %v1228 = vunpack.c.l.s4 1983009808
  %v1229 = vunpack.c.0.s8 %v1228
  %v1230 = vlaneseq
  %v1231 = vshrl.u32 %v1230, 7
  %v1232 = vsub.s32 %v1229, %v1231
  %v1233 = vrot.slane %v218, %v1232
  %v1235 = vunpack.c.l.s4 1983009808
  %v1236 = vunpack.c.0.s8 %v1235
  %v1237 = vlaneseq
  %v1238 = vshrl.u32 %v1237, 7
  %v1239 = vsub.s32 %v1236, %v1238
  %v1240 = vrot.slane %v1226, %v1239
  %v1241 = vcombine.high %v1233, %v1233
  %v1242 = vcombine.high %v1240, %v1240
  %v1243 = vcombine.high %v219, %v219
  %v1245 = vunpack.c.l.s4 1983009808
  %v1246 = vunpack.c.0.s8 %v1245
  %v1247 = vlaneseq
  %v1248 = vshrl.u32 %v1247, 7
  %v1249 = vsub.s32 %v1246, %v1248
  %v1250 = vrot.slane %v219, %v1249
  %v1252 = vunpack.c.l.s4 1983009808
  %v1253 = vunpack.c.0.s8 %v1252
  %v1254 = vlaneseq
  %v1255 = vshrl.u32 %v1254, 7
  %v1256 = vsub.s32 %v1253, %v1255
  %v1257 = vrot.slane %v1243, %v1256
  %v1258 = vcombine.high %v1250, %v1250
  %v1259 = vcombine.high %v1257, %v1257
  %v1260 = vcombine.high %v220, %v220
  %v1262 = vunpack.c.l.s4 1983009808
  %v1263 = vunpack.c.0.s8 %v1262
  %v1264 = vlaneseq
  %v1265 = vshrl.u32 %v1264, 7
  %v1266 = vsub.s32 %v1263, %v1265
  %v1267 = vrot.slane %v220, %v1266
  %v1269 = vunpack.c.l.s4 1983009808
  %v1270 = vunpack.c.0.s8 %v1269
  %v1271 = vlaneseq
  %v1272 = vshrl.u32 %v1271, 7
  %v1273 = vsub.s32 %v1270, %v1272
  %v1274 = vrot.slane %v1260, %v1273
  %v1275 = vcombine.high %v1267, %v1267
  %v1276 = vcombine.high %v1274, %v1274
  %v1277 = vcombine.high %v221, %v221
  %v1279 = vunpack.c.l.s4 1983009808
  %v1280 = vunpack.c.0.s8 %v1279
  %v1281 = vlaneseq
  %v1282 = vshrl.u32 %v1281, 7
  %v1283 = vsub.s32 %v1280, %v1282
  %v1284 = vrot.slane %v221, %v1283
  %v1286 = vunpack.c.l.s4 1983009808
  %v1287 = vunpack.c.0.s8 %v1286
  %v1288 = vlaneseq
  %v1289 = vshrl.u32 %v1288, 7
  %v1290 = vsub.s32 %v1287, %v1289
  %v1291 = vrot.slane %v1277, %v1290
  %v1292 = vcombine.high %v1284, %v1284
  %v1293 = vcombine.high %v1291, %v1291
  %v1294 = vcombine.high %v222, %v222
  %v1296 = vunpack.c.l.s4 1983009808
  %v1297 = vunpack.c.0.s8 %v1296
  %v1298 = vlaneseq
  %v1299 = vshrl.u32 %v1298, 7
  %v1300 = vsub.s32 %v1297, %v1299
  %v1301 = vrot.slane %v222, %v1300
  %v1303 = vunpack.c.l.s4 1983009808
  %v1304 = vunpack.c.0.s8 %v1303
  %v1305 = vlaneseq
  %v1306 = vshrl.u32 %v1305, 7
  %v1307 = vsub.s32 %v1304, %v1306
  %v1308 = vrot.slane %v1294, %v1307
  %v1309 = vcombine.high %v1301, %v1301
  %v1310 = vcombine.high %v1308, %v1308
  %v1311 = vcombine.high %v223, %v223
  %v1313 = vunpack.c.l.s4 1983009808
  %v1314 = vunpack.c.0.s8 %v1313
  %v1315 = vlaneseq
  %v1316 = vshrl.u32 %v1315, 7
  %v1317 = vsub.s32 %v1314, %v1316
  %v1318 = vrot.slane %v223, %v1317
  %v1320 = vunpack.c.l.s4 1983009808
  %v1321 = vunpack.c.0.s8 %v1320
  %v1322 = vlaneseq
  %v1323 = vshrl.u32 %v1322, 7
  %v1324 = vsub.s32 %v1321, %v1323
  %v1325 = vrot.slane %v1311, %v1324
  %v1326 = vcombine.high %v1318, %v1318
  %v1327 = vcombine.high %v1325, %v1325
  %v1328 = vcombine.high %v224, %v224
  %v1330 = vunpack.c.l.s4 1983009808
  %v1331 = vunpack.c.0.s8 %v1330
  %v1332 = vlaneseq
  %v1333 = vshrl.u32 %v1332, 7
  %v1334 = vsub.s32 %v1331, %v1333
  %v1335 = vrot.slane %v224, %v1334
  %v1337 = vunpack.c.l.s4 1983009808
  %v1338 = vunpack.c.0.s8 %v1337
  %v1339 = vlaneseq
  %v1340 = vshrl.u32 %v1339, 7
  %v1341 = vsub.s32 %v1338, %v1340
  %v1342 = vrot.slane %v1328, %v1341
  %v1343 = vcombine.high %v1335, %v1335
  %v1344 = vcombine.high %v1342, %v1342
  %v1345 = vcombine.high %v225, %v225
  %v1347 = vunpack.c.l.s4 1983009808
  %v1348 = vunpack.c.0.s8 %v1347
  %v1349 = vlaneseq
  %v1350 = vshrl.u32 %v1349, 7
  %v1351 = vsub.s32 %v1348, %v1350
  %v1352 = vrot.slane %v225, %v1351
  %v1354 = vunpack.c.l.s4 1983009808
  %v1355 = vunpack.c.0.s8 %v1354
  %v1356 = vlaneseq
  %v1357 = vshrl.u32 %v1356, 7
  %v1358 = vsub.s32 %v1355, %v1357
  %v1359 = vrot.slane %v1345, %v1358
  %v1360 = vcombine.high %v1352, %v1352
  %v1361 = vcombine.high %v1359, %v1359
  %v1362 = vcombine.high %v226, %v226
  %v1364 = vunpack.c.l.s4 1983009808
  %v1365 = vunpack.c.0.s8 %v1364
  %v1366 = vlaneseq
  %v1367 = vshrl.u32 %v1366, 7
  %v1368 = vsub.s32 %v1365, %v1367
  %v1369 = vrot.slane %v226, %v1368
  %v1371 = vunpack.c.l.s4 1983009808
  %v1372 = vunpack.c.0.s8 %v1371
  %v1373 = vlaneseq
  %v1374 = vshrl.u32 %v1373, 7
  %v1375 = vsub.s32 %v1372, %v1374
  %v1376 = vrot.slane %v1362, %v1375
  %v1377 = vcombine.high %v1369, %v1369
  %v1378 = vcombine.high %v1376, %v1376
  %v1379 = vlaneseq
  %v1380 = vshrl.u32 %v1379, 7
  %v1381 = vsub.s32 0, %v1380
  %v1382 = vrot.slane %v298, %v1381
  %v1383 = vlaneseq
  %v1384 = vshrl.u32 %v1383, 7
  %v1385 = vsub.s32 0, %v1384
  %v1386 = vrot.slane %v306, %v1385
  %v1387 = vlaneseq
  %v1388 = vshrl.u32 %v1387, 7
  %v1389 = vsub.s32 0, %v1388
  %v1390 = vrot.slane %v305, %v1389
  %v1391 = vlaneseq
  %v1392 = vshrl.u32 %v1391, 7
  %v1393 = vsub.s32 0, %v1392
  %v1394 = vrot.slane %v307, %v1393
  %v1395 = vlaneseq
  %v1396 = vshrl.u32 %v1395, 7
  %v1397 = vsub.s32 0, %v1396
  %v1398 = vrot.slane %v315, %v1397
  %v1399 = vlaneseq
  %v1400 = vshrl.u32 %v1399, 7
  %v1401 = vsub.s32 0, %v1400
  %v1402 = vrot.slane %v323, %v1401
  %v1403 = vlaneseq
  %v1404 = vshrl.u32 %v1403, 7
  %v1405 = vsub.s32 0, %v1404
  %v1406 = vrot.slane %v322, %v1405
  %v1407 = vlaneseq
  %v1408 = vshrl.u32 %v1407, 7
  %v1409 = vsub.s32 0, %v1408
  %v1410 = vrot.slane %v324, %v1409
  %v1411 = vlaneseq
  %v1412 = vshrl.u32 %v1411, 7
  %v1413 = vsub.s32 0, %v1412
  %v1414 = vrot.slane %v366, %v1413
  %v1415 = vlaneseq
  %v1416 = vshrl.u32 %v1415, 7
  %v1417 = vsub.s32 0, %v1416
  %v1418 = vrot.slane %v374, %v1417
  %v1419 = vlaneseq
  %v1420 = vshrl.u32 %v1419, 7
  %v1421 = vsub.s32 0, %v1420
  %v1422 = vrot.slane %v373, %v1421
  %v1423 = vlaneseq
  %v1424 = vshrl.u32 %v1423, 7
  %v1425 = vsub.s32 0, %v1424
  %v1426 = vrot.slane %v375, %v1425
  %v1427 = vlaneseq
  %v1428 = vshrl.u32 %v1427, 7
  %v1429 = vsub.s32 0, %v1428
  %v1430 = vrot.slane %v383, %v1429
  %v1431 = vlaneseq
  %v1432 = vshrl.u32 %v1431, 7
  %v1433 = vsub.s32 0, %v1432
  %v1434 = vrot.slane %v391, %v1433
  %v1435 = vlaneseq
  %v1436 = vshrl.u32 %v1435, 7
  %v1437 = vsub.s32 0, %v1436
  %v1438 = vrot.slane %v390, %v1437
  %v1439 = vlaneseq
  %v1440 = vshrl.u32 %v1439, 7
  %v1441 = vsub.s32 0, %v1440
  %v1442 = vrot.slane %v392, %v1441
  %v1443 = vlaneseq
  %v1444 = vshrl.u32 %v1443, 7
  %v1445 = vsub.s32 0, %v1444
  %v1446 = vrot.slane %v434, %v1445
  %v1447 = vlaneseq
  %v1448 = vshrl.u32 %v1447, 7
  %v1449 = vsub.s32 0, %v1448
  %v1450 = vrot.slane %v442, %v1449
  %v1451 = vlaneseq
  %v1452 = vshrl.u32 %v1451, 7
  %v1453 = vsub.s32 0, %v1452
  %v1454 = vrot.slane %v441, %v1453
  %v1455 = vlaneseq
  %v1456 = vshrl.u32 %v1455, 7
  %v1457 = vsub.s32 0, %v1456
  %v1458 = vrot.slane %v443, %v1457
  %v1459 = vlaneseq
  %v1460 = vshrl.u32 %v1459, 7
  %v1461 = vsub.s32 0, %v1460
  %v1462 = vrot.slane %v451, %v1461
  %v1463 = vlaneseq
  %v1464 = vshrl.u32 %v1463, 7
  %v1465 = vsub.s32 0, %v1464
  %v1466 = vrot.slane %v459, %v1465
  %v1467 = vlaneseq
  %v1468 = vshrl.u32 %v1467, 7
  %v1469 = vsub.s32 0, %v1468
  %v1470 = vrot.slane %v458, %v1469
  %v1471 = vlaneseq
  %v1472 = vshrl.u32 %v1471, 7
  %v1473 = vsub.s32 0, %v1472
  %v1474 = vrot.slane %v460, %v1473
  %v1475 = vlaneseq
  %v1476 = vshrl.u32 %v1475, 7
  %v1477 = vsub.s32 0, %v1476
  %v1478 = vrot.slane %v502, %v1477
  %v1479 = vlaneseq
  %v1480 = vshrl.u32 %v1479, 7
  %v1481 = vsub.s32 0, %v1480
  %v1482 = vrot.slane %v510, %v1481
  %v1483 = vlaneseq
  %v1484 = vshrl.u32 %v1483, 7
  %v1485 = vsub.s32 0, %v1484
  %v1486 = vrot.slane %v509, %v1485
  %v1487 = vlaneseq
  %v1488 = vshrl.u32 %v1487, 7
  %v1489 = vsub.s32 0, %v1488
  %v1490 = vrot.slane %v511, %v1489
  %v1491 = vlaneseq
  %v1492 = vshrl.u32 %v1491, 7
  %v1493 = vsub.s32 0, %v1492
  %v1494 = vrot.slane %v519, %v1493
  %v1495 = vlaneseq
  %v1496 = vshrl.u32 %v1495, 7
  %v1497 = vsub.s32 0, %v1496
  %v1498 = vrot.slane %v527, %v1497
  %v1499 = vlaneseq
  %v1500 = vshrl.u32 %v1499, 7
  %v1501 = vsub.s32 0, %v1500
  %v1502 = vrot.slane %v526, %v1501
  %v1503 = vlaneseq
  %v1504 = vshrl.u32 %v1503, 7
  %v1505 = vsub.s32 0, %v1504
  %v1506 = vrot.slane %v528, %v1505
  %v1507 = vlaneseq
  %v1508 = vshrl.u32 %v1507, 7
  %v1509 = vsub.s32 0, %v1508
  %v1510 = vrot.slane %v570, %v1509
  %v1511 = vlaneseq
  %v1512 = vshrl.u32 %v1511, 7
  %v1513 = vsub.s32 0, %v1512
  %v1514 = vrot.slane %v578, %v1513
  %v1515 = vlaneseq
  %v1516 = vshrl.u32 %v1515, 7
  %v1517 = vsub.s32 0, %v1516
  %v1518 = vrot.slane %v577, %v1517
  %v1519 = vlaneseq
  %v1520 = vshrl.u32 %v1519, 7
  %v1521 = vsub.s32 0, %v1520
  %v1522 = vrot.slane %v579, %v1521
  %v1523 = vlaneseq
  %v1524 = vshrl.u32 %v1523, 7
  %v1525 = vsub.s32 0, %v1524
  %v1526 = vrot.slane %v587, %v1525
  %v1527 = vlaneseq
  %v1528 = vshrl.u32 %v1527, 7
  %v1529 = vsub.s32 0, %v1528
  %v1530 = vrot.slane %v595, %v1529
  %v1531 = vlaneseq
  %v1532 = vshrl.u32 %v1531, 7
  %v1533 = vsub.s32 0, %v1532
  %v1534 = vrot.slane %v594, %v1533
  %v1535 = vlaneseq
  %v1536 = vshrl.u32 %v1535, 7
  %v1537 = vsub.s32 0, %v1536
  %v1538 = vrot.slane %v596, %v1537
  %v1539 = vlaneseq
  %v1540 = vshrl.u32 %v1539, 7
  %v1541 = vsub.s32 0, %v1540
  %v1542 = vrot.slane %v638, %v1541
  %v1543 = vlaneseq
  %v1544 = vshrl.u32 %v1543, 7
  %v1545 = vsub.s32 0, %v1544
  %v1546 = vrot.slane %v646, %v1545
  %v1547 = vlaneseq
  %v1548 = vshrl.u32 %v1547, 7
  %v1549 = vsub.s32 0, %v1548
  %v1550 = vrot.slane %v645, %v1549
  %v1551 = vlaneseq
  %v1552 = vshrl.u32 %v1551, 7
  %v1553 = vsub.s32 0, %v1552
  %v1554 = vrot.slane %v647, %v1553
  %v1555 = vlaneseq
  %v1556 = vshrl.u32 %v1555, 7
  %v1557 = vsub.s32 0, %v1556
  %v1558 = vrot.slane %v655, %v1557
  %v1559 = vlaneseq
  %v1560 = vshrl.u32 %v1559, 7
  %v1561 = vsub.s32 0, %v1560
  %v1562 = vrot.slane %v663, %v1561
  %v1563 = vlaneseq
  %v1564 = vshrl.u32 %v1563, 7
  %v1565 = vsub.s32 0, %v1564
  %v1566 = vrot.slane %v662, %v1565
  %v1567 = vlaneseq
  %v1568 = vshrl.u32 %v1567, 7
  %v1569 = vsub.s32 0, %v1568
  %v1570 = vrot.slane %v664, %v1569
  %v1571 = vlaneseq
  %v1572 = vshrl.u32 %v1571, 7
  %v1573 = vsub.s32 0, %v1572
  %v1574 = vrot.slane %v706, %v1573
  %v1575 = vlaneseq
  %v1576 = vshrl.u32 %v1575, 7
  %v1577 = vsub.s32 0, %v1576
  %v1578 = vrot.slane %v714, %v1577
  %v1579 = vlaneseq
  %v1580 = vshrl.u32 %v1579, 7
  %v1581 = vsub.s32 0, %v1580
  %v1582 = vrot.slane %v713, %v1581
  %v1583 = vlaneseq
  %v1584 = vshrl.u32 %v1583, 7
  %v1585 = vsub.s32 0, %v1584
  %v1586 = vrot.slane %v715, %v1585
  %v1587 = vlaneseq
  %v1588 = vshrl.u32 %v1587, 7
  %v1589 = vsub.s32 0, %v1588
  %v1590 = vrot.slane %v723, %v1589
  %v1591 = vlaneseq
  %v1592 = vshrl.u32 %v1591, 7
  %v1593 = vsub.s32 0, %v1592
  %v1594 = vrot.slane %v731, %v1593
  %v1595 = vlaneseq
  %v1596 = vshrl.u32 %v1595, 7
  %v1597 = vsub.s32 0, %v1596
  %v1598 = vrot.slane %v730, %v1597
  %v1599 = vlaneseq
  %v1600 = vshrl.u32 %v1599, 7
  %v1601 = vsub.s32 0, %v1600
  %v1602 = vrot.slane %v732, %v1601
  %v1603 = vlaneseq
  %v1604 = vshrl.u32 %v1603, 7
  %v1605 = vsub.s32 0, %v1604
  %v1606 = vrot.slane %v774, %v1605
  %v1607 = vlaneseq
  %v1608 = vshrl.u32 %v1607, 7
  %v1609 = vsub.s32 0, %v1608
  %v1610 = vrot.slane %v782, %v1609
  %v1611 = vlaneseq
  %v1612 = vshrl.u32 %v1611, 7
  %v1613 = vsub.s32 0, %v1612
  %v1614 = vrot.slane %v781, %v1613
  %v1615 = vlaneseq
  %v1616 = vshrl.u32 %v1615, 7
  %v1617 = vsub.s32 0, %v1616
  %v1618 = vrot.slane %v783, %v1617
  %v1619 = vlaneseq
  %v1620 = vshrl.u32 %v1619, 7
  %v1621 = vsub.s32 0, %v1620
  %v1622 = vrot.slane %v791, %v1621
  %v1623 = vlaneseq
  %v1624 = vshrl.u32 %v1623, 7
  %v1625 = vsub.s32 0, %v1624
  %v1626 = vrot.slane %v799, %v1625
  %v1627 = vlaneseq
  %v1628 = vshrl.u32 %v1627, 7
  %v1629 = vsub.s32 0, %v1628
  %v1630 = vrot.slane %v798, %v1629
  %v1631 = vlaneseq
  %v1632 = vshrl.u32 %v1631, 7
  %v1633 = vsub.s32 0, %v1632
  %v1634 = vrot.slane %v800, %v1633
  %v1635 = vlaneseq
  %v1636 = vshrl.u32 %v1635, 7
  %v1637 = vsub.s32 0, %v1636
  %v1638 = vrot.slane %v842, %v1637
  %v1639 = vlaneseq
  %v1640 = vshrl.u32 %v1639, 7
  %v1641 = vsub.s32 0, %v1640
  %v1642 = vrot.slane %v850, %v1641
  %v1643 = vlaneseq
  %v1644 = vshrl.u32 %v1643, 7
  %v1645 = vsub.s32 0, %v1644
  %v1646 = vrot.slane %v849, %v1645
  %v1647 = vlaneseq
  %v1648 = vshrl.u32 %v1647, 7
  %v1649 = vsub.s32 0, %v1648
  %v1650 = vrot.slane %v851, %v1649
  %v1651 = vlaneseq
  %v1652 = vshrl.u32 %v1651, 7
  %v1653 = vsub.s32 0, %v1652
  %v1654 = vrot.slane %v859, %v1653
  %v1655 = vlaneseq
  %v1656 = vshrl.u32 %v1655, 7
  %v1657 = vsub.s32 0, %v1656
  %v1658 = vrot.slane %v867, %v1657
  %v1659 = vlaneseq
  %v1660 = vshrl.u32 %v1659, 7
  %v1661 = vsub.s32 0, %v1660
  %v1662 = vrot.slane %v866, %v1661
  %v1663 = vlaneseq
  %v1664 = vshrl.u32 %v1663, 7
  %v1665 = vsub.s32 0, %v1664
  %v1666 = vrot.slane %v868, %v1665
  %v1667 = vlaneseq
  %v1668 = vshrl.u32 %v1667, 7
  %v1669 = vsub.s32 0, %v1668
  %v1670 = vrot.slane %v910, %v1669
  %v1671 = vlaneseq
  %v1672 = vshrl.u32 %v1671, 7
  %v1673 = vsub.s32 0, %v1672
  %v1674 = vrot.slane %v918, %v1673
  %v1675 = vlaneseq
  %v1676 = vshrl.u32 %v1675, 7
  %v1677 = vsub.s32 0, %v1676
  %v1678 = vrot.slane %v917, %v1677
  %v1679 = vlaneseq
  %v1680 = vshrl.u32 %v1679, 7
  %v1681 = vsub.s32 0, %v1680
  %v1682 = vrot.slane %v919, %v1681
  %v1683 = vlaneseq
  %v1684 = vshrl.u32 %v1683, 7
  %v1685 = vsub.s32 0, %v1684
  %v1686 = vrot.slane %v927, %v1685
  %v1687 = vlaneseq
  %v1688 = vshrl.u32 %v1687, 7
  %v1689 = vsub.s32 0, %v1688
  %v1690 = vrot.slane %v935, %v1689
  %v1691 = vlaneseq
  %v1692 = vshrl.u32 %v1691, 7
  %v1693 = vsub.s32 0, %v1692
  %v1694 = vrot.slane %v934, %v1693
  %v1695 = vlaneseq
  %v1696 = vshrl.u32 %v1695, 7
  %v1697 = vsub.s32 0, %v1696
  %v1698 = vrot.slane %v936, %v1697
  %v1699 = vlaneseq
  %v1700 = vshrl.u32 %v1699, 7
  %v1701 = vsub.s32 0, %v1700
  %v1702 = vrot.slane %v978, %v1701
  %v1703 = vlaneseq
  %v1704 = vshrl.u32 %v1703, 7
  %v1705 = vsub.s32 0, %v1704
  %v1706 = vrot.slane %v986, %v1705
  %v1707 = vlaneseq
  %v1708 = vshrl.u32 %v1707, 7
  %v1709 = vsub.s32 0, %v1708
  %v1710 = vrot.slane %v985, %v1709
  %v1711 = vlaneseq
  %v1712 = vshrl.u32 %v1711, 7
  %v1713 = vsub.s32 0, %v1712
  %v1714 = vrot.slane %v987, %v1713
  %v1715 = vlaneseq
  %v1716 = vshrl.u32 %v1715, 7
  %v1717 = vsub.s32 0, %v1716
  %v1718 = vrot.slane %v995, %v1717
  %v1719 = vlaneseq
  %v1720 = vshrl.u32 %v1719, 7
  %v1721 = vsub.s32 0, %v1720
  %v1722 = vrot.slane %v1003, %v1721
  %v1723 = vlaneseq
  %v1724 = vshrl.u32 %v1723, 7
  %v1725 = vsub.s32 0, %v1724
  %v1726 = vrot.slane %v1002, %v1725
  %v1727 = vlaneseq
  %v1728 = vshrl.u32 %v1727, 7
  %v1729 = vsub.s32 0, %v1728
  %v1730 = vrot.slane %v1004, %v1729
  %v1731 = vlaneseq
  %v1732 = vshrl.u32 %v1731, 7
  %v1733 = vsub.s32 0, %v1732
  %v1734 = vrot.slane %v1046, %v1733
  %v1735 = vlaneseq
  %v1736 = vshrl.u32 %v1735, 7
  %v1737 = vsub.s32 0, %v1736
  %v1738 = vrot.slane %v1054, %v1737
  %v1739 = vlaneseq
  %v1740 = vshrl.u32 %v1739, 7
  %v1741 = vsub.s32 0, %v1740
  %v1742 = vrot.slane %v1053, %v1741
  %v1743 = vlaneseq
  %v1744 = vshrl.u32 %v1743, 7
  %v1745 = vsub.s32 0, %v1744
  %v1746 = vrot.slane %v1055, %v1745
  %v1747 = vlaneseq
  %v1748 = vshrl.u32 %v1747, 7
  %v1749 = vsub.s32 0, %v1748
  %v1750 = vrot.slane %v1063, %v1749
  %v1751 = vlaneseq
  %v1752 = vshrl.u32 %v1751, 7
  %v1753 = vsub.s32 0, %v1752
  %v1754 = vrot.slane %v1071, %v1753
  %v1755 = vlaneseq
  %v1756 = vshrl.u32 %v1755, 7
  %v1757 = vsub.s32 0, %v1756
  %v1758 = vrot.slane %v1070, %v1757
  %v1759 = vlaneseq
  %v1760 = vshrl.u32 %v1759, 7
  %v1761 = vsub.s32 0, %v1760
  %v1762 = vrot.slane %v1072, %v1761
  %v1763 = vlaneseq
  %v1764 = vshrl.u32 %v1763, 7
  %v1765 = vsub.s32 0, %v1764
  %v1766 = vrot.slane %v1114, %v1765
  %v1767 = vlaneseq
  %v1768 = vshrl.u32 %v1767, 7
  %v1769 = vsub.s32 0, %v1768
  %v1770 = vrot.slane %v1122, %v1769
  %v1771 = vlaneseq
  %v1772 = vshrl.u32 %v1771, 7
  %v1773 = vsub.s32 0, %v1772
  %v1774 = vrot.slane %v1121, %v1773
  %v1775 = vlaneseq
  %v1776 = vshrl.u32 %v1775, 7
  %v1777 = vsub.s32 0, %v1776
  %v1778 = vrot.slane %v1123, %v1777
  %v1779 = vlaneseq
  %v1780 = vshrl.u32 %v1779, 7
  %v1781 = vsub.s32 0, %v1780
  %v1782 = vrot.slane %v1131, %v1781
  %v1783 = vlaneseq
  %v1784 = vshrl.u32 %v1783, 7
  %v1785 = vsub.s32 0, %v1784
  %v1786 = vrot.slane %v1139, %v1785
  %v1787 = vlaneseq
  %v1788 = vshrl.u32 %v1787, 7
  %v1789 = vsub.s32 0, %v1788
  %v1790 = vrot.slane %v1138, %v1789
  %v1791 = vlaneseq
  %v1792 = vshrl.u32 %v1791, 7
  %v1793 = vsub.s32 0, %v1792
  %v1794 = vrot.slane %v1140, %v1793
  %v1795 = vlaneseq
  %v1796 = vshrl.u32 %v1795, 7
  %v1797 = vsub.s32 0, %v1796
  %v1798 = vrot.slane %v1182, %v1797
  %v1799 = vlaneseq
  %v1800 = vshrl.u32 %v1799, 7
  %v1801 = vsub.s32 0, %v1800
  %v1802 = vrot.slane %v1190, %v1801
  %v1803 = vlaneseq
  %v1804 = vshrl.u32 %v1803, 7
  %v1805 = vsub.s32 0, %v1804
  %v1806 = vrot.slane %v1189, %v1805
  %v1807 = vlaneseq
  %v1808 = vshrl.u32 %v1807, 7
  %v1809 = vsub.s32 0, %v1808
  %v1810 = vrot.slane %v1191, %v1809
  %v1811 = vlaneseq
  %v1812 = vshrl.u32 %v1811, 7
  %v1813 = vsub.s32 0, %v1812
  %v1814 = vrot.slane %v1199, %v1813
  %v1815 = vlaneseq
  %v1816 = vshrl.u32 %v1815, 7
  %v1817 = vsub.s32 0, %v1816
  %v1818 = vrot.slane %v1207, %v1817
  %v1819 = vlaneseq
  %v1820 = vshrl.u32 %v1819, 7
  %v1821 = vsub.s32 0, %v1820
  %v1822 = vrot.slane %v1206, %v1821
  %v1823 = vlaneseq
  %v1824 = vshrl.u32 %v1823, 7
  %v1825 = vsub.s32 0, %v1824
  %v1826 = vrot.slane %v1208, %v1825
  %v1827 = vlaneseq
  %v1828 = vshrl.u32 %v1827, 7
  %v1829 = vsub.s32 0, %v1828
  %v1830 = vrot.slane %v1250, %v1829
  %v1831 = vlaneseq
  %v1832 = vshrl.u32 %v1831, 7
  %v1833 = vsub.s32 0, %v1832
  %v1834 = vrot.slane %v1258, %v1833
  %v1835 = vlaneseq
  %v1836 = vshrl.u32 %v1835, 7
  %v1837 = vsub.s32 0, %v1836
  %v1838 = vrot.slane %v1257, %v1837
  %v1839 = vlaneseq
  %v1840 = vshrl.u32 %v1839, 7
  %v1841 = vsub.s32 0, %v1840
  %v1842 = vrot.slane %v1259, %v1841
  %v1843 = vlaneseq
  %v1844 = vshrl.u32 %v1843, 7
  %v1845 = vsub.s32 0, %v1844
  %v1846 = vrot.slane %v1267, %v1845
  %v1847 = vlaneseq
  %v1848 = vshrl.u32 %v1847, 7
  %v1849 = vsub.s32 0, %v1848
  %v1850 = vrot.slane %v1275, %v1849
  %v1851 = vlaneseq
  %v1852 = vshrl.u32 %v1851, 7
  %v1853 = vsub.s32 0, %v1852
  %v1854 = vrot.slane %v1274, %v1853
  %v1855 = vlaneseq
  %v1856 = vshrl.u32 %v1855, 7
  %v1857 = vsub.s32 0, %v1856
  %v1858 = vrot.slane %v1276, %v1857
  %v1859 = vlaneseq
  %v1860 = vshrl.u32 %v1859, 7
  %v1861 = vsub.s32 0, %v1860
  %v1862 = vrot.slane %v1318, %v1861
  %v1863 = vlaneseq
  %v1864 = vshrl.u32 %v1863, 7
  %v1865 = vsub.s32 0, %v1864
  %v1866 = vrot.slane %v1326, %v1865
  %v1867 = vlaneseq
  %v1868 = vshrl.u32 %v1867, 7
  %v1869 = vsub.s32 0, %v1868
  %v1870 = vrot.slane %v1325, %v1869
  %v1871 = vlaneseq
  %v1872 = vshrl.u32 %v1871, 7
  %v1873 = vsub.s32 0, %v1872
  %v1874 = vrot.slane %v1327, %v1873
  %v1875 = vlaneseq
  %v1876 = vshrl.u32 %v1875, 7
  %v1877 = vsub.s32 0, %v1876
  %v1878 = vrot.slane %v1335, %v1877
  %v1879 = vlaneseq
  %v1880 = vshrl.u32 %v1879, 7
  %v1881 = vsub.s32 0, %v1880
  %v1882 = vrot.slane %v1343, %v1881
  %v1883 = vlaneseq
  %v1884 = vshrl.u32 %v1883, 7
  %v1885 = vsub.s32 0, %v1884
  %v1886 = vrot.slane %v1342, %v1885
  %v1887 = vlaneseq
  %v1888 = vshrl.u32 %v1887, 7
  %v1889 = vsub.s32 0, %v1888
  %v1890 = vrot.slane %v1344, %v1889
  %vm1891 = vcmask 1041409
  %v1892 = vsel %vm1891, %v1386, %v1382
  %vm1893 = vcmask 1042434
  %v1894 = vsel %vm1893, %v1390, %v1892
  %vm1895 = vcmask 1043459
  %v1896 = vsel %vm1895, %v1394, %v1894
  %vm1897 = vcmask 1044484
  %v1898 = vsel %vm1897, %v1398, %v1896
  %vm1899 = vcmask 1045509
  %v1900 = vsel %vm1899, %v1402, %v1898
  %vm1901 = vcmask 1046534
  %v1902 = vsel %vm1901, %v1406, %v1900
  %vm1903 = vcmask 1047559
  %v1904 = vsel %vm1903, %v1410, %v1902
  %v1905 = vsel %vm1891, %v1418, %v1414
  %v1906 = vsel %vm1893, %v1422, %v1905
  %v1907 = vsel %vm1895, %v1426, %v1906
  %v1908 = vsel %vm1897, %v1430, %v1907
  %v1909 = vsel %vm1899, %v1434, %v1908
  %v1910 = vsel %vm1901, %v1438, %v1909
  %v1911 = vsel %vm1903, %v1442, %v1910
  %v1912 = vsel %vm1891, %v1450, %v1446
  %v1913 = vsel %vm1893, %v1454, %v1912
  %v1914 = vsel %vm1895, %v1458, %v1913
  %v1915 = vsel %vm1897, %v1462, %v1914
  %v1916 = vsel %vm1899, %v1466, %v1915
  %v1917 = vsel %vm1901, %v1470, %v1916
  %v1918 = vsel %vm1903, %v1474, %v1917
  %v1919 = vsel %vm1891, %v1482, %v1478
  %v1920 = vsel %vm1893, %v1486, %v1919
  %v1921 = vsel %vm1895, %v1490, %v1920
  %v1922 = vsel %vm1897, %v1494, %v1921
  %v1923 = vsel %vm1899, %v1498, %v1922
  %v1924 = vsel %vm1901, %v1502, %v1923
  %v1925 = vsel %vm1903, %v1506, %v1924
  %v1926 = vsel %vm1891, %v1514, %v1510
  %v1927 = vsel %vm1893, %v1518, %v1926
  %v1928 = vsel %vm1895, %v1522, %v1927
  %v1929 = vsel %vm1897, %v1526, %v1928
  %v1930 = vsel %vm1899, %v1530, %v1929
  %v1931 = vsel %vm1901, %v1534, %v1930
  %v1932 = vsel %vm1903, %v1538, %v1931
  %v1933 = vsel %vm1891, %v1546, %v1542
  %v1934 = vsel %vm1893, %v1550, %v1933
  %v1935 = vsel %vm1895, %v1554, %v1934
  %v1936 = vsel %vm1897, %v1558, %v1935
  %v1937 = vsel %vm1899, %v1562, %v1936
  %v1938 = vsel %vm1901, %v1566, %v1937
  %v1939 = vsel %vm1903, %v1570, %v1938
  %v1940 = vsel %vm1891, %v1578, %v1574
  %v1941 = vsel %vm1893, %v1582, %v1940
  %v1942 = vsel %vm1895, %v1586, %v1941
  %v1943 = vsel %vm1897, %v1590, %v1942
  %v1944 = vsel %vm1899, %v1594, %v1943
  %v1945 = vsel %vm1901, %v1598, %v1944
  %v1946 = vsel %vm1903, %v1602, %v1945
  %v1947 = vsel %vm1891, %v1610, %v1606
  %v1948 = vsel %vm1893, %v1614, %v1947
  %v1949 = vsel %vm1895, %v1618, %v1948
  %v1950 = vsel %vm1897, %v1622, %v1949
  %v1951 = vsel %vm1899, %v1626, %v1950
  %v1952 = vsel %vm1901, %v1630, %v1951
  %v1953 = vsel %vm1903, %v1634, %v1952
  %v1954 = vsel %vm1891, %v1642, %v1638
  %v1955 = vsel %vm1893, %v1646, %v1954
  %v1956 = vsel %vm1895, %v1650, %v1955
  %v1957 = vsel %vm1897, %v1654, %v1956
  %v1958 = vsel %vm1899, %v1658, %v1957
  %v1959 = vsel %vm1901, %v1662, %v1958
  %v1960 = vsel %vm1903, %v1666, %v1959
  %v1961 = vsel %vm1891, %v1674, %v1670
  %v1962 = vsel %vm1893, %v1678, %v1961
  %v1963 = vsel %vm1895, %v1682, %v1962
  %v1964 = vsel %vm1897, %v1686, %v1963
  %v1965 = vsel %vm1899, %v1690, %v1964
  %v1966 = vsel %vm1901, %v1694, %v1965
  %v1967 = vsel %vm1903, %v1698, %v1966
  %v1968 = vsel %vm1891, %v1706, %v1702
  %v1969 = vsel %vm1893, %v1710, %v1968
  %v1970 = vsel %vm1895, %v1714, %v1969
  %v1971 = vsel %vm1897, %v1718, %v1970
  %v1972 = vsel %vm1899, %v1722, %v1971
  %v1973 = vsel %vm1901, %v1726, %v1972
  %v1974 = vsel %vm1903, %v1730, %v1973
  %v1975 = vsel %vm1891, %v1738, %v1734
  %v1976 = vsel %vm1893, %v1742, %v1975
  %v1977 = vsel %vm1895, %v1746, %v1976
  %v1978 = vsel %vm1897, %v1750, %v1977
  %v1979 = vsel %vm1899, %v1754, %v1978
  %v1980 = vsel %vm1901, %v1758, %v1979
  %v1981 = vsel %vm1903, %v1762, %v1980
  %v1982 = vsel %vm1891, %v1770, %v1766
  %v1983 = vsel %vm1893, %v1774, %v1982
  %v1984 = vsel %vm1895, %v1778, %v1983
  %v1985 = vsel %vm1897, %v1782, %v1984
  %v1986 = vsel %vm1899, %v1786, %v1985
  %v1987 = vsel %vm1901, %v1790, %v1986
  %v1988 = vsel %vm1903, %v1794, %v1987
  %v1989 = vsel %vm1891, %v1802, %v1798
  %v1990 = vsel %vm1893, %v1806, %v1989
  %v1991 = vsel %vm1895, %v1810, %v1990
  %v1992 = vsel %vm1897, %v1814, %v1991
  %v1993 = vsel %vm1899, %v1818, %v1992
  %v1994 = vsel %vm1901, %v1822, %v1993
  %v1995 = vsel %vm1903, %v1826, %v1994
  %v1996 = vsel %vm1891, %v1834, %v1830
  %v1997 = vsel %vm1893, %v1838, %v1996
  %v1998 = vsel %vm1895, %v1842, %v1997
  %v1999 = vsel %vm1897, %v1846, %v1998
  %v2000 = vsel %vm1899, %v1850, %v1999
  %v2001 = vsel %vm1901, %v1854, %v2000
  %v2002 = vsel %vm1903, %v1858, %v2001
  %v2003 = vsel %vm1891, %v1866, %v1862
  %v2004 = vsel %vm1893, %v1870, %v2003
  %v2005 = vsel %vm1895, %v1874, %v2004
  %v2006 = vsel %vm1897, %v1878, %v2005
  %v2007 = vsel %vm1899, %v1882, %v2006
  %v2008 = vsel %vm1901, %v1886, %v2007
  %v2009 = vsel %vm1903, %v1890, %v2008
  %2010 = vrot.lane.b32.xlu0 %v1904, 4
  %v2011 = vpop.permute.xlu0 %2010
  %2012 = vrot.lane.b32.xlu0 %v1911, 4
  %v2013 = vpop.permute.xlu0 %2012
  %2014 = vrot.lane.b32.xlu0 %v1918, 4
  %v2015 = vpop.permute.xlu0 %2014
  %2016 = vrot.lane.b32.xlu0 %v1925, 4
  %v2017 = vpop.permute.xlu0 %2016
  %2018 = vrot.lane.b32.xlu0 %v1932, 4
  %v2019 = vpop.permute.xlu0 %2018
  %2020 = vrot.lane.b32.xlu0 %v1939, 4
  %v2021 = vpop.permute.xlu0 %2020
  %2022 = vrot.lane.b32.xlu0 %v1946, 4
  %v2023 = vpop.permute.xlu0 %2022
  %2024 = vrot.lane.b32.xlu0 %v1953, 4
  %v2025 = vpop.permute.xlu0 %2024
  %2026 = vrot.lane.b32.xlu0 %v1960, 4
  %v2027 = vpop.permute.xlu0 %2026
  %2028 = vrot.lane.b32.xlu0 %v1967, 4
  %v2029 = vpop.permute.xlu0 %2028
  %2030 = vrot.lane.b32.xlu0 %v1974, 4
  %v2031 = vpop.permute.xlu0 %2030
  %2032 = vrot.lane.b32.xlu0 %v1981, 4
  %v2033 = vpop.permute.xlu0 %2032
  %2034 = vrot.lane.b32.xlu0 %v1988, 4
  %v2035 = vpop.permute.xlu0 %2034
  %2036 = vrot.lane.b32.xlu0 %v1995, 4
  %v2037 = vpop.permute.xlu0 %2036
  %2038 = vrot.lane.b32.xlu0 %v2002, 4
  %v2039 = vpop.permute.xlu0 %2038
  %2040 = vrot.lane.b32.xlu0 %v2009, 4
  %v2041 = vpop.permute.xlu0 %2040
  %s2058 = scalar_lea.vmem [#allocation2], 288
  %vm2059 = vcmask 64544
  %2060 = vst.msk [vmem:[%s2058] sm:$0xff] %vm2059, %v2011
  %2061 = vst.msk [vmem:[%s2058 + $0x10] sm:$0xff] %vm2059, %v2013
  %2062 = vst.msk [vmem:[%s2058 + $0x20] sm:$0xff] %vm2059, %v2015
  %2063 = vst.msk [vmem:[%s2058 + $0x30] sm:$0xff] %vm2059, %v2017
  %2064 = vst.msk [vmem:[%s2058 + $0x40] sm:$0xff] %vm2059, %v2019
  %2065 = vst.msk [vmem:[%s2058 + $0x50] sm:$0xff] %vm2059, %v2021
  %2066 = vst.msk [vmem:[%s2058 + $0x60] sm:$0xff] %vm2059, %v2023
  %2067 = vst.msk [vmem:[%s2058 + $0x70] sm:$0xff] %vm2059, %v2025
  %2068 = vst.msk [vmem:[%s2058 + $0x90] sm:$0xff] %vm2059, %v2027
  %2069 = vst.msk [vmem:[%s2058 + $0xa0] sm:$0xff] %vm2059, %v2029
  %2070 = vst.msk [vmem:[%s2058 + $0xb0] sm:$0xff] %vm2059, %v2031
  %2071 = vst.msk [vmem:[%s2058 + $0xc0] sm:$0xff] %vm2059, %v2033
  %2072 = vst.msk [vmem:[%s2058 + $0xd0] sm:$0xff] %vm2059, %v2035
  %2073 = vst.msk [vmem:[%s2058 + $0xe0] sm:$0xff] %vm2059, %v2037
  %2074 = vst.msk [vmem:[%s2058 + $0xf0] sm:$0xff] %vm2059, %v2039
  %2075 = vst.msk [vmem:[%s2058 + $0x100] sm:$0xff] %vm2059, %v2041
  %v2076 = vlaneseq
  %v2077 = vshrl.u32 %v2076, 7
  %v2078 = vsub.s32 1, %v2077
  %v2079 = vrot.slane %v298, %v2078
  %v2080 = vlaneseq
  %v2081 = vshrl.u32 %v2080, 7
  %v2082 = vsub.s32 1, %v2081
  %v2083 = vrot.slane %v306, %v2082
  %v2084 = vlaneseq
  %v2085 = vshrl.u32 %v2084, 7
  %v2086 = vsub.s32 1, %v2085
  %v2087 = vrot.slane %v305, %v2086
  %v2088 = vlaneseq
  %v2089 = vshrl.u32 %v2088, 7
  %v2090 = vsub.s32 1, %v2089
  %v2091 = vrot.slane %v307, %v2090
  %v2092 = vlaneseq
  %v2093 = vshrl.u32 %v2092, 7
  %v2094 = vsub.s32 1, %v2093
  %v2095 = vrot.slane %v315, %v2094
  %v2096 = vlaneseq
  %v2097 = vshrl.u32 %v2096, 7
  %v2098 = vsub.s32 1, %v2097
  %v2099 = vrot.slane %v323, %v2098
  %v2100 = vlaneseq
  %v2101 = vshrl.u32 %v2100, 7
  %v2102 = vsub.s32 1, %v2101
  %v2103 = vrot.slane %v322, %v2102
  %v2104 = vlaneseq
  %v2105 = vshrl.u32 %v2104, 7
  %v2106 = vsub.s32 1, %v2105
  %v2107 = vrot.slane %v324, %v2106
  %v2108 = vlaneseq
  %v2109 = vshrl.u32 %v2108, 7
  %v2110 = vsub.s32 1, %v2109
  %v2111 = vrot.slane %v366, %v2110
  %v2112 = vlaneseq
  %v2113 = vshrl.u32 %v2112, 7
  %v2114 = vsub.s32 1, %v2113
  %v2115 = vrot.slane %v374, %v2114
  %v2116 = vlaneseq
  %v2117 = vshrl.u32 %v2116, 7
  %v2118 = vsub.s32 1, %v2117
  %v2119 = vrot.slane %v373, %v2118
  %v2120 = vlaneseq
  %v2121 = vshrl.u32 %v2120, 7
  %v2122 = vsub.s32 1, %v2121
  %v2123 = vrot.slane %v375, %v2122
  %v2124 = vlaneseq
  %v2125 = vshrl.u32 %v2124, 7
  %v2126 = vsub.s32 1, %v2125
  %v2127 = vrot.slane %v383, %v2126
  %v2128 = vlaneseq
  %v2129 = vshrl.u32 %v2128, 7
  %v2130 = vsub.s32 1, %v2129
  %v2131 = vrot.slane %v391, %v2130
  %v2132 = vlaneseq
  %v2133 = vshrl.u32 %v2132, 7
  %v2134 = vsub.s32 1, %v2133
  %v2135 = vrot.slane %v390, %v2134
  %v2136 = vlaneseq
  %v2137 = vshrl.u32 %v2136, 7
  %v2138 = vsub.s32 1, %v2137
  %v2139 = vrot.slane %v392, %v2138
  %v2140 = vlaneseq
  %v2141 = vshrl.u32 %v2140, 7
  %v2142 = vsub.s32 1, %v2141
  %v2143 = vrot.slane %v434, %v2142
  %v2144 = vlaneseq
  %v2145 = vshrl.u32 %v2144, 7
  %v2146 = vsub.s32 1, %v2145
  %v2147 = vrot.slane %v442, %v2146
  %v2148 = vlaneseq
  %v2149 = vshrl.u32 %v2148, 7
  %v2150 = vsub.s32 1, %v2149
  %v2151 = vrot.slane %v441, %v2150
  %v2152 = vlaneseq
  %v2153 = vshrl.u32 %v2152, 7
  %v2154 = vsub.s32 1, %v2153
  %v2155 = vrot.slane %v443, %v2154
  %v2156 = vlaneseq
  %v2157 = vshrl.u32 %v2156, 7
  %v2158 = vsub.s32 1, %v2157
  %v2159 = vrot.slane %v451, %v2158
  %v2160 = vlaneseq
  %v2161 = vshrl.u32 %v2160, 7
  %v2162 = vsub.s32 1, %v2161
  %v2163 = vrot.slane %v459, %v2162
  %v2164 = vlaneseq
  %v2165 = vshrl.u32 %v2164, 7
  %v2166 = vsub.s32 1, %v2165
  %v2167 = vrot.slane %v458, %v2166
  %v2168 = vlaneseq
  %v2169 = vshrl.u32 %v2168, 7
  %v2170 = vsub.s32 1, %v2169
  %v2171 = vrot.slane %v460, %v2170
  %v2172 = vlaneseq
  %v2173 = vshrl.u32 %v2172, 7
  %v2174 = vsub.s32 1, %v2173
  %v2175 = vrot.slane %v502, %v2174
  %v2176 = vlaneseq
  %v2177 = vshrl.u32 %v2176, 7
  %v2178 = vsub.s32 1, %v2177
  %v2179 = vrot.slane %v510, %v2178
  %v2180 = vlaneseq
  %v2181 = vshrl.u32 %v2180, 7
  %v2182 = vsub.s32 1, %v2181
  %v2183 = vrot.slane %v509, %v2182
  %v2184 = vlaneseq
  %v2185 = vshrl.u32 %v2184, 7
  %v2186 = vsub.s32 1, %v2185
  %v2187 = vrot.slane %v511, %v2186
  %v2188 = vlaneseq
  %v2189 = vshrl.u32 %v2188, 7
  %v2190 = vsub.s32 1, %v2189
  %v2191 = vrot.slane %v519, %v2190
  %v2192 = vlaneseq
  %v2193 = vshrl.u32 %v2192, 7
  %v2194 = vsub.s32 1, %v2193
  %v2195 = vrot.slane %v527, %v2194
  %v2196 = vlaneseq
  %v2197 = vshrl.u32 %v2196, 7
  %v2198 = vsub.s32 1, %v2197
  %v2199 = vrot.slane %v526, %v2198
  %v2200 = vlaneseq
  %v2201 = vshrl.u32 %v2200, 7
  %v2202 = vsub.s32 1, %v2201
  %v2203 = vrot.slane %v528, %v2202
  %v2204 = vlaneseq
  %v2205 = vshrl.u32 %v2204, 7
  %v2206 = vsub.s32 1, %v2205
  %v2207 = vrot.slane %v570, %v2206
  %v2208 = vlaneseq
  %v2209 = vshrl.u32 %v2208, 7
  %v2210 = vsub.s32 1, %v2209
  %v2211 = vrot.slane %v578, %v2210
  %v2212 = vlaneseq
  %v2213 = vshrl.u32 %v2212, 7
  %v2214 = vsub.s32 1, %v2213
  %v2215 = vrot.slane %v577, %v2214
  %v2216 = vlaneseq
  %v2217 = vshrl.u32 %v2216, 7
  %v2218 = vsub.s32 1, %v2217
  %v2219 = vrot.slane %v579, %v2218
  %v2220 = vlaneseq
  %v2221 = vshrl.u32 %v2220, 7
  %v2222 = vsub.s32 1, %v2221
  %v2223 = vrot.slane %v587, %v2222
  %v2224 = vlaneseq
  %v2225 = vshrl.u32 %v2224, 7
  %v2226 = vsub.s32 1, %v2225
  %v2227 = vrot.slane %v595, %v2226
  %v2228 = vlaneseq
  %v2229 = vshrl.u32 %v2228, 7
  %v2230 = vsub.s32 1, %v2229
  %v2231 = vrot.slane %v594, %v2230
  %v2232 = vlaneseq
  %v2233 = vshrl.u32 %v2232, 7
  %v2234 = vsub.s32 1, %v2233
  %v2235 = vrot.slane %v596, %v2234
  %v2236 = vlaneseq
  %v2237 = vshrl.u32 %v2236, 7
  %v2238 = vsub.s32 1, %v2237
  %v2239 = vrot.slane %v638, %v2238
  %v2240 = vlaneseq
  %v2241 = vshrl.u32 %v2240, 7
  %v2242 = vsub.s32 1, %v2241
  %v2243 = vrot.slane %v646, %v2242
  %v2244 = vlaneseq
  %v2245 = vshrl.u32 %v2244, 7
  %v2246 = vsub.s32 1, %v2245
  %v2247 = vrot.slane %v645, %v2246
  %v2248 = vlaneseq
  %v2249 = vshrl.u32 %v2248, 7
  %v2250 = vsub.s32 1, %v2249
  %v2251 = vrot.slane %v647, %v2250
  %v2252 = vlaneseq
  %v2253 = vshrl.u32 %v2252, 7
  %v2254 = vsub.s32 1, %v2253
  %v2255 = vrot.slane %v655, %v2254
  %v2256 = vlaneseq
  %v2257 = vshrl.u32 %v2256, 7
  %v2258 = vsub.s32 1, %v2257
  %v2259 = vrot.slane %v663, %v2258
  %v2260 = vlaneseq
  %v2261 = vshrl.u32 %v2260, 7
  %v2262 = vsub.s32 1, %v2261
  %v2263 = vrot.slane %v662, %v2262
  %v2264 = vlaneseq
  %v2265 = vshrl.u32 %v2264, 7
  %v2266 = vsub.s32 1, %v2265
  %v2267 = vrot.slane %v664, %v2266
  %v2268 = vlaneseq
  %v2269 = vshrl.u32 %v2268, 7
  %v2270 = vsub.s32 1, %v2269
  %v2271 = vrot.slane %v706, %v2270
  %v2272 = vlaneseq
  %v2273 = vshrl.u32 %v2272, 7
  %v2274 = vsub.s32 1, %v2273
  %v2275 = vrot.slane %v714, %v2274
  %v2276 = vlaneseq
  %v2277 = vshrl.u32 %v2276, 7
  %v2278 = vsub.s32 1, %v2277
  %v2279 = vrot.slane %v713, %v2278
  %v2280 = vlaneseq
  %v2281 = vshrl.u32 %v2280, 7
  %v2282 = vsub.s32 1, %v2281
  %v2283 = vrot.slane %v715, %v2282
  %v2284 = vlaneseq
  %v2285 = vshrl.u32 %v2284, 7
  %v2286 = vsub.s32 1, %v2285
  %v2287 = vrot.slane %v723, %v2286
  %v2288 = vlaneseq
  %v2289 = vshrl.u32 %v2288, 7
  %v2290 = vsub.s32 1, %v2289
  %v2291 = vrot.slane %v731, %v2290
  %v2292 = vlaneseq
  %v2293 = vshrl.u32 %v2292, 7
  %v2294 = vsub.s32 1, %v2293
  %v2295 = vrot.slane %v730, %v2294
  %v2296 = vlaneseq
  %v2297 = vshrl.u32 %v2296, 7
  %v2298 = vsub.s32 1, %v2297
  %v2299 = vrot.slane %v732, %v2298
  %v2300 = vlaneseq
  %v2301 = vshrl.u32 %v2300, 7
  %v2302 = vsub.s32 1, %v2301
  %v2303 = vrot.slane %v774, %v2302
  %v2304 = vlaneseq
  %v2305 = vshrl.u32 %v2304, 7
  %v2306 = vsub.s32 1, %v2305
  %v2307 = vrot.slane %v782, %v2306
  %v2308 = vlaneseq
  %v2309 = vshrl.u32 %v2308, 7
  %v2310 = vsub.s32 1, %v2309
  %v2311 = vrot.slane %v781, %v2310
  %v2312 = vlaneseq
  %v2313 = vshrl.u32 %v2312, 7
  %v2314 = vsub.s32 1, %v2313
  %v2315 = vrot.slane %v783, %v2314
  %v2316 = vlaneseq
  %v2317 = vshrl.u32 %v2316, 7
  %v2318 = vsub.s32 1, %v2317
  %v2319 = vrot.slane %v791, %v2318
  %v2320 = vlaneseq
  %v2321 = vshrl.u32 %v2320, 7
  %v2322 = vsub.s32 1, %v2321
  %v2323 = vrot.slane %v799, %v2322
  %v2324 = vlaneseq
  %v2325 = vshrl.u32 %v2324, 7
  %v2326 = vsub.s32 1, %v2325
  %v2327 = vrot.slane %v798, %v2326
  %v2328 = vlaneseq
  %v2329 = vshrl.u32 %v2328, 7
  %v2330 = vsub.s32 1, %v2329
  %v2331 = vrot.slane %v800, %v2330
  %v2332 = vlaneseq
  %v2333 = vshrl.u32 %v2332, 7
  %v2334 = vsub.s32 1, %v2333
  %v2335 = vrot.slane %v842, %v2334
  %v2336 = vlaneseq
  %v2337 = vshrl.u32 %v2336, 7
  %v2338 = vsub.s32 1, %v2337
  %v2339 = vrot.slane %v850, %v2338
  %v2340 = vlaneseq
  %v2341 = vshrl.u32 %v2340, 7
  %v2342 = vsub.s32 1, %v2341
  %v2343 = vrot.slane %v849, %v2342
  %v2344 = vlaneseq
  %v2345 = vshrl.u32 %v2344, 7
  %v2346 = vsub.s32 1, %v2345
  %v2347 = vrot.slane %v851, %v2346
  %v2348 = vlaneseq
  %v2349 = vshrl.u32 %v2348, 7
  %v2350 = vsub.s32 1, %v2349
  %v2351 = vrot.slane %v859, %v2350
  %v2352 = vlaneseq
  %v2353 = vshrl.u32 %v2352, 7
  %v2354 = vsub.s32 1, %v2353
  %v2355 = vrot.slane %v867, %v2354
  %v2356 = vlaneseq
  %v2357 = vshrl.u32 %v2356, 7
  %v2358 = vsub.s32 1, %v2357
  %v2359 = vrot.slane %v866, %v2358
  %v2360 = vlaneseq
  %v2361 = vshrl.u32 %v2360, 7
  %v2362 = vsub.s32 1, %v2361
  %v2363 = vrot.slane %v868, %v2362
  %v2364 = vlaneseq
  %v2365 = vshrl.u32 %v2364, 7
  %v2366 = vsub.s32 1, %v2365
  %v2367 = vrot.slane %v910, %v2366
  %v2368 = vlaneseq
  %v2369 = vshrl.u32 %v2368, 7
  %v2370 = vsub.s32 1, %v2369
  %v2371 = vrot.slane %v918, %v2370
  %v2372 = vlaneseq
  %v2373 = vshrl.u32 %v2372, 7
  %v2374 = vsub.s32 1, %v2373
  %v2375 = vrot.slane %v917, %v2374
  %v2376 = vlaneseq
  %v2377 = vshrl.u32 %v2376, 7
  %v2378 = vsub.s32 1, %v2377
  %v2379 = vrot.slane %v919, %v2378
  %v2380 = vlaneseq
  %v2381 = vshrl.u32 %v2380, 7
  %v2382 = vsub.s32 1, %v2381
  %v2383 = vrot.slane %v927, %v2382
  %v2384 = vlaneseq
  %v2385 = vshrl.u32 %v2384, 7
  %v2386 = vsub.s32 1, %v2385
  %v2387 = vrot.slane %v935, %v2386
  %v2388 = vlaneseq
  %v2389 = vshrl.u32 %v2388, 7
  %v2390 = vsub.s32 1, %v2389
  %v2391 = vrot.slane %v934, %v2390
  %v2392 = vlaneseq
  %v2393 = vshrl.u32 %v2392, 7
  %v2394 = vsub.s32 1, %v2393
  %v2395 = vrot.slane %v936, %v2394
  %v2396 = vlaneseq
  %v2397 = vshrl.u32 %v2396, 7
  %v2398 = vsub.s32 1, %v2397
  %v2399 = vrot.slane %v978, %v2398
  %v2400 = vlaneseq
  %v2401 = vshrl.u32 %v2400, 7
  %v2402 = vsub.s32 1, %v2401
  %v2403 = vrot.slane %v986, %v2402
  %v2404 = vlaneseq
  %v2405 = vshrl.u32 %v2404, 7
  %v2406 = vsub.s32 1, %v2405
  %v2407 = vrot.slane %v985, %v2406
  %v2408 = vlaneseq
  %v2409 = vshrl.u32 %v2408, 7
  %v2410 = vsub.s32 1, %v2409
  %v2411 = vrot.slane %v987, %v2410
  %v2412 = vlaneseq
  %v2413 = vshrl.u32 %v2412, 7
  %v2414 = vsub.s32 1, %v2413
  %v2415 = vrot.slane %v995, %v2414
  %v2416 = vlaneseq
  %v2417 = vshrl.u32 %v2416, 7
  %v2418 = vsub.s32 1, %v2417
  %v2419 = vrot.slane %v1003, %v2418
  %v2420 = vlaneseq
  %v2421 = vshrl.u32 %v2420, 7
  %v2422 = vsub.s32 1, %v2421
  %v2423 = vrot.slane %v1002, %v2422
  %v2424 = vlaneseq
  %v2425 = vshrl.u32 %v2424, 7
  %v2426 = vsub.s32 1, %v2425
  %v2427 = vrot.slane %v1004, %v2426
  %v2428 = vlaneseq
  %v2429 = vshrl.u32 %v2428, 7
  %v2430 = vsub.s32 1, %v2429
  %v2431 = vrot.slane %v1046, %v2430
  %v2432 = vlaneseq
  %v2433 = vshrl.u32 %v2432, 7
  %v2434 = vsub.s32 1, %v2433
  %v2435 = vrot.slane %v1054, %v2434
  %v2436 = vlaneseq
  %v2437 = vshrl.u32 %v2436, 7
  %v2438 = vsub.s32 1, %v2437
  %v2439 = vrot.slane %v1053, %v2438
  %v2440 = vlaneseq
  %v2441 = vshrl.u32 %v2440, 7
  %v2442 = vsub.s32 1, %v2441
  %v2443 = vrot.slane %v1055, %v2442
  %v2444 = vlaneseq
  %v2445 = vshrl.u32 %v2444, 7
  %v2446 = vsub.s32 1, %v2445
  %v2447 = vrot.slane %v1063, %v2446
  %v2448 = vlaneseq
  %v2449 = vshrl.u32 %v2448, 7
  %v2450 = vsub.s32 1, %v2449
  %v2451 = vrot.slane %v1071, %v2450
  %v2452 = vlaneseq
  %v2453 = vshrl.u32 %v2452, 7
  %v2454 = vsub.s32 1, %v2453
  %v2455 = vrot.slane %v1070, %v2454
  %v2456 = vlaneseq
  %v2457 = vshrl.u32 %v2456, 7
  %v2458 = vsub.s32 1, %v2457
  %v2459 = vrot.slane %v1072, %v2458
  %v2460 = vlaneseq
  %v2461 = vshrl.u32 %v2460, 7
  %v2462 = vsub.s32 1, %v2461
  %v2463 = vrot.slane %v1114, %v2462
  %v2464 = vlaneseq
  %v2465 = vshrl.u32 %v2464, 7
  %v2466 = vsub.s32 1, %v2465
  %v2467 = vrot.slane %v1122, %v2466
  %v2468 = vlaneseq
  %v2469 = vshrl.u32 %v2468, 7
  %v2470 = vsub.s32 1, %v2469
  %v2471 = vrot.slane %v1121, %v2470
  %v2472 = vlaneseq
  %v2473 = vshrl.u32 %v2472, 7
  %v2474 = vsub.s32 1, %v2473
  %v2475 = vrot.slane %v1123, %v2474
  %v2476 = vlaneseq
  %v2477 = vshrl.u32 %v2476, 7
  %v2478 = vsub.s32 1, %v2477
  %v2479 = vrot.slane %v1131, %v2478
  %v2480 = vlaneseq
  %v2481 = vshrl.u32 %v2480, 7
  %v2482 = vsub.s32 1, %v2481
  %v2483 = vrot.slane %v1139, %v2482
  %v2484 = vlaneseq
  %v2485 = vshrl.u32 %v2484, 7
  %v2486 = vsub.s32 1, %v2485
  %v2487 = vrot.slane %v1138, %v2486
  %v2488 = vlaneseq
  %v2489 = vshrl.u32 %v2488, 7
  %v2490 = vsub.s32 1, %v2489
  %v2491 = vrot.slane %v1140, %v2490
  %v2492 = vlaneseq
  %v2493 = vshrl.u32 %v2492, 7
  %v2494 = vsub.s32 1, %v2493
  %v2495 = vrot.slane %v1182, %v2494
  %v2496 = vlaneseq
  %v2497 = vshrl.u32 %v2496, 7
  %v2498 = vsub.s32 1, %v2497
  %v2499 = vrot.slane %v1190, %v2498
  %v2500 = vlaneseq
  %v2501 = vshrl.u32 %v2500, 7
  %v2502 = vsub.s32 1, %v2501
  %v2503 = vrot.slane %v1189, %v2502
  %v2504 = vlaneseq
  %v2505 = vshrl.u32 %v2504, 7
  %v2506 = vsub.s32 1, %v2505
  %v2507 = vrot.slane %v1191, %v2506
  %v2508 = vlaneseq
  %v2509 = vshrl.u32 %v2508, 7
  %v2510 = vsub.s32 1, %v2509
  %v2511 = vrot.slane %v1199, %v2510
  %v2512 = vlaneseq
  %v2513 = vshrl.u32 %v2512, 7
  %v2514 = vsub.s32 1, %v2513
  %v2515 = vrot.slane %v1207, %v2514
  %v2516 = vlaneseq
  %v2517 = vshrl.u32 %v2516, 7
  %v2518 = vsub.s32 1, %v2517
  %v2519 = vrot.slane %v1206, %v2518
  %v2520 = vlaneseq
  %v2521 = vshrl.u32 %v2520, 7
  %v2522 = vsub.s32 1, %v2521
  %v2523 = vrot.slane %v1208, %v2522
  %v2524 = vlaneseq
  %v2525 = vshrl.u32 %v2524, 7
  %v2526 = vsub.s32 1, %v2525
  %v2527 = vrot.slane %v1250, %v2526
  %v2528 = vlaneseq
  %v2529 = vshrl.u32 %v2528, 7
  %v2530 = vsub.s32 1, %v2529
  %v2531 = vrot.slane %v1258, %v2530
  %v2532 = vlaneseq
  %v2533 = vshrl.u32 %v2532, 7
  %v2534 = vsub.s32 1, %v2533
  %v2535 = vrot.slane %v1257, %v2534
  %v2536 = vlaneseq
  %v2537 = vshrl.u32 %v2536, 7
  %v2538 = vsub.s32 1, %v2537
  %v2539 = vrot.slane %v1259, %v2538
  %v2540 = vlaneseq
  %v2541 = vshrl.u32 %v2540, 7
  %v2542 = vsub.s32 1, %v2541
  %v2543 = vrot.slane %v1267, %v2542
  %v2544 = vlaneseq
  %v2545 = vshrl.u32 %v2544, 7
  %v2546 = vsub.s32 1, %v2545
  %v2547 = vrot.slane %v1275, %v2546
  %v2548 = vlaneseq
  %v2549 = vshrl.u32 %v2548, 7
  %v2550 = vsub.s32 1, %v2549
  %v2551 = vrot.slane %v1274, %v2550
  %v2552 = vlaneseq
  %v2553 = vshrl.u32 %v2552, 7
  %v2554 = vsub.s32 1, %v2553
  %v2555 = vrot.slane %v1276, %v2554
  %v2556 = vlaneseq
  %v2557 = vshrl.u32 %v2556, 7
  %v2558 = vsub.s32 1, %v2557
  %v2559 = vrot.slane %v1318, %v2558
  %v2560 = vlaneseq
  %v2561 = vshrl.u32 %v2560, 7
  %v2562 = vsub.s32 1, %v2561
  %v2563 = vrot.slane %v1326, %v2562
  %v2564 = vlaneseq
  %v2565 = vshrl.u32 %v2564, 7
  %v2566 = vsub.s32 1, %v2565
  %v2567 = vrot.slane %v1325, %v2566
  %v2568 = vlaneseq
  %v2569 = vshrl.u32 %v2568, 7
  %v2570 = vsub.s32 1, %v2569
  %v2571 = vrot.slane %v1327, %v2570
  %v2572 = vlaneseq
  %v2573 = vshrl.u32 %v2572, 7
  %v2574 = vsub.s32 1, %v2573
  %v2575 = vrot.slane %v1335, %v2574
  %v2576 = vlaneseq
  %v2577 = vshrl.u32 %v2576, 7
  %v2578 = vsub.s32 1, %v2577
  %v2579 = vrot.slane %v1343, %v2578
  %v2580 = vlaneseq
  %v2581 = vshrl.u32 %v2580, 7
  %v2582 = vsub.s32 1, %v2581
  %v2583 = vrot.slane %v1342, %v2582
  %v2584 = vlaneseq
  %v2585 = vshrl.u32 %v2584, 7
  %v2586 = vsub.s32 1, %v2585
  %v2587 = vrot.slane %v1344, %v2586
  %v2588 = vsel %vm1893, %v2083, %v2079
  %v2589 = vsel %vm1895, %v2087, %v2588
  %v2590 = vsel %vm1897, %v2091, %v2589
  %v2591 = vsel %vm1899, %v2095, %v2590
  %v2592 = vsel %vm1901, %v2099, %v2591
  %v2593 = vsel %vm1903, %v2103, %v2592
  %v2594 = vsel %vm1893, %v2115, %v2111
  %v2595 = vsel %vm1895, %v2119, %v2594
  %v2596 = vsel %vm1897, %v2123, %v2595
  %v2597 = vsel %vm1899, %v2127, %v2596
  %v2598 = vsel %vm1901, %v2131, %v2597
  %v2599 = vsel %vm1903, %v2135, %v2598
  %v2600 = vsel %vm1893, %v2147, %v2143
  %v2601 = vsel %vm1895, %v2151, %v2600
  %v2602 = vsel %vm1897, %v2155, %v2601
  %v2603 = vsel %vm1899, %v2159, %v2602
  %v2604 = vsel %vm1901, %v2163, %v2603
  %v2605 = vsel %vm1903, %v2167, %v2604
  %v2606 = vsel %vm1893, %v2179, %v2175
  %v2607 = vsel %vm1895, %v2183, %v2606
  %v2608 = vsel %vm1897, %v2187, %v2607
  %v2609 = vsel %vm1899, %v2191, %v2608
  %v2610 = vsel %vm1901, %v2195, %v2609
  %v2611 = vsel %vm1903, %v2199, %v2610
  %v2612 = vsel %vm1893, %v2211, %v2207
  %v2613 = vsel %vm1895, %v2215, %v2612
  %v2614 = vsel %vm1897, %v2219, %v2613
  %v2615 = vsel %vm1899, %v2223, %v2614
  %v2616 = vsel %vm1901, %v2227, %v2615
  %v2617 = vsel %vm1903, %v2231, %v2616
  %v2618 = vsel %vm1893, %v2243, %v2239
  %v2619 = vsel %vm1895, %v2247, %v2618
  %v2620 = vsel %vm1897, %v2251, %v2619
  %v2621 = vsel %vm1899, %v2255, %v2620
  %v2622 = vsel %vm1901, %v2259, %v2621
  %v2623 = vsel %vm1903, %v2263, %v2622
  %v2624 = vsel %vm1893, %v2275, %v2271
  %v2625 = vsel %vm1895, %v2279, %v2624
  %v2626 = vsel %vm1897, %v2283, %v2625
  %v2627 = vsel %vm1899, %v2287, %v2626
  %v2628 = vsel %vm1901, %v2291, %v2627
  %v2629 = vsel %vm1903, %v2295, %v2628
  %v2630 = vsel %vm1893, %v2307, %v2303
  %v2631 = vsel %vm1895, %v2311, %v2630
  %v2632 = vsel %vm1897, %v2315, %v2631
  %v2633 = vsel %vm1899, %v2319, %v2632
  %v2634 = vsel %vm1901, %v2323, %v2633
  %v2635 = vsel %vm1903, %v2327, %v2634
  %v2636 = vsel %vm1893, %v2339, %v2335
  %v2637 = vsel %vm1895, %v2343, %v2636
  %v2638 = vsel %vm1897, %v2347, %v2637
  %v2639 = vsel %vm1899, %v2351, %v2638
  %v2640 = vsel %vm1901, %v2355, %v2639
  %v2641 = vsel %vm1903, %v2359, %v2640
  %v2642 = vsel %vm1893, %v2371, %v2367
  %v2643 = vsel %vm1895, %v2375, %v2642
  %v2644 = vsel %vm1897, %v2379, %v2643
  %v2645 = vsel %vm1899, %v2383, %v2644
  %v2646 = vsel %vm1901, %v2387, %v2645
  %v2647 = vsel %vm1903, %v2391, %v2646
  %v2648 = vsel %vm1893, %v2403, %v2399
  %v2649 = vsel %vm1895, %v2407, %v2648
  %v2650 = vsel %vm1897, %v2411, %v2649
  %v2651 = vsel %vm1899, %v2415, %v2650
  %v2652 = vsel %vm1901, %v2419, %v2651
  %v2653 = vsel %vm1903, %v2423, %v2652
  %v2654 = vsel %vm1893, %v2435, %v2431
  %v2655 = vsel %vm1895, %v2439, %v2654
  %v2656 = vsel %vm1897, %v2443, %v2655
  %v2657 = vsel %vm1899, %v2447, %v2656
  %v2658 = vsel %vm1901, %v2451, %v2657
  %v2659 = vsel %vm1903, %v2455, %v2658
  %v2660 = vsel %vm1893, %v2467, %v2463
  %v2661 = vsel %vm1895, %v2471, %v2660
  %v2662 = vsel %vm1897, %v2475, %v2661
  %v2663 = vsel %vm1899, %v2479, %v2662
  %v2664 = vsel %vm1901, %v2483, %v2663
  %v2665 = vsel %vm1903, %v2487, %v2664
  %v2666 = vsel %vm1893, %v2499, %v2495
  %v2667 = vsel %vm1895, %v2503, %v2666
  %v2668 = vsel %vm1897, %v2507, %v2667
  %v2669 = vsel %vm1899, %v2511, %v2668
  %v2670 = vsel %vm1901, %v2515, %v2669
  %v2671 = vsel %vm1903, %v2519, %v2670
  %v2672 = vsel %vm1893, %v2531, %v2527
  %v2673 = vsel %vm1895, %v2535, %v2672
  %v2674 = vsel %vm1897, %v2539, %v2673
  %v2675 = vsel %vm1899, %v2543, %v2674
  %v2676 = vsel %vm1901, %v2547, %v2675
  %v2677 = vsel %vm1903, %v2551, %v2676
  %v2678 = vsel %vm1893, %v2563, %v2559
  %v2679 = vsel %vm1895, %v2567, %v2678
  %v2680 = vsel %vm1897, %v2571, %v2679
  %v2681 = vsel %vm1899, %v2575, %v2680
  %v2682 = vsel %vm1901, %v2579, %v2681
  %v2683 = vsel %vm1903, %v2583, %v2682
  %vm2716 = vcmask 31745
  %2717 = vst.msk [vmem:[%s2058] sm:$0xfe] %vm2716, %v2593
  %vm2718 = vcmask 24576
  %2719 = vst.msk [vmem:[%s2058 + $0x8] sm:$0x1] %vm2718, %v2107
  %2720 = vst.msk [vmem:[%s2058 + $0x10] sm:$0xfe] %vm2716, %v2599
  %2721 = vst.msk [vmem:[%s2058 + $0x18] sm:$0x1] %vm2718, %v2139
  %2722 = vst.msk [vmem:[%s2058 + $0x20] sm:$0xfe] %vm2716, %v2605
  %2723 = vst.msk [vmem:[%s2058 + $0x28] sm:$0x1] %vm2718, %v2171
  %2724 = vst.msk [vmem:[%s2058 + $0x30] sm:$0xfe] %vm2716, %v2611
  %2725 = vst.msk [vmem:[%s2058 + $0x38] sm:$0x1] %vm2718, %v2203
  %2726 = vst.msk [vmem:[%s2058 + $0x40] sm:$0xfe] %vm2716, %v2617
  %2727 = vst.msk [vmem:[%s2058 + $0x48] sm:$0x1] %vm2718, %v2235
  %2728 = vst.msk [vmem:[%s2058 + $0x50] sm:$0xfe] %vm2716, %v2623
  %2729 = vst.msk [vmem:[%s2058 + $0x58] sm:$0x1] %vm2718, %v2267
  %2730 = vst.msk [vmem:[%s2058 + $0x60] sm:$0xfe] %vm2716, %v2629
  %2731 = vst.msk [vmem:[%s2058 + $0x68] sm:$0x1] %vm2718, %v2299
  %2732 = vst.msk [vmem:[%s2058 + $0x70] sm:$0xfe] %vm2716, %v2635
  %2733 = vst.msk [vmem:[%s2058 + $0x78] sm:$0x1] %vm2718, %v2331
  %2734 = vst.msk [vmem:[%s2058 + $0x90] sm:$0xfe] %vm2716, %v2641
  %2735 = vst.msk [vmem:[%s2058 + $0x98] sm:$0x1] %vm2718, %v2363
  %2736 = vst.msk [vmem:[%s2058 + $0xa0] sm:$0xfe] %vm2716, %v2647
  %2737 = vst.msk [vmem:[%s2058 + $0xa8] sm:$0x1] %vm2718, %v2395
  %2738 = vst.msk [vmem:[%s2058 + $0xb0] sm:$0xfe] %vm2716, %v2653
  %2739 = vst.msk [vmem:[%s2058 + $0xb8] sm:$0x1] %vm2718, %v2427
  %2740 = vst.msk [vmem:[%s2058 + $0xc0] sm:$0xfe] %vm2716, %v2659
  %2741 = vst.msk [vmem:[%s2058 + $0xc8] sm:$0x1] %vm2718, %v2459
  %2742 = vst.msk [vmem:[%s2058 + $0xd0] sm:$0xfe] %vm2716, %v2665
  %2743 = vst.msk [vmem:[%s2058 + $0xd8] sm:$0x1] %vm2718, %v2491
  %2744 = vst.msk [vmem:[%s2058 + $0xe0] sm:$0xfe] %vm2716, %v2671
  %2745 = vst.msk [vmem:[%s2058 + $0xe8] sm:$0x1] %vm2718, %v2523
  %2746 = vst.msk [vmem:[%s2058 + $0xf0] sm:$0xfe] %vm2716, %v2677
  %2747 = vst.msk [vmem:[%s2058 + $0xf8] sm:$0x1] %vm2718, %v2555
  %2748 = vst.msk [vmem:[%s2058 + $0x100] sm:$0xfe] %vm2716, %v2683
  %2749 = vst.msk [vmem:[%s2058 + $0x108] sm:$0x1] %vm2718, %v2587
  %v2750 = vlaneseq
  %v2751 = vshrl.u32 %v2750, 7
  %v2752 = vsub.s32 0, %v2751
  %v2753 = vrot.slane %v332, %v2752
  %v2754 = vlaneseq
  %v2755 = vshrl.u32 %v2754, 7
  %v2756 = vsub.s32 0, %v2755
  %v2757 = vrot.slane %v340, %v2756
  %v2758 = vlaneseq
  %v2759 = vshrl.u32 %v2758, 7
  %v2760 = vsub.s32 0, %v2759
  %v2761 = vrot.slane %v339, %v2760
  %v2762 = vlaneseq
  %v2763 = vshrl.u32 %v2762, 7
  %v2764 = vsub.s32 0, %v2763
  %v2765 = vrot.slane %v341, %v2764
  %v2766 = vlaneseq
  %v2767 = vshrl.u32 %v2766, 7
  %v2768 = vsub.s32 0, %v2767
  %v2769 = vrot.slane %v349, %v2768
  %v2770 = vlaneseq
  %v2771 = vshrl.u32 %v2770, 7
  %v2772 = vsub.s32 0, %v2771
  %v2773 = vrot.slane %v357, %v2772
  %v2774 = vlaneseq
  %v2775 = vshrl.u32 %v2774, 7
  %v2776 = vsub.s32 0, %v2775
  %v2777 = vrot.slane %v356, %v2776
  %v2778 = vlaneseq
  %v2779 = vshrl.u32 %v2778, 7
  %v2780 = vsub.s32 0, %v2779
  %v2781 = vrot.slane %v358, %v2780
  %v2782 = vlaneseq
  %v2783 = vshrl.u32 %v2782, 7
  %v2784 = vsub.s32 0, %v2783
  %v2785 = vrot.slane %v400, %v2784
  %v2786 = vlaneseq
  %v2787 = vshrl.u32 %v2786, 7
  %v2788 = vsub.s32 0, %v2787
  %v2789 = vrot.slane %v408, %v2788
  %v2790 = vlaneseq
  %v2791 = vshrl.u32 %v2790, 7
  %v2792 = vsub.s32 0, %v2791
  %v2793 = vrot.slane %v407, %v2792
  %v2794 = vlaneseq
  %v2795 = vshrl.u32 %v2794, 7
  %v2796 = vsub.s32 0, %v2795
  %v2797 = vrot.slane %v409, %v2796
  %v2798 = vlaneseq
  %v2799 = vshrl.u32 %v2798, 7
  %v2800 = vsub.s32 0, %v2799
  %v2801 = vrot.slane %v417, %v2800
  %v2802 = vlaneseq
  %v2803 = vshrl.u32 %v2802, 7
  %v2804 = vsub.s32 0, %v2803
  %v2805 = vrot.slane %v425, %v2804
  %v2806 = vlaneseq
  %v2807 = vshrl.u32 %v2806, 7
  %v2808 = vsub.s32 0, %v2807
  %v2809 = vrot.slane %v424, %v2808
  %v2810 = vlaneseq
  %v2811 = vshrl.u32 %v2810, 7
  %v2812 = vsub.s32 0, %v2811
  %v2813 = vrot.slane %v426, %v2812
  %v2814 = vlaneseq
  %v2815 = vshrl.u32 %v2814, 7
  %v2816 = vsub.s32 0, %v2815
  %v2817 = vrot.slane %v468, %v2816
  %v2818 = vlaneseq
  %v2819 = vshrl.u32 %v2818, 7
  %v2820 = vsub.s32 0, %v2819
  %v2821 = vrot.slane %v476, %v2820
  %v2822 = vlaneseq
  %v2823 = vshrl.u32 %v2822, 7
  %v2824 = vsub.s32 0, %v2823
  %v2825 = vrot.slane %v475, %v2824
  %v2826 = vlaneseq
  %v2827 = vshrl.u32 %v2826, 7
  %v2828 = vsub.s32 0, %v2827
  %v2829 = vrot.slane %v477, %v2828
  %v2830 = vlaneseq
  %v2831 = vshrl.u32 %v2830, 7
  %v2832 = vsub.s32 0, %v2831
  %v2833 = vrot.slane %v485, %v2832
  %v2834 = vlaneseq
  %v2835 = vshrl.u32 %v2834, 7
  %v2836 = vsub.s32 0, %v2835
  %v2837 = vrot.slane %v493, %v2836
  %v2838 = vlaneseq
  %v2839 = vshrl.u32 %v2838, 7
  %v2840 = vsub.s32 0, %v2839
  %v2841 = vrot.slane %v492, %v2840
  %v2842 = vlaneseq
  %v2843 = vshrl.u32 %v2842, 7
  %v2844 = vsub.s32 0, %v2843
  %v2845 = vrot.slane %v494, %v2844
  %v2846 = vlaneseq
  %v2847 = vshrl.u32 %v2846, 7
  %v2848 = vsub.s32 0, %v2847
  %v2849 = vrot.slane %v536, %v2848
  %v2850 = vlaneseq
  %v2851 = vshrl.u32 %v2850, 7
  %v2852 = vsub.s32 0, %v2851
  %v2853 = vrot.slane %v544, %v2852
  %v2854 = vlaneseq
  %v2855 = vshrl.u32 %v2854, 7
  %v2856 = vsub.s32 0, %v2855
  %v2857 = vrot.slane %v543, %v2856
  %v2858 = vlaneseq
  %v2859 = vshrl.u32 %v2858, 7
  %v2860 = vsub.s32 0, %v2859
  %v2861 = vrot.slane %v545, %v2860
  %v2862 = vlaneseq
  %v2863 = vshrl.u32 %v2862, 7
  %v2864 = vsub.s32 0, %v2863
  %v2865 = vrot.slane %v553, %v2864
  %v2866 = vlaneseq
  %v2867 = vshrl.u32 %v2866, 7
  %v2868 = vsub.s32 0, %v2867
  %v2869 = vrot.slane %v561, %v2868
  %v2870 = vlaneseq
  %v2871 = vshrl.u32 %v2870, 7
  %v2872 = vsub.s32 0, %v2871
  %v2873 = vrot.slane %v560, %v2872
  %v2874 = vlaneseq
  %v2875 = vshrl.u32 %v2874, 7
  %v2876 = vsub.s32 0, %v2875
  %v2877 = vrot.slane %v562, %v2876
  %v2878 = vlaneseq
  %v2879 = vshrl.u32 %v2878, 7
  %v2880 = vsub.s32 0, %v2879
  %v2881 = vrot.slane %v604, %v2880
  %v2882 = vlaneseq
  %v2883 = vshrl.u32 %v2882, 7
  %v2884 = vsub.s32 0, %v2883
  %v2885 = vrot.slane %v612, %v2884
  %v2886 = vlaneseq
  %v2887 = vshrl.u32 %v2886, 7
  %v2888 = vsub.s32 0, %v2887
  %v2889 = vrot.slane %v611, %v2888
  %v2890 = vlaneseq
  %v2891 = vshrl.u32 %v2890, 7
  %v2892 = vsub.s32 0, %v2891
  %v2893 = vrot.slane %v613, %v2892
  %v2894 = vlaneseq
  %v2895 = vshrl.u32 %v2894, 7
  %v2896 = vsub.s32 0, %v2895
  %v2897 = vrot.slane %v621, %v2896
  %v2898 = vlaneseq
  %v2899 = vshrl.u32 %v2898, 7
  %v2900 = vsub.s32 0, %v2899
  %v2901 = vrot.slane %v629, %v2900
  %v2902 = vlaneseq
  %v2903 = vshrl.u32 %v2902, 7
  %v2904 = vsub.s32 0, %v2903
  %v2905 = vrot.slane %v628, %v2904
  %v2906 = vlaneseq
  %v2907 = vshrl.u32 %v2906, 7
  %v2908 = vsub.s32 0, %v2907
  %v2909 = vrot.slane %v630, %v2908
  %v2910 = vlaneseq
  %v2911 = vshrl.u32 %v2910, 7
  %v2912 = vsub.s32 0, %v2911
  %v2913 = vrot.slane %v672, %v2912
  %v2914 = vlaneseq
  %v2915 = vshrl.u32 %v2914, 7
  %v2916 = vsub.s32 0, %v2915
  %v2917 = vrot.slane %v680, %v2916
  %v2918 = vlaneseq
  %v2919 = vshrl.u32 %v2918, 7
  %v2920 = vsub.s32 0, %v2919
  %v2921 = vrot.slane %v679, %v2920
  %v2922 = vlaneseq
  %v2923 = vshrl.u32 %v2922, 7
  %v2924 = vsub.s32 0, %v2923
  %v2925 = vrot.slane %v681, %v2924
  %v2926 = vlaneseq
  %v2927 = vshrl.u32 %v2926, 7
  %v2928 = vsub.s32 0, %v2927
  %v2929 = vrot.slane %v689, %v2928
  %v2930 = vlaneseq
  %v2931 = vshrl.u32 %v2930, 7
  %v2932 = vsub.s32 0, %v2931
  %v2933 = vrot.slane %v697, %v2932
  %v2934 = vlaneseq
  %v2935 = vshrl.u32 %v2934, 7
  %v2936 = vsub.s32 0, %v2935
  %v2937 = vrot.slane %v696, %v2936
  %v2938 = vlaneseq
  %v2939 = vshrl.u32 %v2938, 7
  %v2940 = vsub.s32 0, %v2939
  %v2941 = vrot.slane %v698, %v2940
  %v2942 = vlaneseq
  %v2943 = vshrl.u32 %v2942, 7
  %v2944 = vsub.s32 0, %v2943
  %v2945 = vrot.slane %v740, %v2944
  %v2946 = vlaneseq
  %v2947 = vshrl.u32 %v2946, 7
  %v2948 = vsub.s32 0, %v2947
  %v2949 = vrot.slane %v748, %v2948
  %v2950 = vlaneseq
  %v2951 = vshrl.u32 %v2950, 7
  %v2952 = vsub.s32 0, %v2951
  %v2953 = vrot.slane %v747, %v2952
  %v2954 = vlaneseq
  %v2955 = vshrl.u32 %v2954, 7
  %v2956 = vsub.s32 0, %v2955
  %v2957 = vrot.slane %v749, %v2956
  %v2958 = vlaneseq
  %v2959 = vshrl.u32 %v2958, 7
  %v2960 = vsub.s32 0, %v2959
  %v2961 = vrot.slane %v757, %v2960
  %v2962 = vlaneseq
  %v2963 = vshrl.u32 %v2962, 7
  %v2964 = vsub.s32 0, %v2963
  %v2965 = vrot.slane %v765, %v2964
  %v2966 = vlaneseq
  %v2967 = vshrl.u32 %v2966, 7
  %v2968 = vsub.s32 0, %v2967
  %v2969 = vrot.slane %v764, %v2968
  %v2970 = vlaneseq
  %v2971 = vshrl.u32 %v2970, 7
  %v2972 = vsub.s32 0, %v2971
  %v2973 = vrot.slane %v766, %v2972
  %v2974 = vlaneseq
  %v2975 = vshrl.u32 %v2974, 7
  %v2976 = vsub.s32 0, %v2975
  %v2977 = vrot.slane %v808, %v2976
  %v2978 = vlaneseq
  %v2979 = vshrl.u32 %v2978, 7
  %v2980 = vsub.s32 0, %v2979
  %v2981 = vrot.slane %v816, %v2980
  %v2982 = vlaneseq
  %v2983 = vshrl.u32 %v2982, 7
  %v2984 = vsub.s32 0, %v2983
  %v2985 = vrot.slane %v815, %v2984
  %v2986 = vlaneseq
  %v2987 = vshrl.u32 %v2986, 7
  %v2988 = vsub.s32 0, %v2987
  %v2989 = vrot.slane %v817, %v2988
  %v2990 = vlaneseq
  %v2991 = vshrl.u32 %v2990, 7
  %v2992 = vsub.s32 0, %v2991
  %v2993 = vrot.slane %v825, %v2992
  %v2994 = vlaneseq
  %v2995 = vshrl.u32 %v2994, 7
  %v2996 = vsub.s32 0, %v2995
  %v2997 = vrot.slane %v833, %v2996
  %v2998 = vlaneseq
  %v2999 = vshrl.u32 %v2998, 7
  %v3000 = vsub.s32 0, %v2999
  %v3001 = vrot.slane %v832, %v3000
  %v3002 = vlaneseq
  %v3003 = vshrl.u32 %v3002, 7
  %v3004 = vsub.s32 0, %v3003
  %v3005 = vrot.slane %v834, %v3004
  %v3006 = vlaneseq
  %v3007 = vshrl.u32 %v3006, 7
  %v3008 = vsub.s32 0, %v3007
  %v3009 = vrot.slane %v876, %v3008
  %v3010 = vlaneseq
  %v3011 = vshrl.u32 %v3010, 7
  %v3012 = vsub.s32 0, %v3011
  %v3013 = vrot.slane %v884, %v3012
  %v3014 = vlaneseq
  %v3015 = vshrl.u32 %v3014, 7
  %v3016 = vsub.s32 0, %v3015
  %v3017 = vrot.slane %v883, %v3016
  %v3018 = vlaneseq
  %v3019 = vshrl.u32 %v3018, 7
  %v3020 = vsub.s32 0, %v3019
  %v3021 = vrot.slane %v885, %v3020
  %v3022 = vlaneseq
  %v3023 = vshrl.u32 %v3022, 7
  %v3024 = vsub.s32 0, %v3023
  %v3025 = vrot.slane %v893, %v3024
  %v3026 = vlaneseq
  %v3027 = vshrl.u32 %v3026, 7
  %v3028 = vsub.s32 0, %v3027
  %v3029 = vrot.slane %v901, %v3028
  %v3030 = vlaneseq
  %v3031 = vshrl.u32 %v3030, 7
  %v3032 = vsub.s32 0, %v3031
  %v3033 = vrot.slane %v900, %v3032
  %v3034 = vlaneseq
  %v3035 = vshrl.u32 %v3034, 7
  %v3036 = vsub.s32 0, %v3035
  %v3037 = vrot.slane %v902, %v3036
  %v3038 = vlaneseq
  %v3039 = vshrl.u32 %v3038, 7
  %v3040 = vsub.s32 0, %v3039
  %v3041 = vrot.slane %v944, %v3040
  %v3042 = vlaneseq
  %v3043 = vshrl.u32 %v3042, 7
  %v3044 = vsub.s32 0, %v3043
  %v3045 = vrot.slane %v952, %v3044
  %v3046 = vlaneseq
  %v3047 = vshrl.u32 %v3046, 7
  %v3048 = vsub.s32 0, %v3047
  %v3049 = vrot.slane %v951, %v3048
  %v3050 = vlaneseq
  %v3051 = vshrl.u32 %v3050, 7
  %v3052 = vsub.s32 0, %v3051
  %v3053 = vrot.slane %v953, %v3052
  %v3054 = vlaneseq
  %v3055 = vshrl.u32 %v3054, 7
  %v3056 = vsub.s32 0, %v3055
  %v3057 = vrot.slane %v961, %v3056
  %v3058 = vlaneseq
  %v3059 = vshrl.u32 %v3058, 7
  %v3060 = vsub.s32 0, %v3059
  %v3061 = vrot.slane %v969, %v3060
  %v3062 = vlaneseq
  %v3063 = vshrl.u32 %v3062, 7
  %v3064 = vsub.s32 0, %v3063
  %v3065 = vrot.slane %v968, %v3064
  %v3066 = vlaneseq
  %v3067 = vshrl.u32 %v3066, 7
  %v3068 = vsub.s32 0, %v3067
  %v3069 = vrot.slane %v970, %v3068
  %v3070 = vlaneseq
  %v3071 = vshrl.u32 %v3070, 7
  %v3072 = vsub.s32 0, %v3071
  %v3073 = vrot.slane %v1012, %v3072
  %v3074 = vlaneseq
  %v3075 = vshrl.u32 %v3074, 7
  %v3076 = vsub.s32 0, %v3075
  %v3077 = vrot.slane %v1020, %v3076
  %v3078 = vlaneseq
  %v3079 = vshrl.u32 %v3078, 7
  %v3080 = vsub.s32 0, %v3079
  %v3081 = vrot.slane %v1019, %v3080
  %v3082 = vlaneseq
  %v3083 = vshrl.u32 %v3082, 7
  %v3084 = vsub.s32 0, %v3083
  %v3085 = vrot.slane %v1021, %v3084
  %v3086 = vlaneseq
  %v3087 = vshrl.u32 %v3086, 7
  %v3088 = vsub.s32 0, %v3087
  %v3089 = vrot.slane %v1029, %v3088
  %v3090 = vlaneseq
  %v3091 = vshrl.u32 %v3090, 7
  %v3092 = vsub.s32 0, %v3091
  %v3093 = vrot.slane %v1037, %v3092
  %v3094 = vlaneseq
  %v3095 = vshrl.u32 %v3094, 7
  %v3096 = vsub.s32 0, %v3095
  %v3097 = vrot.slane %v1036, %v3096
  %v3098 = vlaneseq
  %v3099 = vshrl.u32 %v3098, 7
  %v3100 = vsub.s32 0, %v3099
  %v3101 = vrot.slane %v1038, %v3100
  %v3102 = vlaneseq
  %v3103 = vshrl.u32 %v3102, 7
  %v3104 = vsub.s32 0, %v3103
  %v3105 = vrot.slane %v1080, %v3104
  %v3106 = vlaneseq
  %v3107 = vshrl.u32 %v3106, 7
  %v3108 = vsub.s32 0, %v3107
  %v3109 = vrot.slane %v1088, %v3108
  %v3110 = vlaneseq
  %v3111 = vshrl.u32 %v3110, 7
  %v3112 = vsub.s32 0, %v3111
  %v3113 = vrot.slane %v1087, %v3112
  %v3114 = vlaneseq
  %v3115 = vshrl.u32 %v3114, 7
  %v3116 = vsub.s32 0, %v3115
  %v3117 = vrot.slane %v1089, %v3116
  %v3118 = vlaneseq
  %v3119 = vshrl.u32 %v3118, 7
  %v3120 = vsub.s32 0, %v3119
  %v3121 = vrot.slane %v1097, %v3120
  %v3122 = vlaneseq
  %v3123 = vshrl.u32 %v3122, 7
  %v3124 = vsub.s32 0, %v3123
  %v3125 = vrot.slane %v1105, %v3124
  %v3126 = vlaneseq
  %v3127 = vshrl.u32 %v3126, 7
  %v3128 = vsub.s32 0, %v3127
  %v3129 = vrot.slane %v1104, %v3128
  %v3130 = vlaneseq
  %v3131 = vshrl.u32 %v3130, 7
  %v3132 = vsub.s32 0, %v3131
  %v3133 = vrot.slane %v1106, %v3132
  %v3134 = vlaneseq
  %v3135 = vshrl.u32 %v3134, 7
  %v3136 = vsub.s32 0, %v3135
  %v3137 = vrot.slane %v1148, %v3136
  %v3138 = vlaneseq
  %v3139 = vshrl.u32 %v3138, 7
  %v3140 = vsub.s32 0, %v3139
  %v3141 = vrot.slane %v1156, %v3140
  %v3142 = vlaneseq
  %v3143 = vshrl.u32 %v3142, 7
  %v3144 = vsub.s32 0, %v3143
  %v3145 = vrot.slane %v1155, %v3144
  %v3146 = vlaneseq
  %v3147 = vshrl.u32 %v3146, 7
  %v3148 = vsub.s32 0, %v3147
  %v3149 = vrot.slane %v1157, %v3148
  %v3150 = vlaneseq
  %v3151 = vshrl.u32 %v3150, 7
  %v3152 = vsub.s32 0, %v3151
  %v3153 = vrot.slane %v1165, %v3152
  %v3154 = vlaneseq
  %v3155 = vshrl.u32 %v3154, 7
  %v3156 = vsub.s32 0, %v3155
  %v3157 = vrot.slane %v1173, %v3156
  %v3158 = vlaneseq
  %v3159 = vshrl.u32 %v3158, 7
  %v3160 = vsub.s32 0, %v3159
  %v3161 = vrot.slane %v1172, %v3160
  %v3162 = vlaneseq
  %v3163 = vshrl.u32 %v3162, 7
  %v3164 = vsub.s32 0, %v3163
  %v3165 = vrot.slane %v1174, %v3164
  %v3166 = vlaneseq
  %v3167 = vshrl.u32 %v3166, 7
  %v3168 = vsub.s32 0, %v3167
  %v3169 = vrot.slane %v1216, %v3168
  %v3170 = vlaneseq
  %v3171 = vshrl.u32 %v3170, 7
  %v3172 = vsub.s32 0, %v3171
  %v3173 = vrot.slane %v1224, %v3172
  %v3174 = vlaneseq
  %v3175 = vshrl.u32 %v3174, 7
  %v3176 = vsub.s32 0, %v3175
  %v3177 = vrot.slane %v1223, %v3176
  %v3178 = vlaneseq
  %v3179 = vshrl.u32 %v3178, 7
  %v3180 = vsub.s32 0, %v3179
  %v3181 = vrot.slane %v1225, %v3180
  %v3182 = vlaneseq
  %v3183 = vshrl.u32 %v3182, 7
  %v3184 = vsub.s32 0, %v3183
  %v3185 = vrot.slane %v1233, %v3184
  %v3186 = vlaneseq
  %v3187 = vshrl.u32 %v3186, 7
  %v3188 = vsub.s32 0, %v3187
  %v3189 = vrot.slane %v1241, %v3188
  %v3190 = vlaneseq
  %v3191 = vshrl.u32 %v3190, 7
  %v3192 = vsub.s32 0, %v3191
  %v3193 = vrot.slane %v1240, %v3192
  %v3194 = vlaneseq
  %v3195 = vshrl.u32 %v3194, 7
  %v3196 = vsub.s32 0, %v3195
  %v3197 = vrot.slane %v1242, %v3196
  %v3198 = vlaneseq
  %v3199 = vshrl.u32 %v3198, 7
  %v3200 = vsub.s32 0, %v3199
  %v3201 = vrot.slane %v1284, %v3200
  %v3202 = vlaneseq
  %v3203 = vshrl.u32 %v3202, 7
  %v3204 = vsub.s32 0, %v3203
  %v3205 = vrot.slane %v1292, %v3204
  %v3206 = vlaneseq
  %v3207 = vshrl.u32 %v3206, 7
  %v3208 = vsub.s32 0, %v3207
  %v3209 = vrot.slane %v1291, %v3208
  %v3210 = vlaneseq
  %v3211 = vshrl.u32 %v3210, 7
  %v3212 = vsub.s32 0, %v3211
  %v3213 = vrot.slane %v1293, %v3212
  %v3214 = vlaneseq
  %v3215 = vshrl.u32 %v3214, 7
  %v3216 = vsub.s32 0, %v3215
  %v3217 = vrot.slane %v1301, %v3216
  %v3218 = vlaneseq
  %v3219 = vshrl.u32 %v3218, 7
  %v3220 = vsub.s32 0, %v3219
  %v3221 = vrot.slane %v1309, %v3220
  %v3222 = vlaneseq
  %v3223 = vshrl.u32 %v3222, 7
  %v3224 = vsub.s32 0, %v3223
  %v3225 = vrot.slane %v1308, %v3224
  %v3226 = vlaneseq
  %v3227 = vshrl.u32 %v3226, 7
  %v3228 = vsub.s32 0, %v3227
  %v3229 = vrot.slane %v1310, %v3228
  %v3230 = vlaneseq
  %v3231 = vshrl.u32 %v3230, 7
  %v3232 = vsub.s32 0, %v3231
  %v3233 = vrot.slane %v1352, %v3232
  %v3234 = vlaneseq
  %v3235 = vshrl.u32 %v3234, 7
  %v3236 = vsub.s32 0, %v3235
  %v3237 = vrot.slane %v1360, %v3236
  %v3238 = vlaneseq
  %v3239 = vshrl.u32 %v3238, 7
  %v3240 = vsub.s32 0, %v3239
  %v3241 = vrot.slane %v1359, %v3240
  %v3242 = vlaneseq
  %v3243 = vshrl.u32 %v3242, 7
  %v3244 = vsub.s32 0, %v3243
  %v3245 = vrot.slane %v1361, %v3244
  %v3246 = vlaneseq
  %v3247 = vshrl.u32 %v3246, 7
  %v3248 = vsub.s32 0, %v3247
  %v3249 = vrot.slane %v1369, %v3248
  %v3250 = vlaneseq
  %v3251 = vshrl.u32 %v3250, 7
  %v3252 = vsub.s32 0, %v3251
  %v3253 = vrot.slane %v1377, %v3252
  %v3254 = vlaneseq
  %v3255 = vshrl.u32 %v3254, 7
  %v3256 = vsub.s32 0, %v3255
  %v3257 = vrot.slane %v1376, %v3256
  %v3258 = vlaneseq
  %v3259 = vshrl.u32 %v3258, 7
  %v3260 = vsub.s32 0, %v3259
  %v3261 = vrot.slane %v1378, %v3260
  %v3262 = vsel %vm1891, %v2757, %v2753
  %v3263 = vsel %vm1893, %v2761, %v3262
  %v3264 = vsel %vm1895, %v2765, %v3263
  %v3265 = vsel %vm1897, %v2769, %v3264
  %v3266 = vsel %vm1899, %v2773, %v3265
  %v3267 = vsel %vm1901, %v2777, %v3266
  %v3268 = vsel %vm1903, %v2781, %v3267
  %v3269 = vsel %vm1891, %v2789, %v2785
  %v3270 = vsel %vm1893, %v2793, %v3269
  %v3271 = vsel %vm1895, %v2797, %v3270
  %v3272 = vsel %vm1897, %v2801, %v3271
  %v3273 = vsel %vm1899, %v2805, %v3272
  %v3274 = vsel %vm1901, %v2809, %v3273
  %v3275 = vsel %vm1903, %v2813, %v3274
  %v3276 = vsel %vm1891, %v2821, %v2817
  %v3277 = vsel %vm1893, %v2825, %v3276
  %v3278 = vsel %vm1895, %v2829, %v3277
  %v3279 = vsel %vm1897, %v2833, %v3278
  %v3280 = vsel %vm1899, %v2837, %v3279
  %v3281 = vsel %vm1901, %v2841, %v3280
  %v3282 = vsel %vm1903, %v2845, %v3281
  %v3283 = vsel %vm1891, %v2853, %v2849
  %v3284 = vsel %vm1893, %v2857, %v3283
  %v3285 = vsel %vm1895, %v2861, %v3284
  %v3286 = vsel %vm1897, %v2865, %v3285
  %v3287 = vsel %vm1899, %v2869, %v3286
  %v3288 = vsel %vm1901, %v2873, %v3287
  %v3289 = vsel %vm1903, %v2877, %v3288
  %v3290 = vsel %vm1891, %v2885, %v2881
  %v3291 = vsel %vm1893, %v2889, %v3290
  %v3292 = vsel %vm1895, %v2893, %v3291
  %v3293 = vsel %vm1897, %v2897, %v3292
  %v3294 = vsel %vm1899, %v2901, %v3293
  %v3295 = vsel %vm1901, %v2905, %v3294
  %v3296 = vsel %vm1903, %v2909, %v3295
  %v3297 = vsel %vm1891, %v2917, %v2913
  %v3298 = vsel %vm1893, %v2921, %v3297
  %v3299 = vsel %vm1895, %v2925, %v3298
  %v3300 = vsel %vm1897, %v2929, %v3299
  %v3301 = vsel %vm1899, %v2933, %v3300
  %v3302 = vsel %vm1901, %v2937, %v3301
  %v3303 = vsel %vm1903, %v2941, %v3302
  %v3304 = vsel %vm1891, %v2949, %v2945
  %v3305 = vsel %vm1893, %v2953, %v3304
  %v3306 = vsel %vm1895, %v2957, %v3305
  %v3307 = vsel %vm1897, %v2961, %v3306
  %v3308 = vsel %vm1899, %v2965, %v3307
  %v3309 = vsel %vm1901, %v2969, %v3308
  %v3310 = vsel %vm1903, %v2973, %v3309
  %v3311 = vsel %vm1891, %v2981, %v2977
  %v3312 = vsel %vm1893, %v2985, %v3311
  %v3313 = vsel %vm1895, %v2989, %v3312
  %v3314 = vsel %vm1897, %v2993, %v3313
  %v3315 = vsel %vm1899, %v2997, %v3314
  %v3316 = vsel %vm1901, %v3001, %v3315
  %v3317 = vsel %vm1903, %v3005, %v3316
  %v3318 = vsel %vm1891, %v3013, %v3009
  %v3319 = vsel %vm1893, %v3017, %v3318
  %v3320 = vsel %vm1895, %v3021, %v3319
  %v3321 = vsel %vm1897, %v3025, %v3320
  %v3322 = vsel %vm1899, %v3029, %v3321
  %v3323 = vsel %vm1901, %v3033, %v3322
  %v3324 = vsel %vm1903, %v3037, %v3323
  %v3325 = vsel %vm1891, %v3045, %v3041
  %v3326 = vsel %vm1893, %v3049, %v3325
  %v3327 = vsel %vm1895, %v3053, %v3326
  %v3328 = vsel %vm1897, %v3057, %v3327
  %v3329 = vsel %vm1899, %v3061, %v3328
  %v3330 = vsel %vm1901, %v3065, %v3329
  %v3331 = vsel %vm1903, %v3069, %v3330
  %v3332 = vsel %vm1891, %v3077, %v3073
  %v3333 = vsel %vm1893, %v3081, %v3332
  %v3334 = vsel %vm1895, %v3085, %v3333
  %v3335 = vsel %vm1897, %v3089, %v3334
  %v3336 = vsel %vm1899, %v3093, %v3335
  %v3337 = vsel %vm1901, %v3097, %v3336
  %v3338 = vsel %vm1903, %v3101, %v3337
  %v3339 = vsel %vm1891, %v3109, %v3105
  %v3340 = vsel %vm1893, %v3113, %v3339
  %v3341 = vsel %vm1895, %v3117, %v3340
  %v3342 = vsel %vm1897, %v3121, %v3341
  %v3343 = vsel %vm1899, %v3125, %v3342
  %v3344 = vsel %vm1901, %v3129, %v3343
  %v3345 = vsel %vm1903, %v3133, %v3344
  %v3346 = vsel %vm1891, %v3141, %v3137
  %v3347 = vsel %vm1893, %v3145, %v3346
  %v3348 = vsel %vm1895, %v3149, %v3347
  %v3349 = vsel %vm1897, %v3153, %v3348
  %v3350 = vsel %vm1899, %v3157, %v3349
  %v3351 = vsel %vm1901, %v3161, %v3350
  %v3352 = vsel %vm1903, %v3165, %v3351
  %v3353 = vsel %vm1891, %v3173, %v3169
  %v3354 = vsel %vm1893, %v3177, %v3353
  %v3355 = vsel %vm1895, %v3181, %v3354
  %v3356 = vsel %vm1897, %v3185, %v3355
  %v3357 = vsel %vm1899, %v3189, %v3356
  %v3358 = vsel %vm1901, %v3193, %v3357
  %v3359 = vsel %vm1903, %v3197, %v3358
  %v3360 = vsel %vm1891, %v3205, %v3201
  %v3361 = vsel %vm1893, %v3209, %v3360
  %v3362 = vsel %vm1895, %v3213, %v3361
  %v3363 = vsel %vm1897, %v3217, %v3362
  %v3364 = vsel %vm1899, %v3221, %v3363
  %v3365 = vsel %vm1901, %v3225, %v3364
  %v3366 = vsel %vm1903, %v3229, %v3365
  %v3367 = vsel %vm1891, %v3237, %v3233
  %v3368 = vsel %vm1893, %v3241, %v3367
  %v3369 = vsel %vm1895, %v3245, %v3368
  %v3370 = vsel %vm1897, %v3249, %v3369
  %v3371 = vsel %vm1899, %v3253, %v3370
  %v3372 = vsel %vm1901, %v3257, %v3371
  %v3373 = vsel %vm1903, %v3261, %v3372
  %3374 = vrot.lane.b32.xlu0 %v3268, 4
  %v3375 = vpop.permute.xlu0 %3374
  %3376 = vrot.lane.b32.xlu0 %v3275, 4
  %v3377 = vpop.permute.xlu0 %3376
  %3378 = vrot.lane.b32.xlu0 %v3282, 4
  %v3379 = vpop.permute.xlu0 %3378
  %3380 = vrot.lane.b32.xlu0 %v3289, 4
  %v3381 = vpop.permute.xlu0 %3380
  %3382 = vrot.lane.b32.xlu0 %v3296, 4
  %v3383 = vpop.permute.xlu0 %3382
  %3384 = vrot.lane.b32.xlu0 %v3303, 4
  %v3385 = vpop.permute.xlu0 %3384
  %3386 = vrot.lane.b32.xlu0 %v3310, 4
  %v3387 = vpop.permute.xlu0 %3386
  %3388 = vrot.lane.b32.xlu0 %v3317, 4
  %v3389 = vpop.permute.xlu0 %3388
  %3390 = vrot.lane.b32.xlu0 %v3324, 4
  %v3391 = vpop.permute.xlu0 %3390
  %3392 = vrot.lane.b32.xlu0 %v3331, 4
  %v3393 = vpop.permute.xlu0 %3392
  %3394 = vrot.lane.b32.xlu0 %v3338, 4
  %v3395 = vpop.permute.xlu0 %3394
  %3396 = vrot.lane.b32.xlu0 %v3345, 4
  %v3397 = vpop.permute.xlu0 %3396
  %3398 = vrot.lane.b32.xlu0 %v3352, 4
  %v3399 = vpop.permute.xlu0 %3398
  %3400 = vrot.lane.b32.xlu0 %v3359, 4
  %v3401 = vpop.permute.xlu0 %3400
  %3402 = vrot.lane.b32.xlu0 %v3366, 4
  %v3403 = vpop.permute.xlu0 %3402
  %3404 = vrot.lane.b32.xlu0 %v3373, 4
  %v3405 = vpop.permute.xlu0 %3404
  %s3422 = scalar_lea.vmem [#allocation2], 16
  %3423 = vst.msk [vmem:[%s3422] sm:$0xff] %vm2059, %v3375
  %3424 = vst.msk [vmem:[%s3422 + $0x10] sm:$0xff] %vm2059, %v3377
  %3425 = vst.msk [vmem:[%s3422 + $0x20] sm:$0xff] %vm2059, %v3379
  %3426 = vst.msk [vmem:[%s3422 + $0x30] sm:$0xff] %vm2059, %v3381
  %3427 = vst.msk [vmem:[%s3422 + $0x40] sm:$0xff] %vm2059, %v3383
  %3428 = vst.msk [vmem:[%s3422 + $0x50] sm:$0xff] %vm2059, %v3385
  %3429 = vst.msk [vmem:[%s3422 + $0x60] sm:$0xff] %vm2059, %v3387
  %3430 = vst.msk [vmem:[%s3422 + $0x70] sm:$0xff] %vm2059, %v3389
  %3431 = vst.msk [vmem:[%s3422 + $0x90] sm:$0xff] %vm2059, %v3391
  %3432 = vst.msk [vmem:[%s3422 + $0xa0] sm:$0xff] %vm2059, %v3393
  %3433 = vst.msk [vmem:[%s3422 + $0xb0] sm:$0xff] %vm2059, %v3395
  %3434 = vst.msk [vmem:[%s3422 + $0xc0] sm:$0xff] %vm2059, %v3397
  %3435 = vst.msk [vmem:[%s3422 + $0xd0] sm:$0xff] %vm2059, %v3399
  %3436 = vst.msk [vmem:[%s3422 + $0xe0] sm:$0xff] %vm2059, %v3401
  %3437 = vst.msk [vmem:[%s3422 + $0xf0] sm:$0xff] %vm2059, %v3403
  %3438 = vst.msk [vmem:[%s3422 + $0x100] sm:$0xff] %vm2059, %v3405
  %v3439 = vlaneseq
  %v3440 = vshrl.u32 %v3439, 7
  %v3441 = vsub.s32 1, %v3440
  %v3442 = vrot.slane %v332, %v3441
  %v3443 = vlaneseq
  %v3444 = vshrl.u32 %v3443, 7
  %v3445 = vsub.s32 1, %v3444
  %v3446 = vrot.slane %v340, %v3445
  %v3447 = vlaneseq
  %v3448 = vshrl.u32 %v3447, 7
  %v3449 = vsub.s32 1, %v3448
  %v3450 = vrot.slane %v339, %v3449
  %v3451 = vlaneseq
  %v3452 = vshrl.u32 %v3451, 7
  %v3453 = vsub.s32 1, %v3452
  %v3454 = vrot.slane %v341, %v3453
  %v3455 = vlaneseq
  %v3456 = vshrl.u32 %v3455, 7
  %v3457 = vsub.s32 1, %v3456
  %v3458 = vrot.slane %v349, %v3457
  %v3459 = vlaneseq
  %v3460 = vshrl.u32 %v3459, 7
  %v3461 = vsub.s32 1, %v3460
  %v3462 = vrot.slane %v357, %v3461
  %v3463 = vlaneseq
  %v3464 = vshrl.u32 %v3463, 7
  %v3465 = vsub.s32 1, %v3464
  %v3466 = vrot.slane %v356, %v3465
  %v3467 = vlaneseq
  %v3468 = vshrl.u32 %v3467, 7
  %v3469 = vsub.s32 1, %v3468
  %v3470 = vrot.slane %v358, %v3469
  %v3471 = vlaneseq
  %v3472 = vshrl.u32 %v3471, 7
  %v3473 = vsub.s32 1, %v3472
  %v3474 = vrot.slane %v400, %v3473
  %v3475 = vlaneseq
  %v3476 = vshrl.u32 %v3475, 7
  %v3477 = vsub.s32 1, %v3476
  %v3478 = vrot.slane %v408, %v3477
  %v3479 = vlaneseq
  %v3480 = vshrl.u32 %v3479, 7
  %v3481 = vsub.s32 1, %v3480
  %v3482 = vrot.slane %v407, %v3481
  %v3483 = vlaneseq
  %v3484 = vshrl.u32 %v3483, 7
  %v3485 = vsub.s32 1, %v3484
  %v3486 = vrot.slane %v409, %v3485
  %v3487 = vlaneseq
  %v3488 = vshrl.u32 %v3487, 7
  %v3489 = vsub.s32 1, %v3488
  %v3490 = vrot.slane %v417, %v3489
  %v3491 = vlaneseq
  %v3492 = vshrl.u32 %v3491, 7
  %v3493 = vsub.s32 1, %v3492
  %v3494 = vrot.slane %v425, %v3493
  %v3495 = vlaneseq
  %v3496 = vshrl.u32 %v3495, 7
  %v3497 = vsub.s32 1, %v3496
  %v3498 = vrot.slane %v424, %v3497
  %v3499 = vlaneseq
  %v3500 = vshrl.u32 %v3499, 7
  %v3501 = vsub.s32 1, %v3500
  %v3502 = vrot.slane %v426, %v3501
  %v3503 = vlaneseq
  %v3504 = vshrl.u32 %v3503, 7
  %v3505 = vsub.s32 1, %v3504
  %v3506 = vrot.slane %v468, %v3505
  %v3507 = vlaneseq
  %v3508 = vshrl.u32 %v3507, 7
  %v3509 = vsub.s32 1, %v3508
  %v3510 = vrot.slane %v476, %v3509
  %v3511 = vlaneseq
  %v3512 = vshrl.u32 %v3511, 7
  %v3513 = vsub.s32 1, %v3512
  %v3514 = vrot.slane %v475, %v3513
  %v3515 = vlaneseq
  %v3516 = vshrl.u32 %v3515, 7
  %v3517 = vsub.s32 1, %v3516
  %v3518 = vrot.slane %v477, %v3517
  %v3519 = vlaneseq
  %v3520 = vshrl.u32 %v3519, 7
  %v3521 = vsub.s32 1, %v3520
  %v3522 = vrot.slane %v485, %v3521
  %v3523 = vlaneseq
  %v3524 = vshrl.u32 %v3523, 7
  %v3525 = vsub.s32 1, %v3524
  %v3526 = vrot.slane %v493, %v3525
  %v3527 = vlaneseq
  %v3528 = vshrl.u32 %v3527, 7
  %v3529 = vsub.s32 1, %v3528
  %v3530 = vrot.slane %v492, %v3529
  %v3531 = vlaneseq
  %v3532 = vshrl.u32 %v3531, 7
  %v3533 = vsub.s32 1, %v3532
  %v3534 = vrot.slane %v494, %v3533
  %v3535 = vlaneseq
  %v3536 = vshrl.u32 %v3535, 7
  %v3537 = vsub.s32 1, %v3536
  %v3538 = vrot.slane %v536, %v3537
  %v3539 = vlaneseq
  %v3540 = vshrl.u32 %v3539, 7
  %v3541 = vsub.s32 1, %v3540
  %v3542 = vrot.slane %v544, %v3541
  %v3543 = vlaneseq
  %v3544 = vshrl.u32 %v3543, 7
  %v3545 = vsub.s32 1, %v3544
  %v3546 = vrot.slane %v543, %v3545
  %v3547 = vlaneseq
  %v3548 = vshrl.u32 %v3547, 7
  %v3549 = vsub.s32 1, %v3548
  %v3550 = vrot.slane %v545, %v3549
  %v3551 = vlaneseq
  %v3552 = vshrl.u32 %v3551, 7
  %v3553 = vsub.s32 1, %v3552
  %v3554 = vrot.slane %v553, %v3553
  %v3555 = vlaneseq
  %v3556 = vshrl.u32 %v3555, 7
  %v3557 = vsub.s32 1, %v3556
  %v3558 = vrot.slane %v561, %v3557
  %v3559 = vlaneseq
  %v3560 = vshrl.u32 %v3559, 7
  %v3561 = vsub.s32 1, %v3560
  %v3562 = vrot.slane %v560, %v3561
  %v3563 = vlaneseq
  %v3564 = vshrl.u32 %v3563, 7
  %v3565 = vsub.s32 1, %v3564
  %v3566 = vrot.slane %v562, %v3565
  %v3567 = vlaneseq
  %v3568 = vshrl.u32 %v3567, 7
  %v3569 = vsub.s32 1, %v3568
  %v3570 = vrot.slane %v604, %v3569
  %v3571 = vlaneseq
  %v3572 = vshrl.u32 %v3571, 7
  %v3573 = vsub.s32 1, %v3572
  %v3574 = vrot.slane %v612, %v3573
  %v3575 = vlaneseq
  %v3576 = vshrl.u32 %v3575, 7
  %v3577 = vsub.s32 1, %v3576
  %v3578 = vrot.slane %v611, %v3577
  %v3579 = vlaneseq
  %v3580 = vshrl.u32 %v3579, 7
  %v3581 = vsub.s32 1, %v3580
  %v3582 = vrot.slane %v613, %v3581
  %v3583 = vlaneseq
  %v3584 = vshrl.u32 %v3583, 7
  %v3585 = vsub.s32 1, %v3584
  %v3586 = vrot.slane %v621, %v3585
  %v3587 = vlaneseq
  %v3588 = vshrl.u32 %v3587, 7
  %v3589 = vsub.s32 1, %v3588
  %v3590 = vrot.slane %v629, %v3589
  %v3591 = vlaneseq
  %v3592 = vshrl.u32 %v3591, 7
  %v3593 = vsub.s32 1, %v3592
  %v3594 = vrot.slane %v628, %v3593
  %v3595 = vlaneseq
  %v3596 = vshrl.u32 %v3595, 7
  %v3597 = vsub.s32 1, %v3596
  %v3598 = vrot.slane %v630, %v3597
  %v3599 = vlaneseq
  %v3600 = vshrl.u32 %v3599, 7
  %v3601 = vsub.s32 1, %v3600
  %v3602 = vrot.slane %v672, %v3601
  %v3603 = vlaneseq
  %v3604 = vshrl.u32 %v3603, 7
  %v3605 = vsub.s32 1, %v3604
  %v3606 = vrot.slane %v680, %v3605
  %v3607 = vlaneseq
  %v3608 = vshrl.u32 %v3607, 7
  %v3609 = vsub.s32 1, %v3608
  %v3610 = vrot.slane %v679, %v3609
  %v3611 = vlaneseq
  %v3612 = vshrl.u32 %v3611, 7
  %v3613 = vsub.s32 1, %v3612
  %v3614 = vrot.slane %v681, %v3613
  %v3615 = vlaneseq
  %v3616 = vshrl.u32 %v3615, 7
  %v3617 = vsub.s32 1, %v3616
  %v3618 = vrot.slane %v689, %v3617
  %v3619 = vlaneseq
  %v3620 = vshrl.u32 %v3619, 7
  %v3621 = vsub.s32 1, %v3620
  %v3622 = vrot.slane %v697, %v3621
  %v3623 = vlaneseq
  %v3624 = vshrl.u32 %v3623, 7
  %v3625 = vsub.s32 1, %v3624
  %v3626 = vrot.slane %v696, %v3625
  %v3627 = vlaneseq
  %v3628 = vshrl.u32 %v3627, 7
  %v3629 = vsub.s32 1, %v3628
  %v3630 = vrot.slane %v698, %v3629
  %v3631 = vlaneseq
  %v3632 = vshrl.u32 %v3631, 7
  %v3633 = vsub.s32 1, %v3632
  %v3634 = vrot.slane %v740, %v3633
  %v3635 = vlaneseq
  %v3636 = vshrl.u32 %v3635, 7
  %v3637 = vsub.s32 1, %v3636
  %v3638 = vrot.slane %v748, %v3637
  %v3639 = vlaneseq
  %v3640 = vshrl.u32 %v3639, 7
  %v3641 = vsub.s32 1, %v3640
  %v3642 = vrot.slane %v747, %v3641
  %v3643 = vlaneseq
  %v3644 = vshrl.u32 %v3643, 7
  %v3645 = vsub.s32 1, %v3644
  %v3646 = vrot.slane %v749, %v3645
  %v3647 = vlaneseq
  %v3648 = vshrl.u32 %v3647, 7
  %v3649 = vsub.s32 1, %v3648
  %v3650 = vrot.slane %v757, %v3649
  %v3651 = vlaneseq
  %v3652 = vshrl.u32 %v3651, 7
  %v3653 = vsub.s32 1, %v3652
  %v3654 = vrot.slane %v765, %v3653
  %v3655 = vlaneseq
  %v3656 = vshrl.u32 %v3655, 7
  %v3657 = vsub.s32 1, %v3656
  %v3658 = vrot.slane %v764, %v3657
  %v3659 = vlaneseq
  %v3660 = vshrl.u32 %v3659, 7
  %v3661 = vsub.s32 1, %v3660
  %v3662 = vrot.slane %v766, %v3661
  %v3663 = vlaneseq
  %v3664 = vshrl.u32 %v3663, 7
  %v3665 = vsub.s32 1, %v3664
  %v3666 = vrot.slane %v808, %v3665
  %v3667 = vlaneseq
  %v3668 = vshrl.u32 %v3667, 7
  %v3669 = vsub.s32 1, %v3668
  %v3670 = vrot.slane %v816, %v3669
  %v3671 = vlaneseq
  %v3672 = vshrl.u32 %v3671, 7
  %v3673 = vsub.s32 1, %v3672
  %v3674 = vrot.slane %v815, %v3673
  %v3675 = vlaneseq
  %v3676 = vshrl.u32 %v3675, 7
  %v3677 = vsub.s32 1, %v3676
  %v3678 = vrot.slane %v817, %v3677
  %v3679 = vlaneseq
  %v3680 = vshrl.u32 %v3679, 7
  %v3681 = vsub.s32 1, %v3680
  %v3682 = vrot.slane %v825, %v3681
  %v3683 = vlaneseq
  %v3684 = vshrl.u32 %v3683, 7
  %v3685 = vsub.s32 1, %v3684
  %v3686 = vrot.slane %v833, %v3685
  %v3687 = vlaneseq
  %v3688 = vshrl.u32 %v3687, 7
  %v3689 = vsub.s32 1, %v3688
  %v3690 = vrot.slane %v832, %v3689
  %v3691 = vlaneseq
  %v3692 = vshrl.u32 %v3691, 7
  %v3693 = vsub.s32 1, %v3692
  %v3694 = vrot.slane %v834, %v3693
  %v3695 = vlaneseq
  %v3696 = vshrl.u32 %v3695, 7
  %v3697 = vsub.s32 1, %v3696
  %v3698 = vrot.slane %v876, %v3697
  %v3699 = vlaneseq
  %v3700 = vshrl.u32 %v3699, 7
  %v3701 = vsub.s32 1, %v3700
  %v3702 = vrot.slane %v884, %v3701
  %v3703 = vlaneseq
  %v3704 = vshrl.u32 %v3703, 7
  %v3705 = vsub.s32 1, %v3704
  %v3706 = vrot.slane %v883, %v3705
  %v3707 = vlaneseq
  %v3708 = vshrl.u32 %v3707, 7
  %v3709 = vsub.s32 1, %v3708
  %v3710 = vrot.slane %v885, %v3709
  %v3711 = vlaneseq
  %v3712 = vshrl.u32 %v3711, 7
  %v3713 = vsub.s32 1, %v3712
  %v3714 = vrot.slane %v893, %v3713
  %v3715 = vlaneseq
  %v3716 = vshrl.u32 %v3715, 7
  %v3717 = vsub.s32 1, %v3716
  %v3718 = vrot.slane %v901, %v3717
  %v3719 = vlaneseq
  %v3720 = vshrl.u32 %v3719, 7
  %v3721 = vsub.s32 1, %v3720
  %v3722 = vrot.slane %v900, %v3721
  %v3723 = vlaneseq
  %v3724 = vshrl.u32 %v3723, 7
  %v3725 = vsub.s32 1, %v3724
  %v3726 = vrot.slane %v902, %v3725
  %v3727 = vlaneseq
  %v3728 = vshrl.u32 %v3727, 7
  %v3729 = vsub.s32 1, %v3728
  %v3730 = vrot.slane %v944, %v3729
  %v3731 = vlaneseq
  %v3732 = vshrl.u32 %v3731, 7
  %v3733 = vsub.s32 1, %v3732
  %v3734 = vrot.slane %v952, %v3733
  %v3735 = vlaneseq
  %v3736 = vshrl.u32 %v3735, 7
  %v3737 = vsub.s32 1, %v3736
  %v3738 = vrot.slane %v951, %v3737
  %v3739 = vlaneseq
  %v3740 = vshrl.u32 %v3739, 7
  %v3741 = vsub.s32 1, %v3740
  %v3742 = vrot.slane %v953, %v3741
  %v3743 = vlaneseq
  %v3744 = vshrl.u32 %v3743, 7
  %v3745 = vsub.s32 1, %v3744
  %v3746 = vrot.slane %v961, %v3745
  %v3747 = vlaneseq
  %v3748 = vshrl.u32 %v3747, 7
  %v3749 = vsub.s32 1, %v3748
  %v3750 = vrot.slane %v969, %v3749
  %v3751 = vlaneseq
  %v3752 = vshrl.u32 %v3751, 7
  %v3753 = vsub.s32 1, %v3752
  %v3754 = vrot.slane %v968, %v3753
  %v3755 = vlaneseq
  %v3756 = vshrl.u32 %v3755, 7
  %v3757 = vsub.s32 1, %v3756
  %v3758 = vrot.slane %v970, %v3757
  %v3759 = vlaneseq
  %v3760 = vshrl.u32 %v3759, 7
  %v3761 = vsub.s32 1, %v3760
  %v3762 = vrot.slane %v1012, %v3761
  %v3763 = vlaneseq
  %v3764 = vshrl.u32 %v3763, 7
  %v3765 = vsub.s32 1, %v3764
  %v3766 = vrot.slane %v1020, %v3765
  %v3767 = vlaneseq
  %v3768 = vshrl.u32 %v3767, 7
  %v3769 = vsub.s32 1, %v3768
  %v3770 = vrot.slane %v1019, %v3769
  %v3771 = vlaneseq
  %v3772 = vshrl.u32 %v3771, 7
  %v3773 = vsub.s32 1, %v3772
  %v3774 = vrot.slane %v1021, %v3773
  %v3775 = vlaneseq
  %v3776 = vshrl.u32 %v3775, 7
  %v3777 = vsub.s32 1, %v3776
  %v3778 = vrot.slane %v1029, %v3777
  %v3779 = vlaneseq
  %v3780 = vshrl.u32 %v3779, 7
  %v3781 = vsub.s32 1, %v3780
  %v3782 = vrot.slane %v1037, %v3781
  %v3783 = vlaneseq
  %v3784 = vshrl.u32 %v3783, 7
  %v3785 = vsub.s32 1, %v3784
  %v3786 = vrot.slane %v1036, %v3785
  %v3787 = vlaneseq
  %v3788 = vshrl.u32 %v3787, 7
  %v3789 = vsub.s32 1, %v3788
  %v3790 = vrot.slane %v1038, %v3789
  %v3791 = vlaneseq
  %v3792 = vshrl.u32 %v3791, 7
  %v3793 = vsub.s32 1, %v3792
  %v3794 = vrot.slane %v1080, %v3793
  %v3795 = vlaneseq
  %v3796 = vshrl.u32 %v3795, 7
  %v3797 = vsub.s32 1, %v3796
  %v3798 = vrot.slane %v1088, %v3797
  %v3799 = vlaneseq
  %v3800 = vshrl.u32 %v3799, 7
  %v3801 = vsub.s32 1, %v3800
  %v3802 = vrot.slane %v1087, %v3801
  %v3803 = vlaneseq
  %v3804 = vshrl.u32 %v3803, 7
  %v3805 = vsub.s32 1, %v3804
  %v3806 = vrot.slane %v1089, %v3805
  %v3807 = vlaneseq
  %v3808 = vshrl.u32 %v3807, 7
  %v3809 = vsub.s32 1, %v3808
  %v3810 = vrot.slane %v1097, %v3809
  %v3811 = vlaneseq
  %v3812 = vshrl.u32 %v3811, 7
  %v3813 = vsub.s32 1, %v3812
  %v3814 = vrot.slane %v1105, %v3813
  %v3815 = vlaneseq
  %v3816 = vshrl.u32 %v3815, 7
  %v3817 = vsub.s32 1, %v3816
  %v3818 = vrot.slane %v1104, %v3817
  %v3819 = vlaneseq
  %v3820 = vshrl.u32 %v3819, 7
  %v3821 = vsub.s32 1, %v3820
  %v3822 = vrot.slane %v1106, %v3821
  %v3823 = vlaneseq
  %v3824 = vshrl.u32 %v3823, 7
  %v3825 = vsub.s32 1, %v3824
  %v3826 = vrot.slane %v1148, %v3825
  %v3827 = vlaneseq
  %v3828 = vshrl.u32 %v3827, 7
  %v3829 = vsub.s32 1, %v3828
  %v3830 = vrot.slane %v1156, %v3829
  %v3831 = vlaneseq
  %v3832 = vshrl.u32 %v3831, 7
  %v3833 = vsub.s32 1, %v3832
  %v3834 = vrot.slane %v1155, %v3833
  %v3835 = vlaneseq
  %v3836 = vshrl.u32 %v3835, 7
  %v3837 = vsub.s32 1, %v3836
  %v3838 = vrot.slane %v1157, %v3837
  %v3839 = vlaneseq
  %v3840 = vshrl.u32 %v3839, 7
  %v3841 = vsub.s32 1, %v3840
  %v3842 = vrot.slane %v1165, %v3841
  %v3843 = vlaneseq
  %v3844 = vshrl.u32 %v3843, 7
  %v3845 = vsub.s32 1, %v3844
  %v3846 = vrot.slane %v1173, %v3845
  %v3847 = vlaneseq
  %v3848 = vshrl.u32 %v3847, 7
  %v3849 = vsub.s32 1, %v3848
  %v3850 = vrot.slane %v1172, %v3849
  %v3851 = vlaneseq
  %v3852 = vshrl.u32 %v3851, 7
  %v3853 = vsub.s32 1, %v3852
  %v3854 = vrot.slane %v1174, %v3853
  %v3855 = vlaneseq
  %v3856 = vshrl.u32 %v3855, 7
  %v3857 = vsub.s32 1, %v3856
  %v3858 = vrot.slane %v1216, %v3857
  %v3859 = vlaneseq
  %v3860 = vshrl.u32 %v3859, 7
  %v3861 = vsub.s32 1, %v3860
  %v3862 = vrot.slane %v1224, %v3861
  %v3863 = vlaneseq
  %v3864 = vshrl.u32 %v3863, 7
  %v3865 = vsub.s32 1, %v3864
  %v3866 = vrot.slane %v1223, %v3865
  %v3867 = vlaneseq
  %v3868 = vshrl.u32 %v3867, 7
  %v3869 = vsub.s32 1, %v3868
  %v3870 = vrot.slane %v1225, %v3869
  %v3871 = vlaneseq
  %v3872 = vshrl.u32 %v3871, 7
  %v3873 = vsub.s32 1, %v3872
  %v3874 = vrot.slane %v1233, %v3873
  %v3875 = vlaneseq
  %v3876 = vshrl.u32 %v3875, 7
  %v3877 = vsub.s32 1, %v3876
  %v3878 = vrot.slane %v1241, %v3877
  %v3879 = vlaneseq
  %v3880 = vshrl.u32 %v3879, 7
  %v3881 = vsub.s32 1, %v3880
  %v3882 = vrot.slane %v1240, %v3881
  %v3883 = vlaneseq
  %v3884 = vshrl.u32 %v3883, 7
  %v3885 = vsub.s32 1, %v3884
  %v3886 = vrot.slane %v1242, %v3885
  %v3887 = vlaneseq
  %v3888 = vshrl.u32 %v3887, 7
  %v3889 = vsub.s32 1, %v3888
  %v3890 = vrot.slane %v1284, %v3889
  %v3891 = vlaneseq
  %v3892 = vshrl.u32 %v3891, 7
  %v3893 = vsub.s32 1, %v3892
  %v3894 = vrot.slane %v1292, %v3893
  %v3895 = vlaneseq
  %v3896 = vshrl.u32 %v3895, 7
  %v3897 = vsub.s32 1, %v3896
  %v3898 = vrot.slane %v1291, %v3897
  %v3899 = vlaneseq
  %v3900 = vshrl.u32 %v3899, 7
  %v3901 = vsub.s32 1, %v3900
  %v3902 = vrot.slane %v1293, %v3901
  %v3903 = vlaneseq
  %v3904 = vshrl.u32 %v3903, 7
  %v3905 = vsub.s32 1, %v3904
  %v3906 = vrot.slane %v1301, %v3905
  %v3907 = vlaneseq
  %v3908 = vshrl.u32 %v3907, 7
  %v3909 = vsub.s32 1, %v3908
  %v3910 = vrot.slane %v1309, %v3909
  %v3911 = vlaneseq
  %v3912 = vshrl.u32 %v3911, 7
  %v3913 = vsub.s32 1, %v3912
  %v3914 = vrot.slane %v1308, %v3913
  %v3915 = vlaneseq
  %v3916 = vshrl.u32 %v3915, 7
  %v3917 = vsub.s32 1, %v3916
  %v3918 = vrot.slane %v1310, %v3917
  %v3919 = vlaneseq
  %v3920 = vshrl.u32 %v3919, 7
  %v3921 = vsub.s32 1, %v3920
  %v3922 = vrot.slane %v1352, %v3921
  %v3923 = vlaneseq
  %v3924 = vshrl.u32 %v3923, 7
  %v3925 = vsub.s32 1, %v3924
  %v3926 = vrot.slane %v1360, %v3925
  %v3927 = vlaneseq
  %v3928 = vshrl.u32 %v3927, 7
  %v3929 = vsub.s32 1, %v3928
  %v3930 = vrot.slane %v1359, %v3929
  %v3931 = vlaneseq
  %v3932 = vshrl.u32 %v3931, 7
  %v3933 = vsub.s32 1, %v3932
  %v3934 = vrot.slane %v1361, %v3933
  %v3935 = vlaneseq
  %v3936 = vshrl.u32 %v3935, 7
  %v3937 = vsub.s32 1, %v3936
  %v3938 = vrot.slane %v1369, %v3937
  %v3939 = vlaneseq
  %v3940 = vshrl.u32 %v3939, 7
  %v3941 = vsub.s32 1, %v3940
  %v3942 = vrot.slane %v1377, %v3941
  %v3943 = vlaneseq
  %v3944 = vshrl.u32 %v3943, 7
  %v3945 = vsub.s32 1, %v3944
  %v3946 = vrot.slane %v1376, %v3945
  %v3947 = vlaneseq
  %v3948 = vshrl.u32 %v3947, 7
  %v3949 = vsub.s32 1, %v3948
  %v3950 = vrot.slane %v1378, %v3949
  %v3951 = vsel %vm1893, %v3446, %v3442
  %v3952 = vsel %vm1895, %v3450, %v3951
  %v3953 = vsel %vm1897, %v3454, %v3952
  %v3954 = vsel %vm1899, %v3458, %v3953
  %v3955 = vsel %vm1901, %v3462, %v3954
  %v3956 = vsel %vm1903, %v3466, %v3955
  %v3957 = vsel %vm1893, %v3478, %v3474
  %v3958 = vsel %vm1895, %v3482, %v3957
  %v3959 = vsel %vm1897, %v3486, %v3958
  %v3960 = vsel %vm1899, %v3490, %v3959
  %v3961 = vsel %vm1901, %v3494, %v3960
  %v3962 = vsel %vm1903, %v3498, %v3961
  %v3963 = vsel %vm1893, %v3510, %v3506
  %v3964 = vsel %vm1895, %v3514, %v3963
  %v3965 = vsel %vm1897, %v3518, %v3964
  %v3966 = vsel %vm1899, %v3522, %v3965
  %v3967 = vsel %vm1901, %v3526, %v3966
  %v3968 = vsel %vm1903, %v3530, %v3967
  %v3969 = vsel %vm1893, %v3542, %v3538
  %v3970 = vsel %vm1895, %v3546, %v3969
  %v3971 = vsel %vm1897, %v3550, %v3970
  %v3972 = vsel %vm1899, %v3554, %v3971
  %v3973 = vsel %vm1901, %v3558, %v3972
  %v3974 = vsel %vm1903, %v3562, %v3973
  %v3975 = vsel %vm1893, %v3574, %v3570
  %v3976 = vsel %vm1895, %v3578, %v3975
  %v3977 = vsel %vm1897, %v3582, %v3976
  %v3978 = vsel %vm1899, %v3586, %v3977
  %v3979 = vsel %vm1901, %v3590, %v3978
  %v3980 = vsel %vm1903, %v3594, %v3979
  %v3981 = vsel %vm1893, %v3606, %v3602
  %v3982 = vsel %vm1895, %v3610, %v3981
  %v3983 = vsel %vm1897, %v3614, %v3982
  %v3984 = vsel %vm1899, %v3618, %v3983
  %v3985 = vsel %vm1901, %v3622, %v3984
  %v3986 = vsel %vm1903, %v3626, %v3985
  %v3987 = vsel %vm1893, %v3638, %v3634
  %v3988 = vsel %vm1895, %v3642, %v3987
  %v3989 = vsel %vm1897, %v3646, %v3988
  %v3990 = vsel %vm1899, %v3650, %v3989
  %v3991 = vsel %vm1901, %v3654, %v3990
  %v3992 = vsel %vm1903, %v3658, %v3991
  %v3993 = vsel %vm1893, %v3670, %v3666
  %v3994 = vsel %vm1895, %v3674, %v3993
  %v3995 = vsel %vm1897, %v3678, %v3994
  %v3996 = vsel %vm1899, %v3682, %v3995
  %v3997 = vsel %vm1901, %v3686, %v3996
  %v3998 = vsel %vm1903, %v3690, %v3997
  %v3999 = vsel %vm1893, %v3702, %v3698
  %v4000 = vsel %vm1895, %v3706, %v3999
  %v4001 = vsel %vm1897, %v3710, %v4000
  %v4002 = vsel %vm1899, %v3714, %v4001
  %v4003 = vsel %vm1901, %v3718, %v4002
  %v4004 = vsel %vm1903, %v3722, %v4003
  %v4005 = vsel %vm1893, %v3734, %v3730
  %v4006 = vsel %vm1895, %v3738, %v4005
  %v4007 = vsel %vm1897, %v3742, %v4006
  %v4008 = vsel %vm1899, %v3746, %v4007
  %v4009 = vsel %vm1901, %v3750, %v4008
  %v4010 = vsel %vm1903, %v3754, %v4009
  %v4011 = vsel %vm1893, %v3766, %v3762
  %v4012 = vsel %vm1895, %v3770, %v4011
  %v4013 = vsel %vm1897, %v3774, %v4012
  %v4014 = vsel %vm1899, %v3778, %v4013
  %v4015 = vsel %vm1901, %v3782, %v4014
  %v4016 = vsel %vm1903, %v3786, %v4015
  %v4017 = vsel %vm1893, %v3798, %v3794
  %v4018 = vsel %vm1895, %v3802, %v4017
  %v4019 = vsel %vm1897, %v3806, %v4018
  %v4020 = vsel %vm1899, %v3810, %v4019
  %v4021 = vsel %vm1901, %v3814, %v4020
  %v4022 = vsel %vm1903, %v3818, %v4021
  %v4023 = vsel %vm1893, %v3830, %v3826
  %v4024 = vsel %vm1895, %v3834, %v4023
  %v4025 = vsel %vm1897, %v3838, %v4024
  %v4026 = vsel %vm1899, %v3842, %v4025
  %v4027 = vsel %vm1901, %v3846, %v4026
  %v4028 = vsel %vm1903, %v3850, %v4027
  %v4029 = vsel %vm1893, %v3862, %v3858
  %v4030 = vsel %vm1895, %v3866, %v4029
  %v4031 = vsel %vm1897, %v3870, %v4030
  %v4032 = vsel %vm1899, %v3874, %v4031
  %v4033 = vsel %vm1901, %v3878, %v4032
  %v4034 = vsel %vm1903, %v3882, %v4033
  %v4035 = vsel %vm1893, %v3894, %v3890
  %v4036 = vsel %vm1895, %v3898, %v4035
  %v4037 = vsel %vm1897, %v3902, %v4036
  %v4038 = vsel %vm1899, %v3906, %v4037
  %v4039 = vsel %vm1901, %v3910, %v4038
  %v4040 = vsel %vm1903, %v3914, %v4039
  %v4041 = vsel %vm1893, %v3926, %v3922
  %v4042 = vsel %vm1895, %v3930, %v4041
  %v4043 = vsel %vm1897, %v3934, %v4042
  %v4044 = vsel %vm1899, %v3938, %v4043
  %v4045 = vsel %vm1901, %v3942, %v4044
  %v4046 = vsel %vm1903, %v3946, %v4045
  %4079 = vst.msk [vmem:[%s3422] sm:$0xfe] %vm2716, %v3956
  %4080 = vst.msk [vmem:[%s3422 + $0x8] sm:$0x1] %vm2718, %v3470
  %4081 = vst.msk [vmem:[%s3422 + $0x10] sm:$0xfe] %vm2716, %v3962
  %4082 = vst.msk [vmem:[%s3422 + $0x18] sm:$0x1] %vm2718, %v3502
  %4083 = vst.msk [vmem:[%s3422 + $0x20] sm:$0xfe] %vm2716, %v3968
  %4084 = vst.msk [vmem:[%s3422 + $0x28] sm:$0x1] %vm2718, %v3534
  %4085 = vst.msk [vmem:[%s3422 + $0x30] sm:$0xfe] %vm2716, %v3974
  %4086 = vst.msk [vmem:[%s3422 + $0x38] sm:$0x1] %vm2718, %v3566
  %4087 = vst.msk [vmem:[%s3422 + $0x40] sm:$0xfe] %vm2716, %v3980
  %4088 = vst.msk [vmem:[%s3422 + $0x48] sm:$0x1] %vm2718, %v3598
  %4089 = vst.msk [vmem:[%s3422 + $0x50] sm:$0xfe] %vm2716, %v3986
  %4090 = vst.msk [vmem:[%s3422 + $0x58] sm:$0x1] %vm2718, %v3630
  %4091 = vst.msk [vmem:[%s3422 + $0x60] sm:$0xfe] %vm2716, %v3992
  %4092 = vst.msk [vmem:[%s3422 + $0x68] sm:$0x1] %vm2718, %v3662
  %4093 = vst.msk [vmem:[%s3422 + $0x70] sm:$0xfe] %vm2716, %v3998
  %4094 = vst.msk [vmem:[%s3422 + $0x78] sm:$0x1] %vm2718, %v3694
  %4095 = vst.msk [vmem:[%s3422 + $0x90] sm:$0xfe] %vm2716, %v4004
  %4096 = vst.msk [vmem:[%s3422 + $0x98] sm:$0x1] %vm2718, %v3726
  %4097 = vst.msk [vmem:[%s3422 + $0xa0] sm:$0xfe] %vm2716, %v4010
  %4098 = vst.msk [vmem:[%s3422 + $0xa8] sm:$0x1] %vm2718, %v3758
  %4099 = vst.msk [vmem:[%s3422 + $0xb0] sm:$0xfe] %vm2716, %v4016
  %4100 = vst.msk [vmem:[%s3422 + $0xb8] sm:$0x1] %vm2718, %v3790
  %4101 = vst.msk [vmem:[%s3422 + $0xc0] sm:$0xfe] %vm2716, %v4022
  %4102 = vst.msk [vmem:[%s3422 + $0xc8] sm:$0x1] %vm2718, %v3822
  %4103 = vst.msk [vmem:[%s3422 + $0xd0] sm:$0xfe] %vm2716, %v4028
  %4104 = vst.msk [vmem:[%s3422 + $0xd8] sm:$0x1] %vm2718, %v3854
  %4105 = vst.msk [vmem:[%s3422 + $0xe0] sm:$0xfe] %vm2716, %v4034
  %4106 = vst.msk [vmem:[%s3422 + $0xe8] sm:$0x1] %vm2718, %v3886
  %4107 = vst.msk [vmem:[%s3422 + $0xf0] sm:$0xfe] %vm2716, %v4040
  %4108 = vst.msk [vmem:[%s3422 + $0xf8] sm:$0x1] %vm2718, %v3918
  %4109 = vst.msk [vmem:[%s3422 + $0x100] sm:$0xfe] %vm2716, %v4046
  %4110 = vst.msk [vmem:[%s3422 + $0x108] sm:$0x1] %vm2718, %v3950
  %v4111 = vld [vmem:[#allocation2] sm:$0xff]
  %v4112 = vld [vmem:[#allocation2 + $0x10] sm:$0xff]
  %v4113 = vld [vmem:[#allocation2 + $0x20] sm:$0xff]
  %v4114 = vld [vmem:[#allocation2 + $0x30] sm:$0xff]
  %v4115 = vld [vmem:[#allocation2 + $0x40] sm:$0xff]
  %v4116 = vld [vmem:[#allocation2 + $0x50] sm:$0xff]
  %v4117 = vld [vmem:[#allocation2 + $0x60] sm:$0xff]
  %v4118 = vld [vmem:[#allocation2 + $0x70] sm:$0xff]
  %v4119 = vld [vmem:[#allocation2 + $0x90] sm:$0xff]
  %v4120 = vld [vmem:[#allocation2 + $0xa0] sm:$0xff]
  %v4121 = vld [vmem:[#allocation2 + $0xb0] sm:$0xff]
  %v4122 = vld [vmem:[#allocation2 + $0xc0] sm:$0xff]
  %v4123 = vld [vmem:[#allocation2 + $0xd0] sm:$0xff]
  %v4124 = vld [vmem:[#allocation2 + $0xe0] sm:$0xff]
  %v4125 = vld [vmem:[#allocation2 + $0xf0] sm:$0xff]
  %v4126 = vld [vmem:[#allocation2 + $0x100] sm:$0xff]
  %v4127 = vld [vmem:[%s1] sm:$0xff]
  %v4128 = vld [vmem:[#allocation2 + $0x1] sm:$0xff]
  %v4129 = vld [vmem:[#allocation2 + $0x11] sm:$0xff]
  %v4130 = vld [vmem:[#allocation2 + $0x21] sm:$0xff]
  %v4131 = vld [vmem:[#allocation2 + $0x31] sm:$0xff]
  %v4132 = vld [vmem:[#allocation2 + $0x41] sm:$0xff]
  %v4133 = vld [vmem:[#allocation2 + $0x51] sm:$0xff]
  %v4134 = vld [vmem:[#allocation2 + $0x61] sm:$0xff]
  %v4135 = vld [vmem:[#allocation2 + $0x71] sm:$0xff]
  %v4136 = vld [vmem:[#allocation2 + $0x91] sm:$0xff]
  %v4137 = vld [vmem:[#allocation2 + $0xa1] sm:$0xff]
  %v4138 = vld [vmem:[#allocation2 + $0xb1] sm:$0xff]
  %v4139 = vld [vmem:[#allocation2 + $0xc1] sm:$0xff]
  %v4140 = vld [vmem:[#allocation2 + $0xd1] sm:$0xff]
  %v4141 = vld [vmem:[#allocation2 + $0xe1] sm:$0xff]
  %v4142 = vld [vmem:[#allocation2 + $0xf1] sm:$0xff]
  %v4143 = vld [vmem:[#allocation2 + $0x101] sm:$0xff]
  %s4144 = scalar_lea.vmem %s1, 8
  %v4145 = vld [vmem:[%s4144] sm:$0xff]
  %v4147 = vsel %vm46, %v4128, 0
  %v4150 = vsel %vm46, %v4129, 0
  %v4153 = vsel %vm46, %v4130, 0
  %v4156 = vsel %vm46, %v4131, 0
  %v4159 = vsel %vm46, %v4132, 0
  %v4162 = vsel %vm46, %v4133, 0
  %v4165 = vsel %vm46, %v4134, 0
  %v4168 = vsel %vm46, %v4135, 0
  %v4171 = vsel %vm46, %v4136, 0
  %v4174 = vsel %vm46, %v4137, 0
  %v4177 = vsel %vm46, %v4138, 0
  %v4180 = vsel %vm46, %v4139, 0
  %v4183 = vsel %vm46, %v4140, 0
  %v4186 = vsel %vm46, %v4141, 0
  %v4189 = vsel %vm46, %v4142, 0
  %v4192 = vsel %vm46, %v4143, 0
  %4194 = vmatprep.subr.mxu0 0.0
  %4195 = vmatpush1.msra.mxu0 0.0
  %4196 = vmatprep.subr.mxu0 0.0
  %4197 = vmatpush1.msra.mxu0 0.0
  %4198 = vmatprep.subr.mxu0 0.0
  %4199 = vmatpush1.msra.mxu0 0.0
  %4200 = vmatprep.subr.mxu0 0.0
  %4201 = vmatpush1.msra.mxu0 0.0
  %4202 = vmatprep.subr.mxu0 0.0
  %4203 = vmatpush1.msra.mxu0 0.0
  %4204 = vmatprep.subr.mxu0 0.0
  %4205 = vmatpush1.msra.mxu0 0.0
  %4206 = vmatprep.subr.mxu0 0.0
  %4207 = vmatpush1.msra.mxu0 0.0
  %4208 = vmatprep.subr.mxu0 0.0
  %4209 = vmatpush1.msra.mxu0 0.0
  %4210 = vmatprep.subr.mxu0 0.0
  %4211 = vmatpush1.msra.mxu0 0.0
  %4212 = vmatprep.subr.mxu0 0.0
  %4213 = vmatpush1.msra.mxu0 0.0
  %4214 = vmatprep.subr.mxu0 0.0
  %4215 = vmatpush1.msra.mxu0 0.0
  %4216 = vmatprep.subr.mxu0 0.0
  %4217 = vmatpush1.msra.mxu0 0.0
  %4218 = vmatprep.subr.mxu0 0.0
  %4219 = vmatpush1.msra.mxu0 0.0
  %4220 = vmatprep.subr.mxu0 0.0
  %4221 = vmatpush1.msra.mxu0 0.0
  %4222 = vmatprep.subr.mxu0 0.0
  %4223 = vmatpush1.msra.mxu0 0.0
  %4224 = vmatprep.subr.mxu0 0.0
  %4225 = vmatpush1.msra.mxu0 %v4145
  %4226 = vmatprep.subr.mxu0 0.0
  %4227 = vmatpush2.msra.mxu0 0.0
  %4228 = vmatprep.subr.mxu0 0.0
  %4229 = vmatpush2.msra.mxu0 0.0
  %4230 = vmatprep.subr.mxu0 0.0
  %4231 = vmatpush2.msra.mxu0 0.0
  %4232 = vmatprep.subr.mxu0 0.0
  %4233 = vmatpush2.msra.mxu0 0.0
  %4234 = vmatprep.subr.mxu0 0.0
  %4235 = vmatpush2.msra.mxu0 0.0
  %4236 = vmatprep.subr.mxu0 0.0
  %4237 = vmatpush2.msra.mxu0 0.0
  %4238 = vmatprep.subr.mxu0 0.0
  %4239 = vmatpush2.msra.mxu0 0.0
  %4240 = vmatprep.subr.mxu0 0.0
  %4241 = vmatpush2.msra.mxu0 0.0
  %4242 = vmatprep.subr.mxu0 0.0
  %4243 = vmatpush2.msra.mxu0 0.0
  %4244 = vmatprep.subr.mxu0 0.0
  %4245 = vmatpush2.msra.mxu0 0.0
  %4246 = vmatprep.subr.mxu0 0.0
  %4247 = vmatpush2.msra.mxu0 0.0
  %4248 = vmatprep.subr.mxu0 0.0
  %4249 = vmatpush2.msra.mxu0 0.0
  %4250 = vmatprep.subr.mxu0 0.0
  %4251 = vmatpush2.msra.mxu0 0.0
  %4252 = vmatprep.subr.mxu0 0.0
  %4253 = vmatpush2.msra.mxu0 0.0
  %4254 = vmatprep.subr.mxu0 0.0
  %4255 = vmatpush2.msra.mxu0 0.0
  %4256 = vmatprep.subr.mxu0 0.0
  %4257 = vmatpush2.msra.mxu0 0.0
  %4258 = vmatprep.mubr.f32.mxu0 0.0
  %4259 = vmatmul.mubr.f32.gmra.mxu0 %v4147
  %v4260 = vpop.f32.mrf.mxu0
  %v4261 = vadd.f32 0.0, %v4260
  %v4262 = vpop.f32.mrf.mxu0
  %4263 = vmatprep.mubr.f32.mxu0 0.0
  %4264 = vmatmul.mubr.f32.gmra.mxu0 %v4150
  %v4265 = vpop.f32.mrf.mxu0
  %v4266 = vadd.f32 0.0, %v4265
  %v4267 = vpop.f32.mrf.mxu0
  %4268 = vmatprep.mubr.f32.mxu0 0.0
  %4269 = vmatmul.mubr.f32.gmra.mxu0 %v4153
  %v4270 = vpop.f32.mrf.mxu0
  %v4271 = vadd.f32 0.0, %v4270
  %v4272 = vpop.f32.mrf.mxu0
  %4273 = vmatprep.mubr.f32.mxu0 0.0
  %4274 = vmatmul.mubr.f32.gmra.mxu0 %v4156
  %v4275 = vpop.f32.mrf.mxu0
  %v4276 = vadd.f32 0.0, %v4275
  %v4277 = vpop.f32.mrf.mxu0
  %4278 = vmatprep.mubr.f32.mxu0 0.0
  %4279 = vmatmul.mubr.f32.gmra.mxu0 %v4159
  %v4280 = vpop.f32.mrf.mxu0
  %v4281 = vadd.f32 0.0, %v4280
  %v4282 = vpop.f32.mrf.mxu0
  %4283 = vmatprep.mubr.f32.mxu0 0.0
  %4284 = vmatmul.mubr.f32.gmra.mxu0 %v4162
  %v4285 = vpop.f32.mrf.mxu0
  %v4286 = vadd.f32 0.0, %v4285
  %v4287 = vpop.f32.mrf.mxu0
  %4288 = vmatprep.mubr.f32.mxu0 0.0
  %4289 = vmatmul.mubr.f32.gmra.mxu0 %v4165
  %v4290 = vpop.f32.mrf.mxu0
  %v4291 = vadd.f32 0.0, %v4290
  %v4292 = vpop.f32.mrf.mxu0
  %4293 = vmatprep.mubr.f32.mxu0 0.0
  %4294 = vmatmul.mubr.f32.gmra.mxu0 %v4168
  %v4295 = vpop.f32.mrf.mxu0
  %v4296 = vadd.f32 0.0, %v4295
  %v4297 = vpop.f32.mrf.mxu0
  %4298 = vmatprep.mubr.f32.mxu0 0.0
  %4299 = vmatmul.mubr.f32.gmra.mxu0 %v4171
  %v4300 = vpop.f32.mrf.mxu0
  %v4301 = vadd.f32 0.0, %v4300
  %v4302 = vpop.f32.mrf.mxu0
  %4303 = vmatprep.mubr.f32.mxu0 0.0
  %4304 = vmatmul.mubr.f32.gmra.mxu0 %v4174
  %v4305 = vpop.f32.mrf.mxu0
  %v4306 = vadd.f32 0.0, %v4305
  %v4307 = vpop.f32.mrf.mxu0
  %4308 = vmatprep.mubr.f32.mxu0 0.0
  %4309 = vmatmul.mubr.f32.gmra.mxu0 %v4177
  %v4310 = vpop.f32.mrf.mxu0
  %v4311 = vadd.f32 0.0, %v4310
  %v4312 = vpop.f32.mrf.mxu0
  %4313 = vmatprep.mubr.f32.mxu0 0.0
  %4314 = vmatmul.mubr.f32.gmra.mxu0 %v4180
  %v4315 = vpop.f32.mrf.mxu0
  %v4316 = vadd.f32 0.0, %v4315
  %v4317 = vpop.f32.mrf.mxu0
  %4318 = vmatprep.mubr.f32.mxu0 0.0
  %4319 = vmatmul.mubr.f32.gmra.mxu0 %v4183
  %v4320 = vpop.f32.mrf.mxu0
  %v4321 = vadd.f32 0.0, %v4320
  %v4322 = vpop.f32.mrf.mxu0
  %4323 = vmatprep.mubr.f32.mxu0 0.0
  %4324 = vmatmul.mubr.f32.gmra.mxu0 %v4186
  %v4325 = vpop.f32.mrf.mxu0
  %v4326 = vadd.f32 0.0, %v4325
  %v4327 = vpop.f32.mrf.mxu0
  %4328 = vmatprep.mubr.f32.mxu0 0.0
  %4329 = vmatmul.mubr.f32.gmra.mxu0 %v4189
  %v4330 = vpop.f32.mrf.mxu0
  %v4331 = vadd.f32 0.0, %v4330
  %v4332 = vpop.f32.mrf.mxu0
  %4333 = vmatprep.mubr.f32.mxu0 0.0
  %4334 = vmatmul.mubr.f32.gmra.mxu0 %v4192
  %v4335 = vpop.f32.mrf.mxu0
  %v4336 = vadd.f32 0.0, %v4335
  %v4337 = vpop.f32.mrf.mxu0
  %4338 = vdwg.mxu0
  %v4340 = vsel %vm46, %v4111, 0
  %v4343 = vsel %vm46, %v4112, 0
  %v4346 = vsel %vm46, %v4113, 0
  %v4349 = vsel %vm46, %v4114, 0
  %v4352 = vsel %vm46, %v4115, 0
  %v4355 = vsel %vm46, %v4116, 0
  %v4358 = vsel %vm46, %v4117, 0
  %v4361 = vsel %vm46, %v4118, 0
  %v4364 = vsel %vm46, %v4119, 0
  %v4367 = vsel %vm46, %v4120, 0
  %v4370 = vsel %vm46, %v4121, 0
  %v4373 = vsel %vm46, %v4122, 0
  %v4376 = vsel %vm46, %v4123, 0
  %v4379 = vsel %vm46, %v4124, 0
  %v4382 = vsel %vm46, %v4125, 0
  %v4385 = vsel %vm46, %v4126, 0
  %4387 = vmatprep.subr.mxu0 0.0
  %4388 = vmatpush1.msra.mxu0 0.0
  %4389 = vmatprep.subr.mxu0 0.0
  %4390 = vmatpush1.msra.mxu0 0.0
  %4391 = vmatprep.subr.mxu0 0.0
  %4392 = vmatpush1.msra.mxu0 0.0
  %4393 = vmatprep.subr.mxu0 0.0
  %4394 = vmatpush1.msra.mxu0 0.0
  %4395 = vmatprep.subr.mxu0 0.0
  %4396 = vmatpush1.msra.mxu0 0.0
  %4397 = vmatprep.subr.mxu0 0.0
  %4398 = vmatpush1.msra.mxu0 0.0
  %4399 = vmatprep.subr.mxu0 0.0
  %4400 = vmatpush1.msra.mxu0 0.0
  %4401 = vmatprep.subr.mxu0 0.0
  %4402 = vmatpush1.msra.mxu0 0.0
  %4403 = vmatprep.subr.mxu0 0.0
  %4404 = vmatpush1.msra.mxu0 0.0
  %4405 = vmatprep.subr.mxu0 0.0
  %4406 = vmatpush1.msra.mxu0 0.0
  %4407 = vmatprep.subr.mxu0 0.0
  %4408 = vmatpush1.msra.mxu0 0.0
  %4409 = vmatprep.subr.mxu0 0.0
  %4410 = vmatpush1.msra.mxu0 0.0
  %4411 = vmatprep.subr.mxu0 0.0
  %4412 = vmatpush1.msra.mxu0 0.0
  %4413 = vmatprep.subr.mxu0 0.0
  %4414 = vmatpush1.msra.mxu0 0.0
  %4415 = vmatprep.subr.mxu0 0.0
  %4416 = vmatpush1.msra.mxu0 0.0
  %4417 = vmatprep.subr.mxu0 0.0
  %4418 = vmatpush1.msra.mxu0 %v4127
  %4419 = vmatprep.subr.mxu0 0.0
  %4420 = vmatpush2.msra.mxu0 0.0
  %4421 = vmatprep.subr.mxu0 0.0
  %4422 = vmatpush2.msra.mxu0 0.0
  %4423 = vmatprep.subr.mxu0 0.0
  %4424 = vmatpush2.msra.mxu0 0.0
  %4425 = vmatprep.subr.mxu0 0.0
  %4426 = vmatpush2.msra.mxu0 0.0
  %4427 = vmatprep.subr.mxu0 0.0
  %4428 = vmatpush2.msra.mxu0 0.0
  %4429 = vmatprep.subr.mxu0 0.0
  %4430 = vmatpush2.msra.mxu0 0.0
  %4431 = vmatprep.subr.mxu0 0.0
  %4432 = vmatpush2.msra.mxu0 0.0
  %4433 = vmatprep.subr.mxu0 0.0
  %4434 = vmatpush2.msra.mxu0 0.0
  %4435 = vmatprep.subr.mxu0 0.0
  %4436 = vmatpush2.msra.mxu0 0.0
  %4437 = vmatprep.subr.mxu0 0.0
  %4438 = vmatpush2.msra.mxu0 0.0
  %4439 = vmatprep.subr.mxu0 0.0
  %4440 = vmatpush2.msra.mxu0 0.0
  %4441 = vmatprep.subr.mxu0 0.0
  %4442 = vmatpush2.msra.mxu0 0.0
  %4443 = vmatprep.subr.mxu0 0.0
  %4444 = vmatpush2.msra.mxu0 0.0
  %4445 = vmatprep.subr.mxu0 0.0
  %4446 = vmatpush2.msra.mxu0 0.0
  %4447 = vmatprep.subr.mxu0 0.0
  %4448 = vmatpush2.msra.mxu0 0.0
  %4449 = vmatprep.subr.mxu0 0.0
  %4450 = vmatpush2.msra.mxu0 0.0
  %4451 = vmatprep.mubr.f32.mxu0 0.0
  %4452 = vmatmul.mubr.f32.gmra.mxu0 %v4340
  %v4453 = vpop.f32.mrf.mxu0
  %v4454 = vadd.f32 %v4261, %v4453
  %v4455 = vpop.f32.mrf.mxu0
  %4456 = vmatprep.mubr.f32.mxu0 0.0
  %4457 = vmatmul.mubr.f32.gmra.mxu0 %v4343
  %v4458 = vpop.f32.mrf.mxu0
  %v4459 = vadd.f32 %v4266, %v4458
  %v4460 = vpop.f32.mrf.mxu0
  %4461 = vmatprep.mubr.f32.mxu0 0.0
  %4462 = vmatmul.mubr.f32.gmra.mxu0 %v4346
  %v4463 = vpop.f32.mrf.mxu0
  %v4464 = vadd.f32 %v4271, %v4463
  %v4465 = vpop.f32.mrf.mxu0
  %4466 = vmatprep.mubr.f32.mxu0 0.0
  %4467 = vmatmul.mubr.f32.gmra.mxu0 %v4349
  %v4468 = vpop.f32.mrf.mxu0
  %v4469 = vadd.f32 %v4276, %v4468
  %v4470 = vpop.f32.mrf.mxu0
  %4471 = vmatprep.mubr.f32.mxu0 0.0
  %4472 = vmatmul.mubr.f32.gmra.mxu0 %v4352
  %v4473 = vpop.f32.mrf.mxu0
  %v4474 = vadd.f32 %v4281, %v4473
  %v4475 = vpop.f32.mrf.mxu0
  %4476 = vmatprep.mubr.f32.mxu0 0.0
  %4477 = vmatmul.mubr.f32.gmra.mxu0 %v4355
  %v4478 = vpop.f32.mrf.mxu0
  %v4479 = vadd.f32 %v4286, %v4478
  %v4480 = vpop.f32.mrf.mxu0
  %4481 = vmatprep.mubr.f32.mxu0 0.0
  %4482 = vmatmul.mubr.f32.gmra.mxu0 %v4358
  %v4483 = vpop.f32.mrf.mxu0
  %v4484 = vadd.f32 %v4291, %v4483
  %v4485 = vpop.f32.mrf.mxu0
  %4486 = vmatprep.mubr.f32.mxu0 0.0
  %4487 = vmatmul.mubr.f32.gmra.mxu0 %v4361
  %v4488 = vpop.f32.mrf.mxu0
  %v4489 = vadd.f32 %v4296, %v4488
  %v4490 = vpop.f32.mrf.mxu0
  %4491 = vmatprep.mubr.f32.mxu0 0.0
  %4492 = vmatmul.mubr.f32.gmra.mxu0 %v4364
  %v4493 = vpop.f32.mrf.mxu0
  %v4494 = vadd.f32 %v4301, %v4493
  %v4495 = vpop.f32.mrf.mxu0
  %4496 = vmatprep.mubr.f32.mxu0 0.0
  %4497 = vmatmul.mubr.f32.gmra.mxu0 %v4367
  %v4498 = vpop.f32.mrf.mxu0
  %v4499 = vadd.f32 %v4306, %v4498
  %v4500 = vpop.f32.mrf.mxu0
  %4501 = vmatprep.mubr.f32.mxu0 0.0
  %4502 = vmatmul.mubr.f32.gmra.mxu0 %v4370
  %v4503 = vpop.f32.mrf.mxu0
  %v4504 = vadd.f32 %v4311, %v4503
  %v4505 = vpop.f32.mrf.mxu0
  %4506 = vmatprep.mubr.f32.mxu0 0.0
  %4507 = vmatmul.mubr.f32.gmra.mxu0 %v4373
  %v4508 = vpop.f32.mrf.mxu0
  %v4509 = vadd.f32 %v4316, %v4508
  %v4510 = vpop.f32.mrf.mxu0
  %4511 = vmatprep.mubr.f32.mxu0 0.0
  %4512 = vmatmul.mubr.f32.gmra.mxu0 %v4376
  %v4513 = vpop.f32.mrf.mxu0
  %v4514 = vadd.f32 %v4321, %v4513
  %v4515 = vpop.f32.mrf.mxu0
  %4516 = vmatprep.mubr.f32.mxu0 0.0
  %4517 = vmatmul.mubr.f32.gmra.mxu0 %v4379
  %v4518 = vpop.f32.mrf.mxu0
  %v4519 = vadd.f32 %v4326, %v4518
  %v4520 = vpop.f32.mrf.mxu0
  %4521 = vmatprep.mubr.f32.mxu0 0.0
  %4522 = vmatmul.mubr.f32.gmra.mxu0 %v4382
  %v4523 = vpop.f32.mrf.mxu0
  %v4524 = vadd.f32 %v4331, %v4523
  %v4525 = vpop.f32.mrf.mxu0
  %4526 = vmatprep.mubr.f32.mxu0 0.0
  %4527 = vmatmul.mubr.f32.gmra.mxu0 %v4385
  %v4528 = vpop.f32.mrf.mxu0
  %v4529 = vadd.f32 %v4336, %v4528
  %v4530 = vpop.f32.mrf.mxu0
  %4531 = vdwg.mxu0
  %v4532 = vld [vmem:[%s2058] sm:$0xff]
  %v4533 = vld [vmem:[%s2058 + $0x10] sm:$0xff]
  %v4534 = vld [vmem:[%s2058 + $0x20] sm:$0xff]
  %v4535 = vld [vmem:[%s2058 + $0x30] sm:$0xff]
  %v4536 = vld [vmem:[%s2058 + $0x40] sm:$0xff]
  %v4537 = vld [vmem:[%s2058 + $0x50] sm:$0xff]
  %v4538 = vld [vmem:[%s2058 + $0x60] sm:$0xff]
  %v4539 = vld [vmem:[%s2058 + $0x70] sm:$0xff]
  %v4540 = vld [vmem:[%s2058 + $0x90] sm:$0xff]
  %v4541 = vld [vmem:[%s2058 + $0xa0] sm:$0xff]
  %v4542 = vld [vmem:[%s2058 + $0xb0] sm:$0xff]
  %v4543 = vld [vmem:[%s2058 + $0xc0] sm:$0xff]
  %v4544 = vld [vmem:[%s2058 + $0xd0] sm:$0xff]
  %v4545 = vld [vmem:[%s2058 + $0xe0] sm:$0xff]
  %v4546 = vld [vmem:[%s2058 + $0xf0] sm:$0xff]
  %v4547 = vld [vmem:[%s2058 + $0x100] sm:$0xff]
  %s4548 = scalar_lea.vmem %s1, 16
  %v4549 = vld [vmem:[%s4548] sm:$0xff]
  %v4551 = vsel %vm46, %v4532, 0
  %v4554 = vsel %vm46, %v4533, 0
  %v4557 = vsel %vm46, %v4534, 0
  %v4560 = vsel %vm46, %v4535, 0
  %v4563 = vsel %vm46, %v4536, 0
  %v4566 = vsel %vm46, %v4537, 0
  %v4569 = vsel %vm46, %v4538, 0
  %v4572 = vsel %vm46, %v4539, 0
  %v4575 = vsel %vm46, %v4540, 0
  %v4578 = vsel %vm46, %v4541, 0
  %v4581 = vsel %vm46, %v4542, 0
  %v4584 = vsel %vm46, %v4543, 0
  %v4587 = vsel %vm46, %v4544, 0
  %v4590 = vsel %vm46, %v4545, 0
  %v4593 = vsel %vm46, %v4546, 0
  %v4596 = vsel %vm46, %v4547, 0
  %4598 = vmatprep.subr.mxu0 0.0
  %4599 = vmatpush1.msra.mxu0 0.0
  %4600 = vmatprep.subr.mxu0 0.0
  %4601 = vmatpush1.msra.mxu0 0.0
  %4602 = vmatprep.subr.mxu0 0.0
  %4603 = vmatpush1.msra.mxu0 0.0
  %4604 = vmatprep.subr.mxu0 0.0
  %4605 = vmatpush1.msra.mxu0 0.0
  %4606 = vmatprep.subr.mxu0 0.0
  %4607 = vmatpush1.msra.mxu0 0.0
  %4608 = vmatprep.subr.mxu0 0.0
  %4609 = vmatpush1.msra.mxu0 0.0
  %4610 = vmatprep.subr.mxu0 0.0
  %4611 = vmatpush1.msra.mxu0 0.0
  %4612 = vmatprep.subr.mxu0 0.0
  %4613 = vmatpush1.msra.mxu0 0.0
  %4614 = vmatprep.subr.mxu0 0.0
  %4615 = vmatpush1.msra.mxu0 0.0
  %4616 = vmatprep.subr.mxu0 0.0
  %4617 = vmatpush1.msra.mxu0 0.0
  %4618 = vmatprep.subr.mxu0 0.0
  %4619 = vmatpush1.msra.mxu0 0.0
  %4620 = vmatprep.subr.mxu0 0.0
  %4621 = vmatpush1.msra.mxu0 0.0
  %4622 = vmatprep.subr.mxu0 0.0
  %4623 = vmatpush1.msra.mxu0 0.0
  %4624 = vmatprep.subr.mxu0 0.0
  %4625 = vmatpush1.msra.mxu0 0.0
  %4626 = vmatprep.subr.mxu0 0.0
  %4627 = vmatpush1.msra.mxu0 0.0
  %4628 = vmatprep.subr.mxu0 0.0
  %4629 = vmatpush1.msra.mxu0 %v4549
  %4630 = vmatprep.subr.mxu0 0.0
  %4631 = vmatpush2.msra.mxu0 0.0
  %4632 = vmatprep.subr.mxu0 0.0
  %4633 = vmatpush2.msra.mxu0 0.0
  %4634 = vmatprep.subr.mxu0 0.0
  %4635 = vmatpush2.msra.mxu0 0.0
  %4636 = vmatprep.subr.mxu0 0.0
  %4637 = vmatpush2.msra.mxu0 0.0
  %4638 = vmatprep.subr.mxu0 0.0
  %4639 = vmatpush2.msra.mxu0 0.0
  %4640 = vmatprep.subr.mxu0 0.0
  %4641 = vmatpush2.msra.mxu0 0.0
  %4642 = vmatprep.subr.mxu0 0.0
  %4643 = vmatpush2.msra.mxu0 0.0
  %4644 = vmatprep.subr.mxu0 0.0
  %4645 = vmatpush2.msra.mxu0 0.0
  %4646 = vmatprep.subr.mxu0 0.0
  %4647 = vmatpush2.msra.mxu0 0.0
  %4648 = vmatprep.subr.mxu0 0.0
  %4649 = vmatpush2.msra.mxu0 0.0
  %4650 = vmatprep.subr.mxu0 0.0
  %4651 = vmatpush2.msra.mxu0 0.0
  %4652 = vmatprep.subr.mxu0 0.0
  %4653 = vmatpush2.msra.mxu0 0.0
  %4654 = vmatprep.subr.mxu0 0.0
  %4655 = vmatpush2.msra.mxu0 0.0
  %4656 = vmatprep.subr.mxu0 0.0
  %4657 = vmatpush2.msra.mxu0 0.0
  %4658 = vmatprep.subr.mxu0 0.0
  %4659 = vmatpush2.msra.mxu0 0.0
  %4660 = vmatprep.subr.mxu0 0.0
  %4661 = vmatpush2.msra.mxu0 0.0
  %4662 = vmatprep.mubr.f32.mxu0 0.0
  %4663 = vmatmul.mubr.f32.gmra.mxu0 %v4551
  %v4664 = vpop.f32.mrf.mxu0
  %v4665 = vadd.f32 0.0, %v4664
  %v4666 = vpop.f32.mrf.mxu0
  %4667 = vmatprep.mubr.f32.mxu0 0.0
  %4668 = vmatmul.mubr.f32.gmra.mxu0 %v4554
  %v4669 = vpop.f32.mrf.mxu0
  %v4670 = vadd.f32 0.0, %v4669
  %v4671 = vpop.f32.mrf.mxu0
  %4672 = vmatprep.mubr.f32.mxu0 0.0
  %4673 = vmatmul.mubr.f32.gmra.mxu0 %v4557
  %v4674 = vpop.f32.mrf.mxu0
  %v4675 = vadd.f32 0.0, %v4674
  %v4676 = vpop.f32.mrf.mxu0
  %4677 = vmatprep.mubr.f32.mxu0 0.0
  %4678 = vmatmul.mubr.f32.gmra.mxu0 %v4560
  %v4679 = vpop.f32.mrf.mxu0
  %v4680 = vadd.f32 0.0, %v4679
  %v4681 = vpop.f32.mrf.mxu0
  %4682 = vmatprep.mubr.f32.mxu0 0.0
  %4683 = vmatmul.mubr.f32.gmra.mxu0 %v4563
  %v4684 = vpop.f32.mrf.mxu0
  %v4685 = vadd.f32 0.0, %v4684
  %v4686 = vpop.f32.mrf.mxu0
  %4687 = vmatprep.mubr.f32.mxu0 0.0
  %4688 = vmatmul.mubr.f32.gmra.mxu0 %v4566
  %v4689 = vpop.f32.mrf.mxu0
  %v4690 = vadd.f32 0.0, %v4689
  %v4691 = vpop.f32.mrf.mxu0
  %4692 = vmatprep.mubr.f32.mxu0 0.0
  %4693 = vmatmul.mubr.f32.gmra.mxu0 %v4569
  %v4694 = vpop.f32.mrf.mxu0
  %v4695 = vadd.f32 0.0, %v4694
  %v4696 = vpop.f32.mrf.mxu0
  %4697 = vmatprep.mubr.f32.mxu0 0.0
  %4698 = vmatmul.mubr.f32.gmra.mxu0 %v4572
  %v4699 = vpop.f32.mrf.mxu0
  %v4700 = vadd.f32 0.0, %v4699
  %v4701 = vpop.f32.mrf.mxu0
  %4702 = vmatprep.mubr.f32.mxu0 0.0
  %4703 = vmatmul.mubr.f32.gmra.mxu0 %v4575
  %v4704 = vpop.f32.mrf.mxu0
  %v4705 = vadd.f32 0.0, %v4704
  %v4706 = vpop.f32.mrf.mxu0
  %4707 = vmatprep.mubr.f32.mxu0 0.0
  %4708 = vmatmul.mubr.f32.gmra.mxu0 %v4578
  %v4709 = vpop.f32.mrf.mxu0
  %v4710 = vadd.f32 0.0, %v4709
  %v4711 = vpop.f32.mrf.mxu0
  %4712 = vmatprep.mubr.f32.mxu0 0.0
  %4713 = vmatmul.mubr.f32.gmra.mxu0 %v4581
  %v4714 = vpop.f32.mrf.mxu0
  %v4715 = vadd.f32 0.0, %v4714
  %v4716 = vpop.f32.mrf.mxu0
  %4717 = vmatprep.mubr.f32.mxu0 0.0
  %4718 = vmatmul.mubr.f32.gmra.mxu0 %v4584
  %v4719 = vpop.f32.mrf.mxu0
  %v4720 = vadd.f32 0.0, %v4719
  %v4721 = vpop.f32.mrf.mxu0
  %4722 = vmatprep.mubr.f32.mxu0 0.0
  %4723 = vmatmul.mubr.f32.gmra.mxu0 %v4587
  %v4724 = vpop.f32.mrf.mxu0
  %v4725 = vadd.f32 0.0, %v4724
  %v4726 = vpop.f32.mrf.mxu0
  %4727 = vmatprep.mubr.f32.mxu0 0.0
  %4728 = vmatmul.mubr.f32.gmra.mxu0 %v4590
  %v4729 = vpop.f32.mrf.mxu0
  %v4730 = vadd.f32 0.0, %v4729
  %v4731 = vpop.f32.mrf.mxu0
  %4732 = vmatprep.mubr.f32.mxu0 0.0
  %4733 = vmatmul.mubr.f32.gmra.mxu0 %v4593
  %v4734 = vpop.f32.mrf.mxu0
  %v4735 = vadd.f32 0.0, %v4734
  %v4736 = vpop.f32.mrf.mxu0
  %4737 = vmatprep.mubr.f32.mxu0 0.0
  %4738 = vmatmul.mubr.f32.gmra.mxu0 %v4596
  %v4739 = vpop.f32.mrf.mxu0
  %v4740 = vadd.f32 0.0, %v4739
  %v4741 = vpop.f32.mrf.mxu0
  %4742 = vdwg.mxu0
  %v4743 = vadd.f32 %v4454, %v4665
  %v4744 = vadd.f32 %v4459, %v4670
  %v4745 = vadd.f32 %v4464, %v4675
  %v4746 = vadd.f32 %v4469, %v4680
  %v4747 = vadd.f32 %v4474, %v4685
  %v4748 = vadd.f32 %v4479, %v4690
  %v4749 = vadd.f32 %v4484, %v4695
  %v4750 = vadd.f32 %v4489, %v4700
  %v4751 = vadd.f32 %v4494, %v4705
  %v4752 = vadd.f32 %v4499, %v4710
  %v4753 = vadd.f32 %v4504, %v4715
  %v4754 = vadd.f32 %v4509, %v4720
  %v4755 = vadd.f32 %v4514, %v4725
  %v4756 = vadd.f32 %v4519, %v4730
  %v4757 = vadd.f32 %v4524, %v4735
  %v4758 = vadd.f32 %v4529, %v4740
  %v4759 = vld [vmem:[%s2058 + $0x1] sm:$0xff]
  %v4760 = vld [vmem:[%s2058 + $0x11] sm:$0xff]
  %v4761 = vld [vmem:[%s2058 + $0x21] sm:$0xff]
  %v4762 = vld [vmem:[%s2058 + $0x31] sm:$0xff]
  %v4763 = vld [vmem:[%s2058 + $0x41] sm:$0xff]
  %v4764 = vld [vmem:[%s2058 + $0x51] sm:$0xff]
  %v4765 = vld [vmem:[%s2058 + $0x61] sm:$0xff]
  %v4766 = vld [vmem:[%s2058 + $0x71] sm:$0xff]
  %v4767 = vld [vmem:[%s2058 + $0x91] sm:$0xff]
  %v4768 = vld [vmem:[%s2058 + $0xa1] sm:$0xff]
  %v4769 = vld [vmem:[%s2058 + $0xb1] sm:$0xff]
  %v4770 = vld [vmem:[%s2058 + $0xc1] sm:$0xff]
  %v4771 = vld [vmem:[%s2058 + $0xd1] sm:$0xff]
  %v4772 = vld [vmem:[%s2058 + $0xe1] sm:$0xff]
  %v4773 = vld [vmem:[%s2058 + $0xf1] sm:$0xff]
  %v4774 = vld [vmem:[%s2058 + $0x101] sm:$0xff]
  %s4775 = scalar_lea.vmem %s1, 24
  %v4776 = vld [vmem:[%s4775] sm:$0xff]
  %v4778 = vsel %vm46, %v4759, 0
  %v4781 = vsel %vm46, %v4760, 0
  %v4784 = vsel %vm46, %v4761, 0
  %v4787 = vsel %vm46, %v4762, 0
  %v4790 = vsel %vm46, %v4763, 0
  %v4793 = vsel %vm46, %v4764, 0
  %v4796 = vsel %vm46, %v4765, 0
  %v4799 = vsel %vm46, %v4766, 0
  %v4802 = vsel %vm46, %v4767, 0
  %v4805 = vsel %vm46, %v4768, 0
  %v4808 = vsel %vm46, %v4769, 0
  %v4811 = vsel %vm46, %v4770, 0
  %v4814 = vsel %vm46, %v4771, 0
  %v4817 = vsel %vm46, %v4772, 0
  %v4820 = vsel %vm46, %v4773, 0
  %v4823 = vsel %vm46, %v4774, 0
  %4825 = vmatprep.subr.mxu0 0.0
  %4826 = vmatpush1.msra.mxu0 0.0
  %4827 = vmatprep.subr.mxu0 0.0
  %4828 = vmatpush1.msra.mxu0 0.0
  %4829 = vmatprep.subr.mxu0 0.0
  %4830 = vmatpush1.msra.mxu0 0.0
  %4831 = vmatprep.subr.mxu0 0.0
  %4832 = vmatpush1.msra.mxu0 0.0
  %4833 = vmatprep.subr.mxu0 0.0
  %4834 = vmatpush1.msra.mxu0 0.0
  %4835 = vmatprep.subr.mxu0 0.0
  %4836 = vmatpush1.msra.mxu0 0.0
  %4837 = vmatprep.subr.mxu0 0.0
  %4838 = vmatpush1.msra.mxu0 0.0
  %4839 = vmatprep.subr.mxu0 0.0
  %4840 = vmatpush1.msra.mxu0 0.0
  %4841 = vmatprep.subr.mxu0 0.0
  %4842 = vmatpush1.msra.mxu0 0.0
  %4843 = vmatprep.subr.mxu0 0.0
  %4844 = vmatpush1.msra.mxu0 0.0
  %4845 = vmatprep.subr.mxu0 0.0
  %4846 = vmatpush1.msra.mxu0 0.0
  %4847 = vmatprep.subr.mxu0 0.0
  %4848 = vmatpush1.msra.mxu0 0.0
  %4849 = vmatprep.subr.mxu0 0.0
  %4850 = vmatpush1.msra.mxu0 0.0
  %4851 = vmatprep.subr.mxu0 0.0
  %4852 = vmatpush1.msra.mxu0 0.0
  %4853 = vmatprep.subr.mxu0 0.0
  %4854 = vmatpush1.msra.mxu0 0.0
  %4855 = vmatprep.subr.mxu0 0.0
  %4856 = vmatpush1.msra.mxu0 %v4776
  %4857 = vmatprep.subr.mxu0 0.0
  %4858 = vmatpush2.msra.mxu0 0.0
  %4859 = vmatprep.subr.mxu0 0.0
  %4860 = vmatpush2.msra.mxu0 0.0
  %4861 = vmatprep.subr.mxu0 0.0
  %4862 = vmatpush2.msra.mxu0 0.0
  %4863 = vmatprep.subr.mxu0 0.0
  %4864 = vmatpush2.msra.mxu0 0.0
  %4865 = vmatprep.subr.mxu0 0.0
  %4866 = vmatpush2.msra.mxu0 0.0
  %4867 = vmatprep.subr.mxu0 0.0
  %4868 = vmatpush2.msra.mxu0 0.0
  %4869 = vmatprep.subr.mxu0 0.0
  %4870 = vmatpush2.msra.mxu0 0.0
  %4871 = vmatprep.subr.mxu0 0.0
  %4872 = vmatpush2.msra.mxu0 0.0
  %4873 = vmatprep.subr.mxu0 0.0
  %4874 = vmatpush2.msra.mxu0 0.0
  %4875 = vmatprep.subr.mxu0 0.0
  %4876 = vmatpush2.msra.mxu0 0.0
  %4877 = vmatprep.subr.mxu0 0.0
  %4878 = vmatpush2.msra.mxu0 0.0
  %4879 = vmatprep.subr.mxu0 0.0
  %4880 = vmatpush2.msra.mxu0 0.0
  %4881 = vmatprep.subr.mxu0 0.0
  %4882 = vmatpush2.msra.mxu0 0.0
  %4883 = vmatprep.subr.mxu0 0.0
  %4884 = vmatpush2.msra.mxu0 0.0
  %4885 = vmatprep.subr.mxu0 0.0
  %4886 = vmatpush2.msra.mxu0 0.0
  %4887 = vmatprep.subr.mxu0 0.0
  %4888 = vmatpush2.msra.mxu0 0.0
  %4889 = vmatprep.mubr.f32.mxu0 0.0
  %4890 = vmatmul.mubr.f32.gmra.mxu0 %v4778
  %v4891 = vpop.f32.mrf.mxu0
  %v4892 = vadd.f32 0.0, %v4891
  %v4893 = vpop.f32.mrf.mxu0
  %4894 = vmatprep.mubr.f32.mxu0 0.0
  %4895 = vmatmul.mubr.f32.gmra.mxu0 %v4781
  %v4896 = vpop.f32.mrf.mxu0
  %v4897 = vadd.f32 0.0, %v4896
  %v4898 = vpop.f32.mrf.mxu0
  %4899 = vmatprep.mubr.f32.mxu0 0.0
  %4900 = vmatmul.mubr.f32.gmra.mxu0 %v4784
  %v4901 = vpop.f32.mrf.mxu0
  %v4902 = vadd.f32 0.0, %v4901
  %v4903 = vpop.f32.mrf.mxu0
  %4904 = vmatprep.mubr.f32.mxu0 0.0
  %4905 = vmatmul.mubr.f32.gmra.mxu0 %v4787
  %v4906 = vpop.f32.mrf.mxu0
  %v4907 = vadd.f32 0.0, %v4906
  %v4908 = vpop.f32.mrf.mxu0
  %4909 = vmatprep.mubr.f32.mxu0 0.0
  %4910 = vmatmul.mubr.f32.gmra.mxu0 %v4790
  %v4911 = vpop.f32.mrf.mxu0
  %v4912 = vadd.f32 0.0, %v4911
  %v4913 = vpop.f32.mrf.mxu0
  %4914 = vmatprep.mubr.f32.mxu0 0.0
  %4915 = vmatmul.mubr.f32.gmra.mxu0 %v4793
  %v4916 = vpop.f32.mrf.mxu0
  %v4917 = vadd.f32 0.0, %v4916
  %v4918 = vpop.f32.mrf.mxu0
  %4919 = vmatprep.mubr.f32.mxu0 0.0
  %4920 = vmatmul.mubr.f32.gmra.mxu0 %v4796
  %v4921 = vpop.f32.mrf.mxu0
  %v4922 = vadd.f32 0.0, %v4921
  %v4923 = vpop.f32.mrf.mxu0
  %4924 = vmatprep.mubr.f32.mxu0 0.0
  %4925 = vmatmul.mubr.f32.gmra.mxu0 %v4799
  %v4926 = vpop.f32.mrf.mxu0
  %v4927 = vadd.f32 0.0, %v4926
  %v4928 = vpop.f32.mrf.mxu0
  %4929 = vmatprep.mubr.f32.mxu0 0.0
  %4930 = vmatmul.mubr.f32.gmra.mxu0 %v4802
  %v4931 = vpop.f32.mrf.mxu0
  %v4932 = vadd.f32 0.0, %v4931
  %v4933 = vpop.f32.mrf.mxu0
  %4934 = vmatprep.mubr.f32.mxu0 0.0
  %4935 = vmatmul.mubr.f32.gmra.mxu0 %v4805
  %v4936 = vpop.f32.mrf.mxu0
  %v4937 = vadd.f32 0.0, %v4936
  %v4938 = vpop.f32.mrf.mxu0
  %4939 = vmatprep.mubr.f32.mxu0 0.0
  %4940 = vmatmul.mubr.f32.gmra.mxu0 %v4808
  %v4941 = vpop.f32.mrf.mxu0
  %v4942 = vadd.f32 0.0, %v4941
  %v4943 = vpop.f32.mrf.mxu0
  %4944 = vmatprep.mubr.f32.mxu0 0.0
  %4945 = vmatmul.mubr.f32.gmra.mxu0 %v4811
  %v4946 = vpop.f32.mrf.mxu0
  %v4947 = vadd.f32 0.0, %v4946
  %v4948 = vpop.f32.mrf.mxu0
  %4949 = vmatprep.mubr.f32.mxu0 0.0
  %4950 = vmatmul.mubr.f32.gmra.mxu0 %v4814
  %v4951 = vpop.f32.mrf.mxu0
  %v4952 = vadd.f32 0.0, %v4951
  %v4953 = vpop.f32.mrf.mxu0
  %4954 = vmatprep.mubr.f32.mxu0 0.0
  %4955 = vmatmul.mubr.f32.gmra.mxu0 %v4817
  %v4956 = vpop.f32.mrf.mxu0
  %v4957 = vadd.f32 0.0, %v4956
  %v4958 = vpop.f32.mrf.mxu0
  %4959 = vmatprep.mubr.f32.mxu0 0.0
  %4960 = vmatmul.mubr.f32.gmra.mxu0 %v4820
  %v4961 = vpop.f32.mrf.mxu0
  %v4962 = vadd.f32 0.0, %v4961
  %v4963 = vpop.f32.mrf.mxu0
  %4964 = vmatprep.mubr.f32.mxu0 0.0
  %4965 = vmatmul.mubr.f32.gmra.mxu0 %v4823
  %v4966 = vpop.f32.mrf.mxu0
  %v4967 = vadd.f32 0.0, %v4966
  %v4968 = vpop.f32.mrf.mxu0
  %4969 = vdwg.mxu0
  %v4970 = vadd.f32 %v4743, %v4892
  %v4971 = vadd.f32 %v4744, %v4897
  %v4972 = vadd.f32 %v4745, %v4902
  %v4973 = vadd.f32 %v4746, %v4907
  %v4974 = vadd.f32 %v4747, %v4912
  %v4975 = vadd.f32 %v4748, %v4917
  %v4976 = vadd.f32 %v4749, %v4922
  %v4977 = vadd.f32 %v4750, %v4927
  %v4978 = vadd.f32 %v4751, %v4932
  %v4979 = vadd.f32 %v4752, %v4937
  %v4980 = vadd.f32 %v4753, %v4942
  %v4981 = vadd.f32 %v4754, %v4947
  %v4982 = vadd.f32 %v4755, %v4952
  %v4983 = vadd.f32 %v4756, %v4957
  %v4984 = vadd.f32 %v4757, %v4962
  %v4985 = vadd.f32 %v4758, %v4967
  %v4986 = vld [vmem:[%s3422] sm:$0xff]
  %v4987 = vld [vmem:[%s3422 + $0x10] sm:$0xff]
  %v4988 = vld [vmem:[%s3422 + $0x20] sm:$0xff]
  %v4989 = vld [vmem:[%s3422 + $0x30] sm:$0xff]
  %v4990 = vld [vmem:[%s3422 + $0x40] sm:$0xff]
  %v4991 = vld [vmem:[%s3422 + $0x50] sm:$0xff]
  %v4992 = vld [vmem:[%s3422 + $0x60] sm:$0xff]
  %v4993 = vld [vmem:[%s3422 + $0x70] sm:$0xff]
  %v4994 = vld [vmem:[%s3422 + $0x90] sm:$0xff]
  %v4995 = vld [vmem:[%s3422 + $0xa0] sm:$0xff]
  %v4996 = vld [vmem:[%s3422 + $0xb0] sm:$0xff]
  %v4997 = vld [vmem:[%s3422 + $0xc0] sm:$0xff]
  %v4998 = vld [vmem:[%s3422 + $0xd0] sm:$0xff]
  %v4999 = vld [vmem:[%s3422 + $0xe0] sm:$0xff]
  %v5000 = vld [vmem:[%s3422 + $0xf0] sm:$0xff]
  %v5001 = vld [vmem:[%s3422 + $0x100] sm:$0xff]
  %s5002 = scalar_lea.vmem %s1, 32
  %v5003 = vld [vmem:[%s5002] sm:$0xff]
  %v5005 = vsel %vm46, %v4986, 0
  %v5008 = vsel %vm46, %v4987, 0
  %v5011 = vsel %vm46, %v4988, 0
  %v5014 = vsel %vm46, %v4989, 0
  %v5017 = vsel %vm46, %v4990, 0
  %v5020 = vsel %vm46, %v4991, 0
  %v5023 = vsel %vm46, %v4992, 0
  %v5026 = vsel %vm46, %v4993, 0
  %v5029 = vsel %vm46, %v4994, 0
  %v5032 = vsel %vm46, %v4995, 0
  %v5035 = vsel %vm46, %v4996, 0
  %v5038 = vsel %vm46, %v4997, 0
  %v5041 = vsel %vm46, %v4998, 0
  %v5044 = vsel %vm46, %v4999, 0
  %v5047 = vsel %vm46, %v5000, 0
  %v5050 = vsel %vm46, %v5001, 0
  %5052 = vmatprep.subr.mxu0 0.0
  %5053 = vmatpush1.msra.mxu0 0.0
  %5054 = vmatprep.subr.mxu0 0.0
  %5055 = vmatpush1.msra.mxu0 0.0
  %5056 = vmatprep.subr.mxu0 0.0
  %5057 = vmatpush1.msra.mxu0 0.0
  %5058 = vmatprep.subr.mxu0 0.0
  %5059 = vmatpush1.msra.mxu0 0.0
  %5060 = vmatprep.subr.mxu0 0.0
  %5061 = vmatpush1.msra.mxu0 0.0
  %5062 = vmatprep.subr.mxu0 0.0
  %5063 = vmatpush1.msra.mxu0 0.0
  %5064 = vmatprep.subr.mxu0 0.0
  %5065 = vmatpush1.msra.mxu0 0.0
  %5066 = vmatprep.subr.mxu0 0.0
  %5067 = vmatpush1.msra.mxu0 0.0
  %5068 = vmatprep.subr.mxu0 0.0
  %5069 = vmatpush1.msra.mxu0 0.0
  %5070 = vmatprep.subr.mxu0 0.0
  %5071 = vmatpush1.msra.mxu0 0.0
  %5072 = vmatprep.subr.mxu0 0.0
  %5073 = vmatpush1.msra.mxu0 0.0
  %5074 = vmatprep.subr.mxu0 0.0
  %5075 = vmatpush1.msra.mxu0 0.0
  %5076 = vmatprep.subr.mxu0 0.0
  %5077 = vmatpush1.msra.mxu0 0.0
  %5078 = vmatprep.subr.mxu0 0.0
  %5079 = vmatpush1.msra.mxu0 0.0
  %5080 = vmatprep.subr.mxu0 0.0
  %5081 = vmatpush1.msra.mxu0 0.0
  %5082 = vmatprep.subr.mxu0 0.0
  %5083 = vmatpush1.msra.mxu0 %v5003
  %5084 = vmatprep.subr.mxu0 0.0
  %5085 = vmatpush2.msra.mxu0 0.0
  %5086 = vmatprep.subr.mxu0 0.0
  %5087 = vmatpush2.msra.mxu0 0.0
  %5088 = vmatprep.subr.mxu0 0.0
  %5089 = vmatpush2.msra.mxu0 0.0
  %5090 = vmatprep.subr.mxu0 0.0
  %5091 = vmatpush2.msra.mxu0 0.0
  %5092 = vmatprep.subr.mxu0 0.0
  %5093 = vmatpush2.msra.mxu0 0.0
  %5094 = vmatprep.subr.mxu0 0.0
  %5095 = vmatpush2.msra.mxu0 0.0
  %5096 = vmatprep.subr.mxu0 0.0
  %5097 = vmatpush2.msra.mxu0 0.0
  %5098 = vmatprep.subr.mxu0 0.0
  %5099 = vmatpush2.msra.mxu0 0.0
  %5100 = vmatprep.subr.mxu0 0.0
  %5101 = vmatpush2.msra.mxu0 0.0
  %5102 = vmatprep.subr.mxu0 0.0
  %5103 = vmatpush2.msra.mxu0 0.0
  %5104 = vmatprep.subr.mxu0 0.0
  %5105 = vmatpush2.msra.mxu0 0.0
  %5106 = vmatprep.subr.mxu0 0.0
  %5107 = vmatpush2.msra.mxu0 0.0
  %5108 = vmatprep.subr.mxu0 0.0
  %5109 = vmatpush2.msra.mxu0 0.0
  %5110 = vmatprep.subr.mxu0 0.0
  %5111 = vmatpush2.msra.mxu0 0.0
  %5112 = vmatprep.subr.mxu0 0.0
  %5113 = vmatpush2.msra.mxu0 0.0
  %5114 = vmatprep.subr.mxu0 0.0
  %5115 = vmatpush2.msra.mxu0 0.0
  %5116 = vmatprep.mubr.f32.mxu0 0.0
  %5117 = vmatmul.mubr.f32.gmra.mxu0 %v5005
  %v5118 = vpop.f32.mrf.mxu0
  %v5119 = vadd.f32 0.0, %v5118
  %v5120 = vpop.f32.mrf.mxu0
  %5121 = vmatprep.mubr.f32.mxu0 0.0
  %5122 = vmatmul.mubr.f32.gmra.mxu0 %v5008
  %v5123 = vpop.f32.mrf.mxu0
  %v5124 = vadd.f32 0.0, %v5123
  %v5125 = vpop.f32.mrf.mxu0
  %5126 = vmatprep.mubr.f32.mxu0 0.0
  %5127 = vmatmul.mubr.f32.gmra.mxu0 %v5011
  %v5128 = vpop.f32.mrf.mxu0
  %v5129 = vadd.f32 0.0, %v5128
  %v5130 = vpop.f32.mrf.mxu0
  %5131 = vmatprep.mubr.f32.mxu0 0.0
  %5132 = vmatmul.mubr.f32.gmra.mxu0 %v5014
  %v5133 = vpop.f32.mrf.mxu0
  %v5134 = vadd.f32 0.0, %v5133
  %v5135 = vpop.f32.mrf.mxu0
  %5136 = vmatprep.mubr.f32.mxu0 0.0
  %5137 = vmatmul.mubr.f32.gmra.mxu0 %v5017
  %v5138 = vpop.f32.mrf.mxu0
  %v5139 = vadd.f32 0.0, %v5138
  %v5140 = vpop.f32.mrf.mxu0
  %5141 = vmatprep.mubr.f32.mxu0 0.0
  %5142 = vmatmul.mubr.f32.gmra.mxu0 %v5020
  %v5143 = vpop.f32.mrf.mxu0
  %v5144 = vadd.f32 0.0, %v5143
  %v5145 = vpop.f32.mrf.mxu0
  %5146 = vmatprep.mubr.f32.mxu0 0.0
  %5147 = vmatmul.mubr.f32.gmra.mxu0 %v5023
  %v5148 = vpop.f32.mrf.mxu0
  %v5149 = vadd.f32 0.0, %v5148
  %v5150 = vpop.f32.mrf.mxu0
  %5151 = vmatprep.mubr.f32.mxu0 0.0
  %5152 = vmatmul.mubr.f32.gmra.mxu0 %v5026
  %v5153 = vpop.f32.mrf.mxu0
  %v5154 = vadd.f32 0.0, %v5153
  %v5155 = vpop.f32.mrf.mxu0
  %5156 = vmatprep.mubr.f32.mxu0 0.0
  %5157 = vmatmul.mubr.f32.gmra.mxu0 %v5029
  %v5158 = vpop.f32.mrf.mxu0
  %v5159 = vadd.f32 0.0, %v5158
  %v5160 = vpop.f32.mrf.mxu0
  %5161 = vmatprep.mubr.f32.mxu0 0.0
  %5162 = vmatmul.mubr.f32.gmra.mxu0 %v5032
  %v5163 = vpop.f32.mrf.mxu0
  %v5164 = vadd.f32 0.0, %v5163
  %v5165 = vpop.f32.mrf.mxu0
  %5166 = vmatprep.mubr.f32.mxu0 0.0
  %5167 = vmatmul.mubr.f32.gmra.mxu0 %v5035
  %v5168 = vpop.f32.mrf.mxu0
  %v5169 = vadd.f32 0.0, %v5168
  %v5170 = vpop.f32.mrf.mxu0
  %5171 = vmatprep.mubr.f32.mxu0 0.0
  %5172 = vmatmul.mubr.f32.gmra.mxu0 %v5038
  %v5173 = vpop.f32.mrf.mxu0
  %v5174 = vadd.f32 0.0, %v5173
  %v5175 = vpop.f32.mrf.mxu0
  %5176 = vmatprep.mubr.f32.mxu0 0.0
  %5177 = vmatmul.mubr.f32.gmra.mxu0 %v5041
  %v5178 = vpop.f32.mrf.mxu0
  %v5179 = vadd.f32 0.0, %v5178
  %v5180 = vpop.f32.mrf.mxu0
  %5181 = vmatprep.mubr.f32.mxu0 0.0
  %5182 = vmatmul.mubr.f32.gmra.mxu0 %v5044
  %v5183 = vpop.f32.mrf.mxu0
  %v5184 = vadd.f32 0.0, %v5183
  %v5185 = vpop.f32.mrf.mxu0
  %5186 = vmatprep.mubr.f32.mxu0 0.0
  %5187 = vmatmul.mubr.f32.gmra.mxu0 %v5047
  %v5188 = vpop.f32.mrf.mxu0
  %v5189 = vadd.f32 0.0, %v5188
  %v5190 = vpop.f32.mrf.mxu0
  %5191 = vmatprep.mubr.f32.mxu0 0.0
  %5192 = vmatmul.mubr.f32.gmra.mxu0 %v5050
  %v5193 = vpop.f32.mrf.mxu0
  %v5194 = vadd.f32 0.0, %v5193
  %v5195 = vpop.f32.mrf.mxu0
  %5196 = vdwg.mxu0
  %v5197 = vadd.f32 %v4970, %v5119
  %v5198 = vadd.f32 %v4971, %v5124
  %v5199 = vadd.f32 %v4972, %v5129
  %v5200 = vadd.f32 %v4973, %v5134
  %v5201 = vadd.f32 %v4974, %v5139
  %v5202 = vadd.f32 %v4975, %v5144
  %v5203 = vadd.f32 %v4976, %v5149
  %v5204 = vadd.f32 %v4977, %v5154
  %v5205 = vadd.f32 %v4978, %v5159
  %v5206 = vadd.f32 %v4979, %v5164
  %v5207 = vadd.f32 %v4980, %v5169
  %v5208 = vadd.f32 %v4981, %v5174
  %v5209 = vadd.f32 %v4982, %v5179
  %v5210 = vadd.f32 %v4983, %v5184
  %v5211 = vadd.f32 %v4984, %v5189
  %v5212 = vadd.f32 %v4985, %v5194
  %v5213 = vld [vmem:[%s3422 + $0x1] sm:$0xff]
  %v5214 = vld [vmem:[%s3422 + $0x11] sm:$0xff]
  %v5215 = vld [vmem:[%s3422 + $0x21] sm:$0xff]
  %v5216 = vld [vmem:[%s3422 + $0x31] sm:$0xff]
  %v5217 = vld [vmem:[%s3422 + $0x41] sm:$0xff]
  %v5218 = vld [vmem:[%s3422 + $0x51] sm:$0xff]
  %v5219 = vld [vmem:[%s3422 + $0x61] sm:$0xff]
  %v5220 = vld [vmem:[%s3422 + $0x71] sm:$0xff]
  %v5221 = vld [vmem:[%s3422 + $0x91] sm:$0xff]
  %v5222 = vld [vmem:[%s3422 + $0xa1] sm:$0xff]
  %v5223 = vld [vmem:[%s3422 + $0xb1] sm:$0xff]
  %v5224 = vld [vmem:[%s3422 + $0xc1] sm:$0xff]
  %v5225 = vld [vmem:[%s3422 + $0xd1] sm:$0xff]
  %v5226 = vld [vmem:[%s3422 + $0xe1] sm:$0xff]
  %v5227 = vld [vmem:[%s3422 + $0xf1] sm:$0xff]
  %v5228 = vld [vmem:[%s3422 + $0x101] sm:$0xff]
  %s5229 = scalar_lea.vmem %s1, 40
  %v5230 = vld [vmem:[%s5229] sm:$0xff]
  %v5232 = vsel %vm46, %v5213, 0
  %v5235 = vsel %vm46, %v5214, 0
  %v5238 = vsel %vm46, %v5215, 0
  %v5241 = vsel %vm46, %v5216, 0
  %v5244 = vsel %vm46, %v5217, 0
  %v5247 = vsel %vm46, %v5218, 0
  %v5250 = vsel %vm46, %v5219, 0
  %v5253 = vsel %vm46, %v5220, 0
  %v5256 = vsel %vm46, %v5221, 0
  %v5259 = vsel %vm46, %v5222, 0
  %v5262 = vsel %vm46, %v5223, 0
  %v5265 = vsel %vm46, %v5224, 0
  %v5268 = vsel %vm46, %v5225, 0
  %v5271 = vsel %vm46, %v5226, 0
  %v5274 = vsel %vm46, %v5227, 0
  %v5277 = vsel %vm46, %v5228, 0
  %5279 = vmatprep.subr.mxu0 0.0
  %5280 = vmatpush1.msra.mxu0 0.0
  %5281 = vmatprep.subr.mxu0 0.0
  %5282 = vmatpush1.msra.mxu0 0.0
  %5283 = vmatprep.subr.mxu0 0.0
  %5284 = vmatpush1.msra.mxu0 0.0
  %5285 = vmatprep.subr.mxu0 0.0
  %5286 = vmatpush1.msra.mxu0 0.0
  %5287 = vmatprep.subr.mxu0 0.0
  %5288 = vmatpush1.msra.mxu0 0.0
  %5289 = vmatprep.subr.mxu0 0.0
  %5290 = vmatpush1.msra.mxu0 0.0
  %5291 = vmatprep.subr.mxu0 0.0
  %5292 = vmatpush1.msra.mxu0 0.0
  %5293 = vmatprep.subr.mxu0 0.0
  %5294 = vmatpush1.msra.mxu0 0.0
  %5295 = vmatprep.subr.mxu0 0.0
  %5296 = vmatpush1.msra.mxu0 0.0
  %5297 = vmatprep.subr.mxu0 0.0
  %5298 = vmatpush1.msra.mxu0 0.0
  %5299 = vmatprep.subr.mxu0 0.0
  %5300 = vmatpush1.msra.mxu0 0.0
  %5301 = vmatprep.subr.mxu0 0.0
  %5302 = vmatpush1.msra.mxu0 0.0
  %5303 = vmatprep.subr.mxu0 0.0
  %5304 = vmatpush1.msra.mxu0 0.0
  %5305 = vmatprep.subr.mxu0 0.0
  %5306 = vmatpush1.msra.mxu0 0.0
  %5307 = vmatprep.subr.mxu0 0.0
  %5308 = vmatpush1.msra.mxu0 0.0
  %5309 = vmatprep.subr.mxu0 0.0
  %5310 = vmatpush1.msra.mxu0 %v5230
  %5311 = vmatprep.subr.mxu0 0.0
  %5312 = vmatpush2.msra.mxu0 0.0
  %5313 = vmatprep.subr.mxu0 0.0
  %5314 = vmatpush2.msra.mxu0 0.0
  %5315 = vmatprep.subr.mxu0 0.0
  %5316 = vmatpush2.msra.mxu0 0.0
  %5317 = vmatprep.subr.mxu0 0.0
  %5318 = vmatpush2.msra.mxu0 0.0
  %5319 = vmatprep.subr.mxu0 0.0
  %5320 = vmatpush2.msra.mxu0 0.0
  %5321 = vmatprep.subr.mxu0 0.0
  %5322 = vmatpush2.msra.mxu0 0.0
  %5323 = vmatprep.subr.mxu0 0.0
  %5324 = vmatpush2.msra.mxu0 0.0
  %5325 = vmatprep.subr.mxu0 0.0
  %5326 = vmatpush2.msra.mxu0 0.0
  %5327 = vmatprep.subr.mxu0 0.0
  %5328 = vmatpush2.msra.mxu0 0.0
  %5329 = vmatprep.subr.mxu0 0.0
  %5330 = vmatpush2.msra.mxu0 0.0
  %5331 = vmatprep.subr.mxu0 0.0
  %5332 = vmatpush2.msra.mxu0 0.0
  %5333 = vmatprep.subr.mxu0 0.0
  %5334 = vmatpush2.msra.mxu0 0.0
  %5335 = vmatprep.subr.mxu0 0.0
  %5336 = vmatpush2.msra.mxu0 0.0
  %5337 = vmatprep.subr.mxu0 0.0
  %5338 = vmatpush2.msra.mxu0 0.0
  %5339 = vmatprep.subr.mxu0 0.0
  %5340 = vmatpush2.msra.mxu0 0.0
  %5341 = vmatprep.subr.mxu0 0.0
  %5342 = vmatpush2.msra.mxu0 0.0
  %5343 = vmatprep.mubr.f32.mxu0 0.0
  %5344 = vmatmul.mubr.f32.gmra.mxu0 %v5232
  %v5345 = vpop.f32.mrf.mxu0
  %v5346 = vadd.f32 0.0, %v5345
  %v5347 = vpop.f32.mrf.mxu0
  %5348 = vmatprep.mubr.f32.mxu0 0.0
  %5349 = vmatmul.mubr.f32.gmra.mxu0 %v5235
  %v5350 = vpop.f32.mrf.mxu0
  %v5351 = vadd.f32 0.0, %v5350
  %v5352 = vpop.f32.mrf.mxu0
  %5353 = vmatprep.mubr.f32.mxu0 0.0
  %5354 = vmatmul.mubr.f32.gmra.mxu0 %v5238
  %v5355 = vpop.f32.mrf.mxu0
  %v5356 = vadd.f32 0.0, %v5355
  %v5357 = vpop.f32.mrf.mxu0
  %5358 = vmatprep.mubr.f32.mxu0 0.0
  %5359 = vmatmul.mubr.f32.gmra.mxu0 %v5241
  %v5360 = vpop.f32.mrf.mxu0
  %v5361 = vadd.f32 0.0, %v5360
  %v5362 = vpop.f32.mrf.mxu0
  %5363 = vmatprep.mubr.f32.mxu0 0.0
  %5364 = vmatmul.mubr.f32.gmra.mxu0 %v5244
  %v5365 = vpop.f32.mrf.mxu0
  %v5366 = vadd.f32 0.0, %v5365
  %v5367 = vpop.f32.mrf.mxu0
  %5368 = vmatprep.mubr.f32.mxu0 0.0
  %5369 = vmatmul.mubr.f32.gmra.mxu0 %v5247
  %v5370 = vpop.f32.mrf.mxu0
  %v5371 = vadd.f32 0.0, %v5370
  %v5372 = vpop.f32.mrf.mxu0
  %5373 = vmatprep.mubr.f32.mxu0 0.0
  %5374 = vmatmul.mubr.f32.gmra.mxu0 %v5250
  %v5375 = vpop.f32.mrf.mxu0
  %v5376 = vadd.f32 0.0, %v5375
  %v5377 = vpop.f32.mrf.mxu0
  %5378 = vmatprep.mubr.f32.mxu0 0.0
  %5379 = vmatmul.mubr.f32.gmra.mxu0 %v5253
  %v5380 = vpop.f32.mrf.mxu0
  %v5381 = vadd.f32 0.0, %v5380
  %v5382 = vpop.f32.mrf.mxu0
  %5383 = vmatprep.mubr.f32.mxu0 0.0
  %5384 = vmatmul.mubr.f32.gmra.mxu0 %v5256
  %v5385 = vpop.f32.mrf.mxu0
  %v5386 = vadd.f32 0.0, %v5385
  %v5387 = vpop.f32.mrf.mxu0
  %5388 = vmatprep.mubr.f32.mxu0 0.0
  %5389 = vmatmul.mubr.f32.gmra.mxu0 %v5259
  %v5390 = vpop.f32.mrf.mxu0
  %v5391 = vadd.f32 0.0, %v5390
  %v5392 = vpop.f32.mrf.mxu0
  %5393 = vmatprep.mubr.f32.mxu0 0.0
  %5394 = vmatmul.mubr.f32.gmra.mxu0 %v5262
  %v5395 = vpop.f32.mrf.mxu0
  %v5396 = vadd.f32 0.0, %v5395
  %v5397 = vpop.f32.mrf.mxu0
  %5398 = vmatprep.mubr.f32.mxu0 0.0
  %5399 = vmatmul.mubr.f32.gmra.mxu0 %v5265
  %v5400 = vpop.f32.mrf.mxu0
  %v5401 = vadd.f32 0.0, %v5400
  %v5402 = vpop.f32.mrf.mxu0
  %5403 = vmatprep.mubr.f32.mxu0 0.0
  %5404 = vmatmul.mubr.f32.gmra.mxu0 %v5268
  %v5405 = vpop.f32.mrf.mxu0
  %v5406 = vadd.f32 0.0, %v5405
  %v5407 = vpop.f32.mrf.mxu0
  %5408 = vmatprep.mubr.f32.mxu0 0.0
  %5409 = vmatmul.mubr.f32.gmra.mxu0 %v5271
  %v5410 = vpop.f32.mrf.mxu0
  %v5411 = vadd.f32 0.0, %v5410
  %v5412 = vpop.f32.mrf.mxu0
  %5413 = vmatprep.mubr.f32.mxu0 0.0
  %5414 = vmatmul.mubr.f32.gmra.mxu0 %v5274
  %v5415 = vpop.f32.mrf.mxu0
  %v5416 = vadd.f32 0.0, %v5415
  %v5417 = vpop.f32.mrf.mxu0
  %5418 = vmatprep.mubr.f32.mxu0 0.0
  %5419 = vmatmul.mubr.f32.gmra.mxu0 %v5277
  %v5420 = vpop.f32.mrf.mxu0
  %v5421 = vadd.f32 0.0, %v5420
  %v5422 = vpop.f32.mrf.mxu0
  %5423 = vdwg.mxu0
  %v5424 = vadd.f32 %v5197, %v5346
  %v5425 = vadd.f32 %v5198, %v5351
  %v5426 = vadd.f32 %v5199, %v5356
  %v5427 = vadd.f32 %v5200, %v5361
  %v5428 = vadd.f32 %v5201, %v5366
  %v5429 = vadd.f32 %v5202, %v5371
  %v5430 = vadd.f32 %v5203, %v5376
  %v5431 = vadd.f32 %v5204, %v5381
  %v5432 = vadd.f32 %v5205, %v5386
  %v5433 = vadd.f32 %v5206, %v5391
  %v5434 = vadd.f32 %v5207, %v5396
  %v5435 = vadd.f32 %v5208, %v5401
  %v5436 = vadd.f32 %v5209, %v5406
  %v5437 = vadd.f32 %v5210, %v5411
  %v5438 = vadd.f32 %v5211, %v5416
  %v5439 = vadd.f32 %v5212, %v5421
  %s5440 = scalar_lea.vmem [#allocation2], 304
  %v5441 = vld [vmem:[%s5440] sm:$0xff]
  %v5442 = vld [vmem:[%s5440 + $0x10] sm:$0xff]
  %v5443 = vld [vmem:[%s5440 + $0x20] sm:$0xff]
  %v5444 = vld [vmem:[%s5440 + $0x30] sm:$0xff]
  %v5445 = vld [vmem:[%s5440 + $0x40] sm:$0xff]
  %v5446 = vld [vmem:[%s5440 + $0x50] sm:$0xff]
  %v5447 = vld [vmem:[%s5440 + $0x60] sm:$0xff]
  %v5448 = vld [vmem:[%s5440 + $0x70] sm:$0xff]
  %v5449 = vld [vmem:[%s5440 + $0x90] sm:$0xff]
  %v5450 = vld [vmem:[%s5440 + $0xa0] sm:$0xff]
  %v5451 = vld [vmem:[%s5440 + $0xb0] sm:$0xff]
  %v5452 = vld [vmem:[%s5440 + $0xc0] sm:$0xff]
  %v5453 = vld [vmem:[%s5440 + $0xd0] sm:$0xff]
  %v5454 = vld [vmem:[%s5440 + $0xe0] sm:$0xff]
  %v5455 = vld [vmem:[%s5440 + $0xf0] sm:$0xff]
  %v5456 = vld [vmem:[%s5440 + $0x100] sm:$0xff]
  %s5457 = scalar_lea.vmem %s1, 48
  %v5458 = vld [vmem:[%s5457] sm:$0xff]
  %v5460 = vsel %vm46, %v5441, 0
  %v5463 = vsel %vm46, %v5442, 0
  %v5466 = vsel %vm46, %v5443, 0
  %v5469 = vsel %vm46, %v5444, 0
  %v5472 = vsel %vm46, %v5445, 0
  %v5475 = vsel %vm46, %v5446, 0
  %v5478 = vsel %vm46, %v5447, 0
  %v5481 = vsel %vm46, %v5448, 0
  %v5484 = vsel %vm46, %v5449, 0
  %v5487 = vsel %vm46, %v5450, 0
  %v5490 = vsel %vm46, %v5451, 0
  %v5493 = vsel %vm46, %v5452, 0
  %v5496 = vsel %vm46, %v5453, 0
  %v5499 = vsel %vm46, %v5454, 0
  %v5502 = vsel %vm46, %v5455, 0
  %v5505 = vsel %vm46, %v5456, 0
  %5507 = vmatprep.subr.mxu0 0.0
  %5508 = vmatpush1.msra.mxu0 0.0
  %5509 = vmatprep.subr.mxu0 0.0
  %5510 = vmatpush1.msra.mxu0 0.0
  %5511 = vmatprep.subr.mxu0 0.0
  %5512 = vmatpush1.msra.mxu0 0.0
  %5513 = vmatprep.subr.mxu0 0.0
  %5514 = vmatpush1.msra.mxu0 0.0
  %5515 = vmatprep.subr.mxu0 0.0
  %5516 = vmatpush1.msra.mxu0 0.0
  %5517 = vmatprep.subr.mxu0 0.0
  %5518 = vmatpush1.msra.mxu0 0.0
  %5519 = vmatprep.subr.mxu0 0.0
  %5520 = vmatpush1.msra.mxu0 0.0
  %5521 = vmatprep.subr.mxu0 0.0
  %5522 = vmatpush1.msra.mxu0 0.0
  %5523 = vmatprep.subr.mxu0 0.0
  %5524 = vmatpush1.msra.mxu0 0.0
  %5525 = vmatprep.subr.mxu0 0.0
  %5526 = vmatpush1.msra.mxu0 0.0
  %5527 = vmatprep.subr.mxu0 0.0
  %5528 = vmatpush1.msra.mxu0 0.0
  %5529 = vmatprep.subr.mxu0 0.0
  %5530 = vmatpush1.msra.mxu0 0.0
  %5531 = vmatprep.subr.mxu0 0.0
  %5532 = vmatpush1.msra.mxu0 0.0
  %5533 = vmatprep.subr.mxu0 0.0
  %5534 = vmatpush1.msra.mxu0 0.0
  %5535 = vmatprep.subr.mxu0 0.0
  %5536 = vmatpush1.msra.mxu0 0.0
  %5537 = vmatprep.subr.mxu0 0.0
  %5538 = vmatpush1.msra.mxu0 %v5458
  %5539 = vmatprep.subr.mxu0 0.0
  %5540 = vmatpush2.msra.mxu0 0.0
  %5541 = vmatprep.subr.mxu0 0.0
  %5542 = vmatpush2.msra.mxu0 0.0
  %5543 = vmatprep.subr.mxu0 0.0
  %5544 = vmatpush2.msra.mxu0 0.0
  %5545 = vmatprep.subr.mxu0 0.0
  %5546 = vmatpush2.msra.mxu0 0.0
  %5547 = vmatprep.subr.mxu0 0.0
  %5548 = vmatpush2.msra.mxu0 0.0
  %5549 = vmatprep.subr.mxu0 0.0
  %5550 = vmatpush2.msra.mxu0 0.0
  %5551 = vmatprep.subr.mxu0 0.0
  %5552 = vmatpush2.msra.mxu0 0.0
  %5553 = vmatprep.subr.mxu0 0.0
  %5554 = vmatpush2.msra.mxu0 0.0
  %5555 = vmatprep.subr.mxu0 0.0
  %5556 = vmatpush2.msra.mxu0 0.0
  %5557 = vmatprep.subr.mxu0 0.0
  %5558 = vmatpush2.msra.mxu0 0.0
  %5559 = vmatprep.subr.mxu0 0.0
  %5560 = vmatpush2.msra.mxu0 0.0
  %5561 = vmatprep.subr.mxu0 0.0
  %5562 = vmatpush2.msra.mxu0 0.0
  %5563 = vmatprep.subr.mxu0 0.0
  %5564 = vmatpush2.msra.mxu0 0.0
  %5565 = vmatprep.subr.mxu0 0.0
  %5566 = vmatpush2.msra.mxu0 0.0
  %5567 = vmatprep.subr.mxu0 0.0
  %5568 = vmatpush2.msra.mxu0 0.0
  %5569 = vmatprep.subr.mxu0 0.0
  %5570 = vmatpush2.msra.mxu0 0.0
  %5571 = vmatprep.mubr.f32.mxu0 0.0
  %5572 = vmatmul.mubr.f32.gmra.mxu0 %v5460
  %v5573 = vpop.f32.mrf.mxu0
  %v5574 = vadd.f32 0.0, %v5573
  %v5575 = vpop.f32.mrf.mxu0
  %5576 = vmatprep.mubr.f32.mxu0 0.0
  %5577 = vmatmul.mubr.f32.gmra.mxu0 %v5463
  %v5578 = vpop.f32.mrf.mxu0
  %v5579 = vadd.f32 0.0, %v5578
  %v5580 = vpop.f32.mrf.mxu0
  %5581 = vmatprep.mubr.f32.mxu0 0.0
  %5582 = vmatmul.mubr.f32.gmra.mxu0 %v5466
  %v5583 = vpop.f32.mrf.mxu0
  %v5584 = vadd.f32 0.0, %v5583
  %v5585 = vpop.f32.mrf.mxu0
  %5586 = vmatprep.mubr.f32.mxu0 0.0
  %5587 = vmatmul.mubr.f32.gmra.mxu0 %v5469
  %v5588 = vpop.f32.mrf.mxu0
  %v5589 = vadd.f32 0.0, %v5588
  %v5590 = vpop.f32.mrf.mxu0
  %5591 = vmatprep.mubr.f32.mxu0 0.0
  %5592 = vmatmul.mubr.f32.gmra.mxu0 %v5472
  %v5593 = vpop.f32.mrf.mxu0
  %v5594 = vadd.f32 0.0, %v5593
  %v5595 = vpop.f32.mrf.mxu0
  %5596 = vmatprep.mubr.f32.mxu0 0.0
  %5597 = vmatmul.mubr.f32.gmra.mxu0 %v5475
  %v5598 = vpop.f32.mrf.mxu0
  %v5599 = vadd.f32 0.0, %v5598
  %v5600 = vpop.f32.mrf.mxu0
  %5601 = vmatprep.mubr.f32.mxu0 0.0
  %5602 = vmatmul.mubr.f32.gmra.mxu0 %v5478
  %v5603 = vpop.f32.mrf.mxu0
  %v5604 = vadd.f32 0.0, %v5603
  %v5605 = vpop.f32.mrf.mxu0
  %5606 = vmatprep.mubr.f32.mxu0 0.0
  %5607 = vmatmul.mubr.f32.gmra.mxu0 %v5481
  %v5608 = vpop.f32.mrf.mxu0
  %v5609 = vadd.f32 0.0, %v5608
  %v5610 = vpop.f32.mrf.mxu0
  %5611 = vmatprep.mubr.f32.mxu0 0.0
  %5612 = vmatmul.mubr.f32.gmra.mxu0 %v5484
  %v5613 = vpop.f32.mrf.mxu0
  %v5614 = vadd.f32 0.0, %v5613
  %v5615 = vpop.f32.mrf.mxu0
  %5616 = vmatprep.mubr.f32.mxu0 0.0
  %5617 = vmatmul.mubr.f32.gmra.mxu0 %v5487
  %v5618 = vpop.f32.mrf.mxu0
  %v5619 = vadd.f32 0.0, %v5618
  %v5620 = vpop.f32.mrf.mxu0
  %5621 = vmatprep.mubr.f32.mxu0 0.0
  %5622 = vmatmul.mubr.f32.gmra.mxu0 %v5490
  %v5623 = vpop.f32.mrf.mxu0
  %v5624 = vadd.f32 0.0, %v5623
  %v5625 = vpop.f32.mrf.mxu0
  %5626 = vmatprep.mubr.f32.mxu0 0.0
  %5627 = vmatmul.mubr.f32.gmra.mxu0 %v5493
  %v5628 = vpop.f32.mrf.mxu0
  %v5629 = vadd.f32 0.0, %v5628
  %v5630 = vpop.f32.mrf.mxu0
  %5631 = vmatprep.mubr.f32.mxu0 0.0
  %5632 = vmatmul.mubr.f32.gmra.mxu0 %v5496
  %v5633 = vpop.f32.mrf.mxu0
  %v5634 = vadd.f32 0.0, %v5633
  %v5635 = vpop.f32.mrf.mxu0
  %5636 = vmatprep.mubr.f32.mxu0 0.0
  %5637 = vmatmul.mubr.f32.gmra.mxu0 %v5499
  %v5638 = vpop.f32.mrf.mxu0
  %v5639 = vadd.f32 0.0, %v5638
  %v5640 = vpop.f32.mrf.mxu0
  %5641 = vmatprep.mubr.f32.mxu0 0.0
  %5642 = vmatmul.mubr.f32.gmra.mxu0 %v5502
  %v5643 = vpop.f32.mrf.mxu0
  %v5644 = vadd.f32 0.0, %v5643
  %v5645 = vpop.f32.mrf.mxu0
  %5646 = vmatprep.mubr.f32.mxu0 0.0
  %5647 = vmatmul.mubr.f32.gmra.mxu0 %v5505
  %v5648 = vpop.f32.mrf.mxu0
  %v5649 = vadd.f32 0.0, %v5648
  %v5650 = vpop.f32.mrf.mxu0
  %5651 = vdwg.mxu0
  %v5652 = vadd.f32 %v5424, %v5574
  %v5653 = vadd.f32 %v5425, %v5579
  %v5654 = vadd.f32 %v5426, %v5584
  %v5655 = vadd.f32 %v5427, %v5589
  %v5656 = vadd.f32 %v5428, %v5594
  %v5657 = vadd.f32 %v5429, %v5599
  %v5658 = vadd.f32 %v5430, %v5604
  %v5659 = vadd.f32 %v5431, %v5609
  %v5660 = vadd.f32 %v5432, %v5614
  %v5661 = vadd.f32 %v5433, %v5619
  %v5662 = vadd.f32 %v5434, %v5624
  %v5663 = vadd.f32 %v5435, %v5629
  %v5664 = vadd.f32 %v5436, %v5634
  %v5665 = vadd.f32 %v5437, %v5639
  %v5666 = vadd.f32 %v5438, %v5644
  %v5667 = vadd.f32 %v5439, %v5649
  %v5668 = vld [vmem:[%s5440 + $0x1] sm:$0xff]
  %v5669 = vld [vmem:[%s5440 + $0x11] sm:$0xff]
  %v5670 = vld [vmem:[%s5440 + $0x21] sm:$0xff]
  %v5671 = vld [vmem:[%s5440 + $0x31] sm:$0xff]
  %v5672 = vld [vmem:[%s5440 + $0x41] sm:$0xff]
  %v5673 = vld [vmem:[%s5440 + $0x51] sm:$0xff]
  %v5674 = vld [vmem:[%s5440 + $0x61] sm:$0xff]
  %v5675 = vld [vmem:[%s5440 + $0x71] sm:$0xff]
  %v5676 = vld [vmem:[%s5440 + $0x91] sm:$0xff]
  %v5677 = vld [vmem:[%s5440 + $0xa1] sm:$0xff]
  %v5678 = vld [vmem:[%s5440 + $0xb1] sm:$0xff]
  %v5679 = vld [vmem:[%s5440 + $0xc1] sm:$0xff]
  %v5680 = vld [vmem:[%s5440 + $0xd1] sm:$0xff]
  %v5681 = vld [vmem:[%s5440 + $0xe1] sm:$0xff]
  %v5682 = vld [vmem:[%s5440 + $0xf1] sm:$0xff]
  %v5683 = vld [vmem:[%s5440 + $0x101] sm:$0xff]
  %s5684 = scalar_lea.vmem %s1, 56
  %v5685 = vld [vmem:[%s5684] sm:$0xff]
  %v5687 = vsel %vm46, %v5668, 0
  %v5690 = vsel %vm46, %v5669, 0
  %v5693 = vsel %vm46, %v5670, 0
  %v5696 = vsel %vm46, %v5671, 0
  %v5699 = vsel %vm46, %v5672, 0
  %v5702 = vsel %vm46, %v5673, 0
  %v5705 = vsel %vm46, %v5674, 0
  %v5708 = vsel %vm46, %v5675, 0
  %v5711 = vsel %vm46, %v5676, 0
  %v5714 = vsel %vm46, %v5677, 0
  %v5717 = vsel %vm46, %v5678, 0
  %v5720 = vsel %vm46, %v5679, 0
  %v5723 = vsel %vm46, %v5680, 0
  %v5726 = vsel %vm46, %v5681, 0
  %v5729 = vsel %vm46, %v5682, 0
  %v5732 = vsel %vm46, %v5683, 0
  %5734 = vmatprep.subr.mxu0 0.0
  %5735 = vmatpush1.msra.mxu0 0.0
  %5736 = vmatprep.subr.mxu0 0.0
  %5737 = vmatpush1.msra.mxu0 0.0
  %5738 = vmatprep.subr.mxu0 0.0
  %5739 = vmatpush1.msra.mxu0 0.0
  %5740 = vmatprep.subr.mxu0 0.0
  %5741 = vmatpush1.msra.mxu0 0.0
  %5742 = vmatprep.subr.mxu0 0.0
  %5743 = vmatpush1.msra.mxu0 0.0
  %5744 = vmatprep.subr.mxu0 0.0
  %5745 = vmatpush1.msra.mxu0 0.0
  %5746 = vmatprep.subr.mxu0 0.0
  %5747 = vmatpush1.msra.mxu0 0.0
  %5748 = vmatprep.subr.mxu0 0.0
  %5749 = vmatpush1.msra.mxu0 0.0
  %5750 = vmatprep.subr.mxu0 0.0
  %5751 = vmatpush1.msra.mxu0 0.0
  %5752 = vmatprep.subr.mxu0 0.0
  %5753 = vmatpush1.msra.mxu0 0.0
  %5754 = vmatprep.subr.mxu0 0.0
  %5755 = vmatpush1.msra.mxu0 0.0
  %5756 = vmatprep.subr.mxu0 0.0
  %5757 = vmatpush1.msra.mxu0 0.0
  %5758 = vmatprep.subr.mxu0 0.0
  %5759 = vmatpush1.msra.mxu0 0.0
  %5760 = vmatprep.subr.mxu0 0.0
  %5761 = vmatpush1.msra.mxu0 0.0
  %5762 = vmatprep.subr.mxu0 0.0
  %5763 = vmatpush1.msra.mxu0 0.0
  %5764 = vmatprep.subr.mxu0 0.0
  %5765 = vmatpush1.msra.mxu0 %v5685
  %5766 = vmatprep.subr.mxu0 0.0
  %5767 = vmatpush2.msra.mxu0 0.0
  %5768 = vmatprep.subr.mxu0 0.0
  %5769 = vmatpush2.msra.mxu0 0.0
  %5770 = vmatprep.subr.mxu0 0.0
  %5771 = vmatpush2.msra.mxu0 0.0
  %5772 = vmatprep.subr.mxu0 0.0
  %5773 = vmatpush2.msra.mxu0 0.0
  %5774 = vmatprep.subr.mxu0 0.0
  %5775 = vmatpush2.msra.mxu0 0.0
  %5776 = vmatprep.subr.mxu0 0.0
  %5777 = vmatpush2.msra.mxu0 0.0
  %5778 = vmatprep.subr.mxu0 0.0
  %5779 = vmatpush2.msra.mxu0 0.0
  %5780 = vmatprep.subr.mxu0 0.0
  %5781 = vmatpush2.msra.mxu0 0.0
  %5782 = vmatprep.subr.mxu0 0.0
  %5783 = vmatpush2.msra.mxu0 0.0
  %5784 = vmatprep.subr.mxu0 0.0
  %5785 = vmatpush2.msra.mxu0 0.0
  %5786 = vmatprep.subr.mxu0 0.0
  %5787 = vmatpush2.msra.mxu0 0.0
  %5788 = vmatprep.subr.mxu0 0.0
  %5789 = vmatpush2.msra.mxu0 0.0
  %5790 = vmatprep.subr.mxu0 0.0
  %5791 = vmatpush2.msra.mxu0 0.0
  %5792 = vmatprep.subr.mxu0 0.0
  %5793 = vmatpush2.msra.mxu0 0.0
  %5794 = vmatprep.subr.mxu0 0.0
  %5795 = vmatpush2.msra.mxu0 0.0
  %5796 = vmatprep.subr.mxu0 0.0
  %5797 = vmatpush2.msra.mxu0 0.0
  %5798 = vmatprep.mubr.f32.mxu0 0.0
  %5799 = vmatmul.mubr.f32.gmra.mxu0 %v5687
  %v5800 = vpop.f32.mrf.mxu0
  %v5801 = vadd.f32 0.0, %v5800
  %v5802 = vpop.f32.mrf.mxu0
  %5803 = vmatprep.mubr.f32.mxu0 0.0
  %5804 = vmatmul.mubr.f32.gmra.mxu0 %v5690
  %v5805 = vpop.f32.mrf.mxu0
  %v5806 = vadd.f32 0.0, %v5805
  %v5807 = vpop.f32.mrf.mxu0
  %5808 = vmatprep.mubr.f32.mxu0 0.0
  %5809 = vmatmul.mubr.f32.gmra.mxu0 %v5693
  %v5810 = vpop.f32.mrf.mxu0
  %v5811 = vadd.f32 0.0, %v5810
  %v5812 = vpop.f32.mrf.mxu0
  %5813 = vmatprep.mubr.f32.mxu0 0.0
  %5814 = vmatmul.mubr.f32.gmra.mxu0 %v5696
  %v5815 = vpop.f32.mrf.mxu0
  %v5816 = vadd.f32 0.0, %v5815
  %v5817 = vpop.f32.mrf.mxu0
  %5818 = vmatprep.mubr.f32.mxu0 0.0
  %5819 = vmatmul.mubr.f32.gmra.mxu0 %v5699
  %v5820 = vpop.f32.mrf.mxu0
  %v5821 = vadd.f32 0.0, %v5820
  %v5822 = vpop.f32.mrf.mxu0
  %5823 = vmatprep.mubr.f32.mxu0 0.0
  %5824 = vmatmul.mubr.f32.gmra.mxu0 %v5702
  %v5825 = vpop.f32.mrf.mxu0
  %v5826 = vadd.f32 0.0, %v5825
  %v5827 = vpop.f32.mrf.mxu0
  %5828 = vmatprep.mubr.f32.mxu0 0.0
  %5829 = vmatmul.mubr.f32.gmra.mxu0 %v5705
  %v5830 = vpop.f32.mrf.mxu0
  %v5831 = vadd.f32 0.0, %v5830
  %v5832 = vpop.f32.mrf.mxu0
  %5833 = vmatprep.mubr.f32.mxu0 0.0
  %5834 = vmatmul.mubr.f32.gmra.mxu0 %v5708
  %v5835 = vpop.f32.mrf.mxu0
  %v5836 = vadd.f32 0.0, %v5835
  %v5837 = vpop.f32.mrf.mxu0
  %5838 = vmatprep.mubr.f32.mxu0 0.0
  %5839 = vmatmul.mubr.f32.gmra.mxu0 %v5711
  %v5840 = vpop.f32.mrf.mxu0
  %v5841 = vadd.f32 0.0, %v5840
  %v5842 = vpop.f32.mrf.mxu0
  %5843 = vmatprep.mubr.f32.mxu0 0.0
  %5844 = vmatmul.mubr.f32.gmra.mxu0 %v5714
  %v5845 = vpop.f32.mrf.mxu0
  %v5846 = vadd.f32 0.0, %v5845
  %v5847 = vpop.f32.mrf.mxu0
  %5848 = vmatprep.mubr.f32.mxu0 0.0
  %5849 = vmatmul.mubr.f32.gmra.mxu0 %v5717
  %v5850 = vpop.f32.mrf.mxu0
  %v5851 = vadd.f32 0.0, %v5850
  %v5852 = vpop.f32.mrf.mxu0
  %5853 = vmatprep.mubr.f32.mxu0 0.0
  %5854 = vmatmul.mubr.f32.gmra.mxu0 %v5720
  %v5855 = vpop.f32.mrf.mxu0
  %v5856 = vadd.f32 0.0, %v5855
  %v5857 = vpop.f32.mrf.mxu0
  %5858 = vmatprep.mubr.f32.mxu0 0.0
  %5859 = vmatmul.mubr.f32.gmra.mxu0 %v5723
  %v5860 = vpop.f32.mrf.mxu0
  %v5861 = vadd.f32 0.0, %v5860
  %v5862 = vpop.f32.mrf.mxu0
  %5863 = vmatprep.mubr.f32.mxu0 0.0
  %5864 = vmatmul.mubr.f32.gmra.mxu0 %v5726
  %v5865 = vpop.f32.mrf.mxu0
  %v5866 = vadd.f32 0.0, %v5865
  %v5867 = vpop.f32.mrf.mxu0
  %5868 = vmatprep.mubr.f32.mxu0 0.0
  %5869 = vmatmul.mubr.f32.gmra.mxu0 %v5729
  %v5870 = vpop.f32.mrf.mxu0
  %v5871 = vadd.f32 0.0, %v5870
  %v5872 = vpop.f32.mrf.mxu0
  %5873 = vmatprep.mubr.f32.mxu0 0.0
  %5874 = vmatmul.mubr.f32.gmra.mxu0 %v5732
  %v5875 = vpop.f32.mrf.mxu0
  %v5876 = vadd.f32 0.0, %v5875
  %v5877 = vpop.f32.mrf.mxu0
  %5878 = vdwg.mxu0
  %v5879 = vadd.f32 %v5652, %v5801
  %v5880 = vadd.f32 %v5653, %v5806
  %v5881 = vadd.f32 %v5654, %v5811
  %v5882 = vadd.f32 %v5655, %v5816
  %v5883 = vadd.f32 %v5656, %v5821
  %v5884 = vadd.f32 %v5657, %v5826
  %v5885 = vadd.f32 %v5658, %v5831
  %v5886 = vadd.f32 %v5659, %v5836
  %v5887 = vadd.f32 %v5660, %v5841
  %v5888 = vadd.f32 %v5661, %v5846
  %v5889 = vadd.f32 %v5662, %v5851
  %v5890 = vadd.f32 %v5663, %v5856
  %v5891 = vadd.f32 %v5664, %v5861
  %v5892 = vadd.f32 %v5665, %v5866
  %v5893 = vadd.f32 %v5666, %v5871
  %v5894 = vadd.f32 %v5667, %v5876
  %v5895 = vld [vmem:[%s2] sm:$0x1]
  %v5897 = vlaneseq
  %v5898 = vshrl.u32 %v5897, 7
  %v5899 = vsub.s32 0, %v5898
  %v5900 = vrot.slane %v5895, %v5899
  %v5902 = vadd.f32 %v5879, %v5900
  %v5903 = vadd.f32 %v5880, %v5900
  %v5904 = vadd.f32 %v5881, %v5900
  %v5905 = vadd.f32 %v5882, %v5900
  %v5906 = vadd.f32 %v5883, %v5900
  %v5907 = vadd.f32 %v5884, %v5900
  %v5908 = vadd.f32 %v5885, %v5900
  %v5909 = vadd.f32 %v5886, %v5900
  %v5910 = vadd.f32 %v5887, %v5900
  %v5911 = vadd.f32 %v5888, %v5900
  %v5912 = vadd.f32 %v5889, %v5900
  %v5913 = vadd.f32 %v5890, %v5900
  %v5914 = vadd.f32 %v5891, %v5900
  %v5915 = vadd.f32 %v5892, %v5900
  %v5916 = vadd.f32 %v5893, %v5900
  %v5917 = vadd.f32 %v5894, %v5900
  %vm5918 = vcmp.ge.f32.partialorder %v5902, 0.0
  %vm5919 = vcmp.ge.f32.partialorder %v5903, 0.0
  %vm5920 = vcmp.ge.f32.partialorder %v5904, 0.0
  %vm5921 = vcmp.ge.f32.partialorder %v5905, 0.0
  %vm5922 = vcmp.ge.f32.partialorder %v5906, 0.0
  %vm5923 = vcmp.ge.f32.partialorder %v5907, 0.0
  %vm5924 = vcmp.ge.f32.partialorder %v5908, 0.0
  %vm5925 = vcmp.ge.f32.partialorder %v5909, 0.0
  %vm5926 = vcmp.ge.f32.partialorder %v5910, 0.0
  %vm5927 = vcmp.ge.f32.partialorder %v5911, 0.0
  %vm5928 = vcmp.ge.f32.partialorder %v5912, 0.0
  %vm5929 = vcmp.ge.f32.partialorder %v5913, 0.0
  %vm5930 = vcmp.ge.f32.partialorder %v5914, 0.0
  %vm5931 = vcmp.ge.f32.partialorder %v5915, 0.0
  %vm5932 = vcmp.ge.f32.partialorder %v5916, 0.0
  %vm5933 = vcmp.ge.f32.partialorder %v5917, 0.0
  %v5934 = vmul.f32 %v5902, 0.2
  %v5935 = vmul.f32 %v5903, 0.2
  %v5936 = vmul.f32 %v5904, 0.2
  %v5937 = vmul.f32 %v5905, 0.2
  %v5938 = vmul.f32 %v5906, 0.2
  %v5939 = vmul.f32 %v5907, 0.2
  %v5940 = vmul.f32 %v5908, 0.2
  %v5941 = vmul.f32 %v5909, 0.2
  %v5942 = vmul.f32 %v5910, 0.2
  %v5943 = vmul.f32 %v5911, 0.2
  %v5944 = vmul.f32 %v5912, 0.2
  %v5945 = vmul.f32 %v5913, 0.2
  %v5946 = vmul.f32 %v5914, 0.2
  %v5947 = vmul.f32 %v5915, 0.2
  %v5948 = vmul.f32 %v5916, 0.2
  %v5949 = vmul.f32 %v5917, 0.2
  %v5950 = vsel %vm5918, %v5902, %v5934
  %v5951 = vsel %vm5919, %v5903, %v5935
  %v5952 = vsel %vm5920, %v5904, %v5936
  %v5953 = vsel %vm5921, %v5905, %v5937
  %v5954 = vsel %vm5922, %v5906, %v5938
  %v5955 = vsel %vm5923, %v5907, %v5939
  %v5956 = vsel %vm5924, %v5908, %v5940
  %v5957 = vsel %vm5925, %v5909, %v5941
  %v5958 = vsel %vm5926, %v5910, %v5942
  %v5959 = vsel %vm5927, %v5911, %v5943
  %v5960 = vsel %vm5928, %v5912, %v5944
  %v5961 = vsel %vm5929, %v5913, %v5945
  %v5962 = vsel %vm5930, %v5914, %v5946
  %v5963 = vsel %vm5931, %v5915, %v5947
  %v5964 = vsel %vm5932, %v5916, %v5948
  %v5965 = vsel %vm5933, %v5917, %v5949
  %v5982 = vcombine.high %v5950, %v5950
  %v5984 = vunpack.c.l.s4 1983009808
  %v5985 = vunpack.c.0.s8 %v5984
  %v5986 = vlaneseq
  %v5987 = vshrl.u32 %v5986, 7
  %v5988 = vsub.s32 %v5985, %v5987
  %v5989 = vrot.slane %v5950, %v5988
  %v5991 = vunpack.c.l.s4 1983009808
  %v5992 = vunpack.c.0.s8 %v5991
  %v5993 = vlaneseq
  %v5994 = vshrl.u32 %v5993, 7
  %v5995 = vsub.s32 %v5992, %v5994
  %v5996 = vrot.slane %v5982, %v5995
  %v5997 = vcombine.high %v5989, %v5989
  %v5998 = vcombine.high %v5996, %v5996
  %v5999 = vcombine.high %v5951, %v5951
  %v6001 = vunpack.c.l.s4 1983009808
  %v6002 = vunpack.c.0.s8 %v6001
  %v6003 = vlaneseq
  %v6004 = vshrl.u32 %v6003, 7
  %v6005 = vsub.s32 %v6002, %v6004
  %v6006 = vrot.slane %v5951, %v6005
  %v6008 = vunpack.c.l.s4 1983009808
  %v6009 = vunpack.c.0.s8 %v6008
  %v6010 = vlaneseq
  %v6011 = vshrl.u32 %v6010, 7
  %v6012 = vsub.s32 %v6009, %v6011
  %v6013 = vrot.slane %v5999, %v6012
  %v6014 = vcombine.high %v6006, %v6006
  %v6015 = vcombine.high %v6013, %v6013
  %v6016 = vcombine.high %v5952, %v5952
  %v6018 = vunpack.c.l.s4 1983009808
  %v6019 = vunpack.c.0.s8 %v6018
  %v6020 = vlaneseq
  %v6021 = vshrl.u32 %v6020, 7
  %v6022 = vsub.s32 %v6019, %v6021
  %v6023 = vrot.slane %v5952, %v6022
  %v6025 = vunpack.c.l.s4 1983009808
  %v6026 = vunpack.c.0.s8 %v6025
  %v6027 = vlaneseq
  %v6028 = vshrl.u32 %v6027, 7
  %v6029 = vsub.s32 %v6026, %v6028
  %v6030 = vrot.slane %v6016, %v6029
  %v6031 = vcombine.high %v6023, %v6023
  %v6032 = vcombine.high %v6030, %v6030
  %v6033 = vcombine.high %v5953, %v5953
  %v6035 = vunpack.c.l.s4 1983009808
  %v6036 = vunpack.c.0.s8 %v6035
  %v6037 = vlaneseq
  %v6038 = vshrl.u32 %v6037, 7
  %v6039 = vsub.s32 %v6036, %v6038
  %v6040 = vrot.slane %v5953, %v6039
  %v6042 = vunpack.c.l.s4 1983009808
  %v6043 = vunpack.c.0.s8 %v6042
  %v6044 = vlaneseq
  %v6045 = vshrl.u32 %v6044, 7
  %v6046 = vsub.s32 %v6043, %v6045
  %v6047 = vrot.slane %v6033, %v6046
  %v6048 = vcombine.high %v6040, %v6040
  %v6049 = vcombine.high %v6047, %v6047
  %v6050 = vcombine.high %v5954, %v5954
  %v6052 = vunpack.c.l.s4 1983009808
  %v6053 = vunpack.c.0.s8 %v6052
  %v6054 = vlaneseq
  %v6055 = vshrl.u32 %v6054, 7
  %v6056 = vsub.s32 %v6053, %v6055
  %v6057 = vrot.slane %v5954, %v6056
  %v6059 = vunpack.c.l.s4 1983009808
  %v6060 = vunpack.c.0.s8 %v6059
  %v6061 = vlaneseq
  %v6062 = vshrl.u32 %v6061, 7
  %v6063 = vsub.s32 %v6060, %v6062
  %v6064 = vrot.slane %v6050, %v6063
  %v6065 = vcombine.high %v6057, %v6057
  %v6066 = vcombine.high %v6064, %v6064
  %v6067 = vcombine.high %v5955, %v5955
  %v6069 = vunpack.c.l.s4 1983009808
  %v6070 = vunpack.c.0.s8 %v6069
  %v6071 = vlaneseq
  %v6072 = vshrl.u32 %v6071, 7
  %v6073 = vsub.s32 %v6070, %v6072
  %v6074 = vrot.slane %v5955, %v6073
  %v6076 = vunpack.c.l.s4 1983009808
  %v6077 = vunpack.c.0.s8 %v6076
  %v6078 = vlaneseq
  %v6079 = vshrl.u32 %v6078, 7
  %v6080 = vsub.s32 %v6077, %v6079
  %v6081 = vrot.slane %v6067, %v6080
  %v6082 = vcombine.high %v6074, %v6074
  %v6083 = vcombine.high %v6081, %v6081
  %v6084 = vcombine.high %v5956, %v5956
  %v6086 = vunpack.c.l.s4 1983009808
  %v6087 = vunpack.c.0.s8 %v6086
  %v6088 = vlaneseq
  %v6089 = vshrl.u32 %v6088, 7
  %v6090 = vsub.s32 %v6087, %v6089
  %v6091 = vrot.slane %v5956, %v6090
  %v6093 = vunpack.c.l.s4 1983009808
  %v6094 = vunpack.c.0.s8 %v6093
  %v6095 = vlaneseq
  %v6096 = vshrl.u32 %v6095, 7
  %v6097 = vsub.s32 %v6094, %v6096
  %v6098 = vrot.slane %v6084, %v6097
  %v6099 = vcombine.high %v6091, %v6091
  %v6100 = vcombine.high %v6098, %v6098
  %v6101 = vcombine.high %v5957, %v5957
  %v6103 = vunpack.c.l.s4 1983009808
  %v6104 = vunpack.c.0.s8 %v6103
  %v6105 = vlaneseq
  %v6106 = vshrl.u32 %v6105, 7
  %v6107 = vsub.s32 %v6104, %v6106
  %v6108 = vrot.slane %v5957, %v6107
  %v6110 = vunpack.c.l.s4 1983009808
  %v6111 = vunpack.c.0.s8 %v6110
  %v6112 = vlaneseq
  %v6113 = vshrl.u32 %v6112, 7
  %v6114 = vsub.s32 %v6111, %v6113
  %v6115 = vrot.slane %v6101, %v6114
  %v6116 = vcombine.high %v6108, %v6108
  %v6117 = vcombine.high %v6115, %v6115
  %v6118 = vcombine.high %v5958, %v5958
  %v6120 = vunpack.c.l.s4 1983009808
  %v6121 = vunpack.c.0.s8 %v6120
  %v6122 = vlaneseq
  %v6123 = vshrl.u32 %v6122, 7
  %v6124 = vsub.s32 %v6121, %v6123
  %v6125 = vrot.slane %v5958, %v6124
  %v6127 = vunpack.c.l.s4 1983009808
  %v6128 = vunpack.c.0.s8 %v6127
  %v6129 = vlaneseq
  %v6130 = vshrl.u32 %v6129, 7
  %v6131 = vsub.s32 %v6128, %v6130
  %v6132 = vrot.slane %v6118, %v6131
  %v6133 = vcombine.high %v6125, %v6125
  %v6134 = vcombine.high %v6132, %v6132
  %v6135 = vcombine.high %v5959, %v5959
  %v6137 = vunpack.c.l.s4 1983009808
  %v6138 = vunpack.c.0.s8 %v6137
  %v6139 = vlaneseq
  %v6140 = vshrl.u32 %v6139, 7
  %v6141 = vsub.s32 %v6138, %v6140
  %v6142 = vrot.slane %v5959, %v6141
  %v6144 = vunpack.c.l.s4 1983009808
  %v6145 = vunpack.c.0.s8 %v6144
  %v6146 = vlaneseq
  %v6147 = vshrl.u32 %v6146, 7
  %v6148 = vsub.s32 %v6145, %v6147
  %v6149 = vrot.slane %v6135, %v6148
  %v6150 = vcombine.high %v6142, %v6142
  %v6151 = vcombine.high %v6149, %v6149
  %v6152 = vcombine.high %v5960, %v5960
  %v6154 = vunpack.c.l.s4 1983009808
  %v6155 = vunpack.c.0.s8 %v6154
  %v6156 = vlaneseq
  %v6157 = vshrl.u32 %v6156, 7
  %v6158 = vsub.s32 %v6155, %v6157
  %v6159 = vrot.slane %v5960, %v6158
  %v6161 = vunpack.c.l.s4 1983009808
  %v6162 = vunpack.c.0.s8 %v6161
  %v6163 = vlaneseq
  %v6164 = vshrl.u32 %v6163, 7
  %v6165 = vsub.s32 %v6162, %v6164
  %v6166 = vrot.slane %v6152, %v6165
  %v6167 = vcombine.high %v6159, %v6159
  %v6168 = vcombine.high %v6166, %v6166
  %v6169 = vcombine.high %v5961, %v5961
  %v6171 = vunpack.c.l.s4 1983009808
  %v6172 = vunpack.c.0.s8 %v6171
  %v6173 = vlaneseq
  %v6174 = vshrl.u32 %v6173, 7
  %v6175 = vsub.s32 %v6172, %v6174
  %v6176 = vrot.slane %v5961, %v6175
  %v6178 = vunpack.c.l.s4 1983009808
  %v6179 = vunpack.c.0.s8 %v6178
  %v6180 = vlaneseq
  %v6181 = vshrl.u32 %v6180, 7
  %v6182 = vsub.s32 %v6179, %v6181
  %v6183 = vrot.slane %v6169, %v6182
  %v6184 = vcombine.high %v6176, %v6176
  %v6185 = vcombine.high %v6183, %v6183
  %v6186 = vcombine.high %v5962, %v5962
  %v6188 = vunpack.c.l.s4 1983009808
  %v6189 = vunpack.c.0.s8 %v6188
  %v6190 = vlaneseq
  %v6191 = vshrl.u32 %v6190, 7
  %v6192 = vsub.s32 %v6189, %v6191
  %v6193 = vrot.slane %v5962, %v6192
  %v6195 = vunpack.c.l.s4 1983009808
  %v6196 = vunpack.c.0.s8 %v6195
  %v6197 = vlaneseq
  %v6198 = vshrl.u32 %v6197, 7
  %v6199 = vsub.s32 %v6196, %v6198
  %v6200 = vrot.slane %v6186, %v6199
  %v6201 = vcombine.high %v6193, %v6193
  %v6202 = vcombine.high %v6200, %v6200
  %v6203 = vcombine.high %v5963, %v5963
  %v6205 = vunpack.c.l.s4 1983009808
  %v6206 = vunpack.c.0.s8 %v6205
  %v6207 = vlaneseq
  %v6208 = vshrl.u32 %v6207, 7
  %v6209 = vsub.s32 %v6206, %v6208
  %v6210 = vrot.slane %v5963, %v6209
  %v6212 = vunpack.c.l.s4 1983009808
  %v6213 = vunpack.c.0.s8 %v6212
  %v6214 = vlaneseq
  %v6215 = vshrl.u32 %v6214, 7
  %v6216 = vsub.s32 %v6213, %v6215
  %v6217 = vrot.slane %v6203, %v6216
  %v6218 = vcombine.high %v6210, %v6210
  %v6219 = vcombine.high %v6217, %v6217
  %v6220 = vcombine.high %v5964, %v5964
  %v6222 = vunpack.c.l.s4 1983009808
  %v6223 = vunpack.c.0.s8 %v6222
  %v6224 = vlaneseq
  %v6225 = vshrl.u32 %v6224, 7
  %v6226 = vsub.s32 %v6223, %v6225
  %v6227 = vrot.slane %v5964, %v6226
  %v6229 = vunpack.c.l.s4 1983009808
  %v6230 = vunpack.c.0.s8 %v6229
  %v6231 = vlaneseq
  %v6232 = vshrl.u32 %v6231, 7
  %v6233 = vsub.s32 %v6230, %v6232
  %v6234 = vrot.slane %v6220, %v6233
  %v6235 = vcombine.high %v6227, %v6227
  %v6236 = vcombine.high %v6234, %v6234
  %v6237 = vcombine.high %v5965, %v5965
  %v6239 = vunpack.c.l.s4 1983009808
  %v6240 = vunpack.c.0.s8 %v6239
  %v6241 = vlaneseq
  %v6242 = vshrl.u32 %v6241, 7
  %v6243 = vsub.s32 %v6240, %v6242
  %v6244 = vrot.slane %v5965, %v6243
  %v6246 = vunpack.c.l.s4 1983009808
  %v6247 = vunpack.c.0.s8 %v6246
  %v6248 = vlaneseq
  %v6249 = vshrl.u32 %v6248, 7
  %v6250 = vsub.s32 %v6247, %v6249
  %v6251 = vrot.slane %v6237, %v6250
  %v6252 = vcombine.high %v6244, %v6244
  %v6253 = vcombine.high %v6251, %v6251
  %v6254 = vlaneseq
  %v6255 = vshrl.u32 %v6254, 7
  %v6256 = vsub.s32 0, %v6255
  %v6257 = vrot.slane %v5989, %v6256
  %v6258 = vlaneseq
  %v6259 = vshrl.u32 %v6258, 7
  %v6260 = vsub.s32 0, %v6259
  %v6261 = vrot.slane %v5997, %v6260
  %v6262 = vlaneseq
  %v6263 = vshrl.u32 %v6262, 7
  %v6264 = vsub.s32 0, %v6263
  %v6265 = vrot.slane %v5996, %v6264
  %v6266 = vlaneseq
  %v6267 = vshrl.u32 %v6266, 7
  %v6268 = vsub.s32 0, %v6267
  %v6269 = vrot.slane %v5998, %v6268
  %v6270 = vlaneseq
  %v6271 = vshrl.u32 %v6270, 7
  %v6272 = vsub.s32 0, %v6271
  %v6273 = vrot.slane %v6023, %v6272
  %v6274 = vlaneseq
  %v6275 = vshrl.u32 %v6274, 7
  %v6276 = vsub.s32 0, %v6275
  %v6277 = vrot.slane %v6031, %v6276
  %v6278 = vlaneseq
  %v6279 = vshrl.u32 %v6278, 7
  %v6280 = vsub.s32 0, %v6279
  %v6281 = vrot.slane %v6030, %v6280
  %v6282 = vlaneseq
  %v6283 = vshrl.u32 %v6282, 7
  %v6284 = vsub.s32 0, %v6283
  %v6285 = vrot.slane %v6032, %v6284
  %v6286 = vlaneseq
  %v6287 = vshrl.u32 %v6286, 7
  %v6288 = vsub.s32 0, %v6287
  %v6289 = vrot.slane %v6057, %v6288
  %v6290 = vlaneseq
  %v6291 = vshrl.u32 %v6290, 7
  %v6292 = vsub.s32 0, %v6291
  %v6293 = vrot.slane %v6065, %v6292
  %v6294 = vlaneseq
  %v6295 = vshrl.u32 %v6294, 7
  %v6296 = vsub.s32 0, %v6295
  %v6297 = vrot.slane %v6064, %v6296
  %v6298 = vlaneseq
  %v6299 = vshrl.u32 %v6298, 7
  %v6300 = vsub.s32 0, %v6299
  %v6301 = vrot.slane %v6066, %v6300
  %v6302 = vlaneseq
  %v6303 = vshrl.u32 %v6302, 7
  %v6304 = vsub.s32 0, %v6303
  %v6305 = vrot.slane %v6091, %v6304
  %v6306 = vlaneseq
  %v6307 = vshrl.u32 %v6306, 7
  %v6308 = vsub.s32 0, %v6307
  %v6309 = vrot.slane %v6099, %v6308
  %v6310 = vlaneseq
  %v6311 = vshrl.u32 %v6310, 7
  %v6312 = vsub.s32 0, %v6311
  %v6313 = vrot.slane %v6098, %v6312
  %v6314 = vlaneseq
  %v6315 = vshrl.u32 %v6314, 7
  %v6316 = vsub.s32 0, %v6315
  %v6317 = vrot.slane %v6100, %v6316
  %v6318 = vlaneseq
  %v6319 = vshrl.u32 %v6318, 7
  %v6320 = vsub.s32 0, %v6319
  %v6321 = vrot.slane %v6125, %v6320
  %v6322 = vlaneseq
  %v6323 = vshrl.u32 %v6322, 7
  %v6324 = vsub.s32 0, %v6323
  %v6325 = vrot.slane %v6133, %v6324
  %v6326 = vlaneseq
  %v6327 = vshrl.u32 %v6326, 7
  %v6328 = vsub.s32 0, %v6327
  %v6329 = vrot.slane %v6132, %v6328
  %v6330 = vlaneseq
  %v6331 = vshrl.u32 %v6330, 7
  %v6332 = vsub.s32 0, %v6331
  %v6333 = vrot.slane %v6134, %v6332
  %v6334 = vlaneseq
  %v6335 = vshrl.u32 %v6334, 7
  %v6336 = vsub.s32 0, %v6335
  %v6337 = vrot.slane %v6159, %v6336
  %v6338 = vlaneseq
  %v6339 = vshrl.u32 %v6338, 7
  %v6340 = vsub.s32 0, %v6339
  %v6341 = vrot.slane %v6167, %v6340
  %v6342 = vlaneseq
  %v6343 = vshrl.u32 %v6342, 7
  %v6344 = vsub.s32 0, %v6343
  %v6345 = vrot.slane %v6166, %v6344
  %v6346 = vlaneseq
  %v6347 = vshrl.u32 %v6346, 7
  %v6348 = vsub.s32 0, %v6347
  %v6349 = vrot.slane %v6168, %v6348
  %v6350 = vlaneseq
  %v6351 = vshrl.u32 %v6350, 7
  %v6352 = vsub.s32 0, %v6351
  %v6353 = vrot.slane %v6193, %v6352
  %v6354 = vlaneseq
  %v6355 = vshrl.u32 %v6354, 7
  %v6356 = vsub.s32 0, %v6355
  %v6357 = vrot.slane %v6201, %v6356
  %v6358 = vlaneseq
  %v6359 = vshrl.u32 %v6358, 7
  %v6360 = vsub.s32 0, %v6359
  %v6361 = vrot.slane %v6200, %v6360
  %v6362 = vlaneseq
  %v6363 = vshrl.u32 %v6362, 7
  %v6364 = vsub.s32 0, %v6363
  %v6365 = vrot.slane %v6202, %v6364
  %v6366 = vlaneseq
  %v6367 = vshrl.u32 %v6366, 7
  %v6368 = vsub.s32 0, %v6367
  %v6369 = vrot.slane %v6227, %v6368
  %v6370 = vlaneseq
  %v6371 = vshrl.u32 %v6370, 7
  %v6372 = vsub.s32 0, %v6371
  %v6373 = vrot.slane %v6235, %v6372
  %v6374 = vlaneseq
  %v6375 = vshrl.u32 %v6374, 7
  %v6376 = vsub.s32 0, %v6375
  %v6377 = vrot.slane %v6234, %v6376
  %v6378 = vlaneseq
  %v6379 = vshrl.u32 %v6378, 7
  %v6380 = vsub.s32 0, %v6379
  %v6381 = vrot.slane %v6236, %v6380
  %v6382 = vsel %vm1891, %v6261, %v6257
  %v6383 = vsel %vm1893, %v6265, %v6382
  %v6384 = vsel %vm1895, %v6269, %v6383
  %v6385 = vsel %vm1891, %v6277, %v6273
  %v6386 = vsel %vm1893, %v6281, %v6385
  %v6387 = vsel %vm1895, %v6285, %v6386
  %v6388 = vsel %vm1891, %v6293, %v6289
  %v6389 = vsel %vm1893, %v6297, %v6388
  %v6390 = vsel %vm1895, %v6301, %v6389
  %v6391 = vsel %vm1891, %v6309, %v6305
  %v6392 = vsel %vm1893, %v6313, %v6391
  %v6393 = vsel %vm1895, %v6317, %v6392
  %v6394 = vsel %vm1891, %v6325, %v6321
  %v6395 = vsel %vm1893, %v6329, %v6394
  %v6396 = vsel %vm1895, %v6333, %v6395
  %v6397 = vsel %vm1891, %v6341, %v6337
  %v6398 = vsel %vm1893, %v6345, %v6397
  %v6399 = vsel %vm1895, %v6349, %v6398
  %v6400 = vsel %vm1891, %v6357, %v6353
  %v6401 = vsel %vm1893, %v6361, %v6400
  %v6402 = vsel %vm1895, %v6365, %v6401
  %v6403 = vsel %vm1891, %v6373, %v6369
  %v6404 = vsel %vm1893, %v6377, %v6403
  %v6405 = vsel %vm1895, %v6381, %v6404
  %6406 = vrot.lane.b32.xlu0 %v6384, 8
  %v6407 = vpop.permute.xlu0 %6406
  %6408 = vrot.lane.b32.xlu0 %v6387, 8
  %v6409 = vpop.permute.xlu0 %6408
  %6410 = vrot.lane.b32.xlu0 %v6390, 8
  %v6411 = vpop.permute.xlu0 %6410
  %6412 = vrot.lane.b32.xlu0 %v6393, 8
  %v6413 = vpop.permute.xlu0 %6412
  %6414 = vrot.lane.b32.xlu0 %v6396, 8
  %v6415 = vpop.permute.xlu0 %6414
  %6416 = vrot.lane.b32.xlu0 %v6399, 8
  %v6417 = vpop.permute.xlu0 %6416
  %6418 = vrot.lane.b32.xlu0 %v6402, 8
  %v6419 = vpop.permute.xlu0 %6418
  %6420 = vrot.lane.b32.xlu0 %v6405, 8
  %v6421 = vpop.permute.xlu0 %6420
  %s6430 = scalar_lea.vmem [#allocation3], 80
  %vm6431 = vcmask 126016
  %6432 = vst.msk [vmem:[%s6430] sm:$0xf] %vm6431, %v6407
  %6433 = vst.msk [vmem:[%s6430 + $0x8] sm:$0xf] %vm6431, %v6409
  %6434 = vst.msk [vmem:[%s6430 + $0x10] sm:$0xf] %vm6431, %v6411
  %6435 = vst.msk [vmem:[%s6430 + $0x18] sm:$0xf] %vm6431, %v6413
  %6436 = vst.msk [vmem:[%s6430 + $0x28] sm:$0xf] %vm6431, %v6415
  %6437 = vst.msk [vmem:[%s6430 + $0x30] sm:$0xf] %vm6431, %v6417
  %6438 = vst.msk [vmem:[%s6430 + $0x38] sm:$0xf] %vm6431, %v6419
  %6439 = vst.msk [vmem:[%s6430 + $0x40] sm:$0xf] %vm6431, %v6421
  %v6440 = vlaneseq
  %v6441 = vshrl.u32 %v6440, 7
  %v6442 = vsub.s32 1, %v6441
  %v6443 = vrot.slane %v5989, %v6442
  %v6444 = vlaneseq
  %v6445 = vshrl.u32 %v6444, 7
  %v6446 = vsub.s32 1, %v6445
  %v6447 = vrot.slane %v5997, %v6446
  %v6448 = vlaneseq
  %v6449 = vshrl.u32 %v6448, 7
  %v6450 = vsub.s32 1, %v6449
  %v6451 = vrot.slane %v5996, %v6450
  %v6452 = vlaneseq
  %v6453 = vshrl.u32 %v6452, 7
  %v6454 = vsub.s32 1, %v6453
  %v6455 = vrot.slane %v5998, %v6454
  %v6456 = vlaneseq
  %v6457 = vshrl.u32 %v6456, 7
  %v6458 = vsub.s32 1, %v6457
  %v6459 = vrot.slane %v6023, %v6458
  %v6460 = vlaneseq
  %v6461 = vshrl.u32 %v6460, 7
  %v6462 = vsub.s32 1, %v6461
  %v6463 = vrot.slane %v6031, %v6462
  %v6464 = vlaneseq
  %v6465 = vshrl.u32 %v6464, 7
  %v6466 = vsub.s32 1, %v6465
  %v6467 = vrot.slane %v6030, %v6466
  %v6468 = vlaneseq
  %v6469 = vshrl.u32 %v6468, 7
  %v6470 = vsub.s32 1, %v6469
  %v6471 = vrot.slane %v6032, %v6470
  %v6472 = vlaneseq
  %v6473 = vshrl.u32 %v6472, 7
  %v6474 = vsub.s32 1, %v6473
  %v6475 = vrot.slane %v6057, %v6474
  %v6476 = vlaneseq
  %v6477 = vshrl.u32 %v6476, 7
  %v6478 = vsub.s32 1, %v6477
  %v6479 = vrot.slane %v6065, %v6478
  %v6480 = vlaneseq
  %v6481 = vshrl.u32 %v6480, 7
  %v6482 = vsub.s32 1, %v6481
  %v6483 = vrot.slane %v6064, %v6482
  %v6484 = vlaneseq
  %v6485 = vshrl.u32 %v6484, 7
  %v6486 = vsub.s32 1, %v6485
  %v6487 = vrot.slane %v6066, %v6486
  %v6488 = vlaneseq
  %v6489 = vshrl.u32 %v6488, 7
  %v6490 = vsub.s32 1, %v6489
  %v6491 = vrot.slane %v6091, %v6490
  %v6492 = vlaneseq
  %v6493 = vshrl.u32 %v6492, 7
  %v6494 = vsub.s32 1, %v6493
  %v6495 = vrot.slane %v6099, %v6494
  %v6496 = vlaneseq
  %v6497 = vshrl.u32 %v6496, 7
  %v6498 = vsub.s32 1, %v6497
  %v6499 = vrot.slane %v6098, %v6498
  %v6500 = vlaneseq
  %v6501 = vshrl.u32 %v6500, 7
  %v6502 = vsub.s32 1, %v6501
  %v6503 = vrot.slane %v6100, %v6502
  %v6504 = vlaneseq
  %v6505 = vshrl.u32 %v6504, 7
  %v6506 = vsub.s32 1, %v6505
  %v6507 = vrot.slane %v6125, %v6506
  %v6508 = vlaneseq
  %v6509 = vshrl.u32 %v6508, 7
  %v6510 = vsub.s32 1, %v6509
  %v6511 = vrot.slane %v6133, %v6510
  %v6512 = vlaneseq
  %v6513 = vshrl.u32 %v6512, 7
  %v6514 = vsub.s32 1, %v6513
  %v6515 = vrot.slane %v6132, %v6514
  %v6516 = vlaneseq
  %v6517 = vshrl.u32 %v6516, 7
  %v6518 = vsub.s32 1, %v6517
  %v6519 = vrot.slane %v6134, %v6518
  %v6520 = vlaneseq
  %v6521 = vshrl.u32 %v6520, 7
  %v6522 = vsub.s32 1, %v6521
  %v6523 = vrot.slane %v6159, %v6522
  %v6524 = vlaneseq
  %v6525 = vshrl.u32 %v6524, 7
  %v6526 = vsub.s32 1, %v6525
  %v6527 = vrot.slane %v6167, %v6526
  %v6528 = vlaneseq
  %v6529 = vshrl.u32 %v6528, 7
  %v6530 = vsub.s32 1, %v6529
  %v6531 = vrot.slane %v6166, %v6530
  %v6532 = vlaneseq
  %v6533 = vshrl.u32 %v6532, 7
  %v6534 = vsub.s32 1, %v6533
  %v6535 = vrot.slane %v6168, %v6534
  %v6536 = vlaneseq
  %v6537 = vshrl.u32 %v6536, 7
  %v6538 = vsub.s32 1, %v6537
  %v6539 = vrot.slane %v6193, %v6538
  %v6540 = vlaneseq
  %v6541 = vshrl.u32 %v6540, 7
  %v6542 = vsub.s32 1, %v6541
  %v6543 = vrot.slane %v6201, %v6542
  %v6544 = vlaneseq
  %v6545 = vshrl.u32 %v6544, 7
  %v6546 = vsub.s32 1, %v6545
  %v6547 = vrot.slane %v6200, %v6546
  %v6548 = vlaneseq
  %v6549 = vshrl.u32 %v6548, 7
  %v6550 = vsub.s32 1, %v6549
  %v6551 = vrot.slane %v6202, %v6550
  %v6552 = vlaneseq
  %v6553 = vshrl.u32 %v6552, 7
  %v6554 = vsub.s32 1, %v6553
  %v6555 = vrot.slane %v6227, %v6554
  %v6556 = vlaneseq
  %v6557 = vshrl.u32 %v6556, 7
  %v6558 = vsub.s32 1, %v6557
  %v6559 = vrot.slane %v6235, %v6558
  %v6560 = vlaneseq
  %v6561 = vshrl.u32 %v6560, 7
  %v6562 = vsub.s32 1, %v6561
  %v6563 = vrot.slane %v6234, %v6562
  %v6564 = vlaneseq
  %v6565 = vshrl.u32 %v6564, 7
  %v6566 = vsub.s32 1, %v6565
  %v6567 = vrot.slane %v6236, %v6566
  %v6568 = vsel %vm1893, %v6447, %v6443
  %v6569 = vsel %vm1895, %v6451, %v6568
  %v6570 = vsel %vm1897, %v6455, %v6569
  %v6571 = vsel %vm1893, %v6463, %v6459
  %v6572 = vsel %vm1895, %v6467, %v6571
  %v6573 = vsel %vm1897, %v6471, %v6572
  %v6574 = vsel %vm1893, %v6479, %v6475
  %v6575 = vsel %vm1895, %v6483, %v6574
  %v6576 = vsel %vm1897, %v6487, %v6575
  %v6577 = vsel %vm1893, %v6495, %v6491
  %v6578 = vsel %vm1895, %v6499, %v6577
  %v6579 = vsel %vm1897, %v6503, %v6578
  %v6580 = vsel %vm1893, %v6511, %v6507
  %v6581 = vsel %vm1895, %v6515, %v6580
  %v6582 = vsel %vm1897, %v6519, %v6581
  %v6583 = vsel %vm1893, %v6527, %v6523
  %v6584 = vsel %vm1895, %v6531, %v6583
  %v6585 = vsel %vm1897, %v6535, %v6584
  %v6586 = vsel %vm1893, %v6543, %v6539
  %v6587 = vsel %vm1895, %v6547, %v6586
  %v6588 = vsel %vm1897, %v6551, %v6587
  %v6589 = vsel %vm1893, %v6559, %v6555
  %v6590 = vsel %vm1895, %v6563, %v6589
  %v6591 = vsel %vm1897, %v6567, %v6590
  %vm6600 = vcmask 61441
  %6601 = vst.msk [vmem:[%s6430] sm:$0x1e] %vm6600, %v6570
  %6602 = vst.msk [vmem:[%s6430 + $0x8] sm:$0x1e] %vm6600, %v6573
  %6603 = vst.msk [vmem:[%s6430 + $0x10] sm:$0x1e] %vm6600, %v6576
  %6604 = vst.msk [vmem:[%s6430 + $0x18] sm:$0x1e] %vm6600, %v6579
  %6605 = vst.msk [vmem:[%s6430 + $0x28] sm:$0x1e] %vm6600, %v6582
  %6606 = vst.msk [vmem:[%s6430 + $0x30] sm:$0x1e] %vm6600, %v6585
  %6607 = vst.msk [vmem:[%s6430 + $0x38] sm:$0x1e] %vm6600, %v6588
  %6608 = vst.msk [vmem:[%s6430 + $0x40] sm:$0x1e] %vm6600, %v6591
  %v6609 = vlaneseq
  %v6610 = vshrl.u32 %v6609, 7
  %v6611 = vsub.s32 0, %v6610
  %v6612 = vrot.slane %v6006, %v6611
  %v6613 = vlaneseq
  %v6614 = vshrl.u32 %v6613, 7
  %v6615 = vsub.s32 0, %v6614
  %v6616 = vrot.slane %v6014, %v6615
  %v6617 = vlaneseq
  %v6618 = vshrl.u32 %v6617, 7
  %v6619 = vsub.s32 0, %v6618
  %v6620 = vrot.slane %v6013, %v6619
  %v6621 = vlaneseq
  %v6622 = vshrl.u32 %v6621, 7
  %v6623 = vsub.s32 0, %v6622
  %v6624 = vrot.slane %v6015, %v6623
  %v6625 = vlaneseq
  %v6626 = vshrl.u32 %v6625, 7
  %v6627 = vsub.s32 0, %v6626
  %v6628 = vrot.slane %v6040, %v6627
  %v6629 = vlaneseq
  %v6630 = vshrl.u32 %v6629, 7
  %v6631 = vsub.s32 0, %v6630
  %v6632 = vrot.slane %v6048, %v6631
  %v6633 = vlaneseq
  %v6634 = vshrl.u32 %v6633, 7
  %v6635 = vsub.s32 0, %v6634
  %v6636 = vrot.slane %v6047, %v6635
  %v6637 = vlaneseq
  %v6638 = vshrl.u32 %v6637, 7
  %v6639 = vsub.s32 0, %v6638
  %v6640 = vrot.slane %v6049, %v6639
  %v6641 = vlaneseq
  %v6642 = vshrl.u32 %v6641, 7
  %v6643 = vsub.s32 0, %v6642
  %v6644 = vrot.slane %v6074, %v6643
  %v6645 = vlaneseq
  %v6646 = vshrl.u32 %v6645, 7
  %v6647 = vsub.s32 0, %v6646
  %v6648 = vrot.slane %v6082, %v6647
  %v6649 = vlaneseq
  %v6650 = vshrl.u32 %v6649, 7
  %v6651 = vsub.s32 0, %v6650
  %v6652 = vrot.slane %v6081, %v6651
  %v6653 = vlaneseq
  %v6654 = vshrl.u32 %v6653, 7
  %v6655 = vsub.s32 0, %v6654
  %v6656 = vrot.slane %v6083, %v6655
  %v6657 = vlaneseq
  %v6658 = vshrl.u32 %v6657, 7
  %v6659 = vsub.s32 0, %v6658
  %v6660 = vrot.slane %v6108, %v6659
  %v6661 = vlaneseq
  %v6662 = vshrl.u32 %v6661, 7
  %v6663 = vsub.s32 0, %v6662
  %v6664 = vrot.slane %v6116, %v6663
  %v6665 = vlaneseq
  %v6666 = vshrl.u32 %v6665, 7
  %v6667 = vsub.s32 0, %v6666
  %v6668 = vrot.slane %v6115, %v6667
  %v6669 = vlaneseq
  %v6670 = vshrl.u32 %v6669, 7
  %v6671 = vsub.s32 0, %v6670
  %v6672 = vrot.slane %v6117, %v6671
  %v6673 = vlaneseq
  %v6674 = vshrl.u32 %v6673, 7
  %v6675 = vsub.s32 0, %v6674
  %v6676 = vrot.slane %v6142, %v6675
  %v6677 = vlaneseq
  %v6678 = vshrl.u32 %v6677, 7
  %v6679 = vsub.s32 0, %v6678
  %v6680 = vrot.slane %v6150, %v6679
  %v6681 = vlaneseq
  %v6682 = vshrl.u32 %v6681, 7
  %v6683 = vsub.s32 0, %v6682
  %v6684 = vrot.slane %v6149, %v6683
  %v6685 = vlaneseq
  %v6686 = vshrl.u32 %v6685, 7
  %v6687 = vsub.s32 0, %v6686
  %v6688 = vrot.slane %v6151, %v6687
  %v6689 = vlaneseq
  %v6690 = vshrl.u32 %v6689, 7
  %v6691 = vsub.s32 0, %v6690
  %v6692 = vrot.slane %v6176, %v6691
  %v6693 = vlaneseq
  %v6694 = vshrl.u32 %v6693, 7
  %v6695 = vsub.s32 0, %v6694
  %v6696 = vrot.slane %v6184, %v6695
  %v6697 = vlaneseq
  %v6698 = vshrl.u32 %v6697, 7
  %v6699 = vsub.s32 0, %v6698
  %v6700 = vrot.slane %v6183, %v6699
  %v6701 = vlaneseq
  %v6702 = vshrl.u32 %v6701, 7
  %v6703 = vsub.s32 0, %v6702
  %v6704 = vrot.slane %v6185, %v6703
  %v6705 = vlaneseq
  %v6706 = vshrl.u32 %v6705, 7
  %v6707 = vsub.s32 0, %v6706
  %v6708 = vrot.slane %v6210, %v6707
  %v6709 = vlaneseq
  %v6710 = vshrl.u32 %v6709, 7
  %v6711 = vsub.s32 0, %v6710
  %v6712 = vrot.slane %v6218, %v6711
  %v6713 = vlaneseq
  %v6714 = vshrl.u32 %v6713, 7
  %v6715 = vsub.s32 0, %v6714
  %v6716 = vrot.slane %v6217, %v6715
  %v6717 = vlaneseq
  %v6718 = vshrl.u32 %v6717, 7
  %v6719 = vsub.s32 0, %v6718
  %v6720 = vrot.slane %v6219, %v6719
  %v6721 = vlaneseq
  %v6722 = vshrl.u32 %v6721, 7
  %v6723 = vsub.s32 0, %v6722
  %v6724 = vrot.slane %v6244, %v6723
  %v6725 = vlaneseq
  %v6726 = vshrl.u32 %v6725, 7
  %v6727 = vsub.s32 0, %v6726
  %v6728 = vrot.slane %v6252, %v6727
  %v6729 = vlaneseq
  %v6730 = vshrl.u32 %v6729, 7
  %v6731 = vsub.s32 0, %v6730
  %v6732 = vrot.slane %v6251, %v6731
  %v6733 = vlaneseq
  %v6734 = vshrl.u32 %v6733, 7
  %v6735 = vsub.s32 0, %v6734
  %v6736 = vrot.slane %v6253, %v6735
  %v6737 = vsel %vm1891, %v6616, %v6612
  %v6738 = vsel %vm1893, %v6620, %v6737
  %v6739 = vsel %vm1895, %v6624, %v6738
  %v6740 = vsel %vm1891, %v6632, %v6628
  %v6741 = vsel %vm1893, %v6636, %v6740
  %v6742 = vsel %vm1895, %v6640, %v6741
  %v6743 = vsel %vm1891, %v6648, %v6644
  %v6744 = vsel %vm1893, %v6652, %v6743
  %v6745 = vsel %vm1895, %v6656, %v6744
  %v6746 = vsel %vm1891, %v6664, %v6660
  %v6747 = vsel %vm1893, %v6668, %v6746
  %v6748 = vsel %vm1895, %v6672, %v6747
  %v6749 = vsel %vm1891, %v6680, %v6676
  %v6750 = vsel %vm1893, %v6684, %v6749
  %v6751 = vsel %vm1895, %v6688, %v6750
  %v6752 = vsel %vm1891, %v6696, %v6692
  %v6753 = vsel %vm1893, %v6700, %v6752
  %v6754 = vsel %vm1895, %v6704, %v6753
  %v6755 = vsel %vm1891, %v6712, %v6708
  %v6756 = vsel %vm1893, %v6716, %v6755
  %v6757 = vsel %vm1895, %v6720, %v6756
  %v6758 = vsel %vm1891, %v6728, %v6724
  %v6759 = vsel %vm1893, %v6732, %v6758
  %v6760 = vsel %vm1895, %v6736, %v6759
  %6761 = vrot.lane.b32.xlu0 %v6739, 8
  %v6762 = vpop.permute.xlu0 %6761
  %6763 = vrot.lane.b32.xlu0 %v6742, 8
  %v6764 = vpop.permute.xlu0 %6763
  %6765 = vrot.lane.b32.xlu0 %v6745, 8
  %v6766 = vpop.permute.xlu0 %6765
  %6767 = vrot.lane.b32.xlu0 %v6748, 8
  %v6768 = vpop.permute.xlu0 %6767
  %6769 = vrot.lane.b32.xlu0 %v6751, 8
  %v6770 = vpop.permute.xlu0 %6769
  %6771 = vrot.lane.b32.xlu0 %v6754, 8
  %v6772 = vpop.permute.xlu0 %6771
  %6773 = vrot.lane.b32.xlu0 %v6757, 8
  %v6774 = vpop.permute.xlu0 %6773
  %6775 = vrot.lane.b32.xlu0 %v6760, 8
  %v6776 = vpop.permute.xlu0 %6775
  %s6785 = scalar_lea.vmem [#allocation3], 8
  %6786 = vst.msk [vmem:[%s6785] sm:$0xf] %vm6431, %v6762
  %6787 = vst.msk [vmem:[%s6785 + $0x8] sm:$0xf] %vm6431, %v6764
  %6788 = vst.msk [vmem:[%s6785 + $0x10] sm:$0xf] %vm6431, %v6766
  %6789 = vst.msk [vmem:[%s6785 + $0x18] sm:$0xf] %vm6431, %v6768
  %6790 = vst.msk [vmem:[%s6785 + $0x28] sm:$0xf] %vm6431, %v6770
  %6791 = vst.msk [vmem:[%s6785 + $0x30] sm:$0xf] %vm6431, %v6772
  %6792 = vst.msk [vmem:[%s6785 + $0x38] sm:$0xf] %vm6431, %v6774
  %6793 = vst.msk [vmem:[%s6785 + $0x40] sm:$0xf] %vm6431, %v6776
  %v6794 = vlaneseq
  %v6795 = vshrl.u32 %v6794, 7
  %v6796 = vsub.s32 1, %v6795
  %v6797 = vrot.slane %v6006, %v6796
  %v6798 = vlaneseq
  %v6799 = vshrl.u32 %v6798, 7
  %v6800 = vsub.s32 1, %v6799
  %v6801 = vrot.slane %v6014, %v6800
  %v6802 = vlaneseq
  %v6803 = vshrl.u32 %v6802, 7
  %v6804 = vsub.s32 1, %v6803
  %v6805 = vrot.slane %v6013, %v6804
  %v6806 = vlaneseq
  %v6807 = vshrl.u32 %v6806, 7
  %v6808 = vsub.s32 1, %v6807
  %v6809 = vrot.slane %v6015, %v6808
  %v6810 = vlaneseq
  %v6811 = vshrl.u32 %v6810, 7
  %v6812 = vsub.s32 1, %v6811
  %v6813 = vrot.slane %v6040, %v6812
  %v6814 = vlaneseq
  %v6815 = vshrl.u32 %v6814, 7
  %v6816 = vsub.s32 1, %v6815
  %v6817 = vrot.slane %v6048, %v6816
  %v6818 = vlaneseq
  %v6819 = vshrl.u32 %v6818, 7
  %v6820 = vsub.s32 1, %v6819
  %v6821 = vrot.slane %v6047, %v6820
  %v6822 = vlaneseq
  %v6823 = vshrl.u32 %v6822, 7
  %v6824 = vsub.s32 1, %v6823
  %v6825 = vrot.slane %v6049, %v6824
  %v6826 = vlaneseq
  %v6827 = vshrl.u32 %v6826, 7
  %v6828 = vsub.s32 1, %v6827
  %v6829 = vrot.slane %v6074, %v6828
  %v6830 = vlaneseq
  %v6831 = vshrl.u32 %v6830, 7
  %v6832 = vsub.s32 1, %v6831
  %v6833 = vrot.slane %v6082, %v6832
  %v6834 = vlaneseq
  %v6835 = vshrl.u32 %v6834, 7
  %v6836 = vsub.s32 1, %v6835
  %v6837 = vrot.slane %v6081, %v6836
  %v6838 = vlaneseq
  %v6839 = vshrl.u32 %v6838, 7
  %v6840 = vsub.s32 1, %v6839
  %v6841 = vrot.slane %v6083, %v6840
  %v6842 = vlaneseq
  %v6843 = vshrl.u32 %v6842, 7
  %v6844 = vsub.s32 1, %v6843
  %v6845 = vrot.slane %v6108, %v6844
  %v6846 = vlaneseq
  %v6847 = vshrl.u32 %v6846, 7
  %v6848 = vsub.s32 1, %v6847
  %v6849 = vrot.slane %v6116, %v6848
  %v6850 = vlaneseq
  %v6851 = vshrl.u32 %v6850, 7
  %v6852 = vsub.s32 1, %v6851
  %v6853 = vrot.slane %v6115, %v6852
  %v6854 = vlaneseq
  %v6855 = vshrl.u32 %v6854, 7
  %v6856 = vsub.s32 1, %v6855
  %v6857 = vrot.slane %v6117, %v6856
  %v6858 = vlaneseq
  %v6859 = vshrl.u32 %v6858, 7
  %v6860 = vsub.s32 1, %v6859
  %v6861 = vrot.slane %v6142, %v6860
  %v6862 = vlaneseq
  %v6863 = vshrl.u32 %v6862, 7
  %v6864 = vsub.s32 1, %v6863
  %v6865 = vrot.slane %v6150, %v6864
  %v6866 = vlaneseq
  %v6867 = vshrl.u32 %v6866, 7
  %v6868 = vsub.s32 1, %v6867
  %v6869 = vrot.slane %v6149, %v6868
  %v6870 = vlaneseq
  %v6871 = vshrl.u32 %v6870, 7
  %v6872 = vsub.s32 1, %v6871
  %v6873 = vrot.slane %v6151, %v6872
  %v6874 = vlaneseq
  %v6875 = vshrl.u32 %v6874, 7
  %v6876 = vsub.s32 1, %v6875
  %v6877 = vrot.slane %v6176, %v6876
  %v6878 = vlaneseq
  %v6879 = vshrl.u32 %v6878, 7
  %v6880 = vsub.s32 1, %v6879
  %v6881 = vrot.slane %v6184, %v6880
  %v6882 = vlaneseq
  %v6883 = vshrl.u32 %v6882, 7
  %v6884 = vsub.s32 1, %v6883
  %v6885 = vrot.slane %v6183, %v6884
  %v6886 = vlaneseq
  %v6887 = vshrl.u32 %v6886, 7
  %v6888 = vsub.s32 1, %v6887
  %v6889 = vrot.slane %v6185, %v6888
  %v6890 = vlaneseq
  %v6891 = vshrl.u32 %v6890, 7
  %v6892 = vsub.s32 1, %v6891
  %v6893 = vrot.slane %v6210, %v6892
  %v6894 = vlaneseq
  %v6895 = vshrl.u32 %v6894, 7
  %v6896 = vsub.s32 1, %v6895
  %v6897 = vrot.slane %v6218, %v6896
  %v6898 = vlaneseq
  %v6899 = vshrl.u32 %v6898, 7
  %v6900 = vsub.s32 1, %v6899
  %v6901 = vrot.slane %v6217, %v6900
  %v6902 = vlaneseq
  %v6903 = vshrl.u32 %v6902, 7
  %v6904 = vsub.s32 1, %v6903
  %v6905 = vrot.slane %v6219, %v6904
  %v6906 = vlaneseq
  %v6907 = vshrl.u32 %v6906, 7
  %v6908 = vsub.s32 1, %v6907
  %v6909 = vrot.slane %v6244, %v6908
  %v6910 = vlaneseq
  %v6911 = vshrl.u32 %v6910, 7
  %v6912 = vsub.s32 1, %v6911
  %v6913 = vrot.slane %v6252, %v6912
  %v6914 = vlaneseq
  %v6915 = vshrl.u32 %v6914, 7
  %v6916 = vsub.s32 1, %v6915
  %v6917 = vrot.slane %v6251, %v6916
  %v6918 = vlaneseq
  %v6919 = vshrl.u32 %v6918, 7
  %v6920 = vsub.s32 1, %v6919
  %v6921 = vrot.slane %v6253, %v6920
  %v6922 = vsel %vm1893, %v6801, %v6797
  %v6923 = vsel %vm1895, %v6805, %v6922
  %v6924 = vsel %vm1897, %v6809, %v6923
  %v6925 = vsel %vm1893, %v6817, %v6813
  %v6926 = vsel %vm1895, %v6821, %v6925
  %v6927 = vsel %vm1897, %v6825, %v6926
  %v6928 = vsel %vm1893, %v6833, %v6829
  %v6929 = vsel %vm1895, %v6837, %v6928
  %v6930 = vsel %vm1897, %v6841, %v6929
  %v6931 = vsel %vm1893, %v6849, %v6845
  %v6932 = vsel %vm1895, %v6853, %v6931
  %v6933 = vsel %vm1897, %v6857, %v6932
  %v6934 = vsel %vm1893, %v6865, %v6861
  %v6935 = vsel %vm1895, %v6869, %v6934
  %v6936 = vsel %vm1897, %v6873, %v6935
  %v6937 = vsel %vm1893, %v6881, %v6877
  %v6938 = vsel %vm1895, %v6885, %v6937
  %v6939 = vsel %vm1897, %v6889, %v6938
  %v6940 = vsel %vm1893, %v6897, %v6893
  %v6941 = vsel %vm1895, %v6901, %v6940
  %v6942 = vsel %vm1897, %v6905, %v6941
  %v6943 = vsel %vm1893, %v6913, %v6909
  %v6944 = vsel %vm1895, %v6917, %v6943
  %v6945 = vsel %vm1897, %v6921, %v6944
  %6954 = vst.msk [vmem:[%s6785] sm:$0x1e] %vm6600, %v6924
  %6955 = vst.msk [vmem:[%s6785 + $0x8] sm:$0x1e] %vm6600, %v6927
  %6956 = vst.msk [vmem:[%s6785 + $0x10] sm:$0x1e] %vm6600, %v6930
  %6957 = vst.msk [vmem:[%s6785 + $0x18] sm:$0x1e] %vm6600, %v6933
  %6958 = vst.msk [vmem:[%s6785 + $0x28] sm:$0x1e] %vm6600, %v6936
  %6959 = vst.msk [vmem:[%s6785 + $0x30] sm:$0x1e] %vm6600, %v6939
  %6960 = vst.msk [vmem:[%s6785 + $0x38] sm:$0x1e] %vm6600, %v6942
  %6961 = vst.msk [vmem:[%s6785 + $0x40] sm:$0x1e] %vm6600, %v6945
  %v6962 = vld [vmem:[#allocation3] sm:$0xf]
  %v6963 = vld [vmem:[#allocation3 + $0x8] sm:$0xf]
  %v6964 = vld [vmem:[#allocation3 + $0x10] sm:$0xf]
  %v6965 = vld [vmem:[#allocation3 + $0x18] sm:$0xf]
  %v6966 = vld [vmem:[#allocation3 + $0x28] sm:$0xf]
  %v6967 = vld [vmem:[#allocation3 + $0x30] sm:$0xf]
  %v6968 = vld [vmem:[#allocation3 + $0x38] sm:$0xf]
  %v6969 = vld [vmem:[#allocation3 + $0x40] sm:$0xf]
  %v6970 = vld [vmem:[%s3] sm:$0xff]
  %v6971 = vld [vmem:[%s3 + $0x8] sm:$0xff]
  %v6972 = vld [vmem:[#allocation3 + $0x1] sm:$0xf]
  %v6973 = vld [vmem:[#allocation3 + $0x9] sm:$0xf]
  %v6974 = vld [vmem:[#allocation3 + $0x11] sm:$0xf]
  %v6975 = vld [vmem:[#allocation3 + $0x19] sm:$0xf]
  %v6976 = vld [vmem:[#allocation3 + $0x29] sm:$0xf]
  %v6977 = vld [vmem:[#allocation3 + $0x31] sm:$0xf]
  %v6978 = vld [vmem:[#allocation3 + $0x39] sm:$0xf]
  %v6979 = vld [vmem:[#allocation3 + $0x41] sm:$0xf]
  %s6980 = scalar_lea.vmem %s3, 16
  %v6981 = vld [vmem:[%s6980] sm:$0xff]
  %v6982 = vld [vmem:[%s6980 + $0x8] sm:$0xff]
  %v6991 = vcombine.low %v6972, %v6973
  %v6992 = vcombine.low %v6974, %v6975
  %v6993 = vcombine.low %v6976, %v6977
  %v6994 = vcombine.low %v6978, %v6979
  %vm6995 = vcmask 130048
  %v6996 = vsel %vm6995, %v6991, 0
  %v6998 = vsel %vm6995, %v6992, 0
  %v7000 = vsel %vm6995, %v6993, 0
  %v7002 = vsel %vm6995, %v6994, 0
  %7004 = vmatprep.subr.mxu0 0.0
  %7005 = vmatpush1.msra.mxu0 0.0
  %7006 = vmatprep.subr.mxu0 0.0
  %7007 = vmatpush1.msra.mxu0 0.0
  %7008 = vmatprep.subr.mxu0 0.0
  %7009 = vmatpush1.msra.mxu0 0.0
  %7010 = vmatprep.subr.mxu0 0.0
  %7011 = vmatpush1.msra.mxu0 0.0
  %7012 = vmatprep.subr.mxu0 0.0
  %7013 = vmatpush1.msra.mxu0 0.0
  %7014 = vmatprep.subr.mxu0 0.0
  %7015 = vmatpush1.msra.mxu0 0.0
  %7016 = vmatprep.subr.mxu0 0.0
  %7017 = vmatpush1.msra.mxu0 0.0
  %7018 = vmatprep.subr.mxu0 0.0
  %7019 = vmatpush1.msra.mxu0 0.0
  %7020 = vmatprep.subr.mxu0 0.0
  %7021 = vmatpush1.msra.mxu0 0.0
  %7022 = vmatprep.subr.mxu0 0.0
  %7023 = vmatpush1.msra.mxu0 0.0
  %7024 = vmatprep.subr.mxu0 0.0
  %7025 = vmatpush1.msra.mxu0 0.0
  %7026 = vmatprep.subr.mxu0 0.0
  %7027 = vmatpush1.msra.mxu0 0.0
  %7028 = vmatprep.subr.mxu0 0.0
  %7029 = vmatpush1.msra.mxu0 0.0
  %7030 = vmatprep.subr.mxu0 0.0
  %7031 = vmatpush1.msra.mxu0 0.0
  %7032 = vmatprep.subr.mxu0 0.0
  %7033 = vmatpush1.msra.mxu0 %v6982
  %7034 = vmatprep.subr.mxu0 0.0
  %7035 = vmatpush1.msra.mxu0 %v6981
  %7036 = vmatprep.subr.mxu0 0.0
  %7037 = vmatpush2.msra.mxu0 0.0
  %7038 = vmatprep.subr.mxu0 0.0
  %7039 = vmatpush2.msra.mxu0 0.0
  %7040 = vmatprep.subr.mxu0 0.0
  %7041 = vmatpush2.msra.mxu0 0.0
  %7042 = vmatprep.subr.mxu0 0.0
  %7043 = vmatpush2.msra.mxu0 0.0
  %7044 = vmatprep.subr.mxu0 0.0
  %7045 = vmatpush2.msra.mxu0 0.0
  %7046 = vmatprep.subr.mxu0 0.0
  %7047 = vmatpush2.msra.mxu0 0.0
  %7048 = vmatprep.subr.mxu0 0.0
  %7049 = vmatpush2.msra.mxu0 0.0
  %7050 = vmatprep.subr.mxu0 0.0
  %7051 = vmatpush2.msra.mxu0 0.0
  %7052 = vmatprep.subr.mxu0 0.0
  %7053 = vmatpush2.msra.mxu0 0.0
  %7054 = vmatprep.subr.mxu0 0.0
  %7055 = vmatpush2.msra.mxu0 0.0
  %7056 = vmatprep.subr.mxu0 0.0
  %7057 = vmatpush2.msra.mxu0 0.0
  %7058 = vmatprep.subr.mxu0 0.0
  %7059 = vmatpush2.msra.mxu0 0.0
  %7060 = vmatprep.subr.mxu0 0.0
  %7061 = vmatpush2.msra.mxu0 0.0
  %7062 = vmatprep.subr.mxu0 0.0
  %7063 = vmatpush2.msra.mxu0 0.0
  %7064 = vmatprep.subr.mxu0 0.0
  %7065 = vmatpush2.msra.mxu0 0.0
  %7066 = vmatprep.subr.mxu0 0.0
  %7067 = vmatpush2.msra.mxu0 0.0
  %7068 = vmatprep.mubr.f32.mxu0 0.0
  %7069 = vmatmul.mubr.f32.gmra.mxu0 %v6996
  %v7070 = vpop.f32.mrf.mxu0
  %v7071 = vadd.f32 0.0, %v7070
  %v7072 = vpop.f32.mrf.mxu0
  %7073 = vmatprep.mubr.f32.mxu0 0.0
  %7074 = vmatmul.mubr.f32.gmra.mxu0 %v6998
  %v7075 = vpop.f32.mrf.mxu0
  %v7076 = vadd.f32 0.0, %v7075
  %v7077 = vpop.f32.mrf.mxu0
  %7078 = vmatprep.mubr.f32.mxu0 0.0
  %7079 = vmatmul.mubr.f32.gmra.mxu0 %v7000
  %v7080 = vpop.f32.mrf.mxu0
  %v7081 = vadd.f32 0.0, %v7080
  %v7082 = vpop.f32.mrf.mxu0
  %7083 = vmatprep.mubr.f32.mxu0 0.0
  %7084 = vmatmul.mubr.f32.gmra.mxu0 %v7002
  %v7085 = vpop.f32.mrf.mxu0
  %v7086 = vadd.f32 0.0, %v7085
  %v7087 = vpop.f32.mrf.mxu0
  %7088 = vdwg.mxu0
  %v7097 = vcombine.low %v6962, %v6963
  %v7098 = vcombine.low %v6964, %v6965
  %v7099 = vcombine.low %v6966, %v6967
  %v7100 = vcombine.low %v6968, %v6969
  %v7101 = vsel %vm6995, %v7097, 0
  %v7103 = vsel %vm6995, %v7098, 0
  %v7105 = vsel %vm6995, %v7099, 0
  %v7107 = vsel %vm6995, %v7100, 0
  %7109 = vmatprep.subr.mxu0 0.0
  %7110 = vmatpush1.msra.mxu0 0.0
  %7111 = vmatprep.subr.mxu0 0.0
  %7112 = vmatpush1.msra.mxu0 0.0
  %7113 = vmatprep.subr.mxu0 0.0
  %7114 = vmatpush1.msra.mxu0 0.0
  %7115 = vmatprep.subr.mxu0 0.0
  %7116 = vmatpush1.msra.mxu0 0.0
  %7117 = vmatprep.subr.mxu0 0.0
  %7118 = vmatpush1.msra.mxu0 0.0
  %7119 = vmatprep.subr.mxu0 0.0
  %7120 = vmatpush1.msra.mxu0 0.0
  %7121 = vmatprep.subr.mxu0 0.0
  %7122 = vmatpush1.msra.mxu0 0.0
  %7123 = vmatprep.subr.mxu0 0.0
  %7124 = vmatpush1.msra.mxu0 0.0
  %7125 = vmatprep.subr.mxu0 0.0
  %7126 = vmatpush1.msra.mxu0 0.0
  %7127 = vmatprep.subr.mxu0 0.0
  %7128 = vmatpush1.msra.mxu0 0.0
  %7129 = vmatprep.subr.mxu0 0.0
  %7130 = vmatpush1.msra.mxu0 0.0
  %7131 = vmatprep.subr.mxu0 0.0
  %7132 = vmatpush1.msra.mxu0 0.0
  %7133 = vmatprep.subr.mxu0 0.0
  %7134 = vmatpush1.msra.mxu0 0.0
  %7135 = vmatprep.subr.mxu0 0.0
  %7136 = vmatpush1.msra.mxu0 0.0
  %7137 = vmatprep.subr.mxu0 0.0
  %7138 = vmatpush1.msra.mxu0 %v6971
  %7139 = vmatprep.subr.mxu0 0.0
  %7140 = vmatpush1.msra.mxu0 %v6970
  %7141 = vmatprep.subr.mxu0 0.0
  %7142 = vmatpush2.msra.mxu0 0.0
  %7143 = vmatprep.subr.mxu0 0.0
  %7144 = vmatpush2.msra.mxu0 0.0
  %7145 = vmatprep.subr.mxu0 0.0
  %7146 = vmatpush2.msra.mxu0 0.0
  %7147 = vmatprep.subr.mxu0 0.0
  %7148 = vmatpush2.msra.mxu0 0.0
  %7149 = vmatprep.subr.mxu0 0.0
  %7150 = vmatpush2.msra.mxu0 0.0
  %7151 = vmatprep.subr.mxu0 0.0
  %7152 = vmatpush2.msra.mxu0 0.0
  %7153 = vmatprep.subr.mxu0 0.0
  %7154 = vmatpush2.msra.mxu0 0.0
  %7155 = vmatprep.subr.mxu0 0.0
  %7156 = vmatpush2.msra.mxu0 0.0
  %7157 = vmatprep.subr.mxu0 0.0
  %7158 = vmatpush2.msra.mxu0 0.0
  %7159 = vmatprep.subr.mxu0 0.0
  %7160 = vmatpush2.msra.mxu0 0.0
  %7161 = vmatprep.subr.mxu0 0.0
  %7162 = vmatpush2.msra.mxu0 0.0
  %7163 = vmatprep.subr.mxu0 0.0
  %7164 = vmatpush2.msra.mxu0 0.0
  %7165 = vmatprep.subr.mxu0 0.0
  %7166 = vmatpush2.msra.mxu0 0.0
  %7167 = vmatprep.subr.mxu0 0.0
  %7168 = vmatpush2.msra.mxu0 0.0
  %7169 = vmatprep.subr.mxu0 0.0
  %7170 = vmatpush2.msra.mxu0 0.0
  %7171 = vmatprep.subr.mxu0 0.0
  %7172 = vmatpush2.msra.mxu0 0.0
  %7173 = vmatprep.mubr.f32.mxu0 0.0
  %7174 = vmatmul.mubr.f32.gmra.mxu0 %v7101
  %v7175 = vpop.f32.mrf.mxu0
  %v7176 = vadd.f32 %v7071, %v7175
  %v7177 = vpop.f32.mrf.mxu0
  %7178 = vmatprep.mubr.f32.mxu0 0.0
  %7179 = vmatmul.mubr.f32.gmra.mxu0 %v7103
  %v7180 = vpop.f32.mrf.mxu0
  %v7181 = vadd.f32 %v7076, %v7180
  %v7182 = vpop.f32.mrf.mxu0
  %7183 = vmatprep.mubr.f32.mxu0 0.0
  %7184 = vmatmul.mubr.f32.gmra.mxu0 %v7105
  %v7185 = vpop.f32.mrf.mxu0
  %v7186 = vadd.f32 %v7081, %v7185
  %v7187 = vpop.f32.mrf.mxu0
  %7188 = vmatprep.mubr.f32.mxu0 0.0
  %7189 = vmatmul.mubr.f32.gmra.mxu0 %v7107
  %v7190 = vpop.f32.mrf.mxu0
  %v7191 = vadd.f32 %v7086, %v7190
  %v7192 = vpop.f32.mrf.mxu0
  %7193 = vdwg.mxu0
  %v7194 = vld [vmem:[%s6430] sm:$0xf]
  %v7195 = vld [vmem:[%s6430 + $0x8] sm:$0xf]
  %v7196 = vld [vmem:[%s6430 + $0x10] sm:$0xf]
  %v7197 = vld [vmem:[%s6430 + $0x18] sm:$0xf]
  %v7198 = vld [vmem:[%s6430 + $0x28] sm:$0xf]
  %v7199 = vld [vmem:[%s6430 + $0x30] sm:$0xf]
  %v7200 = vld [vmem:[%s6430 + $0x38] sm:$0xf]
  %v7201 = vld [vmem:[%s6430 + $0x40] sm:$0xf]
  %s7202 = scalar_lea.vmem %s3, 32
  %v7203 = vld [vmem:[%s7202] sm:$0xff]
  %v7204 = vld [vmem:[%s7202 + $0x8] sm:$0xff]
  %v7213 = vcombine.low %v7194, %v7195
  %v7214 = vcombine.low %v7196, %v7197
  %v7215 = vcombine.low %v7198, %v7199
  %v7216 = vcombine.low %v7200, %v7201
  %v7217 = vsel %vm6995, %v7213, 0
  %v7219 = vsel %vm6995, %v7214, 0
  %v7221 = vsel %vm6995, %v7215, 0
  %v7223 = vsel %vm6995, %v7216, 0
  %7225 = vmatprep.subr.mxu0 0.0
  %7226 = vmatpush1.msra.mxu0 0.0
  %7227 = vmatprep.subr.mxu0 0.0
  %7228 = vmatpush1.msra.mxu0 0.0
  %7229 = vmatprep.subr.mxu0 0.0
  %7230 = vmatpush1.msra.mxu0 0.0
  %7231 = vmatprep.subr.mxu0 0.0
  %7232 = vmatpush1.msra.mxu0 0.0
  %7233 = vmatprep.subr.mxu0 0.0
  %7234 = vmatpush1.msra.mxu0 0.0
  %7235 = vmatprep.subr.mxu0 0.0
  %7236 = vmatpush1.msra.mxu0 0.0
  %7237 = vmatprep.subr.mxu0 0.0
  %7238 = vmatpush1.msra.mxu0 0.0
  %7239 = vmatprep.subr.mxu0 0.0
  %7240 = vmatpush1.msra.mxu0 0.0
  %7241 = vmatprep.subr.mxu0 0.0
  %7242 = vmatpush1.msra.mxu0 0.0
  %7243 = vmatprep.subr.mxu0 0.0
  %7244 = vmatpush1.msra.mxu0 0.0
  %7245 = vmatprep.subr.mxu0 0.0
  %7246 = vmatpush1.msra.mxu0 0.0
  %7247 = vmatprep.subr.mxu0 0.0
  %7248 = vmatpush1.msra.mxu0 0.0
  %7249 = vmatprep.subr.mxu0 0.0
  %7250 = vmatpush1.msra.mxu0 0.0
  %7251 = vmatprep.subr.mxu0 0.0
  %7252 = vmatpush1.msra.mxu0 0.0
  %7253 = vmatprep.subr.mxu0 0.0
  %7254 = vmatpush1.msra.mxu0 %v7204
  %7255 = vmatprep.subr.mxu0 0.0
  %7256 = vmatpush1.msra.mxu0 %v7203
  %7257 = vmatprep.subr.mxu0 0.0
  %7258 = vmatpush2.msra.mxu0 0.0
  %7259 = vmatprep.subr.mxu0 0.0
  %7260 = vmatpush2.msra.mxu0 0.0
  %7261 = vmatprep.subr.mxu0 0.0
  %7262 = vmatpush2.msra.mxu0 0.0
  %7263 = vmatprep.subr.mxu0 0.0
  %7264 = vmatpush2.msra.mxu0 0.0
  %7265 = vmatprep.subr.mxu0 0.0
  %7266 = vmatpush2.msra.mxu0 0.0
  %7267 = vmatprep.subr.mxu0 0.0
  %7268 = vmatpush2.msra.mxu0 0.0
  %7269 = vmatprep.subr.mxu0 0.0
  %7270 = vmatpush2.msra.mxu0 0.0
  %7271 = vmatprep.subr.mxu0 0.0
  %7272 = vmatpush2.msra.mxu0 0.0
  %7273 = vmatprep.subr.mxu0 0.0
  %7274 = vmatpush2.msra.mxu0 0.0
  %7275 = vmatprep.subr.mxu0 0.0
  %7276 = vmatpush2.msra.mxu0 0.0
  %7277 = vmatprep.subr.mxu0 0.0
  %7278 = vmatpush2.msra.mxu0 0.0
  %7279 = vmatprep.subr.mxu0 0.0
  %7280 = vmatpush2.msra.mxu0 0.0
  %7281 = vmatprep.subr.mxu0 0.0
  %7282 = vmatpush2.msra.mxu0 0.0
  %7283 = vmatprep.subr.mxu0 0.0
  %7284 = vmatpush2.msra.mxu0 0.0
  %7285 = vmatprep.subr.mxu0 0.0
  %7286 = vmatpush2.msra.mxu0 0.0
  %7287 = vmatprep.subr.mxu0 0.0
  %7288 = vmatpush2.msra.mxu0 0.0
  %7289 = vmatprep.mubr.f32.mxu0 0.0
  %7290 = vmatmul.mubr.f32.gmra.mxu0 %v7217
  %v7291 = vpop.f32.mrf.mxu0
  %v7292 = vadd.f32 0.0, %v7291
  %v7293 = vpop.f32.mrf.mxu0
  %7294 = vmatprep.mubr.f32.mxu0 0.0
  %7295 = vmatmul.mubr.f32.gmra.mxu0 %v7219
  %v7296 = vpop.f32.mrf.mxu0
  %v7297 = vadd.f32 0.0, %v7296
  %v7298 = vpop.f32.mrf.mxu0
  %7299 = vmatprep.mubr.f32.mxu0 0.0
  %7300 = vmatmul.mubr.f32.gmra.mxu0 %v7221
  %v7301 = vpop.f32.mrf.mxu0
  %v7302 = vadd.f32 0.0, %v7301
  %v7303 = vpop.f32.mrf.mxu0
  %7304 = vmatprep.mubr.f32.mxu0 0.0
  %7305 = vmatmul.mubr.f32.gmra.mxu0 %v7223
  %v7306 = vpop.f32.mrf.mxu0
  %v7307 = vadd.f32 0.0, %v7306
  %v7308 = vpop.f32.mrf.mxu0
  %7309 = vdwg.mxu0
  %v7310 = vadd.f32 %v7176, %v7292
  %v7311 = vadd.f32 %v7181, %v7297
  %v7312 = vadd.f32 %v7186, %v7302
  %v7313 = vadd.f32 %v7191, %v7307
  %v7314 = vld [vmem:[%s6430 + $0x1] sm:$0xf]
  %v7315 = vld [vmem:[%s6430 + $0x9] sm:$0xf]
  %v7316 = vld [vmem:[%s6430 + $0x11] sm:$0xf]
  %v7317 = vld [vmem:[%s6430 + $0x19] sm:$0xf]
  %v7318 = vld [vmem:[%s6430 + $0x29] sm:$0xf]
  %v7319 = vld [vmem:[%s6430 + $0x31] sm:$0xf]
  %v7320 = vld [vmem:[%s6430 + $0x39] sm:$0xf]
  %v7321 = vld [vmem:[%s6430 + $0x41] sm:$0xf]
  %s7322 = scalar_lea.vmem %s3, 48
  %v7323 = vld [vmem:[%s7322] sm:$0xff]
  %v7324 = vld [vmem:[%s7322 + $0x8] sm:$0xff]
  %v7333 = vcombine.low %v7314, %v7315
  %v7334 = vcombine.low %v7316, %v7317
  %v7335 = vcombine.low %v7318, %v7319
  %v7336 = vcombine.low %v7320, %v7321
  %v7337 = vsel %vm6995, %v7333, 0
  %v7339 = vsel %vm6995, %v7334, 0
  %v7341 = vsel %vm6995, %v7335, 0
  %v7343 = vsel %vm6995, %v7336, 0
  %7345 = vmatprep.subr.mxu0 0.0
  %7346 = vmatpush1.msra.mxu0 0.0
  %7347 = vmatprep.subr.mxu0 0.0
  %7348 = vmatpush1.msra.mxu0 0.0
  %7349 = vmatprep.subr.mxu0 0.0
  %7350 = vmatpush1.msra.mxu0 0.0
  %7351 = vmatprep.subr.mxu0 0.0
  %7352 = vmatpush1.msra.mxu0 0.0
  %7353 = vmatprep.subr.mxu0 0.0
  %7354 = vmatpush1.msra.mxu0 0.0
  %7355 = vmatprep.subr.mxu0 0.0
  %7356 = vmatpush1.msra.mxu0 0.0
  %7357 = vmatprep.subr.mxu0 0.0
  %7358 = vmatpush1.msra.mxu0 0.0
  %7359 = vmatprep.subr.mxu0 0.0
  %7360 = vmatpush1.msra.mxu0 0.0
  %7361 = vmatprep.subr.mxu0 0.0
  %7362 = vmatpush1.msra.mxu0 0.0
  %7363 = vmatprep.subr.mxu0 0.0
  %7364 = vmatpush1.msra.mxu0 0.0
  %7365 = vmatprep.subr.mxu0 0.0
  %7366 = vmatpush1.msra.mxu0 0.0
  %7367 = vmatprep.subr.mxu0 0.0
  %7368 = vmatpush1.msra.mxu0 0.0
  %7369 = vmatprep.subr.mxu0 0.0
  %7370 = vmatpush1.msra.mxu0 0.0
  %7371 = vmatprep.subr.mxu0 0.0
  %7372 = vmatpush1.msra.mxu0 0.0
  %7373 = vmatprep.subr.mxu0 0.0
  %7374 = vmatpush1.msra.mxu0 %v7324
  %7375 = vmatprep.subr.mxu0 0.0
  %7376 = vmatpush1.msra.mxu0 %v7323
  %7377 = vmatprep.subr.mxu0 0.0
  %7378 = vmatpush2.msra.mxu0 0.0
  %7379 = vmatprep.subr.mxu0 0.0
  %7380 = vmatpush2.msra.mxu0 0.0
  %7381 = vmatprep.subr.mxu0 0.0
  %7382 = vmatpush2.msra.mxu0 0.0
  %7383 = vmatprep.subr.mxu0 0.0
  %7384 = vmatpush2.msra.mxu0 0.0
  %7385 = vmatprep.subr.mxu0 0.0
  %7386 = vmatpush2.msra.mxu0 0.0
  %7387 = vmatprep.subr.mxu0 0.0
  %7388 = vmatpush2.msra.mxu0 0.0
  %7389 = vmatprep.subr.mxu0 0.0
  %7390 = vmatpush2.msra.mxu0 0.0
  %7391 = vmatprep.subr.mxu0 0.0
  %7392 = vmatpush2.msra.mxu0 0.0
  %7393 = vmatprep.subr.mxu0 0.0
  %7394 = vmatpush2.msra.mxu0 0.0
  %7395 = vmatprep.subr.mxu0 0.0
  %7396 = vmatpush2.msra.mxu0 0.0
  %7397 = vmatprep.subr.mxu0 0.0
  %7398 = vmatpush2.msra.mxu0 0.0
  %7399 = vmatprep.subr.mxu0 0.0
  %7400 = vmatpush2.msra.mxu0 0.0
  %7401 = vmatprep.subr.mxu0 0.0
  %7402 = vmatpush2.msra.mxu0 0.0
  %7403 = vmatprep.subr.mxu0 0.0
  %7404 = vmatpush2.msra.mxu0 0.0
  %7405 = vmatprep.subr.mxu0 0.0
  %7406 = vmatpush2.msra.mxu0 0.0
  %7407 = vmatprep.subr.mxu0 0.0
  %7408 = vmatpush2.msra.mxu0 0.0
  %7409 = vmatprep.mubr.f32.mxu0 0.0
  %7410 = vmatmul.mubr.f32.gmra.mxu0 %v7337
  %v7411 = vpop.f32.mrf.mxu0
  %v7412 = vadd.f32 0.0, %v7411
  %v7413 = vpop.f32.mrf.mxu0
  %7414 = vmatprep.mubr.f32.mxu0 0.0
  %7415 = vmatmul.mubr.f32.gmra.mxu0 %v7339
  %v7416 = vpop.f32.mrf.mxu0
  %v7417 = vadd.f32 0.0, %v7416
  %v7418 = vpop.f32.mrf.mxu0
  %7419 = vmatprep.mubr.f32.mxu0 0.0
  %7420 = vmatmul.mubr.f32.gmra.mxu0 %v7341
  %v7421 = vpop.f32.mrf.mxu0
  %v7422 = vadd.f32 0.0, %v7421
  %v7423 = vpop.f32.mrf.mxu0
  %7424 = vmatprep.mubr.f32.mxu0 0.0
  %7425 = vmatmul.mubr.f32.gmra.mxu0 %v7343
  %v7426 = vpop.f32.mrf.mxu0
  %v7427 = vadd.f32 0.0, %v7426
  %v7428 = vpop.f32.mrf.mxu0
  %7429 = vdwg.mxu0
  %v7430 = vadd.f32 %v7310, %v7412
  %v7431 = vadd.f32 %v7311, %v7417
  %v7432 = vadd.f32 %v7312, %v7422
  %v7433 = vadd.f32 %v7313, %v7427
  %v7434 = vld [vmem:[%s6785] sm:$0xf]
  %v7435 = vld [vmem:[%s6785 + $0x8] sm:$0xf]
  %v7436 = vld [vmem:[%s6785 + $0x10] sm:$0xf]
  %v7437 = vld [vmem:[%s6785 + $0x18] sm:$0xf]
  %v7438 = vld [vmem:[%s6785 + $0x28] sm:$0xf]
  %v7439 = vld [vmem:[%s6785 + $0x30] sm:$0xf]
  %v7440 = vld [vmem:[%s6785 + $0x38] sm:$0xf]
  %v7441 = vld [vmem:[%s6785 + $0x40] sm:$0xf]
  %s7442 = scalar_lea.vmem %s3, 64
  %v7443 = vld [vmem:[%s7442] sm:$0xff]
  %v7444 = vld [vmem:[%s7442 + $0x8] sm:$0xff]
  %v7453 = vcombine.low %v7434, %v7435
  %v7454 = vcombine.low %v7436, %v7437
  %v7455 = vcombine.low %v7438, %v7439
  %v7456 = vcombine.low %v7440, %v7441
  %v7457 = vsel %vm6995, %v7453, 0
  %v7459 = vsel %vm6995, %v7454, 0
  %v7461 = vsel %vm6995, %v7455, 0
  %v7463 = vsel %vm6995, %v7456, 0
  %7465 = vmatprep.subr.mxu0 0.0
  %7466 = vmatpush1.msra.mxu0 0.0
  %7467 = vmatprep.subr.mxu0 0.0
  %7468 = vmatpush1.msra.mxu0 0.0
  %7469 = vmatprep.subr.mxu0 0.0
  %7470 = vmatpush1.msra.mxu0 0.0
  %7471 = vmatprep.subr.mxu0 0.0
  %7472 = vmatpush1.msra.mxu0 0.0
  %7473 = vmatprep.subr.mxu0 0.0
  %7474 = vmatpush1.msra.mxu0 0.0
  %7475 = vmatprep.subr.mxu0 0.0
  %7476 = vmatpush1.msra.mxu0 0.0
  %7477 = vmatprep.subr.mxu0 0.0
  %7478 = vmatpush1.msra.mxu0 0.0
  %7479 = vmatprep.subr.mxu0 0.0
  %7480 = vmatpush1.msra.mxu0 0.0
  %7481 = vmatprep.subr.mxu0 0.0
  %7482 = vmatpush1.msra.mxu0 0.0
  %7483 = vmatprep.subr.mxu0 0.0
  %7484 = vmatpush1.msra.mxu0 0.0
  %7485 = vmatprep.subr.mxu0 0.0
  %7486 = vmatpush1.msra.mxu0 0.0
  %7487 = vmatprep.subr.mxu0 0.0
  %7488 = vmatpush1.msra.mxu0 0.0
  %7489 = vmatprep.subr.mxu0 0.0
  %7490 = vmatpush1.msra.mxu0 0.0
  %7491 = vmatprep.subr.mxu0 0.0
  %7492 = vmatpush1.msra.mxu0 0.0
  %7493 = vmatprep.subr.mxu0 0.0
  %7494 = vmatpush1.msra.mxu0 %v7444
  %7495 = vmatprep.subr.mxu0 0.0
  %7496 = vmatpush1.msra.mxu0 %v7443
  %7497 = vmatprep.subr.mxu0 0.0
  %7498 = vmatpush2.msra.mxu0 0.0
  %7499 = vmatprep.subr.mxu0 0.0
  %7500 = vmatpush2.msra.mxu0 0.0
  %7501 = vmatprep.subr.mxu0 0.0
  %7502 = vmatpush2.msra.mxu0 0.0
  %7503 = vmatprep.subr.mxu0 0.0
  %7504 = vmatpush2.msra.mxu0 0.0
  %7505 = vmatprep.subr.mxu0 0.0
  %7506 = vmatpush2.msra.mxu0 0.0
  %7507 = vmatprep.subr.mxu0 0.0
  %7508 = vmatpush2.msra.mxu0 0.0
  %7509 = vmatprep.subr.mxu0 0.0
  %7510 = vmatpush2.msra.mxu0 0.0
  %7511 = vmatprep.subr.mxu0 0.0
  %7512 = vmatpush2.msra.mxu0 0.0
  %7513 = vmatprep.subr.mxu0 0.0
  %7514 = vmatpush2.msra.mxu0 0.0
  %7515 = vmatprep.subr.mxu0 0.0
  %7516 = vmatpush2.msra.mxu0 0.0
  %7517 = vmatprep.subr.mxu0 0.0
  %7518 = vmatpush2.msra.mxu0 0.0
  %7519 = vmatprep.subr.mxu0 0.0
  %7520 = vmatpush2.msra.mxu0 0.0
  %7521 = vmatprep.subr.mxu0 0.0
  %7522 = vmatpush2.msra.mxu0 0.0
  %7523 = vmatprep.subr.mxu0 0.0
  %7524 = vmatpush2.msra.mxu0 0.0
  %7525 = vmatprep.subr.mxu0 0.0
  %7526 = vmatpush2.msra.mxu0 0.0
  %7527 = vmatprep.subr.mxu0 0.0
  %7528 = vmatpush2.msra.mxu0 0.0
  %7529 = vmatprep.mubr.f32.mxu0 0.0
  %7530 = vmatmul.mubr.f32.gmra.mxu0 %v7457
  %v7531 = vpop.f32.mrf.mxu0
  %v7532 = vadd.f32 0.0, %v7531
  %v7533 = vpop.f32.mrf.mxu0
  %7534 = vmatprep.mubr.f32.mxu0 0.0
  %7535 = vmatmul.mubr.f32.gmra.mxu0 %v7459
  %v7536 = vpop.f32.mrf.mxu0
  %v7537 = vadd.f32 0.0, %v7536
  %v7538 = vpop.f32.mrf.mxu0
  %7539 = vmatprep.mubr.f32.mxu0 0.0
  %7540 = vmatmul.mubr.f32.gmra.mxu0 %v7461
  %v7541 = vpop.f32.mrf.mxu0
  %v7542 = vadd.f32 0.0, %v7541
  %v7543 = vpop.f32.mrf.mxu0
  %7544 = vmatprep.mubr.f32.mxu0 0.0
  %7545 = vmatmul.mubr.f32.gmra.mxu0 %v7463
  %v7546 = vpop.f32.mrf.mxu0
  %v7547 = vadd.f32 0.0, %v7546
  %v7548 = vpop.f32.mrf.mxu0
  %7549 = vdwg.mxu0
  %v7550 = vadd.f32 %v7430, %v7532
  %v7551 = vadd.f32 %v7431, %v7537
  %v7552 = vadd.f32 %v7432, %v7542
  %v7553 = vadd.f32 %v7433, %v7547
  %v7554 = vld [vmem:[%s6785 + $0x1] sm:$0xf]
  %v7555 = vld [vmem:[%s6785 + $0x9] sm:$0xf]
  %v7556 = vld [vmem:[%s6785 + $0x11] sm:$0xf]
  %v7557 = vld [vmem:[%s6785 + $0x19] sm:$0xf]
  %v7558 = vld [vmem:[%s6785 + $0x29] sm:$0xf]
  %v7559 = vld [vmem:[%s6785 + $0x31] sm:$0xf]
  %v7560 = vld [vmem:[%s6785 + $0x39] sm:$0xf]
  %v7561 = vld [vmem:[%s6785 + $0x41] sm:$0xf]
  %s7562 = scalar_lea.vmem %s3, 80
  %v7563 = vld [vmem:[%s7562] sm:$0xff]
  %v7564 = vld [vmem:[%s7562 + $0x8] sm:$0xff]
  %v7573 = vcombine.low %v7554, %v7555
  %v7574 = vcombine.low %v7556, %v7557
  %v7575 = vcombine.low %v7558, %v7559
  %v7576 = vcombine.low %v7560, %v7561
  %v7577 = vsel %vm6995, %v7573, 0
  %v7579 = vsel %vm6995, %v7574, 0
  %v7581 = vsel %vm6995, %v7575, 0
  %v7583 = vsel %vm6995, %v7576, 0
  %7585 = vmatprep.subr.mxu0 0.0
  %7586 = vmatpush1.msra.mxu0 0.0
  %7587 = vmatprep.subr.mxu0 0.0
  %7588 = vmatpush1.msra.mxu0 0.0
  %7589 = vmatprep.subr.mxu0 0.0
  %7590 = vmatpush1.msra.mxu0 0.0
  %7591 = vmatprep.subr.mxu0 0.0
  %7592 = vmatpush1.msra.mxu0 0.0
  %7593 = vmatprep.subr.mxu0 0.0
  %7594 = vmatpush1.msra.mxu0 0.0
  %7595 = vmatprep.subr.mxu0 0.0
  %7596 = vmatpush1.msra.mxu0 0.0
  %7597 = vmatprep.subr.mxu0 0.0
  %7598 = vmatpush1.msra.mxu0 0.0
  %7599 = vmatprep.subr.mxu0 0.0
  %7600 = vmatpush1.msra.mxu0 0.0
  %7601 = vmatprep.subr.mxu0 0.0
  %7602 = vmatpush1.msra.mxu0 0.0
  %7603 = vmatprep.subr.mxu0 0.0
  %7604 = vmatpush1.msra.mxu0 0.0
  %7605 = vmatprep.subr.mxu0 0.0
  %7606 = vmatpush1.msra.mxu0 0.0
  %7607 = vmatprep.subr.mxu0 0.0
  %7608 = vmatpush1.msra.mxu0 0.0
  %7609 = vmatprep.subr.mxu0 0.0
  %7610 = vmatpush1.msra.mxu0 0.0
  %7611 = vmatprep.subr.mxu0 0.0
  %7612 = vmatpush1.msra.mxu0 0.0
  %7613 = vmatprep.subr.mxu0 0.0
  %7614 = vmatpush1.msra.mxu0 %v7564
  %7615 = vmatprep.subr.mxu0 0.0
  %7616 = vmatpush1.msra.mxu0 %v7563
  %7617 = vmatprep.subr.mxu0 0.0
  %7618 = vmatpush2.msra.mxu0 0.0
  %7619 = vmatprep.subr.mxu0 0.0
  %7620 = vmatpush2.msra.mxu0 0.0
  %7621 = vmatprep.subr.mxu0 0.0
  %7622 = vmatpush2.msra.mxu0 0.0
  %7623 = vmatprep.subr.mxu0 0.0
  %7624 = vmatpush2.msra.mxu0 0.0
  %7625 = vmatprep.subr.mxu0 0.0
  %7626 = vmatpush2.msra.mxu0 0.0
  %7627 = vmatprep.subr.mxu0 0.0
  %7628 = vmatpush2.msra.mxu0 0.0
  %7629 = vmatprep.subr.mxu0 0.0
  %7630 = vmatpush2.msra.mxu0 0.0
  %7631 = vmatprep.subr.mxu0 0.0
  %7632 = vmatpush2.msra.mxu0 0.0
  %7633 = vmatprep.subr.mxu0 0.0
  %7634 = vmatpush2.msra.mxu0 0.0
  %7635 = vmatprep.subr.mxu0 0.0
  %7636 = vmatpush2.msra.mxu0 0.0
  %7637 = vmatprep.subr.mxu0 0.0
  %7638 = vmatpush2.msra.mxu0 0.0
  %7639 = vmatprep.subr.mxu0 0.0
  %7640 = vmatpush2.msra.mxu0 0.0
  %7641 = vmatprep.subr.mxu0 0.0
  %7642 = vmatpush2.msra.mxu0 0.0
  %7643 = vmatprep.subr.mxu0 0.0
  %7644 = vmatpush2.msra.mxu0 0.0
  %7645 = vmatprep.subr.mxu0 0.0
  %7646 = vmatpush2.msra.mxu0 0.0
  %7647 = vmatprep.subr.mxu0 0.0
  %7648 = vmatpush2.msra.mxu0 0.0
  %7649 = vmatprep.mubr.f32.mxu0 0.0
  %7650 = vmatmul.mubr.f32.gmra.mxu0 %v7577
  %v7651 = vpop.f32.mrf.mxu0
  %v7652 = vadd.f32 0.0, %v7651
  %v7653 = vpop.f32.mrf.mxu0
  %7654 = vmatprep.mubr.f32.mxu0 0.0
  %7655 = vmatmul.mubr.f32.gmra.mxu0 %v7579
  %v7656 = vpop.f32.mrf.mxu0
  %v7657 = vadd.f32 0.0, %v7656
  %v7658 = vpop.f32.mrf.mxu0
  %7659 = vmatprep.mubr.f32.mxu0 0.0
  %7660 = vmatmul.mubr.f32.gmra.mxu0 %v7581
  %v7661 = vpop.f32.mrf.mxu0
  %v7662 = vadd.f32 0.0, %v7661
  %v7663 = vpop.f32.mrf.mxu0
  %7664 = vmatprep.mubr.f32.mxu0 0.0
  %7665 = vmatmul.mubr.f32.gmra.mxu0 %v7583
  %v7666 = vpop.f32.mrf.mxu0
  %v7667 = vadd.f32 0.0, %v7666
  %v7668 = vpop.f32.mrf.mxu0
  %7669 = vdwg.mxu0
  %v7670 = vadd.f32 %v7550, %v7652
  %v7671 = vadd.f32 %v7551, %v7657
  %v7672 = vadd.f32 %v7552, %v7662
  %v7673 = vadd.f32 %v7553, %v7667
  %s7674 = scalar_lea.vmem [#allocation3], 88
  %v7675 = vld [vmem:[%s7674] sm:$0xf]
  %v7676 = vld [vmem:[%s7674 + $0x8] sm:$0xf]
  %v7677 = vld [vmem:[%s7674 + $0x10] sm:$0xf]
  %v7678 = vld [vmem:[%s7674 + $0x18] sm:$0xf]
  %v7679 = vld [vmem:[%s7674 + $0x28] sm:$0xf]
  %v7680 = vld [vmem:[%s7674 + $0x30] sm:$0xf]
  %v7681 = vld [vmem:[%s7674 + $0x38] sm:$0xf]
  %v7682 = vld [vmem:[%s7674 + $0x40] sm:$0xf]
  %s7683 = scalar_lea.vmem %s3, 96
  %v7684 = vld [vmem:[%s7683] sm:$0xff]
  %v7685 = vld [vmem:[%s7683 + $0x8] sm:$0xff]
  %v7694 = vcombine.low %v7675, %v7676
  %v7695 = vcombine.low %v7677, %v7678
  %v7696 = vcombine.low %v7679, %v7680
  %v7697 = vcombine.low %v7681, %v7682
  %v7698 = vsel %vm6995, %v7694, 0
  %v7700 = vsel %vm6995, %v7695, 0
  %v7702 = vsel %vm6995, %v7696, 0
  %v7704 = vsel %vm6995, %v7697, 0
  %7706 = vmatprep.subr.mxu0 0.0
  %7707 = vmatpush1.msra.mxu0 0.0
  %7708 = vmatprep.subr.mxu0 0.0
  %7709 = vmatpush1.msra.mxu0 0.0
  %7710 = vmatprep.subr.mxu0 0.0
  %7711 = vmatpush1.msra.mxu0 0.0
  %7712 = vmatprep.subr.mxu0 0.0
  %7713 = vmatpush1.msra.mxu0 0.0
  %7714 = vmatprep.subr.mxu0 0.0
  %7715 = vmatpush1.msra.mxu0 0.0
  %7716 = vmatprep.subr.mxu0 0.0
  %7717 = vmatpush1.msra.mxu0 0.0
  %7718 = vmatprep.subr.mxu0 0.0
  %7719 = vmatpush1.msra.mxu0 0.0
  %7720 = vmatprep.subr.mxu0 0.0
  %7721 = vmatpush1.msra.mxu0 0.0
  %7722 = vmatprep.subr.mxu0 0.0
  %7723 = vmatpush1.msra.mxu0 0.0
  %7724 = vmatprep.subr.mxu0 0.0
  %7725 = vmatpush1.msra.mxu0 0.0
  %7726 = vmatprep.subr.mxu0 0.0
  %7727 = vmatpush1.msra.mxu0 0.0
  %7728 = vmatprep.subr.mxu0 0.0
  %7729 = vmatpush1.msra.mxu0 0.0
  %7730 = vmatprep.subr.mxu0 0.0
  %7731 = vmatpush1.msra.mxu0 0.0
  %7732 = vmatprep.subr.mxu0 0.0
  %7733 = vmatpush1.msra.mxu0 0.0
  %7734 = vmatprep.subr.mxu0 0.0
  %7735 = vmatpush1.msra.mxu0 %v7685
  %7736 = vmatprep.subr.mxu0 0.0
  %7737 = vmatpush1.msra.mxu0 %v7684
  %7738 = vmatprep.subr.mxu0 0.0
  %7739 = vmatpush2.msra.mxu0 0.0
  %7740 = vmatprep.subr.mxu0 0.0
  %7741 = vmatpush2.msra.mxu0 0.0
  %7742 = vmatprep.subr.mxu0 0.0
  %7743 = vmatpush2.msra.mxu0 0.0
  %7744 = vmatprep.subr.mxu0 0.0
  %7745 = vmatpush2.msra.mxu0 0.0
  %7746 = vmatprep.subr.mxu0 0.0
  %7747 = vmatpush2.msra.mxu0 0.0
  %7748 = vmatprep.subr.mxu0 0.0
  %7749 = vmatpush2.msra.mxu0 0.0
  %7750 = vmatprep.subr.mxu0 0.0
  %7751 = vmatpush2.msra.mxu0 0.0
  %7752 = vmatprep.subr.mxu0 0.0
  %7753 = vmatpush2.msra.mxu0 0.0
  %7754 = vmatprep.subr.mxu0 0.0
  %7755 = vmatpush2.msra.mxu0 0.0
  %7756 = vmatprep.subr.mxu0 0.0
  %7757 = vmatpush2.msra.mxu0 0.0
  %7758 = vmatprep.subr.mxu0 0.0
  %7759 = vmatpush2.msra.mxu0 0.0
  %7760 = vmatprep.subr.mxu0 0.0
  %7761 = vmatpush2.msra.mxu0 0.0
  %7762 = vmatprep.subr.mxu0 0.0
  %7763 = vmatpush2.msra.mxu0 0.0
  %7764 = vmatprep.subr.mxu0 0.0
  %7765 = vmatpush2.msra.mxu0 0.0
  %7766 = vmatprep.subr.mxu0 0.0
  %7767 = vmatpush2.msra.mxu0 0.0
  %7768 = vmatprep.subr.mxu0 0.0
  %7769 = vmatpush2.msra.mxu0 0.0
  %7770 = vmatprep.mubr.f32.mxu0 0.0
  %7771 = vmatmul.mubr.f32.gmra.mxu0 %v7698
  %v7772 = vpop.f32.mrf.mxu0
  %v7773 = vadd.f32 0.0, %v7772
  %v7774 = vpop.f32.mrf.mxu0
  %7775 = vmatprep.mubr.f32.mxu0 0.0
  %7776 = vmatmul.mubr.f32.gmra.mxu0 %v7700
  %v7777 = vpop.f32.mrf.mxu0
  %v7778 = vadd.f32 0.0, %v7777
  %v7779 = vpop.f32.mrf.mxu0
  %7780 = vmatprep.mubr.f32.mxu0 0.0
  %7781 = vmatmul.mubr.f32.gmra.mxu0 %v7702
  %v7782 = vpop.f32.mrf.mxu0
  %v7783 = vadd.f32 0.0, %v7782
  %v7784 = vpop.f32.mrf.mxu0
  %7785 = vmatprep.mubr.f32.mxu0 0.0
  %7786 = vmatmul.mubr.f32.gmra.mxu0 %v7704
  %v7787 = vpop.f32.mrf.mxu0
  %v7788 = vadd.f32 0.0, %v7787
  %v7789 = vpop.f32.mrf.mxu0
  %7790 = vdwg.mxu0
  %v7791 = vadd.f32 %v7670, %v7773
  %v7792 = vadd.f32 %v7671, %v7778
  %v7793 = vadd.f32 %v7672, %v7783
  %v7794 = vadd.f32 %v7673, %v7788
  %v7795 = vld [vmem:[%s7674 + $0x1] sm:$0xf]
  %v7796 = vld [vmem:[%s7674 + $0x9] sm:$0xf]
  %v7797 = vld [vmem:[%s7674 + $0x11] sm:$0xf]
  %v7798 = vld [vmem:[%s7674 + $0x19] sm:$0xf]
  %v7799 = vld [vmem:[%s7674 + $0x29] sm:$0xf]
  %v7800 = vld [vmem:[%s7674 + $0x31] sm:$0xf]
  %v7801 = vld [vmem:[%s7674 + $0x39] sm:$0xf]
  %v7802 = vld [vmem:[%s7674 + $0x41] sm:$0xf]
  %s7803 = scalar_lea.vmem %s3, 112
  %v7804 = vld [vmem:[%s7803] sm:$0xff]
  %v7805 = vld [vmem:[%s7803 + $0x8] sm:$0xff]
  %v7814 = vcombine.low %v7795, %v7796
  %v7815 = vcombine.low %v7797, %v7798
  %v7816 = vcombine.low %v7799, %v7800
  %v7817 = vcombine.low %v7801, %v7802
  %v7818 = vsel %vm6995, %v7814, 0
  %v7820 = vsel %vm6995, %v7815, 0
  %v7822 = vsel %vm6995, %v7816, 0
  %v7824 = vsel %vm6995, %v7817, 0
  %7826 = vmatprep.subr.mxu0 0.0
  %7827 = vmatpush1.msra.mxu0 0.0
  %7828 = vmatprep.subr.mxu0 0.0
  %7829 = vmatpush1.msra.mxu0 0.0
  %7830 = vmatprep.subr.mxu0 0.0
  %7831 = vmatpush1.msra.mxu0 0.0
  %7832 = vmatprep.subr.mxu0 0.0
  %7833 = vmatpush1.msra.mxu0 0.0
  %7834 = vmatprep.subr.mxu0 0.0
  %7835 = vmatpush1.msra.mxu0 0.0
  %7836 = vmatprep.subr.mxu0 0.0
  %7837 = vmatpush1.msra.mxu0 0.0
  %7838 = vmatprep.subr.mxu0 0.0
  %7839 = vmatpush1.msra.mxu0 0.0
  %7840 = vmatprep.subr.mxu0 0.0
  %7841 = vmatpush1.msra.mxu0 0.0
  %7842 = vmatprep.subr.mxu0 0.0
  %7843 = vmatpush1.msra.mxu0 0.0
  %7844 = vmatprep.subr.mxu0 0.0
  %7845 = vmatpush1.msra.mxu0 0.0
  %7846 = vmatprep.subr.mxu0 0.0
  %7847 = vmatpush1.msra.mxu0 0.0
  %7848 = vmatprep.subr.mxu0 0.0
  %7849 = vmatpush1.msra.mxu0 0.0
  %7850 = vmatprep.subr.mxu0 0.0
  %7851 = vmatpush1.msra.mxu0 0.0
  %7852 = vmatprep.subr.mxu0 0.0
  %7853 = vmatpush1.msra.mxu0 0.0
  %7854 = vmatprep.subr.mxu0 0.0
  %7855 = vmatpush1.msra.mxu0 %v7805
  %7856 = vmatprep.subr.mxu0 0.0
  %7857 = vmatpush1.msra.mxu0 %v7804
  %7858 = vmatprep.subr.mxu0 0.0
  %7859 = vmatpush2.msra.mxu0 0.0
  %7860 = vmatprep.subr.mxu0 0.0
  %7861 = vmatpush2.msra.mxu0 0.0
  %7862 = vmatprep.subr.mxu0 0.0
  %7863 = vmatpush2.msra.mxu0 0.0
  %7864 = vmatprep.subr.mxu0 0.0
  %7865 = vmatpush2.msra.mxu0 0.0
  %7866 = vmatprep.subr.mxu0 0.0
  %7867 = vmatpush2.msra.mxu0 0.0
  %7868 = vmatprep.subr.mxu0 0.0
  %7869 = vmatpush2.msra.mxu0 0.0
  %7870 = vmatprep.subr.mxu0 0.0
  %7871 = vmatpush2.msra.mxu0 0.0
  %7872 = vmatprep.subr.mxu0 0.0
  %7873 = vmatpush2.msra.mxu0 0.0
  %7874 = vmatprep.subr.mxu0 0.0
  %7875 = vmatpush2.msra.mxu0 0.0
  %7876 = vmatprep.subr.mxu0 0.0
  %7877 = vmatpush2.msra.mxu0 0.0
  %7878 = vmatprep.subr.mxu0 0.0
  %7879 = vmatpush2.msra.mxu0 0.0
  %7880 = vmatprep.subr.mxu0 0.0
  %7881 = vmatpush2.msra.mxu0 0.0
  %7882 = vmatprep.subr.mxu0 0.0
  %7883 = vmatpush2.msra.mxu0 0.0
  %7884 = vmatprep.subr.mxu0 0.0
  %7885 = vmatpush2.msra.mxu0 0.0
  %7886 = vmatprep.subr.mxu0 0.0
  %7887 = vmatpush2.msra.mxu0 0.0
  %7888 = vmatprep.subr.mxu0 0.0
  %7889 = vmatpush2.msra.mxu0 0.0
  %7890 = vmatprep.mubr.f32.mxu0 0.0
  %7891 = vmatmul.mubr.f32.gmra.mxu0 %v7818
  %v7892 = vpop.f32.mrf.mxu0
  %v7893 = vadd.f32 0.0, %v7892
  %v7894 = vpop.f32.mrf.mxu0
  %7895 = vmatprep.mubr.f32.mxu0 0.0
  %7896 = vmatmul.mubr.f32.gmra.mxu0 %v7820
  %v7897 = vpop.f32.mrf.mxu0
  %v7898 = vadd.f32 0.0, %v7897
  %v7899 = vpop.f32.mrf.mxu0
  %7900 = vmatprep.mubr.f32.mxu0 0.0
  %7901 = vmatmul.mubr.f32.gmra.mxu0 %v7822
  %v7902 = vpop.f32.mrf.mxu0
  %v7903 = vadd.f32 0.0, %v7902
  %v7904 = vpop.f32.mrf.mxu0
  %7905 = vmatprep.mubr.f32.mxu0 0.0
  %7906 = vmatmul.mubr.f32.gmra.mxu0 %v7824
  %v7907 = vpop.f32.mrf.mxu0
  %v7908 = vadd.f32 0.0, %v7907
  %v7909 = vpop.f32.mrf.mxu0
  %7910 = vdwg.mxu0
  %v7911 = vadd.f32 %v7791, %v7893
  %v7912 = vadd.f32 %v7792, %v7898
  %v7913 = vadd.f32 %v7793, %v7903
  %v7914 = vadd.f32 %v7794, %v7908
  %v7915 = vld [vmem:[%s4] sm:$0x1]
  %v7917 = vlaneseq
  %v7918 = vshrl.u32 %v7917, 7
  %v7919 = vsub.s32 0, %v7918
  %v7920 = vrot.slane %v7915, %v7919
  %v7922 = vadd.f32 %v7911, %v7920
  %v7923 = vadd.f32 %v7912, %v7920
  %v7924 = vadd.f32 %v7913, %v7920
  %v7925 = vadd.f32 %v7914, %v7920
  %v7926 = vsel %vm6995, %v7922, 0.0
  %v7927 = vsel %vm6995, %v7923, 0.0
  %v7928 = vadd.f32 %v7926, %v7927
  %v7929 = vsel %vm6995, %v7924, 0.0
  %v7930 = vadd.f32 %v7928, %v7929
  %v7931 = vsel %vm6995, %v7925, 0.0
  %v7932 = vadd.f32 %v7930, %v7931
  %v7933 = vrot.slane %v7932, 4
  %v7934 = vadd.f32 %v7932, %v7933
  %v7935 = vrot.slane %v7934, 2
  %v7936 = vadd.f32 %v7934, %v7935
  %v7937 = vrot.slane %v7936, 1
  %v7938 = vadd.f32 %v7936, %v7937
  %v7939 = vmul.f32 %v7922, %v7922
  %v7940 = vmul.f32 %v7923, %v7923
  %v7941 = vmul.f32 %v7924, %v7924
  %v7942 = vmul.f32 %v7925, %v7925
  %v7943 = vsel %vm6995, %v7939, 0.0
  %v7944 = vsel %vm6995, %v7940, 0.0
  %v7945 = vadd.f32 %v7943, %v7944
  %v7946 = vsel %vm6995, %v7941, 0.0
  %v7947 = vadd.f32 %v7945, %v7946
  %v7948 = vsel %vm6995, %v7942, 0.0
  %v7949 = vadd.f32 %v7947, %v7948
  %v7950 = vrot.slane %v7949, 4
  %v7951 = vadd.f32 %v7949, %v7950
  %v7952 = vrot.slane %v7951, 2
  %v7953 = vadd.f32 %v7951, %v7952
  %v7954 = vrot.slane %v7953, 1
  %v7955 = vadd.f32 %v7953, %v7954
  %v7956 = vmul.f32 %v7938, 0.03125
  %v7957 = vmul.f32 %v7955, 0.03125
  %v7958 = vmul.f32 %v7956, %v7956
  %v7959 = vsub.f32 %v7957, %v7958
  %v7960 = vsub.f32 %v7922, %v7956
  %v7961 = vsub.f32 %v7923, %v7956
  %v7962 = vsub.f32 %v7924, %v7956
  %v7963 = vsub.f32 %v7925, %v7956
  %v7964 = vadd.f32 %v7959, 1e-05
  %v7965 = vrsqrt.pop %v7964
  %v7966 = vmul.f32 %v7960, %v7965
  %v7967 = vmul.f32 %v7961, %v7965
  %v7968 = vmul.f32 %v7962, %v7965
  %v7969 = vmul.f32 %v7963, %v7965
  %v7970 = vld [vmem:[%s5] sm:$0x1]
  %v7972 = vlaneseq
  %v7973 = vshrl.u32 %v7972, 7
  %v7974 = vsub.s32 0, %v7973
  %v7975 = vrot.slane %v7970, %v7974
  %v7977 = vmul.f32 %v7966, %v7975
  %v7978 = vmul.f32 %v7967, %v7975
  %v7979 = vmul.f32 %v7968, %v7975
  %v7980 = vmul.f32 %v7969, %v7975
  %v7981 = vld [vmem:[%s6] sm:$0x1]
  %v7983 = vlaneseq
  %v7984 = vshrl.u32 %v7983, 7
  %v7985 = vsub.s32 0, %v7984
  %v7986 = vrot.slane %v7981, %v7985
  %v7988 = vadd.f32 %v7977, %v7986
  %v7989 = vadd.f32 %v7978, %v7986
  %v7990 = vadd.f32 %v7979, %v7986
  %v7991 = vadd.f32 %v7980, %v7986
  %vm7992 = vcmp.ge.f32.partialorder %v7988, 0.0
  %vm7993 = vcmp.ge.f32.partialorder %v7989, 0.0
  %vm7994 = vcmp.ge.f32.partialorder %v7990, 0.0
  %vm7995 = vcmp.ge.f32.partialorder %v7991, 0.0
  %v7996 = vmul.f32 %v7988, 0.2
  %v7997 = vmul.f32 %v7989, 0.2
  %v7998 = vmul.f32 %v7990, 0.2
  %v7999 = vmul.f32 %v7991, 0.2
  %v8000 = vsel %vm7992, %v7988, %v7996
  %v8001 = vsel %vm7993, %v7989, %v7997
  %v8002 = vsel %vm7994, %v7990, %v7998
  %v8003 = vsel %vm7995, %v7991, %v7999
  %v8008 = vcombine.high %v8000, %v8000
  %v8010 = vunpack.c.l.s4 1983009808
  %v8011 = vunpack.c.0.s8 %v8010
  %v8012 = vlaneseq
  %v8013 = vshrl.u32 %v8012, 7
  %v8014 = vsub.s32 %v8011, %v8013
  %v8015 = vrot.slane %v8000, %v8014
  %v8017 = vunpack.c.l.s4 1983009808
  %v8018 = vunpack.c.0.s8 %v8017
  %v8019 = vlaneseq
  %v8020 = vshrl.u32 %v8019, 7
  %v8021 = vsub.s32 %v8018, %v8020
  %v8022 = vrot.slane %v8008, %v8021
  %v8023 = vcombine.high %v8015, %v8015
  %v8024 = vcombine.high %v8022, %v8022
  %v8025 = vcombine.high %v8001, %v8001
  %v8027 = vunpack.c.l.s4 1983009808
  %v8028 = vunpack.c.0.s8 %v8027
  %v8029 = vlaneseq
  %v8030 = vshrl.u32 %v8029, 7
  %v8031 = vsub.s32 %v8028, %v8030
  %v8032 = vrot.slane %v8001, %v8031
  %v8034 = vunpack.c.l.s4 1983009808
  %v8035 = vunpack.c.0.s8 %v8034
  %v8036 = vlaneseq
  %v8037 = vshrl.u32 %v8036, 7
  %v8038 = vsub.s32 %v8035, %v8037
  %v8039 = vrot.slane %v8025, %v8038
  %v8040 = vcombine.high %v8032, %v8032
  %v8041 = vcombine.high %v8039, %v8039
  %v8042 = vcombine.high %v8002, %v8002
  %v8044 = vunpack.c.l.s4 1983009808
  %v8045 = vunpack.c.0.s8 %v8044
  %v8046 = vlaneseq
  %v8047 = vshrl.u32 %v8046, 7
  %v8048 = vsub.s32 %v8045, %v8047
  %v8049 = vrot.slane %v8002, %v8048
  %v8051 = vunpack.c.l.s4 1983009808
  %v8052 = vunpack.c.0.s8 %v8051
  %v8053 = vlaneseq
  %v8054 = vshrl.u32 %v8053, 7
  %v8055 = vsub.s32 %v8052, %v8054
  %v8056 = vrot.slane %v8042, %v8055
  %v8057 = vcombine.high %v8049, %v8049
  %v8058 = vcombine.high %v8056, %v8056
  %v8059 = vcombine.high %v8003, %v8003
  %v8061 = vunpack.c.l.s4 1983009808
  %v8062 = vunpack.c.0.s8 %v8061
  %v8063 = vlaneseq
  %v8064 = vshrl.u32 %v8063, 7
  %v8065 = vsub.s32 %v8062, %v8064
  %v8066 = vrot.slane %v8003, %v8065
  %v8068 = vunpack.c.l.s4 1983009808
  %v8069 = vunpack.c.0.s8 %v8068
  %v8070 = vlaneseq
  %v8071 = vshrl.u32 %v8070, 7
  %v8072 = vsub.s32 %v8069, %v8071
  %v8073 = vrot.slane %v8059, %v8072
  %v8074 = vcombine.high %v8066, %v8066
  %v8075 = vcombine.high %v8073, %v8073
  %v8076 = vlaneseq
  %v8077 = vshrl.u32 %v8076, 7
  %v8078 = vsub.s32 0, %v8077
  %v8079 = vrot.slane %v8015, %v8078
  %v8080 = vlaneseq
  %v8081 = vshrl.u32 %v8080, 7
  %v8082 = vsub.s32 0, %v8081
  %v8083 = vrot.slane %v8023, %v8082
  %v8084 = vlaneseq
  %v8085 = vshrl.u32 %v8084, 7
  %v8086 = vsub.s32 0, %v8085
  %v8087 = vrot.slane %v8032, %v8086
  %v8088 = vlaneseq
  %v8089 = vshrl.u32 %v8088, 7
  %v8090 = vsub.s32 0, %v8089
  %v8091 = vrot.slane %v8040, %v8090
  %v8092 = vlaneseq
  %v8093 = vshrl.u32 %v8092, 7
  %v8094 = vsub.s32 0, %v8093
  %v8095 = vrot.slane %v8049, %v8094
  %v8096 = vlaneseq
  %v8097 = vshrl.u32 %v8096, 7
  %v8098 = vsub.s32 0, %v8097
  %v8099 = vrot.slane %v8057, %v8098
  %v8100 = vlaneseq
  %v8101 = vshrl.u32 %v8100, 7
  %v8102 = vsub.s32 0, %v8101
  %v8103 = vrot.slane %v8066, %v8102
  %v8104 = vlaneseq
  %v8105 = vshrl.u32 %v8104, 7
  %v8106 = vsub.s32 0, %v8105
  %v8107 = vrot.slane %v8074, %v8106
  %v8108 = vsel %vm1891, %v8083, %v8079
  %v8109 = vsel %vm1891, %v8091, %v8087
  %v8110 = vsel %vm1891, %v8099, %v8095
  %v8111 = vsel %vm1891, %v8107, %v8103
  %8112 = vrot.lane.b32.xlu0 %v8108, 16
  %v8113 = vpop.permute.xlu0 %8112
  %8114 = vrot.lane.b32.xlu0 %v8109, 16
  %v8115 = vpop.permute.xlu0 %8114
  %8116 = vrot.lane.b32.xlu0 %v8110, 16
  %v8117 = vpop.permute.xlu0 %8116
  %8118 = vrot.lane.b32.xlu0 %v8111, 16
  %v8119 = vpop.permute.xlu0 %8118
  %s8124 = scalar_lea.vmem [#allocation4], 24
  %vm8125 = vcmask 255104
  %8126 = vst.msk [vmem:[%s8124] sm:$0x3] %vm8125, %v8113
  %8127 = vst.msk [vmem:[%s8124 + $0x4] sm:$0x3] %vm8125, %v8115
  %8128 = vst.msk [vmem:[%s8124 + $0xc] sm:$0x3] %vm8125, %v8117
  %8129 = vst.msk [vmem:[%s8124 + $0x10] sm:$0x3] %vm8125, %v8119
  %v8130 = vlaneseq
  %v8131 = vshrl.u32 %v8130, 7
  %v8132 = vsub.s32 1, %v8131
  %v8133 = vrot.slane %v8015, %v8132
  %v8134 = vlaneseq
  %v8135 = vshrl.u32 %v8134, 7
  %v8136 = vsub.s32 1, %v8135
  %v8137 = vrot.slane %v8023, %v8136
  %v8138 = vlaneseq
  %v8139 = vshrl.u32 %v8138, 7
  %v8140 = vsub.s32 1, %v8139
  %v8141 = vrot.slane %v8032, %v8140
  %v8142 = vlaneseq
  %v8143 = vshrl.u32 %v8142, 7
  %v8144 = vsub.s32 1, %v8143
  %v8145 = vrot.slane %v8040, %v8144
  %v8146 = vlaneseq
  %v8147 = vshrl.u32 %v8146, 7
  %v8148 = vsub.s32 1, %v8147
  %v8149 = vrot.slane %v8049, %v8148
  %v8150 = vlaneseq
  %v8151 = vshrl.u32 %v8150, 7
  %v8152 = vsub.s32 1, %v8151
  %v8153 = vrot.slane %v8057, %v8152
  %v8154 = vlaneseq
  %v8155 = vshrl.u32 %v8154, 7
  %v8156 = vsub.s32 1, %v8155
  %v8157 = vrot.slane %v8066, %v8156
  %v8158 = vlaneseq
  %v8159 = vshrl.u32 %v8158, 7
  %v8160 = vsub.s32 1, %v8159
  %v8161 = vrot.slane %v8074, %v8160
  %v8162 = vsel %vm1893, %v8137, %v8133
  %v8163 = vsel %vm1893, %v8145, %v8141
  %v8164 = vsel %vm1893, %v8153, %v8149
  %v8165 = vsel %vm1893, %v8161, %v8157
  %vm8170 = vcmask 124929
  %8171 = vst.msk [vmem:[%s8124] sm:$0x6] %vm8170, %v8162
  %8172 = vst.msk [vmem:[%s8124 + $0x4] sm:$0x6] %vm8170, %v8163
  %8173 = vst.msk [vmem:[%s8124 + $0xc] sm:$0x6] %vm8170, %v8164
  %8174 = vst.msk [vmem:[%s8124 + $0x10] sm:$0x6] %vm8170, %v8165
  %v8175 = vlaneseq
  %v8176 = vshrl.u32 %v8175, 7
  %v8177 = vsub.s32 0, %v8176
  %v8178 = vrot.slane %v8022, %v8177
  %v8179 = vlaneseq
  %v8180 = vshrl.u32 %v8179, 7
  %v8181 = vsub.s32 0, %v8180
  %v8182 = vrot.slane %v8024, %v8181
  %v8183 = vlaneseq
  %v8184 = vshrl.u32 %v8183, 7
  %v8185 = vsub.s32 0, %v8184
  %v8186 = vrot.slane %v8039, %v8185
  %v8187 = vlaneseq
  %v8188 = vshrl.u32 %v8187, 7
  %v8189 = vsub.s32 0, %v8188
  %v8190 = vrot.slane %v8041, %v8189
  %v8191 = vlaneseq
  %v8192 = vshrl.u32 %v8191, 7
  %v8193 = vsub.s32 0, %v8192
  %v8194 = vrot.slane %v8056, %v8193
  %v8195 = vlaneseq
  %v8196 = vshrl.u32 %v8195, 7
  %v8197 = vsub.s32 0, %v8196
  %v8198 = vrot.slane %v8058, %v8197
  %v8199 = vlaneseq
  %v8200 = vshrl.u32 %v8199, 7
  %v8201 = vsub.s32 0, %v8200
  %v8202 = vrot.slane %v8073, %v8201
  %v8203 = vlaneseq
  %v8204 = vshrl.u32 %v8203, 7
  %v8205 = vsub.s32 0, %v8204
  %v8206 = vrot.slane %v8075, %v8205
  %v8207 = vsel %vm1891, %v8182, %v8178
  %v8208 = vsel %vm1891, %v8190, %v8186
  %v8209 = vsel %vm1891, %v8198, %v8194
  %v8210 = vsel %vm1891, %v8206, %v8202
  %8211 = vrot.lane.b32.xlu0 %v8207, 16
  %v8212 = vpop.permute.xlu0 %8211
  %8213 = vrot.lane.b32.xlu0 %v8208, 16
  %v8214 = vpop.permute.xlu0 %8213
  %8215 = vrot.lane.b32.xlu0 %v8209, 16
  %v8216 = vpop.permute.xlu0 %8215
  %8217 = vrot.lane.b32.xlu0 %v8210, 16
  %v8218 = vpop.permute.xlu0 %8217
  %s8223 = scalar_lea.vmem [#allocation4], 4
  %8224 = vst.msk [vmem:[%s8223] sm:$0x3] %vm8125, %v8212
  %8225 = vst.msk [vmem:[%s8223 + $0x4] sm:$0x3] %vm8125, %v8214
  %8226 = vst.msk [vmem:[%s8223 + $0xc] sm:$0x3] %vm8125, %v8216
  %8227 = vst.msk [vmem:[%s8223 + $0x10] sm:$0x3] %vm8125, %v8218
  %v8228 = vlaneseq
  %v8229 = vshrl.u32 %v8228, 7
  %v8230 = vsub.s32 1, %v8229
  %v8231 = vrot.slane %v8022, %v8230
  %v8232 = vlaneseq
  %v8233 = vshrl.u32 %v8232, 7
  %v8234 = vsub.s32 1, %v8233
  %v8235 = vrot.slane %v8024, %v8234
  %v8236 = vlaneseq
  %v8237 = vshrl.u32 %v8236, 7
  %v8238 = vsub.s32 1, %v8237
  %v8239 = vrot.slane %v8039, %v8238
  %v8240 = vlaneseq
  %v8241 = vshrl.u32 %v8240, 7
  %v8242 = vsub.s32 1, %v8241
  %v8243 = vrot.slane %v8041, %v8242
  %v8244 = vlaneseq
  %v8245 = vshrl.u32 %v8244, 7
  %v8246 = vsub.s32 1, %v8245
  %v8247 = vrot.slane %v8056, %v8246
  %v8248 = vlaneseq
  %v8249 = vshrl.u32 %v8248, 7
  %v8250 = vsub.s32 1, %v8249
  %v8251 = vrot.slane %v8058, %v8250
  %v8252 = vlaneseq
  %v8253 = vshrl.u32 %v8252, 7
  %v8254 = vsub.s32 1, %v8253
  %v8255 = vrot.slane %v8073, %v8254
  %v8256 = vlaneseq
  %v8257 = vshrl.u32 %v8256, 7
  %v8258 = vsub.s32 1, %v8257
  %v8259 = vrot.slane %v8075, %v8258
  %v8260 = vsel %vm1893, %v8235, %v8231
  %v8261 = vsel %vm1893, %v8243, %v8239
  %v8262 = vsel %vm1893, %v8251, %v8247
  %v8263 = vsel %vm1893, %v8259, %v8255
  %8268 = vst.msk [vmem:[%s8223] sm:$0x6] %vm8170, %v8260
  %8269 = vst.msk [vmem:[%s8223 + $0x4] sm:$0x6] %vm8170, %v8261
  %8270 = vst.msk [vmem:[%s8223 + $0xc] sm:$0x6] %vm8170, %v8262
  %8271 = vst.msk [vmem:[%s8223 + $0x10] sm:$0x6] %vm8170, %v8263
  %v8272 = vld [vmem:[#allocation4] sm:$0x3]
  %v8273 = vld [vmem:[#allocation4 + $0x4] sm:$0x3]
  %v8274 = vld [vmem:[#allocation4 + $0xc] sm:$0x3]
  %v8275 = vld [vmem:[#allocation4 + $0x10] sm:$0x3]
  %v8276 = vld [vmem:[%s7] sm:$0xff]
  %v8277 = vld [vmem:[%s7 + $0x8] sm:$0xff]
  %v8278 = vld [vmem:[%s7 + $0x10] sm:$0xff]
  %v8279 = vld [vmem:[%s7 + $0x18] sm:$0xff]
  %v8280 = vld [vmem:[#allocation4 + $0x1] sm:$0x3]
  %v8281 = vld [vmem:[#allocation4 + $0x5] sm:$0x3]
  %v8282 = vld [vmem:[#allocation4 + $0xd] sm:$0x3]
  %v8283 = vld [vmem:[#allocation4 + $0x11] sm:$0x3]
  %s8284 = scalar_lea.vmem %s7, 32
  %v8285 = vld [vmem:[%s8284] sm:$0xff]
  %v8286 = vld [vmem:[%s8284 + $0x8] sm:$0xff]
  %v8287 = vld [vmem:[%s8284 + $0x10] sm:$0xff]
  %v8288 = vld [vmem:[%s8284 + $0x18] sm:$0xff]
  %v8293 = vcombine.low %v8280, %v8281
  %v8294 = vcombine.low %v8282, %v8283
  %v8296 = vunpack.c.l.s4 1983009808
  %v8297 = vunpack.c.0.s8 %v8296
  %v8298 = vlaneseq
  %v8299 = vshrl.u32 %v8298, 7
  %v8300 = vsub.s32 %v8297, %v8299
  %v8301 = vrot.slane %v8293, %v8300
  %v8303 = vunpack.c.l.s4 1983009808
  %v8304 = vunpack.c.0.s8 %v8303
  %v8305 = vlaneseq
  %v8306 = vshrl.u32 %v8305, 7
  %v8307 = vsub.s32 %v8304, %v8306
  %v8308 = vrot.slane %v8294, %v8307
  %v8309 = vcombine.low %v8301, %v8308
  %vm8310 = vcmask 261120
  %v8311 = vsel %vm8310, %v8309, 0
  %8313 = vmatprep.subr.mxu0 0.0
  %8314 = vmatpush1.msra.mxu0 0.0
  %8315 = vmatprep.subr.mxu0 0.0
  %8316 = vmatpush1.msra.mxu0 0.0
  %8317 = vmatprep.subr.mxu0 0.0
  %8318 = vmatpush1.msra.mxu0 0.0
  %8319 = vmatprep.subr.mxu0 0.0
  %8320 = vmatpush1.msra.mxu0 0.0
  %8321 = vmatprep.subr.mxu0 0.0
  %8322 = vmatpush1.msra.mxu0 0.0
  %8323 = vmatprep.subr.mxu0 0.0
  %8324 = vmatpush1.msra.mxu0 0.0
  %8325 = vmatprep.subr.mxu0 0.0
  %8326 = vmatpush1.msra.mxu0 0.0
  %8327 = vmatprep.subr.mxu0 0.0
  %8328 = vmatpush1.msra.mxu0 0.0
  %8329 = vmatprep.subr.mxu0 0.0
  %8330 = vmatpush1.msra.mxu0 0.0
  %8331 = vmatprep.subr.mxu0 0.0
  %8332 = vmatpush1.msra.mxu0 0.0
  %8333 = vmatprep.subr.mxu0 0.0
  %8334 = vmatpush1.msra.mxu0 0.0
  %8335 = vmatprep.subr.mxu0 0.0
  %8336 = vmatpush1.msra.mxu0 0.0
  %8337 = vmatprep.subr.mxu0 0.0
  %8338 = vmatpush1.msra.mxu0 %v8288
  %8339 = vmatprep.subr.mxu0 0.0
  %8340 = vmatpush1.msra.mxu0 %v8287
  %8341 = vmatprep.subr.mxu0 0.0
  %8342 = vmatpush1.msra.mxu0 %v8286
  %8343 = vmatprep.subr.mxu0 0.0
  %8344 = vmatpush1.msra.mxu0 %v8285
  %8345 = vmatprep.subr.mxu0 0.0
  %8346 = vmatpush2.msra.mxu0 0.0
  %8347 = vmatprep.subr.mxu0 0.0
  %8348 = vmatpush2.msra.mxu0 0.0
  %8349 = vmatprep.subr.mxu0 0.0
  %8350 = vmatpush2.msra.mxu0 0.0
  %8351 = vmatprep.subr.mxu0 0.0
  %8352 = vmatpush2.msra.mxu0 0.0
  %8353 = vmatprep.subr.mxu0 0.0
  %8354 = vmatpush2.msra.mxu0 0.0
  %8355 = vmatprep.subr.mxu0 0.0
  %8356 = vmatpush2.msra.mxu0 0.0
  %8357 = vmatprep.subr.mxu0 0.0
  %8358 = vmatpush2.msra.mxu0 0.0
  %8359 = vmatprep.subr.mxu0 0.0
  %8360 = vmatpush2.msra.mxu0 0.0
  %8361 = vmatprep.subr.mxu0 0.0
  %8362 = vmatpush2.msra.mxu0 0.0
  %8363 = vmatprep.subr.mxu0 0.0
  %8364 = vmatpush2.msra.mxu0 0.0
  %8365 = vmatprep.subr.mxu0 0.0
  %8366 = vmatpush2.msra.mxu0 0.0
  %8367 = vmatprep.subr.mxu0 0.0
  %8368 = vmatpush2.msra.mxu0 0.0
  %8369 = vmatprep.subr.mxu0 0.0
  %8370 = vmatpush2.msra.mxu0 0.0
  %8371 = vmatprep.subr.mxu0 0.0
  %8372 = vmatpush2.msra.mxu0 0.0
  %8373 = vmatprep.subr.mxu0 0.0
  %8374 = vmatpush2.msra.mxu0 0.0
  %8375 = vmatprep.subr.mxu0 0.0
  %8376 = vmatpush2.msra.mxu0 0.0
  %8377 = vmatprep.mubr.f32.mxu0 0.0
  %8378 = vmatmul.mubr.f32.gmra.mxu0 %v8311
  %v8379 = vpop.f32.mrf.mxu0
  %v8380 = vadd.f32 0.0, %v8379
  %v8381 = vpop.f32.mrf.mxu0
  %8382 = vdwg.mxu0
  %v8387 = vcombine.low %v8272, %v8273
  %v8388 = vcombine.low %v8274, %v8275
  %v8390 = vunpack.c.l.s4 1983009808
  %v8391 = vunpack.c.0.s8 %v8390
  %v8392 = vlaneseq
  %v8393 = vshrl.u32 %v8392, 7
  %v8394 = vsub.s32 %v8391, %v8393
  %v8395 = vrot.slane %v8387, %v8394
  %v8397 = vunpack.c.l.s4 1983009808
  %v8398 = vunpack.c.0.s8 %v8397
  %v8399 = vlaneseq
  %v8400 = vshrl.u32 %v8399, 7
  %v8401 = vsub.s32 %v8398, %v8400
  %v8402 = vrot.slane %v8388, %v8401
  %v8403 = vcombine.low %v8395, %v8402
  %v8404 = vsel %vm8310, %v8403, 0
  %8406 = vmatprep.subr.mxu0 0.0
  %8407 = vmatpush1.msra.mxu0 0.0
  %8408 = vmatprep.subr.mxu0 0.0
  %8409 = vmatpush1.msra.mxu0 0.0
  %8410 = vmatprep.subr.mxu0 0.0
  %8411 = vmatpush1.msra.mxu0 0.0
  %8412 = vmatprep.subr.mxu0 0.0
  %8413 = vmatpush1.msra.mxu0 0.0
  %8414 = vmatprep.subr.mxu0 0.0
  %8415 = vmatpush1.msra.mxu0 0.0
  %8416 = vmatprep.subr.mxu0 0.0
  %8417 = vmatpush1.msra.mxu0 0.0
  %8418 = vmatprep.subr.mxu0 0.0
  %8419 = vmatpush1.msra.mxu0 0.0
  %8420 = vmatprep.subr.mxu0 0.0
  %8421 = vmatpush1.msra.mxu0 0.0
  %8422 = vmatprep.subr.mxu0 0.0
  %8423 = vmatpush1.msra.mxu0 0.0
  %8424 = vmatprep.subr.mxu0 0.0
  %8425 = vmatpush1.msra.mxu0 0.0
  %8426 = vmatprep.subr.mxu0 0.0
  %8427 = vmatpush1.msra.mxu0 0.0
  %8428 = vmatprep.subr.mxu0 0.0
  %8429 = vmatpush1.msra.mxu0 0.0
  %8430 = vmatprep.subr.mxu0 0.0
  %8431 = vmatpush1.msra.mxu0 %v8279
  %8432 = vmatprep.subr.mxu0 0.0
  %8433 = vmatpush1.msra.mxu0 %v8278
  %8434 = vmatprep.subr.mxu0 0.0
  %8435 = vmatpush1.msra.mxu0 %v8277
  %8436 = vmatprep.subr.mxu0 0.0
  %8437 = vmatpush1.msra.mxu0 %v8276
  %8438 = vmatprep.subr.mxu0 0.0
  %8439 = vmatpush2.msra.mxu0 0.0
  %8440 = vmatprep.subr.mxu0 0.0
  %8441 = vmatpush2.msra.mxu0 0.0
  %8442 = vmatprep.subr.mxu0 0.0
  %8443 = vmatpush2.msra.mxu0 0.0
  %8444 = vmatprep.subr.mxu0 0.0
  %8445 = vmatpush2.msra.mxu0 0.0
  %8446 = vmatprep.subr.mxu0 0.0
  %8447 = vmatpush2.msra.mxu0 0.0
  %8448 = vmatprep.subr.mxu0 0.0
  %8449 = vmatpush2.msra.mxu0 0.0
  %8450 = vmatprep.subr.mxu0 0.0
  %8451 = vmatpush2.msra.mxu0 0.0
  %8452 = vmatprep.subr.mxu0 0.0
  %8453 = vmatpush2.msra.mxu0 0.0
  %8454 = vmatprep.subr.mxu0 0.0
  %8455 = vmatpush2.msra.mxu0 0.0
  %8456 = vmatprep.subr.mxu0 0.0
  %8457 = vmatpush2.msra.mxu0 0.0
  %8458 = vmatprep.subr.mxu0 0.0
  %8459 = vmatpush2.msra.mxu0 0.0
  %8460 = vmatprep.subr.mxu0 0.0
  %8461 = vmatpush2.msra.mxu0 0.0
  %8462 = vmatprep.subr.mxu0 0.0
  %8463 = vmatpush2.msra.mxu0 0.0
  %8464 = vmatprep.subr.mxu0 0.0
  %8465 = vmatpush2.msra.mxu0 0.0
  %8466 = vmatprep.subr.mxu0 0.0
  %8467 = vmatpush2.msra.mxu0 0.0
  %8468 = vmatprep.subr.mxu0 0.0
  %8469 = vmatpush2.msra.mxu0 0.0
  %8470 = vmatprep.mubr.f32.mxu0 0.0
  %8471 = vmatmul.mubr.f32.gmra.mxu0 %v8404
  %v8472 = vpop.f32.mrf.mxu0
  %v8473 = vadd.f32 %v8380, %v8472
  %v8474 = vpop.f32.mrf.mxu0
  %8475 = vdwg.mxu0
  %v8476 = vld [vmem:[%s8124] sm:$0x3]
  %v8477 = vld [vmem:[%s8124 + $0x4] sm:$0x3]
  %v8478 = vld [vmem:[%s8124 + $0xc] sm:$0x3]
  %v8479 = vld [vmem:[%s8124 + $0x10] sm:$0x3]
  %s8480 = scalar_lea.vmem %s7, 64
  %v8481 = vld [vmem:[%s8480] sm:$0xff]
  %v8482 = vld [vmem:[%s8480 + $0x8] sm:$0xff]
  %v8483 = vld [vmem:[%s8480 + $0x10] sm:$0xff]
  %v8484 = vld [vmem:[%s8480 + $0x18] sm:$0xff]
  %v8489 = vcombine.low %v8476, %v8477
  %v8490 = vcombine.low %v8478, %v8479
  %v8492 = vunpack.c.l.s4 1983009808
  %v8493 = vunpack.c.0.s8 %v8492
  %v8494 = vlaneseq
  %v8495 = vshrl.u32 %v8494, 7
  %v8496 = vsub.s32 %v8493, %v8495
  %v8497 = vrot.slane %v8489, %v8496
  %v8499 = vunpack.c.l.s4 1983009808
  %v8500 = vunpack.c.0.s8 %v8499
  %v8501 = vlaneseq
  %v8502 = vshrl.u32 %v8501, 7
  %v8503 = vsub.s32 %v8500, %v8502
  %v8504 = vrot.slane %v8490, %v8503
  %v8505 = vcombine.low %v8497, %v8504
  %v8506 = vsel %vm8310, %v8505, 0
  %8508 = vmatprep.subr.mxu0 0.0
  %8509 = vmatpush1.msra.mxu0 0.0
  %8510 = vmatprep.subr.mxu0 0.0
  %8511 = vmatpush1.msra.mxu0 0.0
  %8512 = vmatprep.subr.mxu0 0.0
  %8513 = vmatpush1.msra.mxu0 0.0
  %8514 = vmatprep.subr.mxu0 0.0
  %8515 = vmatpush1.msra.mxu0 0.0
  %8516 = vmatprep.subr.mxu0 0.0
  %8517 = vmatpush1.msra.mxu0 0.0
  %8518 = vmatprep.subr.mxu0 0.0
  %8519 = vmatpush1.msra.mxu0 0.0
  %8520 = vmatprep.subr.mxu0 0.0
  %8521 = vmatpush1.msra.mxu0 0.0
  %8522 = vmatprep.subr.mxu0 0.0
  %8523 = vmatpush1.msra.mxu0 0.0
  %8524 = vmatprep.subr.mxu0 0.0
  %8525 = vmatpush1.msra.mxu0 0.0
  %8526 = vmatprep.subr.mxu0 0.0
  %8527 = vmatpush1.msra.mxu0 0.0
  %8528 = vmatprep.subr.mxu0 0.0
  %8529 = vmatpush1.msra.mxu0 0.0
  %8530 = vmatprep.subr.mxu0 0.0
  %8531 = vmatpush1.msra.mxu0 0.0
  %8532 = vmatprep.subr.mxu0 0.0
  %8533 = vmatpush1.msra.mxu0 %v8484
  %8534 = vmatprep.subr.mxu0 0.0
  %8535 = vmatpush1.msra.mxu0 %v8483
  %8536 = vmatprep.subr.mxu0 0.0
  %8537 = vmatpush1.msra.mxu0 %v8482
  %8538 = vmatprep.subr.mxu0 0.0
  %8539 = vmatpush1.msra.mxu0 %v8481
  %8540 = vmatprep.subr.mxu0 0.0
  %8541 = vmatpush2.msra.mxu0 0.0
  %8542 = vmatprep.subr.mxu0 0.0
  %8543 = vmatpush2.msra.mxu0 0.0
  %8544 = vmatprep.subr.mxu0 0.0
  %8545 = vmatpush2.msra.mxu0 0.0
  %8546 = vmatprep.subr.mxu0 0.0
  %8547 = vmatpush2.msra.mxu0 0.0
  %8548 = vmatprep.subr.mxu0 0.0
  %8549 = vmatpush2.msra.mxu0 0.0
  %8550 = vmatprep.subr.mxu0 0.0
  %8551 = vmatpush2.msra.mxu0 0.0
  %8552 = vmatprep.subr.mxu0 0.0
  %8553 = vmatpush2.msra.mxu0 0.0
  %8554 = vmatprep.subr.mxu0 0.0
  %8555 = vmatpush2.msra.mxu0 0.0
  %8556 = vmatprep.subr.mxu0 0.0
  %8557 = vmatpush2.msra.mxu0 0.0
  %8558 = vmatprep.subr.mxu0 0.0
  %8559 = vmatpush2.msra.mxu0 0.0
  %8560 = vmatprep.subr.mxu0 0.0
  %8561 = vmatpush2.msra.mxu0 0.0
  %8562 = vmatprep.subr.mxu0 0.0
  %8563 = vmatpush2.msra.mxu0 0.0
  %8564 = vmatprep.subr.mxu0 0.0
  %8565 = vmatpush2.msra.mxu0 0.0
  %8566 = vmatprep.subr.mxu0 0.0
  %8567 = vmatpush2.msra.mxu0 0.0
  %8568 = vmatprep.subr.mxu0 0.0
  %8569 = vmatpush2.msra.mxu0 0.0
  %8570 = vmatprep.subr.mxu0 0.0
  %8571 = vmatpush2.msra.mxu0 0.0
  %8572 = vmatprep.mubr.f32.mxu0 0.0
  %8573 = vmatmul.mubr.f32.gmra.mxu0 %v8506
  %v8574 = vpop.f32.mrf.mxu0
  %v8575 = vadd.f32 0.0, %v8574
  %v8576 = vpop.f32.mrf.mxu0
  %8577 = vdwg.mxu0
  %v8578 = vadd.f32 %v8473, %v8575
  %v8579 = vld [vmem:[%s8124 + $0x1] sm:$0x3]
  %v8580 = vld [vmem:[%s8124 + $0x5] sm:$0x3]
  %v8581 = vld [vmem:[%s8124 + $0xd] sm:$0x3]
  %v8582 = vld [vmem:[%s8124 + $0x11] sm:$0x3]
  %s8583 = scalar_lea.vmem %s7, 96
  %v8584 = vld [vmem:[%s8583] sm:$0xff]
  %v8585 = vld [vmem:[%s8583 + $0x8] sm:$0xff]
  %v8586 = vld [vmem:[%s8583 + $0x10] sm:$0xff]
  %v8587 = vld [vmem:[%s8583 + $0x18] sm:$0xff]
  %v8592 = vcombine.low %v8579, %v8580
  %v8593 = vcombine.low %v8581, %v8582
  %v8595 = vunpack.c.l.s4 1983009808
  %v8596 = vunpack.c.0.s8 %v8595
  %v8597 = vlaneseq
  %v8598 = vshrl.u32 %v8597, 7
  %v8599 = vsub.s32 %v8596, %v8598
  %v8600 = vrot.slane %v8592, %v8599
  %v8602 = vunpack.c.l.s4 1983009808
  %v8603 = vunpack.c.0.s8 %v8602
  %v8604 = vlaneseq
  %v8605 = vshrl.u32 %v8604, 7
  %v8606 = vsub.s32 %v8603, %v8605
  %v8607 = vrot.slane %v8593, %v8606
  %v8608 = vcombine.low %v8600, %v8607
  %v8609 = vsel %vm8310, %v8608, 0
  %8611 = vmatprep.subr.mxu0 0.0
  %8612 = vmatpush1.msra.mxu0 0.0
  %8613 = vmatprep.subr.mxu0 0.0
  %8614 = vmatpush1.msra.mxu0 0.0
  %8615 = vmatprep.subr.mxu0 0.0
  %8616 = vmatpush1.msra.mxu0 0.0
  %8617 = vmatprep.subr.mxu0 0.0
  %8618 = vmatpush1.msra.mxu0 0.0
  %8619 = vmatprep.subr.mxu0 0.0
  %8620 = vmatpush1.msra.mxu0 0.0
  %8621 = vmatprep.subr.mxu0 0.0
  %8622 = vmatpush1.msra.mxu0 0.0
  %8623 = vmatprep.subr.mxu0 0.0
  %8624 = vmatpush1.msra.mxu0 0.0
  %8625 = vmatprep.subr.mxu0 0.0
  %8626 = vmatpush1.msra.mxu0 0.0
  %8627 = vmatprep.subr.mxu0 0.0
  %8628 = vmatpush1.msra.mxu0 0.0
  %8629 = vmatprep.subr.mxu0 0.0
  %8630 = vmatpush1.msra.mxu0 0.0
  %8631 = vmatprep.subr.mxu0 0.0
  %8632 = vmatpush1.msra.mxu0 0.0
  %8633 = vmatprep.subr.mxu0 0.0
  %8634 = vmatpush1.msra.mxu0 0.0
  %8635 = vmatprep.subr.mxu0 0.0
  %8636 = vmatpush1.msra.mxu0 %v8587
  %8637 = vmatprep.subr.mxu0 0.0
  %8638 = vmatpush1.msra.mxu0 %v8586
  %8639 = vmatprep.subr.mxu0 0.0
  %8640 = vmatpush1.msra.mxu0 %v8585
  %8641 = vmatprep.subr.mxu0 0.0
  %8642 = vmatpush1.msra.mxu0 %v8584
  %8643 = vmatprep.subr.mxu0 0.0
  %8644 = vmatpush2.msra.mxu0 0.0
  %8645 = vmatprep.subr.mxu0 0.0
  %8646 = vmatpush2.msra.mxu0 0.0
  %8647 = vmatprep.subr.mxu0 0.0
  %8648 = vmatpush2.msra.mxu0 0.0
  %8649 = vmatprep.subr.mxu0 0.0
  %8650 = vmatpush2.msra.mxu0 0.0
  %8651 = vmatprep.subr.mxu0 0.0
  %8652 = vmatpush2.msra.mxu0 0.0
  %8653 = vmatprep.subr.mxu0 0.0
  %8654 = vmatpush2.msra.mxu0 0.0
  %8655 = vmatprep.subr.mxu0 0.0
  %8656 = vmatpush2.msra.mxu0 0.0
  %8657 = vmatprep.subr.mxu0 0.0
  %8658 = vmatpush2.msra.mxu0 0.0
  %8659 = vmatprep.subr.mxu0 0.0
  %8660 = vmatpush2.msra.mxu0 0.0
  %8661 = vmatprep.subr.mxu0 0.0
  %8662 = vmatpush2.msra.mxu0 0.0
  %8663 = vmatprep.subr.mxu0 0.0
  %8664 = vmatpush2.msra.mxu0 0.0
  %8665 = vmatprep.subr.mxu0 0.0
  %8666 = vmatpush2.msra.mxu0 0.0
  %8667 = vmatprep.subr.mxu0 0.0
  %8668 = vmatpush2.msra.mxu0 0.0
  %8669 = vmatprep.subr.mxu0 0.0
  %8670 = vmatpush2.msra.mxu0 0.0
  %8671 = vmatprep.subr.mxu0 0.0
  %8672 = vmatpush2.msra.mxu0 0.0
  %8673 = vmatprep.subr.mxu0 0.0
  %8674 = vmatpush2.msra.mxu0 0.0
  %8675 = vmatprep.mubr.f32.mxu0 0.0
  %8676 = vmatmul.mubr.f32.gmra.mxu0 %v8609
  %v8677 = vpop.f32.mrf.mxu0
  %v8678 = vadd.f32 0.0, %v8677
  %v8679 = vpop.f32.mrf.mxu0
  %8680 = vdwg.mxu0
  %v8681 = vadd.f32 %v8578, %v8678
  %v8682 = vld [vmem:[%s8223] sm:$0x3]
  %v8683 = vld [vmem:[%s8223 + $0x4] sm:$0x3]
  %v8684 = vld [vmem:[%s8223 + $0xc] sm:$0x3]
  %v8685 = vld [vmem:[%s8223 + $0x10] sm:$0x3]
  %s8686 = scalar_lea.vmem %s7, 128
  %v8687 = vld [vmem:[%s8686] sm:$0xff]
  %v8688 = vld [vmem:[%s8686 + $0x8] sm:$0xff]
  %v8689 = vld [vmem:[%s8686 + $0x10] sm:$0xff]
  %v8690 = vld [vmem:[%s8686 + $0x18] sm:$0xff]
  %v8695 = vcombine.low %v8682, %v8683
  %v8696 = vcombine.low %v8684, %v8685
  %v8698 = vunpack.c.l.s4 1983009808
  %v8699 = vunpack.c.0.s8 %v8698
  %v8700 = vlaneseq
  %v8701 = vshrl.u32 %v8700, 7
  %v8702 = vsub.s32 %v8699, %v8701
  %v8703 = vrot.slane %v8695, %v8702
  %v8705 = vunpack.c.l.s4 1983009808
  %v8706 = vunpack.c.0.s8 %v8705
  %v8707 = vlaneseq
  %v8708 = vshrl.u32 %v8707, 7
  %v8709 = vsub.s32 %v8706, %v8708
  %v8710 = vrot.slane %v8696, %v8709
  %v8711 = vcombine.low %v8703, %v8710
  %v8712 = vsel %vm8310, %v8711, 0
  %8714 = vmatprep.subr.mxu0 0.0
  %8715 = vmatpush1.msra.mxu0 0.0
  %8716 = vmatprep.subr.mxu0 0.0
  %8717 = vmatpush1.msra.mxu0 0.0
  %8718 = vmatprep.subr.mxu0 0.0
  %8719 = vmatpush1.msra.mxu0 0.0
  %8720 = vmatprep.subr.mxu0 0.0
  %8721 = vmatpush1.msra.mxu0 0.0
  %8722 = vmatprep.subr.mxu0 0.0
  %8723 = vmatpush1.msra.mxu0 0.0
  %8724 = vmatprep.subr.mxu0 0.0
  %8725 = vmatpush1.msra.mxu0 0.0
  %8726 = vmatprep.subr.mxu0 0.0
  %8727 = vmatpush1.msra.mxu0 0.0
  %8728 = vmatprep.subr.mxu0 0.0
  %8729 = vmatpush1.msra.mxu0 0.0
  %8730 = vmatprep.subr.mxu0 0.0
  %8731 = vmatpush1.msra.mxu0 0.0
  %8732 = vmatprep.subr.mxu0 0.0
  %8733 = vmatpush1.msra.mxu0 0.0
  %8734 = vmatprep.subr.mxu0 0.0
  %8735 = vmatpush1.msra.mxu0 0.0
  %8736 = vmatprep.subr.mxu0 0.0
  %8737 = vmatpush1.msra.mxu0 0.0
  %8738 = vmatprep.subr.mxu0 0.0
  %8739 = vmatpush1.msra.mxu0 %v8690
  %8740 = vmatprep.subr.mxu0 0.0
  %8741 = vmatpush1.msra.mxu0 %v8689
  %8742 = vmatprep.subr.mxu0 0.0
  %8743 = vmatpush1.msra.mxu0 %v8688
  %8744 = vmatprep.subr.mxu0 0.0
  %8745 = vmatpush1.msra.mxu0 %v8687
  %8746 = vmatprep.subr.mxu0 0.0
  %8747 = vmatpush2.msra.mxu0 0.0
  %8748 = vmatprep.subr.mxu0 0.0
  %8749 = vmatpush2.msra.mxu0 0.0
  %8750 = vmatprep.subr.mxu0 0.0
  %8751 = vmatpush2.msra.mxu0 0.0
  %8752 = vmatprep.subr.mxu0 0.0
  %8753 = vmatpush2.msra.mxu0 0.0
  %8754 = vmatprep.subr.mxu0 0.0
  %8755 = vmatpush2.msra.mxu0 0.0
  %8756 = vmatprep.subr.mxu0 0.0
  %8757 = vmatpush2.msra.mxu0 0.0
  %8758 = vmatprep.subr.mxu0 0.0
  %8759 = vmatpush2.msra.mxu0 0.0
  %8760 = vmatprep.subr.mxu0 0.0
  %8761 = vmatpush2.msra.mxu0 0.0
  %8762 = vmatprep.subr.mxu0 0.0
  %8763 = vmatpush2.msra.mxu0 0.0
  %8764 = vmatprep.subr.mxu0 0.0
  %8765 = vmatpush2.msra.mxu0 0.0
  %8766 = vmatprep.subr.mxu0 0.0
  %8767 = vmatpush2.msra.mxu0 0.0
  %8768 = vmatprep.subr.mxu0 0.0
  %8769 = vmatpush2.msra.mxu0 0.0
  %8770 = vmatprep.subr.mxu0 0.0
  %8771 = vmatpush2.msra.mxu0 0.0
  %8772 = vmatprep.subr.mxu0 0.0
  %8773 = vmatpush2.msra.mxu0 0.0
  %8774 = vmatprep.subr.mxu0 0.0
  %8775 = vmatpush2.msra.mxu0 0.0
  %8776 = vmatprep.subr.mxu0 0.0
  %8777 = vmatpush2.msra.mxu0 0.0
  %8778 = vmatprep.mubr.f32.mxu0 0.0
  %8779 = vmatmul.mubr.f32.gmra.mxu0 %v8712
  %v8780 = vpop.f32.mrf.mxu0
  %v8781 = vadd.f32 0.0, %v8780
  %v8782 = vpop.f32.mrf.mxu0
  %8783 = vdwg.mxu0
  %v8784 = vadd.f32 %v8681, %v8781
  %v8785 = vld [vmem:[%s8223 + $0x1] sm:$0x3]
  %v8786 = vld [vmem:[%s8223 + $0x5] sm:$0x3]
  %v8787 = vld [vmem:[%s8223 + $0xd] sm:$0x3]
  %v8788 = vld [vmem:[%s8223 + $0x11] sm:$0x3]
  %s8789 = scalar_lea.vmem %s7, 160
  %v8790 = vld [vmem:[%s8789] sm:$0xff]
  %v8791 = vld [vmem:[%s8789 + $0x8] sm:$0xff]
  %v8792 = vld [vmem:[%s8789 + $0x10] sm:$0xff]
  %v8793 = vld [vmem:[%s8789 + $0x18] sm:$0xff]
  %v8798 = vcombine.low %v8785, %v8786
  %v8799 = vcombine.low %v8787, %v8788
  %v8801 = vunpack.c.l.s4 1983009808
  %v8802 = vunpack.c.0.s8 %v8801
  %v8803 = vlaneseq
  %v8804 = vshrl.u32 %v8803, 7
  %v8805 = vsub.s32 %v8802, %v8804
  %v8806 = vrot.slane %v8798, %v8805
  %v8808 = vunpack.c.l.s4 1983009808
  %v8809 = vunpack.c.0.s8 %v8808
  %v8810 = vlaneseq
  %v8811 = vshrl.u32 %v8810, 7
  %v8812 = vsub.s32 %v8809, %v8811
  %v8813 = vrot.slane %v8799, %v8812
  %v8814 = vcombine.low %v8806, %v8813
  %v8815 = vsel %vm8310, %v8814, 0
  %8817 = vmatprep.subr.mxu0 0.0
  %8818 = vmatpush1.msra.mxu0 0.0
  %8819 = vmatprep.subr.mxu0 0.0
  %8820 = vmatpush1.msra.mxu0 0.0
  %8821 = vmatprep.subr.mxu0 0.0
  %8822 = vmatpush1.msra.mxu0 0.0
  %8823 = vmatprep.subr.mxu0 0.0
  %8824 = vmatpush1.msra.mxu0 0.0
  %8825 = vmatprep.subr.mxu0 0.0
  %8826 = vmatpush1.msra.mxu0 0.0
  %8827 = vmatprep.subr.mxu0 0.0
  %8828 = vmatpush1.msra.mxu0 0.0
  %8829 = vmatprep.subr.mxu0 0.0
  %8830 = vmatpush1.msra.mxu0 0.0
  %8831 = vmatprep.subr.mxu0 0.0
  %8832 = vmatpush1.msra.mxu0 0.0
  %8833 = vmatprep.subr.mxu0 0.0
  %8834 = vmatpush1.msra.mxu0 0.0
  %8835 = vmatprep.subr.mxu0 0.0
  %8836 = vmatpush1.msra.mxu0 0.0
  %8837 = vmatprep.subr.mxu0 0.0
  %8838 = vmatpush1.msra.mxu0 0.0
  %8839 = vmatprep.subr.mxu0 0.0
  %8840 = vmatpush1.msra.mxu0 0.0
  %8841 = vmatprep.subr.mxu0 0.0
  %8842 = vmatpush1.msra.mxu0 %v8793
  %8843 = vmatprep.subr.mxu0 0.0
  %8844 = vmatpush1.msra.mxu0 %v8792
  %8845 = vmatprep.subr.mxu0 0.0
  %8846 = vmatpush1.msra.mxu0 %v8791
  %8847 = vmatprep.subr.mxu0 0.0
  %8848 = vmatpush1.msra.mxu0 %v8790
  %8849 = vmatprep.subr.mxu0 0.0
  %8850 = vmatpush2.msra.mxu0 0.0
  %8851 = vmatprep.subr.mxu0 0.0
  %8852 = vmatpush2.msra.mxu0 0.0
  %8853 = vmatprep.subr.mxu0 0.0
  %8854 = vmatpush2.msra.mxu0 0.0
  %8855 = vmatprep.subr.mxu0 0.0
  %8856 = vmatpush2.msra.mxu0 0.0
  %8857 = vmatprep.subr.mxu0 0.0
  %8858 = vmatpush2.msra.mxu0 0.0
  %8859 = vmatprep.subr.mxu0 0.0
  %8860 = vmatpush2.msra.mxu0 0.0
  %8861 = vmatprep.subr.mxu0 0.0
  %8862 = vmatpush2.msra.mxu0 0.0
  %8863 = vmatprep.subr.mxu0 0.0
  %8864 = vmatpush2.msra.mxu0 0.0
  %8865 = vmatprep.subr.mxu0 0.0
  %8866 = vmatpush2.msra.mxu0 0.0
  %8867 = vmatprep.subr.mxu0 0.0
  %8868 = vmatpush2.msra.mxu0 0.0
  %8869 = vmatprep.subr.mxu0 0.0
  %8870 = vmatpush2.msra.mxu0 0.0
  %8871 = vmatprep.subr.mxu0 0.0
  %8872 = vmatpush2.msra.mxu0 0.0
  %8873 = vmatprep.subr.mxu0 0.0
  %8874 = vmatpush2.msra.mxu0 0.0
  %8875 = vmatprep.subr.mxu0 0.0
  %8876 = vmatpush2.msra.mxu0 0.0
  %8877 = vmatprep.subr.mxu0 0.0
  %8878 = vmatpush2.msra.mxu0 0.0
  %8879 = vmatprep.subr.mxu0 0.0
  %8880 = vmatpush2.msra.mxu0 0.0
  %8881 = vmatprep.mubr.f32.mxu0 0.0
  %8882 = vmatmul.mubr.f32.gmra.mxu0 %v8815
  %v8883 = vpop.f32.mrf.mxu0
  %v8884 = vadd.f32 0.0, %v8883
  %v8885 = vpop.f32.mrf.mxu0
  %8886 = vdwg.mxu0
  %v8887 = vadd.f32 %v8784, %v8884
  %s8888 = scalar_lea.vmem [#allocation4], 28
  %v8889 = vld [vmem:[%s8888] sm:$0x3]
  %v8890 = vld [vmem:[%s8888 + $0x4] sm:$0x3]
  %v8891 = vld [vmem:[%s8888 + $0xc] sm:$0x3]
  %v8892 = vld [vmem:[%s8888 + $0x10] sm:$0x3]
  %s8893 = scalar_lea.vmem %s7, 192
  %v8894 = vld [vmem:[%s8893] sm:$0xff]
  %v8895 = vld [vmem:[%s8893 + $0x8] sm:$0xff]
  %v8896 = vld [vmem:[%s8893 + $0x10] sm:$0xff]
  %v8897 = vld [vmem:[%s8893 + $0x18] sm:$0xff]
  %v8902 = vcombine.low %v8889, %v8890
  %v8903 = vcombine.low %v8891, %v8892
  %v8905 = vunpack.c.l.s4 1983009808
  %v8906 = vunpack.c.0.s8 %v8905
  %v8907 = vlaneseq
  %v8908 = vshrl.u32 %v8907, 7
  %v8909 = vsub.s32 %v8906, %v8908
  %v8910 = vrot.slane %v8902, %v8909
  %v8912 = vunpack.c.l.s4 1983009808
  %v8913 = vunpack.c.0.s8 %v8912
  %v8914 = vlaneseq
  %v8915 = vshrl.u32 %v8914, 7
  %v8916 = vsub.s32 %v8913, %v8915
  %v8917 = vrot.slane %v8903, %v8916
  %v8918 = vcombine.low %v8910, %v8917
  %v8919 = vsel %vm8310, %v8918, 0
  %8921 = vmatprep.subr.mxu0 0.0
  %8922 = vmatpush1.msra.mxu0 0.0
  %8923 = vmatprep.subr.mxu0 0.0
  %8924 = vmatpush1.msra.mxu0 0.0
  %8925 = vmatprep.subr.mxu0 0.0
  %8926 = vmatpush1.msra.mxu0 0.0
  %8927 = vmatprep.subr.mxu0 0.0
  %8928 = vmatpush1.msra.mxu0 0.0
  %8929 = vmatprep.subr.mxu0 0.0
  %8930 = vmatpush1.msra.mxu0 0.0
  %8931 = vmatprep.subr.mxu0 0.0
  %8932 = vmatpush1.msra.mxu0 0.0
  %8933 = vmatprep.subr.mxu0 0.0
  %8934 = vmatpush1.msra.mxu0 0.0
  %8935 = vmatprep.subr.mxu0 0.0
  %8936 = vmatpush1.msra.mxu0 0.0
  %8937 = vmatprep.subr.mxu0 0.0
  %8938 = vmatpush1.msra.mxu0 0.0
  %8939 = vmatprep.subr.mxu0 0.0
  %8940 = vmatpush1.msra.mxu0 0.0
  %8941 = vmatprep.subr.mxu0 0.0
  %8942 = vmatpush1.msra.mxu0 0.0
  %8943 = vmatprep.subr.mxu0 0.0
  %8944 = vmatpush1.msra.mxu0 0.0
  %8945 = vmatprep.subr.mxu0 0.0
  %8946 = vmatpush1.msra.mxu0 %v8897
  %8947 = vmatprep.subr.mxu0 0.0
  %8948 = vmatpush1.msra.mxu0 %v8896
  %8949 = vmatprep.subr.mxu0 0.0
  %8950 = vmatpush1.msra.mxu0 %v8895
  %8951 = vmatprep.subr.mxu0 0.0
  %8952 = vmatpush1.msra.mxu0 %v8894
  %8953 = vmatprep.subr.mxu0 0.0
  %8954 = vmatpush2.msra.mxu0 0.0
  %8955 = vmatprep.subr.mxu0 0.0
  %8956 = vmatpush2.msra.mxu0 0.0
  %8957 = vmatprep.subr.mxu0 0.0
  %8958 = vmatpush2.msra.mxu0 0.0
  %8959 = vmatprep.subr.mxu0 0.0
  %8960 = vmatpush2.msra.mxu0 0.0
  %8961 = vmatprep.subr.mxu0 0.0
  %8962 = vmatpush2.msra.mxu0 0.0
  %8963 = vmatprep.subr.mxu0 0.0
  %8964 = vmatpush2.msra.mxu0 0.0
  %8965 = vmatprep.subr.mxu0 0.0
  %8966 = vmatpush2.msra.mxu0 0.0
  %8967 = vmatprep.subr.mxu0 0.0
  %8968 = vmatpush2.msra.mxu0 0.0
  %8969 = vmatprep.subr.mxu0 0.0
  %8970 = vmatpush2.msra.mxu0 0.0
  %8971 = vmatprep.subr.mxu0 0.0
  %8972 = vmatpush2.msra.mxu0 0.0
  %8973 = vmatprep.subr.mxu0 0.0
  %8974 = vmatpush2.msra.mxu0 0.0
  %8975 = vmatprep.subr.mxu0 0.0
  %8976 = vmatpush2.msra.mxu0 0.0
  %8977 = vmatprep.subr.mxu0 0.0
  %8978 = vmatpush2.msra.mxu0 0.0
  %8979 = vmatprep.subr.mxu0 0.0
  %8980 = vmatpush2.msra.mxu0 0.0
  %8981 = vmatprep.subr.mxu0 0.0
  %8982 = vmatpush2.msra.mxu0 0.0
  %8983 = vmatprep.subr.mxu0 0.0
  %8984 = vmatpush2.msra.mxu0 0.0
  %8985 = vmatprep.mubr.f32.mxu0 0.0
  %8986 = vmatmul.mubr.f32.gmra.mxu0 %v8919
  %v8987 = vpop.f32.mrf.mxu0
  %v8988 = vadd.f32 0.0, %v8987
  %v8989 = vpop.f32.mrf.mxu0
  %8990 = vdwg.mxu0
  %v8991 = vadd.f32 %v8887, %v8988
  %v8992 = vld [vmem:[%s8888 + $0x1] sm:$0x3]
  %v8993 = vld [vmem:[%s8888 + $0x5] sm:$0x3]
  %v8994 = vld [vmem:[%s8888 + $0xd] sm:$0x3]
  %v8995 = vld [vmem:[%s8888 + $0x11] sm:$0x3]
  %s8996 = scalar_lea.vmem %s7, 224
  %v8997 = vld [vmem:[%s8996] sm:$0xff]
  %v8998 = vld [vmem:[%s8996 + $0x8] sm:$0xff]
  %v8999 = vld [vmem:[%s8996 + $0x10] sm:$0xff]
  %v9000 = vld [vmem:[%s8996 + $0x18] sm:$0xff]
  %v9005 = vcombine.low %v8992, %v8993
  %v9006 = vcombine.low %v8994, %v8995
  %v9008 = vunpack.c.l.s4 1983009808
  %v9009 = vunpack.c.0.s8 %v9008
  %v9010 = vlaneseq
  %v9011 = vshrl.u32 %v9010, 7
  %v9012 = vsub.s32 %v9009, %v9011
  %v9013 = vrot.slane %v9005, %v9012
  %v9015 = vunpack.c.l.s4 1983009808
  %v9016 = vunpack.c.0.s8 %v9015
  %v9017 = vlaneseq
  %v9018 = vshrl.u32 %v9017, 7
  %v9019 = vsub.s32 %v9016, %v9018
  %v9020 = vrot.slane %v9006, %v9019
  %v9021 = vcombine.low %v9013, %v9020
  %v9022 = vsel %vm8310, %v9021, 0
  %9024 = vmatprep.subr.mxu0 0.0
  %9025 = vmatpush1.msra.mxu0 0.0
  %9026 = vmatprep.subr.mxu0 0.0
  %9027 = vmatpush1.msra.mxu0 0.0
  %9028 = vmatprep.subr.mxu0 0.0
  %9029 = vmatpush1.msra.mxu0 0.0
  %9030 = vmatprep.subr.mxu0 0.0
  %9031 = vmatpush1.msra.mxu0 0.0
  %9032 = vmatprep.subr.mxu0 0.0
  %9033 = vmatpush1.msra.mxu0 0.0
  %9034 = vmatprep.subr.mxu0 0.0
  %9035 = vmatpush1.msra.mxu0 0.0
  %9036 = vmatprep.subr.mxu0 0.0
  %9037 = vmatpush1.msra.mxu0 0.0
  %9038 = vmatprep.subr.mxu0 0.0
  %9039 = vmatpush1.msra.mxu0 0.0
  %9040 = vmatprep.subr.mxu0 0.0
  %9041 = vmatpush1.msra.mxu0 0.0
  %9042 = vmatprep.subr.mxu0 0.0
  %9043 = vmatpush1.msra.mxu0 0.0
  %9044 = vmatprep.subr.mxu0 0.0
  %9045 = vmatpush1.msra.mxu0 0.0
  %9046 = vmatprep.subr.mxu0 0.0
  %9047 = vmatpush1.msra.mxu0 0.0
  %9048 = vmatprep.subr.mxu0 0.0
  %9049 = vmatpush1.msra.mxu0 %v9000
  %9050 = vmatprep.subr.mxu0 0.0
  %9051 = vmatpush1.msra.mxu0 %v8999
  %9052 = vmatprep.subr.mxu0 0.0
  %9053 = vmatpush1.msra.mxu0 %v8998
  %9054 = vmatprep.subr.mxu0 0.0
  %9055 = vmatpush1.msra.mxu0 %v8997
  %9056 = vmatprep.subr.mxu0 0.0
  %9057 = vmatpush2.msra.mxu0 0.0
  %9058 = vmatprep.subr.mxu0 0.0
  %9059 = vmatpush2.msra.mxu0 0.0
  %9060 = vmatprep.subr.mxu0 0.0
  %9061 = vmatpush2.msra.mxu0 0.0
  %9062 = vmatprep.subr.mxu0 0.0
  %9063 = vmatpush2.msra.mxu0 0.0
  %9064 = vmatprep.subr.mxu0 0.0
  %9065 = vmatpush2.msra.mxu0 0.0
  %9066 = vmatprep.subr.mxu0 0.0
  %9067 = vmatpush2.msra.mxu0 0.0
  %9068 = vmatprep.subr.mxu0 0.0
  %9069 = vmatpush2.msra.mxu0 0.0
  %9070 = vmatprep.subr.mxu0 0.0
  %9071 = vmatpush2.msra.mxu0 0.0
  %9072 = vmatprep.subr.mxu0 0.0
  %9073 = vmatpush2.msra.mxu0 0.0
  %9074 = vmatprep.subr.mxu0 0.0
  %9075 = vmatpush2.msra.mxu0 0.0
  %9076 = vmatprep.subr.mxu0 0.0
  %9077 = vmatpush2.msra.mxu0 0.0
  %9078 = vmatprep.subr.mxu0 0.0
  %9079 = vmatpush2.msra.mxu0 0.0
  %9080 = vmatprep.subr.mxu0 0.0
  %9081 = vmatpush2.msra.mxu0 0.0
  %9082 = vmatprep.subr.mxu0 0.0
  %9083 = vmatpush2.msra.mxu0 0.0
  %9084 = vmatprep.subr.mxu0 0.0
  %9085 = vmatpush2.msra.mxu0 0.0
  %9086 = vmatprep.subr.mxu0 0.0
  %9087 = vmatpush2.msra.mxu0 0.0
  %9088 = vmatprep.mubr.f32.mxu0 0.0
  %9089 = vmatmul.mubr.f32.gmra.mxu0 %v9022
  %v9090 = vpop.f32.mrf.mxu0
  %v9091 = vadd.f32 0.0, %v9090
  %v9092 = vpop.f32.mrf.mxu0
  %9093 = vdwg.mxu0
  %v9094 = vadd.f32 %v8991, %v9091
  %v9095 = vld [vmem:[%s8] sm:$0x1]
  %v9097 = vlaneseq
  %v9098 = vshrl.u32 %v9097, 7
  %v9099 = vsub.s32 0, %v9098
  %v9100 = vrot.slane %v9095, %v9099
  %v9102 = vadd.f32 %v9094, %v9100
  %v9103 = vsel %vm8310, %v9102, 0.0
  %v9104 = vrot.slane %v9103, 4
  %v9105 = vadd.f32 %v9103, %v9104
  %v9106 = vrot.slane %v9105, 2
  %v9107 = vadd.f32 %v9105, %v9106
  %v9108 = vrot.slane %v9107, 1
  %v9109 = vadd.f32 %v9107, %v9108
  %v9110 = vmul.f32 %v9102, %v9102
  %v9111 = vsel %vm8310, %v9110, 0.0
  %v9112 = vrot.slane %v9111, 4
  %v9113 = vadd.f32 %v9111, %v9112
  %v9114 = vrot.slane %v9113, 2
  %v9115 = vadd.f32 %v9113, %v9114
  %v9116 = vrot.slane %v9115, 1
  %v9117 = vadd.f32 %v9115, %v9116
  %v9118 = vmul.f32 %v9109, 0.125
  %v9119 = vmul.f32 %v9117, 0.125
  %v9120 = vmul.f32 %v9118, %v9118
  %v9121 = vsub.f32 %v9119, %v9120
  %v9122 = vsub.f32 %v9102, %v9118
  %v9123 = vadd.f32 %v9121, 1e-05
  %v9124 = vrsqrt.pop %v9123
  %v9125 = vmul.f32 %v9122, %v9124
  %v9126 = vld [vmem:[%s9] sm:$0x1]
  %v9128 = vlaneseq
  %v9129 = vshrl.u32 %v9128, 7
  %v9130 = vsub.s32 0, %v9129
  %v9131 = vrot.slane %v9126, %v9130
  %v9133 = vmul.f32 %v9125, %v9131
  %v9134 = vld [vmem:[%s10] sm:$0x1]
  %v9136 = vlaneseq
  %v9137 = vshrl.u32 %v9136, 7
  %v9138 = vsub.s32 0, %v9137
  %v9139 = vrot.slane %v9134, %v9138
  %v9141 = vadd.f32 %v9133, %v9139
  %vm9142 = vcmp.ge.f32.partialorder %v9141, 0.0
  %v9143 = vmul.f32 %v9141, 0.2
  %v9144 = vsel %vm9142, %v9141, %v9143
  %v9146 = vcombine.high %v9144, %v9144
  %v9148 = vunpack.c.l.s4 1983009808
  %v9149 = vunpack.c.0.s8 %v9148
  %v9150 = vlaneseq
  %v9151 = vshrl.u32 %v9150, 7
  %v9152 = vsub.s32 %v9149, %v9151
  %v9153 = vrot.slane %v9144, %v9152
  %v9155 = vunpack.c.l.s4 1983009808
  %v9156 = vunpack.c.0.s8 %v9155
  %v9157 = vlaneseq
  %v9158 = vshrl.u32 %v9157, 7
  %v9159 = vsub.s32 %v9156, %v9158
  %v9160 = vrot.slane %v9146, %v9159
  %v9161 = vcombine.high %v9153, %v9153
  %v9162 = vcombine.high %v9160, %v9160
  %v9167 = vlaneseq
  %v9168 = vshrl.u32 %v9167, 7
  %v9169 = vsub.s32 0, %v9168
  %v9170 = vrot.slane %v9153, %v9169
  %v9171 = vlaneseq
  %v9172 = vshrl.u32 %v9171, 7
  %v9173 = vsub.s32 0, %v9172
  %v9174 = vrot.slane %v9160, %v9173
  %9175 = vrot.lane.b32.xlu0 %v9170, 32
  %v9176 = vpop.permute.xlu0 %9175
  %9177 = vrot.lane.b32.xlu0 %v9174, 32
  %v9178 = vpop.permute.xlu0 %9177
  %s9181 = scalar_lea.vmem [#allocation5], 8
  %vm9182 = vcmask 516352
  %9183 = vst.msk [vmem:[%s9181] sm:$0x1] %vm9182, %v9176
  %9184 = vst.msk [vmem:[%s9181 + $0x4] sm:$0x1] %vm9182, %v9178
  %vm9185 = vcmask 254977
  %9186 = vst.msk [vmem:[%s9181] sm:$0x2] %vm9185, %v9153
  %9187 = vst.msk [vmem:[%s9181 + $0x4] sm:$0x2] %vm9185, %v9160
  %v9188 = vlaneseq
  %v9189 = vshrl.u32 %v9188, 7
  %v9190 = vsub.s32 0, %v9189
  %v9191 = vrot.slane %v9161, %v9190
  %v9192 = vlaneseq
  %v9193 = vshrl.u32 %v9192, 7
  %v9194 = vsub.s32 0, %v9193
  %v9195 = vrot.slane %v9162, %v9194
  %9196 = vrot.lane.b32.xlu0 %v9191, 32
  %v9197 = vpop.permute.xlu0 %9196
  %9198 = vrot.lane.b32.xlu0 %v9195, 32
  %v9199 = vpop.permute.xlu0 %9198
  %s9202 = scalar_lea.vmem [#allocation5], 2
  %9203 = vst.msk [vmem:[%s9202] sm:$0x1] %vm9182, %v9197
  %9204 = vst.msk [vmem:[%s9202 + $0x4] sm:$0x1] %vm9182, %v9199
  %9205 = vst.msk [vmem:[%s9202] sm:$0x2] %vm9185, %v9161
  %9206 = vst.msk [vmem:[%s9202 + $0x4] sm:$0x2] %vm9185, %v9162
  %v9207 = vld [vmem:[#allocation5] sm:$0x1]
  %v9208 = vld [vmem:[#allocation5 + $0x4] sm:$0x1]
  %v9209 = vld [vmem:[%s11] sm:$0x1]
  %v9211 = vlaneseq
  %v9212 = vshrl.u32 %v9211, 7
  %v9213 = vsub.s32 0, %v9212
  %v9214 = vrot.slane %v9209, %v9213
  %v9216 = vmul.f32 %v9207, %v9214
  %v9217 = vmul.f32 %v9208, %v9214
  %v9220 = vrot.slane %v9217, 7
  %v9221 = vsel %vm1891, %v9220, %v9216
  %v9223 = vsel %vm154, %v9221, 0.0
  %9224 = vadd.xlane.f32.xlu0 %v9223
  %v9225 = vpop.xlane.xlu0 %9224
  %v9226 = vadd.f32 %v9225, 0.0
  %v9227 = vld [vmem:[#allocation5 + $0x1] sm:$0x1]
  %v9228 = vld [vmem:[#allocation5 + $0x5] sm:$0x1]
  %s9229 = scalar_lea.vmem %s11, 1
  %v9230 = vld [vmem:[%s9229] sm:$0x1]
  %v9232 = vlaneseq
  %v9233 = vshrl.u32 %v9232, 7
  %v9234 = vsub.s32 0, %v9233
  %v9235 = vrot.slane %v9230, %v9234
  %v9237 = vmul.f32 %v9227, %v9235
  %v9238 = vmul.f32 %v9228, %v9235
  %v9241 = vrot.slane %v9238, 7
  %v9242 = vsel %vm1891, %v9241, %v9237
  %v9244 = vsel %vm154, %v9242, 0.0
  %9245 = vadd.xlane.f32.xlu0 %v9244
  %v9246 = vpop.xlane.xlu0 %9245
  %v9247 = vadd.f32 %v9226, %v9246
  %v9248 = vld [vmem:[%s9181] sm:$0x1]
  %v9249 = vld [vmem:[%s9181 + $0x4] sm:$0x1]
  %s9250 = scalar_lea.vmem %s11, 2
  %v9251 = vld [vmem:[%s9250] sm:$0x1]
  %v9253 = vlaneseq
  %v9254 = vshrl.u32 %v9253, 7
  %v9255 = vsub.s32 0, %v9254
  %v9256 = vrot.slane %v9251, %v9255
  %v9258 = vmul.f32 %v9248, %v9256
  %v9259 = vmul.f32 %v9249, %v9256
  %v9262 = vrot.slane %v9259, 7
  %v9263 = vsel %vm1891, %v9262, %v9258
  %v9265 = vsel %vm154, %v9263, 0.0
  %9266 = vadd.xlane.f32.xlu0 %v9265
  %v9267 = vpop.xlane.xlu0 %9266
  %v9268 = vadd.f32 %v9247, %v9267
  %v9269 = vld [vmem:[%s9181 + $0x1] sm:$0x1]
  %v9270 = vld [vmem:[%s9181 + $0x5] sm:$0x1]
  %s9271 = scalar_lea.vmem %s11, 3
  %v9272 = vld [vmem:[%s9271] sm:$0x1]
  %v9274 = vlaneseq
  %v9275 = vshrl.u32 %v9274, 7
  %v9276 = vsub.s32 0, %v9275
  %v9277 = vrot.slane %v9272, %v9276
  %v9279 = vmul.f32 %v9269, %v9277
  %v9280 = vmul.f32 %v9270, %v9277
  %v9283 = vrot.slane %v9280, 7
  %v9284 = vsel %vm1891, %v9283, %v9279
  %v9286 = vsel %vm154, %v9284, 0.0
  %9287 = vadd.xlane.f32.xlu0 %v9286
  %v9288 = vpop.xlane.xlu0 %9287
  %v9289 = vadd.f32 %v9268, %v9288
  %v9290 = vld [vmem:[%s9202] sm:$0x1]
  %v9291 = vld [vmem:[%s9202 + $0x4] sm:$0x1]
  %s9292 = scalar_lea.vmem %s11, 4
  %v9293 = vld [vmem:[%s9292] sm:$0x1]
  %v9295 = vlaneseq
  %v9296 = vshrl.u32 %v9295, 7
  %v9297 = vsub.s32 0, %v9296
  %v9298 = vrot.slane %v9293, %v9297
  %v9300 = vmul.f32 %v9290, %v9298
  %v9301 = vmul.f32 %v9291, %v9298
  %v9304 = vrot.slane %v9301, 7
  %v9305 = vsel %vm1891, %v9304, %v9300
  %v9307 = vsel %vm154, %v9305, 0.0
  %9308 = vadd.xlane.f32.xlu0 %v9307
  %v9309 = vpop.xlane.xlu0 %9308
  %v9310 = vadd.f32 %v9289, %v9309
  %v9311 = vld [vmem:[%s9202 + $0x1] sm:$0x1]
  %v9312 = vld [vmem:[%s9202 + $0x5] sm:$0x1]
  %s9313 = scalar_lea.vmem %s11, 5
  %v9314 = vld [vmem:[%s9313] sm:$0x1]
  %v9316 = vlaneseq
  %v9317 = vshrl.u32 %v9316, 7
  %v9318 = vsub.s32 0, %v9317
  %v9319 = vrot.slane %v9314, %v9318
  %v9321 = vmul.f32 %v9311, %v9319
  %v9322 = vmul.f32 %v9312, %v9319
  %v9325 = vrot.slane %v9322, 7
  %v9326 = vsel %vm1891, %v9325, %v9321
  %v9328 = vsel %vm154, %v9326, 0.0
  %9329 = vadd.xlane.f32.xlu0 %v9328
  %v9330 = vpop.xlane.xlu0 %9329
  %v9331 = vadd.f32 %v9310, %v9330
  %s9332 = scalar_lea.vmem [#allocation5], 10
  %v9333 = vld [vmem:[%s9332] sm:$0x1]
  %v9334 = vld [vmem:[%s9332 + $0x4] sm:$0x1]
  %s9335 = scalar_lea.vmem %s11, 6
  %v9336 = vld [vmem:[%s9335] sm:$0x1]
  %v9338 = vlaneseq
  %v9339 = vshrl.u32 %v9338, 7
  %v9340 = vsub.s32 0, %v9339
  %v9341 = vrot.slane %v9336, %v9340
  %v9343 = vmul.f32 %v9333, %v9341
  %v9344 = vmul.f32 %v9334, %v9341
  %v9347 = vrot.slane %v9344, 7
  %v9348 = vsel %vm1891, %v9347, %v9343
  %v9350 = vsel %vm154, %v9348, 0.0
  %9351 = vadd.xlane.f32.xlu0 %v9350
  %v9352 = vpop.xlane.xlu0 %9351
  %v9353 = vadd.f32 %v9331, %v9352
  %v9354 = vld [vmem:[%s9332 + $0x1] sm:$0x1]
  %v9355 = vld [vmem:[%s9332 + $0x5] sm:$0x1]
  %s9356 = scalar_lea.vmem %s11, 7
  %v9357 = vld [vmem:[%s9356] sm:$0x1]
  %v9359 = vlaneseq
  %v9360 = vshrl.u32 %v9359, 7
  %v9361 = vsub.s32 0, %v9360
  %v9362 = vrot.slane %v9357, %v9361
  %v9364 = vmul.f32 %v9354, %v9362
  %v9365 = vmul.f32 %v9355, %v9362
  %v9368 = vrot.slane %v9365, 7
  %v9369 = vsel %vm1891, %v9368, %v9364
  %v9371 = vsel %vm154, %v9369, 0.0
  %9372 = vadd.xlane.f32.xlu0 %v9371
  %v9373 = vpop.xlane.xlu0 %9372
  %v9374 = vadd.f32 %v9353, %v9373
  %v9375 = vld [vmem:[#allocation6] sm:$0x1]
  %v9377 = vlaneseq
  %v9378 = vshrl.u32 %v9377, 7
  %v9379 = vsub.s32 0, %v9378
  %v9380 = vrot.slane %v9375, %v9379
  %v9382 = vadd.f32 %v9374, %v9380
  %vm9383 = vcmask 1024
  %9384 = vst.msk [vmem:[%s13] sm:$0x3] %vm9383, %v9382
  // Predicated region
  $region54: #{discriminator_forward.1} parent=0 // pred_check
    _
  $region55: #{discriminator_forward.1} parent=0 // pred_check_branch
    %9386 = sbr.rel (0) target = $region57
  $region56: #{discriminator_forward.1} parent=0 // pred_region
    _
  $region57: #{discriminator_forward.1} parent=0 // pred_fallthru
    _
  // Predicated region
  $region58: #{discriminator_forward.1} parent=0 // pred_check
    _
  $region59: #{discriminator_forward.1} parent=0 // pred_check_branch
    %9388 = sbr.rel (0) target = $region61
  $region60: #{discriminator_forward.1} parent=0 // pred_region
    _
  $region61: #{discriminator_forward.1} parent=0 // pred_fallthru
    _

</llo_original>
